<compile_context>
chip_gen: v6e
topology: v6e:2x2x1
jax: 0.10.0
libtpu: 0.0.40
codegen_flags: <defaults>
</compile_context>

<pallas_src>
import functools
import math

import jax
import jax.numpy as jnp
import numpy as np
from jax.experimental import pallas as pl
from jax.experimental.pallas import tpu as pltpu

# ----------------------------- model config (small) -----------------------------
EMBED_DIM = 64
INPUT_RES = 32
VISION_LAYERS = 2
VISION_WIDTH = 64
PATCH = 16
VISION_HEADS = max(VISION_WIDTH // 64, 1)   # = 1 (matches CLIP: vision_width // 64)
CONTEXT_LEN = 8
TEXT_LAYERS = 2
TEXT_WIDTH = 64
TEXT_HEADS = 2
VOCAB = 128
BATCH = 2
DTYPE = jnp.float32
MXU_DTYPE = jnp.bfloat16                    # matmul-operand dtype (f32 accumulate)

_VMEM = pl.BlockSpec(memory_space=pltpu.MemorySpace.VMEM)
_SMEM = pl.BlockSpec(memory_space=pltpu.MemorySpace.SMEM)


# ------------------------------ in-kernel helpers -------------------------------
def _ln_f32(x, g, b, eps=1e-5):
    """LayerNorm in f32 (VPU); g/b are [1, W] and broadcast over rows."""
    m = jnp.mean(x, axis=-1, keepdims=True)
    v = jnp.mean((x - m) ** 2, axis=-1, keepdims=True)
    return (x - m) * jax.lax.rsqrt(v + eps) * g + b


def _mm(a, b):
    """bf16 MXU matmul, f32 accumulation."""
    return jnp.dot(a.astype(MXU_DTYPE), b.astype(MXU_DTYPE),
                   preferred_element_type=jnp.float32)


def _mm_nt(a, b):
    """a @ b.T (contract last dims) without an explicit transpose in the wrapper."""
    return jax.lax.dot_general(a.astype(MXU_DTYPE), b.astype(MXU_DTYPE),
                               (((1,), (1,)), ((), ())),
                               preferred_element_type=jnp.float32)


def _run_layers(x, blk, attn_buf, mask, *, n_layers, n_heads, head_dim,
                seq, batch, width):
    """Pre-LN transformer stack on flattened [B*S, W] activations.

    blk is the tuple of stacked per-layer weight refs ([L, ...] leading axis),
    indexed with a static Python layer index. Big matmuls (QKV / out-proj / MLP)
    run on all B*S rows at once; only the [S,S] score matmuls loop (batch, head).
    """
    ln1g, ln1b, wqkv, bqkv, wo, bo, ln2g, ln2b, wfc, bfc, wcp, bcp = blk
    scale = 1.0 / math.sqrt(head_dim)
    for l in range(n_layers):
        # ---------------- multi-head self-attention ----------------
        h = _ln_f32(x, ln1g[l], ln1b[l])
        qkv = _mm(h, wqkv[l]) + bqkv[l]                 # [B*S, 3W] f32
        for b in range(batch):
            qkv_b = qkv[b * seq:(b + 1) * seq]
            for hd in range(n_heads):
                q = qkv_b[:, hd * head_dim:(hd + 1) * head_dim] * scale
                k = qkv_b[:, width + hd * head_dim:width + (hd + 1) * head_dim]
                v = qkv_b[:, 2 * width + hd * head_dim:2 * width + (hd + 1) * head_dim]
                s = _mm_nt(q, k)                        # [S, S] f32
                if mask is not None:
                    s = s + mask
                s = s - jnp.max(s, axis=-1, keepdims=True)
                p = jnp.exp(s)
                p = p * pl.reciprocal(jnp.sum(p, axis=-1, keepdims=True), approx=True)
                # lane-wise head concat into the [B*S, W] attention slab
                attn_buf[b * seq:(b + 1) * seq,
                         hd * head_dim:(hd + 1) * head_dim] = _mm(p, v)
        # single flattened out-projection over all batch rows
        x = x + _mm(attn_buf[...], wo[l]) + bo[l]
        # -------------------------- fused MLP --------------------------
        h2 = _ln_f32(x, ln2g[l], ln2b[l])
        f = _mm(h2, wfc[l]) + bfc[l]                    # [B*S, 4W] f32
        f = f * jax.nn.sigmoid(1.702 * f)               # QuickGELU (EUP sigmoid)
        x = x + _mm(f, wcp[l]) + bcp[l]
    return x


# ================================ Pallas kernels ================================
def _vision_tower_kernel(patches_ref, convw_ref, cls_ref, pos_ref,
                         lnpre_g, lnpre_b,
                         ln1g, ln1b, wqkv, bqkv, wo, bo,
                         ln2g, ln2b, wfc, bfc, wcp, bcp,
                         lnpost_g, lnpost_b, proj_ref,
                         feat_ref, x_buf, attn_buf,
                         *, n_layers, n_heads, head_dim, n_patch, seq, batch, width):
    """Full vision tower: stem + transformer + ln_post + proj + L2-normalize."""
    # ---- stem: patch-embed matmul + CLS concat + positional embedding ----
    emb = _mm(patches_ref[...], convw_ref[...])         # [B*np, W] f32
    cls = cls_ref[...].astype(jnp.float32)              # [1, W]
    pos = pos_ref[...].astype(jnp.float32)              # [S, W]
    for b in range(batch):
        x_buf[b * seq:b * seq + 1, :] = cls + pos[0:1]
        x_buf[b * seq + 1:(b + 1) * seq, :] = emb[b * n_patch:(b + 1) * n_patch] + pos[1:seq]
    x = _ln_f32(x_buf[...], lnpre_g[...], lnpre_b[...])

    # ---- transformer stack (VMEM-resident activations) ----
    x = _run_layers(x, (ln1g, ln1b, wqkv, bqkv, wo, bo, ln2g, ln2b, wfc, bfc, wcp, bcp),
                    attn_buf, None, n_layers=n_layers, n_heads=n_heads,
                    head_dim=head_dim, seq=seq, batch=batch, width=width)

    # ---- CLS gather -> ln_post -> projection -> L2 normalize ----
    for b in range(batch):                               # reuse x_buf rows 0..B
        x_buf[b:b + 1, :] = x[b * seq:b * seq + 1, :]
    cls_tok = x_buf[0:batch, :]
    feats = _mm(_ln_f32(cls_tok, lnpost_g[...], lnpost_b[...]), proj_ref[...])  # [B, E]
    feats = feats * jax.lax.rsqrt(jnp.sum(feats * feats, axis=-1, keepdims=True) + 1e-12)
    feat_ref[...] = feats.astype(feat_ref.dtype)


def _text_head_kernel(x0_ref, mask_ref, eot_ref,
                      ln1g, ln1b, wqkv, bqkv, wo, bo,
                      ln2g, ln2b, wfc, bfc, wcp, bcp,
                      lnf_g, lnf_b, tproj_ref, img_ref, scale_ref,
                      logits_ref, attn_buf, eot_buf,
                      *, n_layers, n_heads, head_dim, seq, batch, width):
    """Full text tower + contrastive head (EOT gather, ln_final, proj, logits)."""
    x = x0_ref[...].astype(jnp.float32)                  # [B*L, W]
    mask = mask_ref[...].astype(jnp.float32)             # [L, L] causal

    x = _run_layers(x, (ln1g, ln1b, wqkv, bqkv, wo, bo, ln2g, ln2b, wfc, bfc, wcp, bcp),
                    attn_buf, mask, n_layers=n_layers, n_heads=n_heads,
                    head_dim=head_dim, seq=seq, batch=batch, width=width)

    # ---- EOT token gather via SMEM indices + masked row-sum (exact, VPU) ----
    row_ids = jax.lax.broadcasted_iota(jnp.int32, (seq, 1), 0)
    for b in range(batch):
        sel = row_ids == eot_ref[b]
        eot_buf[b:b + 1, :] = jnp.sum(
            jnp.where(sel, x[b * seq:(b + 1) * seq], 0.0), axis=0, keepdims=True)

    # ---- ln_final -> text projection -> L2 normalize ----
    # (LN is per-token, so gather-then-LN == LN-then-gather as in the reference.)
    txt = _mm(_ln_f32(eot_buf[...], lnf_g[...], lnf_b[...]), tproj_ref[...])  # [B, E]
    txt = txt * jax.lax.rsqrt(jnp.sum(txt * txt, axis=-1, keepdims=True) + 1e-12)

    # ---- scaled logit matmul against (already normalized) image features ----
    img = img_ref[...].astype(jnp.float32)               # [B, E]
    logits = jnp.exp(scale_ref[0]) * jax.lax.dot_general(
        img, txt, (((1,), (1,)), ((), ())), preferred_element_type=jnp.float32)
    logits_ref[...] = logits.astype(logits_ref.dtype)    # logits_per_image


# ================================== wrappers =====================================
def encode_image_features(image, vp):
    """image: [B, 3, H, W] (NCHW) -> L2-normalized image features [B, E]."""
    B, C, H, Wd = image.shape
    P = PATCH
    gh, gw = H // P, Wd // P
    n_patch = gh * gw
    S = n_patch + 1
    # stride==kernel conv -> patch matmul (layout glue in XLA, matmul in the kernel)
    patches = image.reshape(B, C, gh, P, gw, P).transpose(0, 2, 4, 1, 3, 5)
    patches = patches.reshape(B * n_patch, C * P * P)

    kernel = functools.partial(
        _vision_tower_kernel, n_layers=VISION_LAYERS, n_heads=VISION_HEADS,
        head_dim=VISION_WIDTH // VISION_HEADS, n_patch=n_patch, seq=S, batch=B,
        width=VISION_WIDTH)
    return pl.pallas_call(
        kernel,
        out_shape=jax.ShapeDtypeStruct((B, EMBED_DIM), DTYPE),
        in_specs=[_VMEM] * 21,
        out_specs=_VMEM,
        scratch_shapes=[pltpu.VMEM((B * S, VISION_WIDTH), jnp.float32),   # x_buf
                        pltpu.VMEM((B * S, VISION_WIDTH), jnp.float32)],  # attn slab
    )(patches, vp["conv1_w"], vp["class_emb"], vp["pos_emb"],
      vp["ln_pre_g"], vp["ln_pre_b"],
      vp["ln1_g"], vp["ln1_b"], vp["wqkv"], vp["bqkv"], vp["wo"], vp["bo"],
      vp["ln2_g"], vp["ln2_b"], vp["wfc"], vp["bfc"], vp["wcp"], vp["bcp"],
      vp["ln_post_g"], vp["ln_post_b"], vp["proj"])


def text_head_logits(tokens, img_feat, tp, logit_scale):
    """tokens: [B, L] int32 ids; img_feat: [B, E] normalized -> logits_per_image."""
    B, L = tokens.shape
    x0 = jnp.take(tp["tok_emb"], tokens, axis=0).astype(DTYPE) + tp["pos_emb"][None]
    x0 = x0.reshape(B * L, TEXT_WIDTH)
    eot = jnp.argmax(tokens, axis=-1).astype(jnp.int32)          # text.argmax(dim=-1)

    kernel = functools.partial(
        _text_head_kernel, n_layers=TEXT_LAYERS, n_heads=TEXT_HEADS,
        head_dim=TEXT_WIDTH // TEXT_HEADS, seq=L, batch=B, width=TEXT_WIDTH)
    return pl.pallas_call(
        kernel,
        out_shape=jax.ShapeDtypeStruct((B, B), DTYPE),
        in_specs=[_VMEM, _VMEM, _SMEM] + [_VMEM] * 12 + [_VMEM] * 4 + [_SMEM],
        out_specs=_VMEM,
        scratch_shapes=[pltpu.VMEM((B * L, TEXT_WIDTH), jnp.float32),    # attn slab
                        pltpu.VMEM((B, TEXT_WIDTH), jnp.float32)],      # EOT rows
    )(x0, tp["mask"], eot,
      tp["ln1_g"], tp["ln1_b"], tp["wqkv"], tp["bqkv"], tp["wo"], tp["bo"],
      tp["ln2_g"], tp["ln2_b"], tp["wfc"], tp["bfc"], tp["wcp"], tp["bcp"],
      tp["ln_final_g"], tp["ln_final_b"], tp["text_projection"], img_feat,
      logit_scale.reshape(1))


def clip_forward(image, tokens, params):
    img_feat = encode_image_features(image, params["visual"])
    logits_per_image = text_head_logits(tokens, img_feat, params["text"],
                                        params["logit_scale"])
    logits_per_text = logits_per_image.T                          # tiny wrapper transpose
    return logits_per_image, logits_per_text


# ================================ parameter init ================================
def build_attention_mask(L):
    # large negative strictly above the diagonal (causal); added in f32 in-kernel
    return jnp.triu(jnp.full((L, L), -1e9, DTYPE), k=1)


def _init_block_stack(key, width, layers):
    """Per-layer weights stacked on a leading [L, ...] axis; MXU weights in bf16."""
    std = 0.02
    keys = jax.random.split(key, layers)

    def one(k):
        k1, k2, k3, k4 = jax.random.split(k, 4)
        return (jax.random.normal(k1, (width, 3 * width), DTYPE) * std,
                jax.random.normal(k2, (width, width), DTYPE) * std,
                jax.random.normal(k3, (width, 4 * width), DTYPE) * std,
                jax.random.normal(k4, (4 * width, width), DTYPE) * std)

    ws = [one(k) for k in keys]
    return {
        "ln1_g": jnp.ones((layers, 1, width), DTYPE),
        "ln1_b": jnp.zeros((layers, 1, width), DTYPE),
        "wqkv": jnp.stack([w[0] for w in ws]).astype(MXU_DTYPE),
        "bqkv": jnp.zeros((layers, 1, 3 * width), DTYPE),
        "wo": jnp.stack([w[1] for w in ws]).astype(MXU_DTYPE),
        "bo": jnp.zeros((layers, 1, width), DTYPE),
        "ln2_g": jnp.ones((layers, 1, width), DTYPE),
        "ln2_b": jnp.zeros((layers, 1, width), DTYPE),
        "wfc": jnp.stack([w[2] for w in ws]).astype(MXU_DTYPE),
        "bfc": jnp.zeros((layers, 1, 4 * width), DTYPE),
        "wcp": jnp.stack([w[3] for w in ws]).astype(MXU_DTYPE),
        "bcp": jnp.zeros((layers, 1, width), DTYPE),
    }


def init_params(key):
    kv, kt, k1, k2, k3, k4, k5, k6, k7 = jax.random.split(key, 9)
    grid = INPUT_RES // PATCH
    S = grid * grid + 1
    conv_w = jax.random.normal(k1, (VISION_WIDTH, 3, PATCH, PATCH), DTYPE) * 0.02
    vis = {
        # conv1 (bias-free) folded into a patch matmul weight [C*P*P, Wv], bf16 once
        "conv1_w": conv_w.reshape(VISION_WIDTH, -1).T.astype(MXU_DTYPE),
        "class_emb": jax.random.normal(k2, (1, VISION_WIDTH), DTYPE) * 0.02,
        "pos_emb": jax.random.normal(k3, (S, VISION_WIDTH), DTYPE) * 0.02,
        "ln_pre_g": jnp.ones((1, VISION_WIDTH), DTYPE),
        "ln_pre_b": jnp.zeros((1, VISION_WIDTH), DTYPE),
        "ln_post_g": jnp.ones((1, VISION_WIDTH), DTYPE),
        "ln_post_b": jnp.zeros((1, VISION_WIDTH), DTYPE),
        "proj": (jax.random.normal(k4, (VISION_WIDTH, EMBED_DIM), DTYPE)
                 * VISION_WIDTH ** -0.5).astype(MXU_DTYPE),
    }
    vis.update(_init_block_stack(kv, VISION_WIDTH, VISION_LAYERS))

    txt = {
        "tok_emb": jax.random.normal(k5, (VOCAB, TEXT_WIDTH), DTYPE) * 0.02,
        "pos_emb": jax.random.normal(k6, (CONTEXT_LEN, TEXT_WIDTH), DTYPE) * 0.01,
        "ln_final_g": jnp.ones((1, TEXT_WIDTH), DTYPE),
        "ln_final_b": jnp.zeros((1, TEXT_WIDTH), DTYPE),
        "text_projection": (jax.random.normal(k7, (TEXT_WIDTH, EMBED_DIM), DTYPE)
                            * TEXT_WIDTH ** -0.5).astype(MXU_DTYPE),
        "mask": build_attention_mask(CONTEXT_LEN),
    }
    txt.update(_init_block_stack(kt, TEXT_WIDTH, TEXT_LAYERS))

    return {"visual": vis, "text": txt,
            "logit_scale": jnp.asarray(np.log(1.0 / 0.07), DTYPE)}


# ===================================== main =====================================
if __name__ == "__main__":
    key = jax.random.PRNGKey(0)
    k_img, k_txt, k_par = jax.random.split(key, 3)

    image = jax.random.normal(k_img, (BATCH, 3, INPUT_RES, INPUT_RES), DTYPE)   # NCHW
    tokens = jax.random.randint(k_txt, (BATCH, CONTEXT_LEN), 1, VOCAB, jnp.int32)

    params = init_params(k_par)

    logits_per_image, logits_per_text = jax.jit(clip_forward)(image, tokens, params)
    jax.block_until_ready((logits_per_image, logits_per_text))

    assert logits_per_image.shape == (BATCH, BATCH)
    assert logits_per_text.shape == (BATCH, BATCH)
    assert bool(jnp.all(jnp.isfinite(logits_per_image)))
    assert bool(jnp.allclose(logits_per_image.T, logits_per_text))
    print("KERNEL_OK")
</pallas_src>

<mosaic_0001>
module attributes {stable_mosaic.version = 11 : i64} {
  func.func @_vision_tower_kernel(%arg0: memref<8x768xf32, #tpu.memory_space<vmem>>, %arg1: memref<768x64xbf16, #tpu.memory_space<vmem>>, %arg2: memref<1x64xf32, #tpu.memory_space<vmem>>, %arg3: memref<5x64xf32, #tpu.memory_space<vmem>>, %arg4: memref<1x64xf32, #tpu.memory_space<vmem>>, %arg5: memref<1x64xf32, #tpu.memory_space<vmem>>, %arg6: memref<2x1x64xf32, #tpu.memory_space<vmem>>, %arg7: memref<2x1x64xf32, #tpu.memory_space<vmem>>, %arg8: memref<2x64x192xbf16, #tpu.memory_space<vmem>>, %arg9: memref<2x1x192xf32, #tpu.memory_space<vmem>>, %arg10: memref<2x64x64xbf16, #tpu.memory_space<vmem>>, %arg11: memref<2x1x64xf32, #tpu.memory_space<vmem>>, %arg12: memref<2x1x64xf32, #tpu.memory_space<vmem>>, %arg13: memref<2x1x64xf32, #tpu.memory_space<vmem>>, %arg14: memref<2x64x256xbf16, #tpu.memory_space<vmem>>, %arg15: memref<2x1x256xf32, #tpu.memory_space<vmem>>, %arg16: memref<2x256x64xbf16, #tpu.memory_space<vmem>>, %arg17: memref<2x1x64xf32, #tpu.memory_space<vmem>>, %arg18: memref<1x64xf32, #tpu.memory_space<vmem>>, %arg19: memref<1x64xf32, #tpu.memory_space<vmem>>, %arg20: memref<64x64xbf16, #tpu.memory_space<vmem>>, %arg21: memref<2x64xf32, #tpu.memory_space<vmem>>, %arg22: memref<10x64xf32, #tpu.memory_space<vmem>>, %arg23: memref<10x64xf32, #tpu.memory_space<vmem>>) attributes {dimension_semantics = [], scalar_prefetch = 0 : i64, scratch_operands = 2 : i64, tpu.core_type = #tpu.core_type<tc>} {
    %c0 = arith.constant 0 : index
    %c0_0 = arith.constant 0 : index
    %0 = vector.load %arg0[%c0, %c0_0] : memref<8x768xf32, #tpu.memory_space<vmem>>, vector<8x768xf32>
    %c0_1 = arith.constant 0 : index
    %c0_2 = arith.constant 0 : index
    %1 = vector.load %arg1[%c0_1, %c0_2] : memref<768x64xbf16, #tpu.memory_space<vmem>>, vector<768x64xbf16>
    %2 = arith.truncf %0 : vector<8x768xf32> to vector<8x768xbf16>
    %cst = arith.constant dense<0.000000e+00> : vector<8x64xf32>
    %3 = tpu.matmul %2, %1, %cst {dimension_numbers = #tpu.dot_dimension_numbers<[1], [0], [0], [1], [0, 0, 1, 1], [], []>} : vector<8x768xbf16>, vector<768x64xbf16>, vector<8x64xf32> -> vector<8x64xf32>
    %c0_3 = arith.constant 0 : index
    %c0_4 = arith.constant 0 : index
    %4 = vector.load %arg2[%c0_3, %c0_4] : memref<1x64xf32, #tpu.memory_space<vmem>>, vector<1x64xf32>
    %c0_5 = arith.constant 0 : index
    %c0_6 = arith.constant 0 : index
    %5 = vector.load %arg3[%c0_5, %c0_6] : memref<5x64xf32, #tpu.memory_space<vmem>>, vector<5x64xf32>
    %6 = vector.extract_strided_slice %5 {offsets = [0, 0], sizes = [1, 64], strides = [1, 1]} : vector<5x64xf32> to vector<1x64xf32>
    %7 = arith.addf %4, %6 : vector<1x64xf32>
    %c0_7 = arith.constant 0 : index
    %c0_8 = arith.constant 0 : index
    %8 = vector.load %arg22[%c0_7, %c0_8] : memref<10x64xf32, #tpu.memory_space<vmem>>, vector<1x64xf32>
    tpu.vector_store %arg22[%c0_7, %c0_8], %7 {strides = array<i32>} : memref<10x64xf32, #tpu.memory_space<vmem>>, vector<1x64xf32>,
    %9 = vector.extract_strided_slice %3 {offsets = [0, 0], sizes = [4, 64], strides = [1, 1]} : vector<8x64xf32> to vector<4x64xf32>
    %10 = vector.extract_strided_slice %5 {offsets = [1, 0], sizes = [4, 64], strides = [1, 1]} : vector<5x64xf32> to vector<4x64xf32>
    %11 = arith.addf %9, %10 : vector<4x64xf32>
    %c1 = arith.constant 1 : index
    %c0_9 = arith.constant 0 : index
    %12 = vector.load %arg22[%c1, %c0_9] : memref<10x64xf32, #tpu.memory_space<vmem>>, vector<4x64xf32>
    tpu.vector_store %arg22[%c1, %c0_9], %11 {strides = array<i32>} : memref<10x64xf32, #tpu.memory_space<vmem>>, vector<4x64xf32>,
    %13 = vector.extract_strided_slice %5 {offsets = [0, 0], sizes = [1, 64], strides = [1, 1]} : vector<5x64xf32> to vector<1x64xf32>
    %14 = arith.addf %4, %13 : vector<1x64xf32>
    %c5 = arith.constant 5 : index
    %c0_10 = arith.constant 0 : index
    %15 = vector.load %arg22[%c5, %c0_10] : memref<10x64xf32, #tpu.memory_space<vmem>>, vector<1x64xf32>
    tpu.vector_store %arg22[%c5, %c0_10], %14 {strides = array<i32>} : memref<10x64xf32, #tpu.memory_space<vmem>>, vector<1x64xf32>,
    %16 = vector.extract_strided_slice %3 {offsets = [4, 0], sizes = [4, 64], strides = [1, 1]} : vector<8x64xf32> to vector<4x64xf32>
    %17 = vector.extract_strided_slice %5 {offsets = [1, 0], sizes = [4, 64], strides = [1, 1]} : vector<5x64xf32> to vector<4x64xf32>
    %18 = arith.addf %16, %17 : vector<4x64xf32>
    %c6 = arith.constant 6 : index
    %c0_11 = arith.constant 0 : index
    %19 = vector.load %arg22[%c6, %c0_11] : memref<10x64xf32, #tpu.memory_space<vmem>>, vector<4x64xf32>
    tpu.vector_store %arg22[%c6, %c0_11], %18 {strides = array<i32>} : memref<10x64xf32, #tpu.memory_space<vmem>>, vector<4x64xf32>,
    %c0_12 = arith.constant 0 : index
    %c0_13 = arith.constant 0 : index
    %20 = vector.load %arg22[%c0_12, %c0_13] : memref<10x64xf32, #tpu.memory_space<vmem>>, vector<10x64xf32>
    %c0_14 = arith.constant 0 : index
    %c0_15 = arith.constant 0 : index
    %21 = vector.load %arg4[%c0_14, %c0_15] : memref<1x64xf32, #tpu.memory_space<vmem>>, vector<1x64xf32>
    %c0_16 = arith.constant 0 : index
    %c0_17 = arith.constant 0 : index
    %22 = vector.load %arg5[%c0_16, %c0_17] : memref<1x64xf32, #tpu.memory_space<vmem>>, vector<1x64xf32>
    %cst_18 = arith.constant dense<0.000000e+00> : vector<10xf32>
    %23 = vector.multi_reduction <add>, %20, %cst_18 [1] : vector<10x64xf32> to vector<10xf32>
    %24 = vector.shape_cast %23 : vector<10xf32> to vector<10x1xf32>
    %cst_19 = arith.constant 6.400000e+01 : f32
    %25 = vector.broadcast %cst_19 : f32 to vector<10x1xf32>
    %26 = arith.divf %24, %25 : vector<10x1xf32>
    %27 = vector.broadcast %26 : vector<10x1xf32> to vector<10x64xf32>
    %28 = arith.subf %20, %27 : vector<10x64xf32>
    %29 = arith.mulf %28, %28 : vector<10x64xf32>
    %cst_20 = arith.constant dense<0.000000e+00> : vector<10xf32>
    %30 = vector.multi_reduction <add>, %29, %cst_20 [1] : vector<10x64xf32> to vector<10xf32>
    %31 = vector.shape_cast %30 : vector<10xf32> to vector<10x1xf32>
    %cst_21 = arith.constant 6.400000e+01 : f32
    %32 = vector.broadcast %cst_21 : f32 to vector<10x1xf32>
    %33 = arith.divf %31, %32 : vector<10x1xf32>
    %34 = vector.broadcast %26 : vector<10x1xf32> to vector<10x64xf32>
    %35 = arith.subf %20, %34 : vector<10x64xf32>
    %cst_22 = arith.constant 9.99999974E-6 : f32
    %36 = vector.broadcast %cst_22 : f32 to vector<10x1xf32>
    %37 = arith.addf %33, %36 : vector<10x1xf32>
    %38 = math.rsqrt %37 : vector<10x1xf32>
    %39 = vector.broadcast %38 : vector<10x1xf32> to vector<10x64xf32>
    %40 = arith.mulf %35, %39 : vector<10x64xf32>
    %41 = vector.broadcast %21 : vector<1x64xf32> to vector<10x64xf32>
    %42 = arith.mulf %40, %41 : vector<10x64xf32>
    %43 = vector.broadcast %22 : vector<1x64xf32> to vector<10x64xf32>
    %44 = arith.addf %42, %43 : vector<10x64xf32>
    %c0_23 = arith.constant 0 : index
    %c0_24 = arith.constant 0 : index
    %c0_25 = arith.constant 0 : index
    %45 = vector.load %arg6[%c0_23, %c0_24, %c0_25] : memref<2x1x64xf32, #tpu.memory_space<vmem>>, vector<1x1x64xf32>
    %46 = vector.shape_cast %45 : vector<1x1x64xf32> to vector<1x64xf32>
    %c0_26 = arith.constant 0 : index
    %c0_27 = arith.constant 0 : index
    %c0_28 = arith.constant 0 : index
    %47 = vector.load %arg7[%c0_26, %c0_27, %c0_28] : memref<2x1x64xf32, #tpu.memory_space<vmem>>, vector<1x1x64xf32>
    %48 = vector.shape_cast %47 : vector<1x1x64xf32> to vector<1x64xf32>
    %cst_29 = arith.constant dense<0.000000e+00> : vector<10xf32>
    %49 = vector.multi_reduction <add>, %44, %cst_29 [1] : vector<10x64xf32> to vector<10xf32>
    %50 = vector.shape_cast %49 : vector<10xf32> to vector<10x1xf32>
    %cst_30 = arith.constant 6.400000e+01 : f32
    %51 = vector.broadcast %cst_30 : f32 to vector<10x1xf32>
    %52 = arith.divf %50, %51 : vector<10x1xf32>
    %53 = vector.broadcast %52 : vector<10x1xf32> to vector<10x64xf32>
    %54 = arith.subf %44, %53 : vector<10x64xf32>
    %55 = arith.mulf %54, %54 : vector<10x64xf32>
    %cst_31 = arith.constant dense<0.000000e+00> : vector<10xf32>
    %56 = vector.multi_reduction <add>, %55, %cst_31 [1] : vector<10x64xf32> to vector<10xf32>
    %57 = vector.shape_cast %56 : vector<10xf32> to vector<10x1xf32>
    %cst_32 = arith.constant 6.400000e+01 : f32
    %58 = vector.broadcast %cst_32 : f32 to vector<10x1xf32>
    %59 = arith.divf %57, %58 : vector<10x1xf32>
    %60 = vector.broadcast %52 : vector<10x1xf32> to vector<10x64xf32>
    %61 = arith.subf %44, %60 : vector<10x64xf32>
    %cst_33 = arith.constant 9.99999974E-6 : f32
    %62 = vector.broadcast %cst_33 : f32 to vector<10x1xf32>
    %63 = arith.addf %59, %62 : vector<10x1xf32>
    %64 = math.rsqrt %63 : vector<10x1xf32>
    %65 = vector.broadcast %64 : vector<10x1xf32> to vector<10x64xf32>
    %66 = arith.mulf %61, %65 : vector<10x64xf32>
    %67 = vector.broadcast %46 : vector<1x64xf32> to vector<10x64xf32>
    %68 = arith.mulf %66, %67 : vector<10x64xf32>
    %69 = vector.broadcast %48 : vector<1x64xf32> to vector<10x64xf32>
    %70 = arith.addf %68, %69 : vector<10x64xf32>
    %c0_34 = arith.constant 0 : index
    %c0_35 = arith.constant 0 : index
    %c0_36 = arith.constant 0 : index
    %71 = vector.load %arg8[%c0_34, %c0_35, %c0_36] : memref<2x64x192xbf16, #tpu.memory_space<vmem>>, vector<1x64x192xbf16>
    %72 = vector.shape_cast %71 : vector<1x64x192xbf16> to vector<64x192xbf16>
    %73 = arith.truncf %70 : vector<10x64xf32> to vector<10x64xbf16>
    %cst_37 = arith.constant dense<0.000000e+00> : vector<10x192xf32>
    %74 = tpu.matmul %73, %72, %cst_37 {dimension_numbers = #tpu.dot_dimension_numbers<[1], [0], [0], [1], [0, 0, 1, 1], [], []>} : vector<10x64xbf16>, vector<64x192xbf16>, vector<10x192xf32> -> vector<10x192xf32>
    %c0_38 = arith.constant 0 : index
    %c0_39 = arith.constant 0 : index
    %c0_40 = arith.constant 0 : index
    %75 = vector.load %arg9[%c0_38, %c0_39, %c0_40] : memref<2x1x192xf32, #tpu.memory_space<vmem>>, vector<1x1x192xf32>
    %76 = vector.shape_cast %75 : vector<1x1x192xf32> to vector<1x192xf32>
    %77 = vector.broadcast %76 : vector<1x192xf32> to vector<10x192xf32>
    %78 = arith.addf %74, %77 : vector<10x192xf32>
    %79 = vector.extract_strided_slice %78 {offsets = [0, 0], sizes = [5, 192], strides = [1, 1]} : vector<10x192xf32> to vector<5x192xf32>
    %80 = vector.extract_strided_slice %79 {offsets = [0, 0], sizes = [5, 64], strides = [1, 1]} : vector<5x192xf32> to vector<5x64xf32>
    %cst_41 = arith.constant 1.250000e-01 : f32
    %81 = vector.broadcast %cst_41 : f32 to vector<5x64xf32>
    %82 = arith.mulf %80, %81 : vector<5x64xf32>
    %83 = vector.extract_strided_slice %79 {offsets = [0, 64], sizes = [5, 64], strides = [1, 1]} : vector<5x192xf32> to vector<5x64xf32>
    %84 = vector.extract_strided_slice %79 {offsets = [0, 128], sizes = [5, 64], strides = [1, 1]} : vector<5x192xf32> to vector<5x64xf32>
    %85 = arith.truncf %82 : vector<5x64xf32> to vector<5x64xbf16>
    %86 = arith.truncf %83 : vector<5x64xf32> to vector<5x64xbf16>
    %cst_42 = arith.constant dense<0.000000e+00> : vector<5x5xf32>
    %87 = tpu.matmul %85, %86, %cst_42 {dimension_numbers = #tpu.dot_dimension_numbers<[1], [1], [0], [0], [0, 0, 1, 0], [], []>} : vector<5x64xbf16>, vector<5x64xbf16>, vector<5x5xf32> -> vector<5x5xf32>
    %cst_43 = arith.constant dense<0xFF800000> : vector<5xf32>
    %88 = vector.multi_reduction <maximumf>, %87, %cst_43 [1] : vector<5x5xf32> to vector<5xf32>
    %89 = vector.shape_cast %88 : vector<5xf32> to vector<5x1xf32>
    %90 = vector.broadcast %89 : vector<5x1xf32> to vector<5x5xf32>
    %91 = arith.subf %87, %90 : vector<5x5xf32>
    %92 = math.exp %91 : vector<5x5xf32>
    %cst_44 = arith.constant dense<0.000000e+00> : vector<5xf32>
    %93 = vector.multi_reduction <add>, %92, %cst_44 [1] : vector<5x5xf32> to vector<5xf32>
    %94 = vector.shape_cast %93 : vector<5xf32> to vector<5x1xf32>
    %95 = tpu.reciprocal %94 {approx = true} : vector<5x1xf32> -> vector<5x1xf32>
    %96 = vector.broadcast %95 : vector<5x1xf32> to vector<5x5xf32>
    %97 = arith.mulf %92, %96 : vector<5x5xf32>
    %98 = arith.truncf %97 : vector<5x5xf32> to vector<5x5xbf16>
    %99 = arith.truncf %84 : vector<5x64xf32> to vector<5x64xbf16>
    %cst_45 = arith.constant dense<0.000000e+00> : vector<5x64xf32>
    %100 = tpu.matmul %98, %99, %cst_45 {dimension_numbers = #tpu.dot_dimension_numbers<[1], [0], [0], [1], [0, 0, 1, 1], [], []>} : vector<5x5xbf16>, vector<5x64xbf16>, vector<5x64xf32> -> vector<5x64xf32>
    %c0_46 = arith.constant 0 : index
    %c0_47 = arith.constant 0 : index
    %101 = vector.load %arg23[%c0_46, %c0_47] : memref<10x64xf32, #tpu.memory_space<vmem>>, vector<5x64xf32>
    tpu.vector_store %arg23[%c0_46, %c0_47], %100 {strides = array<i32>} : memref<10x64xf32, #tpu.memory_space<vmem>>, vector<5x64xf32>,
    %102 = vector.extract_strided_slice %78 {offsets = [5, 0], sizes = [5, 192], strides = [1, 1]} : vector<10x192xf32> to vector<5x192xf32>
    %103 = vector.extract_strided_slice %102 {offsets = [0, 0], sizes = [5, 64], strides = [1, 1]} : vector<5x192xf32> to vector<5x64xf32>
    %cst_48 = arith.constant 1.250000e-01 : f32
    %104 = vector.broadcast %cst_48 : f32 to vector<5x64xf32>
    %105 = arith.mulf %103, %104 : vector<5x64xf32>
    %106 = vector.extract_strided_slice %102 {offsets = [0, 64], sizes = [5, 64], strides = [1, 1]} : vector<5x192xf32> to vector<5x64xf32>
    %107 = vector.extract_strided_slice %102 {offsets = [0, 128], sizes = [5, 64], strides = [1, 1]} : vector<5x192xf32> to vector<5x64xf32>
    %108 = arith.truncf %105 : vector<5x64xf32> to vector<5x64xbf16>
    %109 = arith.truncf %106 : vector<5x64xf32> to vector<5x64xbf16>
    %cst_49 = arith.constant dense<0.000000e+00> : vector<5x5xf32>
    %110 = tpu.matmul %108, %109, %cst_49 {dimension_numbers = #tpu.dot_dimension_numbers<[1], [1], [0], [0], [0, 0, 1, 0], [], []>} : vector<5x64xbf16>, vector<5x64xbf16>, vector<5x5xf32> -> vector<5x5xf32>
    %cst_50 = arith.constant dense<0xFF800000> : vector<5xf32>
    %111 = vector.multi_reduction <maximumf>, %110, %cst_50 [1] : vector<5x5xf32> to vector<5xf32>
    %112 = vector.shape_cast %111 : vector<5xf32> to vector<5x1xf32>
    %113 = vector.broadcast %112 : vector<5x1xf32> to vector<5x5xf32>
    %114 = arith.subf %110, %113 : vector<5x5xf32>
    %115 = math.exp %114 : vector<5x5xf32>
    %cst_51 = arith.constant dense<0.000000e+00> : vector<5xf32>
    %116 = vector.multi_reduction <add>, %115, %cst_51 [1] : vector<5x5xf32> to vector<5xf32>
    %117 = vector.shape_cast %116 : vector<5xf32> to vector<5x1xf32>
    %118 = tpu.reciprocal %117 {approx = true} : vector<5x1xf32> -> vector<5x1xf32>
    %119 = vector.broadcast %118 : vector<5x1xf32> to vector<5x5xf32>
    %120 = arith.mulf %115, %119 : vector<5x5xf32>
    %121 = arith.truncf %120 : vector<5x5xf32> to vector<5x5xbf16>
    %122 = arith.truncf %107 : vector<5x64xf32> to vector<5x64xbf16>
    %cst_52 = arith.constant dense<0.000000e+00> : vector<5x64xf32>
    %123 = tpu.matmul %121, %122, %cst_52 {dimension_numbers = #tpu.dot_dimension_numbers<[1], [0], [0], [1], [0, 0, 1, 1], [], []>} : vector<5x5xbf16>, vector<5x64xbf16>, vector<5x64xf32> -> vector<5x64xf32>
    %c5_53 = arith.constant 5 : index
    %c0_54 = arith.constant 0 : index
    %124 = vector.load %arg23[%c5_53, %c0_54] : memref<10x64xf32, #tpu.memory_space<vmem>>, vector<5x64xf32>
    tpu.vector_store %arg23[%c5_53, %c0_54], %123 {strides = array<i32>} : memref<10x64xf32, #tpu.memory_space<vmem>>, vector<5x64xf32>,
    %c0_55 = arith.constant 0 : index
    %c0_56 = arith.constant 0 : index
    %125 = vector.load %arg23[%c0_55, %c0_56] : memref<10x64xf32, #tpu.memory_space<vmem>>, vector<10x64xf32>
    %c0_57 = arith.constant 0 : index
    %c0_58 = arith.constant 0 : index
    %c0_59 = arith.constant 0 : index
    %126 = vector.load %arg10[%c0_57, %c0_58, %c0_59] : memref<2x64x64xbf16, #tpu.memory_space<vmem>>, vector<1x64x64xbf16>
    %127 = vector.shape_cast %126 : vector<1x64x64xbf16> to vector<64x64xbf16>
    %128 = arith.truncf %125 : vector<10x64xf32> to vector<10x64xbf16>
    %cst_60 = arith.constant dense<0.000000e+00> : vector<10x64xf32>
    %129 = tpu.matmul %128, %127, %cst_60 {dimension_numbers = #tpu.dot_dimension_numbers<[1], [0], [0], [1], [0, 0, 1, 1], [], []>} : vector<10x64xbf16>, vector<64x64xbf16>, vector<10x64xf32> -> vector<10x64xf32>
    %130 = arith.addf %44, %129 : vector<10x64xf32>
    %c0_61 = arith.constant 0 : index
    %c0_62 = arith.constant 0 : index
    %c0_63 = arith.constant 0 : index
    %131 = vector.load %arg11[%c0_61, %c0_62, %c0_63] : memref<2x1x64xf32, #tpu.memory_space<vmem>>, vector<1x1x64xf32>
    %132 = vector.shape_cast %131 : vector<1x1x64xf32> to vector<1x64xf32>
    %133 = vector.broadcast %132 : vector<1x64xf32> to vector<10x64xf32>
    %134 = arith.addf %130, %133 : vector<10x64xf32>
    %c0_64 = arith.constant 0 : index
    %c0_65 = arith.constant 0 : index
    %c0_66 = arith.constant 0 : index
    %135 = vector.load %arg12[%c0_64, %c0_65, %c0_66] : memref<2x1x64xf32, #tpu.memory_space<vmem>>, vector<1x1x64xf32>
    %136 = vector.shape_cast %135 : vector<1x1x64xf32> to vector<1x64xf32>
    %c0_67 = arith.constant 0 : index
    %c0_68 = arith.constant 0 : index
    %c0_69 = arith.constant 0 : index
    %137 = vector.load %arg13[%c0_67, %c0_68, %c0_69] : memref<2x1x64xf32, #tpu.memory_space<vmem>>, vector<1x1x64xf32>
    %138 = vector.shape_cast %137 : vector<1x1x64xf32> to vector<1x64xf32>
    %cst_70 = arith.constant dense<0.000000e+00> : vector<10xf32>
    %139 = vector.multi_reduction <add>, %134, %cst_70 [1] : vector<10x64xf32> to vector<10xf32>
    %140 = vector.shape_cast %139 : vector<10xf32> to vector<10x1xf32>
    %cst_71 = arith.constant 6.400000e+01 : f32
    %141 = vector.broadcast %cst_71 : f32 to vector<10x1xf32>
    %142 = arith.divf %140, %141 : vector<10x1xf32>
    %143 = vector.broadcast %142 : vector<10x1xf32> to vector<10x64xf32>
    %144 = arith.subf %134, %143 : vector<10x64xf32>
    %145 = arith.mulf %144, %144 : vector<10x64xf32>
    %cst_72 = arith.constant dense<0.000000e+00> : vector<10xf32>
    %146 = vector.multi_reduction <add>, %145, %cst_72 [1] : vector<10x64xf32> to vector<10xf32>
    %147 = vector.shape_cast %146 : vector<10xf32> to vector<10x1xf32>
    %cst_73 = arith.constant 6.400000e+01 : f32
    %148 = vector.broadcast %cst_73 : f32 to vector<10x1xf32>
    %149 = arith.divf %147, %148 : vector<10x1xf32>
    %150 = vector.broadcast %142 : vector<10x1xf32> to vector<10x64xf32>
    %151 = arith.subf %134, %150 : vector<10x64xf32>
    %cst_74 = arith.constant 9.99999974E-6 : f32
    %152 = vector.broadcast %cst_74 : f32 to vector<10x1xf32>
    %153 = arith.addf %149, %152 : vector<10x1xf32>
    %154 = math.rsqrt %153 : vector<10x1xf32>
    %155 = vector.broadcast %154 : vector<10x1xf32> to vector<10x64xf32>
    %156 = arith.mulf %151, %155 : vector<10x64xf32>
    %157 = vector.broadcast %136 : vector<1x64xf32> to vector<10x64xf32>
    %158 = arith.mulf %156, %157 : vector<10x64xf32>
    %159 = vector.broadcast %138 : vector<1x64xf32> to vector<10x64xf32>
    %160 = arith.addf %158, %159 : vector<10x64xf32>
    %c0_75 = arith.constant 0 : index
    %c0_76 = arith.constant 0 : index
    %c0_77 = arith.constant 0 : index
    %161 = vector.load %arg14[%c0_75, %c0_76, %c0_77] : memref<2x64x256xbf16, #tpu.memory_space<vmem>>, vector<1x64x256xbf16>
    %162 = vector.shape_cast %161 : vector<1x64x256xbf16> to vector<64x256xbf16>
    %163 = arith.truncf %160 : vector<10x64xf32> to vector<10x64xbf16>
    %cst_78 = arith.constant dense<0.000000e+00> : vector<10x256xf32>
    %164 = tpu.matmul %163, %162, %cst_78 {dimension_numbers = #tpu.dot_dimension_numbers<[1], [0], [0], [1], [0, 0, 1, 1], [], []>} : vector<10x64xbf16>, vector<64x256xbf16>, vector<10x256xf32> -> vector<10x256xf32>
    %c0_79 = arith.constant 0 : index
    %c0_80 = arith.constant 0 : index
    %c0_81 = arith.constant 0 : index
    %165 = vector.load %arg15[%c0_79, %c0_80, %c0_81] : memref<2x1x256xf32, #tpu.memory_space<vmem>>, vector<1x1x256xf32>
    %166 = vector.shape_cast %165 : vector<1x1x256xf32> to vector<1x256xf32>
    %167 = vector.broadcast %166 : vector<1x256xf32> to vector<10x256xf32>
    %168 = arith.addf %164, %167 : vector<10x256xf32>
    %cst_82 = arith.constant 1.702000e+00 : f32
    %169 = vector.broadcast %cst_82 : f32 to vector<10x256xf32>
    %170 = arith.mulf %169, %168 : vector<10x256xf32>
    %171 = arith.negf %170 : vector<10x256xf32>
    %172 = math.exp %171 : vector<10x256xf32>
    %cst_83 = arith.constant 1.000000e+00 : f32
    %173 = vector.broadcast %cst_83 : f32 to vector<10x256xf32>
    %174 = arith.addf %173, %172 : vector<10x256xf32>
    %175 = arith.divf %173, %174 : vector<10x256xf32>
    %176 = arith.mulf %168, %175 : vector<10x256xf32>
    %c0_84 = arith.constant 0 : index
    %c0_85 = arith.constant 0 : index
    %c0_86 = arith.constant 0 : index
    %177 = vector.load %arg16[%c0_84, %c0_85, %c0_86] : memref<2x256x64xbf16, #tpu.memory_space<vmem>>, vector<1x256x64xbf16>
    %178 = vector.shape_cast %177 : vector<1x256x64xbf16> to vector<256x64xbf16>
    %179 = arith.truncf %176 : vector<10x256xf32> to vector<10x256xbf16>
    %cst_87 = arith.constant dense<0.000000e+00> : vector<10x64xf32>
    %180 = tpu.matmul %179, %178, %cst_87 {dimension_numbers = #tpu.dot_dimension_numbers<[1], [0], [0], [1], [0, 0, 1, 1], [], []>} : vector<10x256xbf16>, vector<256x64xbf16>, vector<10x64xf32> -> vector<10x64xf32>
    %181 = arith.addf %134, %180 : vector<10x64xf32>
    %c0_88 = arith.constant 0 : index
    %c0_89 = arith.constant 0 : index
    %c0_90 = arith.constant 0 : index
    %182 = vector.load %arg17[%c0_88, %c0_89, %c0_90] : memref<2x1x64xf32, #tpu.memory_space<vmem>>, vector<1x1x64xf32>
    %183 = vector.shape_cast %182 : vector<1x1x64xf32> to vector<1x64xf32>
    %184 = vector.broadcast %183 : vector<1x64xf32> to vector<10x64xf32>
    %185 = arith.addf %181, %184 : vector<10x64xf32>
    %c1_91 = arith.constant 1 : index
    %c0_92 = arith.constant 0 : index
    %c0_93 = arith.constant 0 : index
    %186 = vector.load %arg6[%c1_91, %c0_92, %c0_93] : memref<2x1x64xf32, #tpu.memory_space<vmem>>, vector<1x1x64xf32>
    %187 = vector.shape_cast %186 : vector<1x1x64xf32> to vector<1x64xf32>
    %c1_94 = arith.constant 1 : index
    %c0_95 = arith.constant 0 : index
    %c0_96 = arith.constant 0 : index
    %188 = vector.load %arg7[%c1_94, %c0_95, %c0_96] : memref<2x1x64xf32, #tpu.memory_space<vmem>>, vector<1x1x64xf32>
    %189 = vector.shape_cast %188 : vector<1x1x64xf32> to vector<1x64xf32>
    %cst_97 = arith.constant dense<0.000000e+00> : vector<10xf32>
    %190 = vector.multi_reduction <add>, %185, %cst_97 [1] : vector<10x64xf32> to vector<10xf32>
    %191 = vector.shape_cast %190 : vector<10xf32> to vector<10x1xf32>
    %cst_98 = arith.constant 6.400000e+01 : f32
    %192 = vector.broadcast %cst_98 : f32 to vector<10x1xf32>
    %193 = arith.divf %191, %192 : vector<10x1xf32>
    %194 = vector.broadcast %193 : vector<10x1xf32> to vector<10x64xf32>
    %195 = arith.subf %185, %194 : vector<10x64xf32>
    %196 = arith.mulf %195, %195 : vector<10x64xf32>
    %cst_99 = arith.constant dense<0.000000e+00> : vector<10xf32>
    %197 = vector.multi_reduction <add>, %196, %cst_99 [1] : vector<10x64xf32> to vector<10xf32>
    %198 = vector.shape_cast %197 : vector<10xf32> to vector<10x1xf32>
    %cst_100 = arith.constant 6.400000e+01 : f32
    %199 = vector.broadcast %cst_100 : f32 to vector<10x1xf32>
    %200 = arith.divf %198, %199 : vector<10x1xf32>
    %201 = vector.broadcast %193 : vector<10x1xf32> to vector<10x64xf32>
    %202 = arith.subf %185, %201 : vector<10x64xf32>
    %cst_101 = arith.constant 9.99999974E-6 : f32
    %203 = vector.broadcast %cst_101 : f32 to vector<10x1xf32>
    %204 = arith.addf %200, %203 : vector<10x1xf32>
    %205 = math.rsqrt %204 : vector<10x1xf32>
    %206 = vector.broadcast %205 : vector<10x1xf32> to vector<10x64xf32>
    %207 = arith.mulf %202, %206 : vector<10x64xf32>
    %208 = vector.broadcast %187 : vector<1x64xf32> to vector<10x64xf32>
    %209 = arith.mulf %207, %208 : vector<10x64xf32>
    %210 = vector.broadcast %189 : vector<1x64xf32> to vector<10x64xf32>
    %211 = arith.addf %209, %210 : vector<10x64xf32>
    %c1_102 = arith.constant 1 : index
    %c0_103 = arith.constant 0 : index
    %c0_104 = arith.constant 0 : index
    %212 = vector.load %arg8[%c1_102, %c0_103, %c0_104] : memref<2x64x192xbf16, #tpu.memory_space<vmem>>, vector<1x64x192xbf16>
    %213 = vector.shape_cast %212 : vector<1x64x192xbf16> to vector<64x192xbf16>
    %214 = arith.truncf %211 : vector<10x64xf32> to vector<10x64xbf16>
    %cst_105 = arith.constant dense<0.000000e+00> : vector<10x192xf32>
    %215 = tpu.matmul %214, %213, %cst_105 {dimension_numbers = #tpu.dot_dimension_numbers<[1], [0], [0], [1], [0, 0, 1, 1], [], []>} : vector<10x64xbf16>, vector<64x192xbf16>, vector<10x192xf32> -> vector<10x192xf32>
    %c1_106 = arith.constant 1 : index
    %c0_107 = arith.constant 0 : index
    %c0_108 = arith.constant 0 : index
    %216 = vector.load %arg9[%c1_106, %c0_107, %c0_108] : memref<2x1x192xf32, #tpu.memory_space<vmem>>, vector<1x1x192xf32>
    %217 = vector.shape_cast %216 : vector<1x1x192xf32> to vector<1x192xf32>
    %218 = vector.broadcast %217 : vector<1x192xf32> to vector<10x192xf32>
    %219 = arith.addf %215, %218 : vector<10x192xf32>
    %220 = vector.extract_strided_slice %219 {offsets = [0, 0], sizes = [5, 192], strides = [1, 1]} : vector<10x192xf32> to vector<5x192xf32>
    %221 = vector.extract_strided_slice %220 {offsets = [0, 0], sizes = [5, 64], strides = [1, 1]} : vector<5x192xf32> to vector<5x64xf32>
    %cst_109 = arith.constant 1.250000e-01 : f32
    %222 = vector.broadcast %cst_109 : f32 to vector<5x64xf32>
    %223 = arith.mulf %221, %222 : vector<5x64xf32>
    %224 = vector.extract_strided_slice %220 {offsets = [0, 64], sizes = [5, 64], strides = [1, 1]} : vector<5x192xf32> to vector<5x64xf32>
    %225 = vector.extract_strided_slice %220 {offsets = [0, 128], sizes = [5, 64], strides = [1, 1]} : vector<5x192xf32> to vector<5x64xf32>
    %226 = arith.truncf %223 : vector<5x64xf32> to vector<5x64xbf16>
    %227 = arith.truncf %224 : vector<5x64xf32> to vector<5x64xbf16>
    %cst_110 = arith.constant dense<0.000000e+00> : vector<5x5xf32>
    %228 = tpu.matmul %226, %227, %cst_110 {dimension_numbers = #tpu.dot_dimension_numbers<[1], [1], [0], [0], [0, 0, 1, 0], [], []>} : vector<5x64xbf16>, vector<5x64xbf16>, vector<5x5xf32> -> vector<5x5xf32>
    %cst_111 = arith.constant dense<0xFF800000> : vector<5xf32>
    %229 = vector.multi_reduction <maximumf>, %228, %cst_111 [1] : vector<5x5xf32> to vector<5xf32>
    %230 = vector.shape_cast %229 : vector<5xf32> to vector<5x1xf32>
    %231 = vector.broadcast %230 : vector<5x1xf32> to vector<5x5xf32>
    %232 = arith.subf %228, %231 : vector<5x5xf32>
    %233 = math.exp %232 : vector<5x5xf32>
    %cst_112 = arith.constant dense<0.000000e+00> : vector<5xf32>
    %234 = vector.multi_reduction <add>, %233, %cst_112 [1] : vector<5x5xf32> to vector<5xf32>
    %235 = vector.shape_cast %234 : vector<5xf32> to vector<5x1xf32>
    %236 = tpu.reciprocal %235 {approx = true} : vector<5x1xf32> -> vector<5x1xf32>
    %237 = vector.broadcast %236 : vector<5x1xf32> to vector<5x5xf32>
    %238 = arith.mulf %233, %237 : vector<5x5xf32>
    %239 = arith.truncf %238 : vector<5x5xf32> to vector<5x5xbf16>
    %240 = arith.truncf %225 : vector<5x64xf32> to vector<5x64xbf16>
    %cst_113 = arith.constant dense<0.000000e+00> : vector<5x64xf32>
    %241 = tpu.matmul %239, %240, %cst_113 {dimension_numbers = #tpu.dot_dimension_numbers<[1], [0], [0], [1], [0, 0, 1, 1], [], []>} : vector<5x5xbf16>, vector<5x64xbf16>, vector<5x64xf32> -> vector<5x64xf32>
    %c0_114 = arith.constant 0 : index
    %c0_115 = arith.constant 0 : index
    %242 = vector.load %arg23[%c0_114, %c0_115] : memref<10x64xf32, #tpu.memory_space<vmem>>, vector<5x64xf32>
    tpu.vector_store %arg23[%c0_114, %c0_115], %241 {strides = array<i32>} : memref<10x64xf32, #tpu.memory_space<vmem>>, vector<5x64xf32>,
    %243 = vector.extract_strided_slice %219 {offsets = [5, 0], sizes = [5, 192], strides = [1, 1]} : vector<10x192xf32> to vector<5x192xf32>
    %244 = vector.extract_strided_slice %243 {offsets = [0, 0], sizes = [5, 64], strides = [1, 1]} : vector<5x192xf32> to vector<5x64xf32>
    %cst_116 = arith.constant 1.250000e-01 : f32
    %245 = vector.broadcast %cst_116 : f32 to vector<5x64xf32>
    %246 = arith.mulf %244, %245 : vector<5x64xf32>
    %247 = vector.extract_strided_slice %243 {offsets = [0, 64], sizes = [5, 64], strides = [1, 1]} : vector<5x192xf32> to vector<5x64xf32>
    %248 = vector.extract_strided_slice %243 {offsets = [0, 128], sizes = [5, 64], strides = [1, 1]} : vector<5x192xf32> to vector<5x64xf32>
    %249 = arith.truncf %246 : vector<5x64xf32> to vector<5x64xbf16>
    %250 = arith.truncf %247 : vector<5x64xf32> to vector<5x64xbf16>
    %cst_117 = arith.constant dense<0.000000e+00> : vector<5x5xf32>
    %251 = tpu.matmul %249, %250, %cst_117 {dimension_numbers = #tpu.dot_dimension_numbers<[1], [1], [0], [0], [0, 0, 1, 0], [], []>} : vector<5x64xbf16>, vector<5x64xbf16>, vector<5x5xf32> -> vector<5x5xf32>
    %cst_118 = arith.constant dense<0xFF800000> : vector<5xf32>
    %252 = vector.multi_reduction <maximumf>, %251, %cst_118 [1] : vector<5x5xf32> to vector<5xf32>
    %253 = vector.shape_cast %252 : vector<5xf32> to vector<5x1xf32>
    %254 = vector.broadcast %253 : vector<5x1xf32> to vector<5x5xf32>
    %255 = arith.subf %251, %254 : vector<5x5xf32>
    %256 = math.exp %255 : vector<5x5xf32>
    %cst_119 = arith.constant dense<0.000000e+00> : vector<5xf32>
    %257 = vector.multi_reduction <add>, %256, %cst_119 [1] : vector<5x5xf32> to vector<5xf32>
    %258 = vector.shape_cast %257 : vector<5xf32> to vector<5x1xf32>
    %259 = tpu.reciprocal %258 {approx = true} : vector<5x1xf32> -> vector<5x1xf32>
    %260 = vector.broadcast %259 : vector<5x1xf32> to vector<5x5xf32>
    %261 = arith.mulf %256, %260 : vector<5x5xf32>
    %262 = arith.truncf %261 : vector<5x5xf32> to vector<5x5xbf16>
    %263 = arith.truncf %248 : vector<5x64xf32> to vector<5x64xbf16>
    %cst_120 = arith.constant dense<0.000000e+00> : vector<5x64xf32>
    %264 = tpu.matmul %262, %263, %cst_120 {dimension_numbers = #tpu.dot_dimension_numbers<[1], [0], [0], [1], [0, 0, 1, 1], [], []>} : vector<5x5xbf16>, vector<5x64xbf16>, vector<5x64xf32> -> vector<5x64xf32>
    %c5_121 = arith.constant 5 : index
    %c0_122 = arith.constant 0 : index
    %265 = vector.load %arg23[%c5_121, %c0_122] : memref<10x64xf32, #tpu.memory_space<vmem>>, vector<5x64xf32>
    tpu.vector_store %arg23[%c5_121, %c0_122], %264 {strides = array<i32>} : memref<10x64xf32, #tpu.memory_space<vmem>>, vector<5x64xf32>,
    %c0_123 = arith.constant 0 : index
    %c0_124 = arith.constant 0 : index
    %266 = vector.load %arg23[%c0_123, %c0_124] : memref<10x64xf32, #tpu.memory_space<vmem>>, vector<10x64xf32>
    %c1_125 = arith.constant 1 : index
    %c0_126 = arith.constant 0 : index
    %c0_127 = arith.constant 0 : index
    %267 = vector.load %arg10[%c1_125, %c0_126, %c0_127] : memref<2x64x64xbf16, #tpu.memory_space<vmem>>, vector<1x64x64xbf16>
    %268 = vector.shape_cast %267 : vector<1x64x64xbf16> to vector<64x64xbf16>
    %269 = arith.truncf %266 : vector<10x64xf32> to vector<10x64xbf16>
    %cst_128 = arith.constant dense<0.000000e+00> : vector<10x64xf32>
    %270 = tpu.matmul %269, %268, %cst_128 {dimension_numbers = #tpu.dot_dimension_numbers<[1], [0], [0], [1], [0, 0, 1, 1], [], []>} : vector<10x64xbf16>, vector<64x64xbf16>, vector<10x64xf32> -> vector<10x64xf32>
    %271 = arith.addf %185, %270 : vector<10x64xf32>
    %c1_129 = arith.constant 1 : index
    %c0_130 = arith.constant 0 : index
    %c0_131 = arith.constant 0 : index
    %272 = vector.load %arg11[%c1_129, %c0_130, %c0_131] : memref<2x1x64xf32, #tpu.memory_space<vmem>>, vector<1x1x64xf32>
    %273 = vector.shape_cast %272 : vector<1x1x64xf32> to vector<1x64xf32>
    %274 = vector.broadcast %273 : vector<1x64xf32> to vector<10x64xf32>
    %275 = arith.addf %271, %274 : vector<10x64xf32>
    %c1_132 = arith.constant 1 : index
    %c0_133 = arith.constant 0 : index
    %c0_134 = arith.constant 0 : index
    %276 = vector.load %arg12[%c1_132, %c0_133, %c0_134] : memref<2x1x64xf32, #tpu.memory_space<vmem>>, vector<1x1x64xf32>
    %277 = vector.shape_cast %276 : vector<1x1x64xf32> to vector<1x64xf32>
    %c1_135 = arith.constant 1 : index
    %c0_136 = arith.constant 0 : index
    %c0_137 = arith.constant 0 : index
    %278 = vector.load %arg13[%c1_135, %c0_136, %c0_137] : memref<2x1x64xf32, #tpu.memory_space<vmem>>, vector<1x1x64xf32>
    %279 = vector.shape_cast %278 : vector<1x1x64xf32> to vector<1x64xf32>
    %cst_138 = arith.constant dense<0.000000e+00> : vector<10xf32>
    %280 = vector.multi_reduction <add>, %275, %cst_138 [1] : vector<10x64xf32> to vector<10xf32>
    %281 = vector.shape_cast %280 : vector<10xf32> to vector<10x1xf32>
    %cst_139 = arith.constant 6.400000e+01 : f32
    %282 = vector.broadcast %cst_139 : f32 to vector<10x1xf32>
    %283 = arith.divf %281, %282 : vector<10x1xf32>
    %284 = vector.broadcast %283 : vector<10x1xf32> to vector<10x64xf32>
    %285 = arith.subf %275, %284 : vector<10x64xf32>
    %286 = arith.mulf %285, %285 : vector<10x64xf32>
    %cst_140 = arith.constant dense<0.000000e+00> : vector<10xf32>
    %287 = vector.multi_reduction <add>, %286, %cst_140 [1] : vector<10x64xf32> to vector<10xf32>
    %288 = vector.shape_cast %287 : vector<10xf32> to vector<10x1xf32>
    %cst_141 = arith.constant 6.400000e+01 : f32
    %289 = vector.broadcast %cst_141 : f32 to vector<10x1xf32>
    %290 = arith.divf %288, %289 : vector<10x1xf32>
    %291 = vector.broadcast %283 : vector<10x1xf32> to vector<10x64xf32>
    %292 = arith.subf %275, %291 : vector<10x64xf32>
    %cst_142 = arith.constant 9.99999974E-6 : f32
    %293 = vector.broadcast %cst_142 : f32 to vector<10x1xf32>
    %294 = arith.addf %290, %293 : vector<10x1xf32>
    %295 = math.rsqrt %294 : vector<10x1xf32>
    %296 = vector.broadcast %295 : vector<10x1xf32> to vector<10x64xf32>
    %297 = arith.mulf %292, %296 : vector<10x64xf32>
    %298 = vector.broadcast %277 : vector<1x64xf32> to vector<10x64xf32>
    %299 = arith.mulf %297, %298 : vector<10x64xf32>
    %300 = vector.broadcast %279 : vector<1x64xf32> to vector<10x64xf32>
    %301 = arith.addf %299, %300 : vector<10x64xf32>
    %c1_143 = arith.constant 1 : index
    %c0_144 = arith.constant 0 : index
    %c0_145 = arith.constant 0 : index
    %302 = vector.load %arg14[%c1_143, %c0_144, %c0_145] : memref<2x64x256xbf16, #tpu.memory_space<vmem>>, vector<1x64x256xbf16>
    %303 = vector.shape_cast %302 : vector<1x64x256xbf16> to vector<64x256xbf16>
    %304 = arith.truncf %301 : vector<10x64xf32> to vector<10x64xbf16>
    %cst_146 = arith.constant dense<0.000000e+00> : vector<10x256xf32>
    %305 = tpu.matmul %304, %303, %cst_146 {dimension_numbers = #tpu.dot_dimension_numbers<[1], [0], [0], [1], [0, 0, 1, 1], [], []>} : vector<10x64xbf16>, vector<64x256xbf16>, vector<10x256xf32> -> vector<10x256xf32>
    %c1_147 = arith.constant 1 : index
    %c0_148 = arith.constant 0 : index
    %c0_149 = arith.constant 0 : index
    %306 = vector.load %arg15[%c1_147, %c0_148, %c0_149] : memref<2x1x256xf32, #tpu.memory_space<vmem>>, vector<1x1x256xf32>
    %307 = vector.shape_cast %306 : vector<1x1x256xf32> to vector<1x256xf32>
    %308 = vector.broadcast %307 : vector<1x256xf32> to vector<10x256xf32>
    %309 = arith.addf %305, %308 : vector<10x256xf32>
    %cst_150 = arith.constant 1.702000e+00 : f32
    %310 = vector.broadcast %cst_150 : f32 to vector<10x256xf32>
    %311 = arith.mulf %310, %309 : vector<10x256xf32>
    %312 = arith.negf %311 : vector<10x256xf32>
    %313 = math.exp %312 : vector<10x256xf32>
    %cst_151 = arith.constant 1.000000e+00 : f32
    %314 = vector.broadcast %cst_151 : f32 to vector<10x256xf32>
    %315 = arith.addf %314, %313 : vector<10x256xf32>
    %316 = arith.divf %314, %315 : vector<10x256xf32>
    %317 = arith.mulf %309, %316 : vector<10x256xf32>
    %c1_152 = arith.constant 1 : index
    %c0_153 = arith.constant 0 : index
    %c0_154 = arith.constant 0 : index
    %318 = vector.load %arg16[%c1_152, %c0_153, %c0_154] : memref<2x256x64xbf16, #tpu.memory_space<vmem>>, vector<1x256x64xbf16>
    %319 = vector.shape_cast %318 : vector<1x256x64xbf16> to vector<256x64xbf16>
    %320 = arith.truncf %317 : vector<10x256xf32> to vector<10x256xbf16>
    %cst_155 = arith.constant dense<0.000000e+00> : vector<10x64xf32>
    %321 = tpu.matmul %320, %319, %cst_155 {dimension_numbers = #tpu.dot_dimension_numbers<[1], [0], [0], [1], [0, 0, 1, 1], [], []>} : vector<10x256xbf16>, vector<256x64xbf16>, vector<10x64xf32> -> vector<10x64xf32>
    %322 = arith.addf %275, %321 : vector<10x64xf32>
    %c1_156 = arith.constant 1 : index
    %c0_157 = arith.constant 0 : index
    %c0_158 = arith.constant 0 : index
    %323 = vector.load %arg17[%c1_156, %c0_157, %c0_158] : memref<2x1x64xf32, #tpu.memory_space<vmem>>, vector<1x1x64xf32>
    %324 = vector.shape_cast %323 : vector<1x1x64xf32> to vector<1x64xf32>
    %325 = vector.broadcast %324 : vector<1x64xf32> to vector<10x64xf32>
    %326 = arith.addf %322, %325 : vector<10x64xf32>
    %327 = vector.extract_strided_slice %326 {offsets = [0, 0], sizes = [1, 64], strides = [1, 1]} : vector<10x64xf32> to vector<1x64xf32>
    %c0_159 = arith.constant 0 : index
    %c0_160 = arith.constant 0 : index
    %328 = vector.load %arg22[%c0_159, %c0_160] : memref<10x64xf32, #tpu.memory_space<vmem>>, vector<1x64xf32>
    tpu.vector_store %arg22[%c0_159, %c0_160], %327 {strides = array<i32>} : memref<10x64xf32, #tpu.memory_space<vmem>>, vector<1x64xf32>,
    %329 = vector.extract_strided_slice %326 {offsets = [5, 0], sizes = [1, 64], strides = [1, 1]} : vector<10x64xf32> to vector<1x64xf32>
    %c1_161 = arith.constant 1 : index
    %c0_162 = arith.constant 0 : index
    %330 = vector.load %arg22[%c1_161, %c0_162] : memref<10x64xf32, #tpu.memory_space<vmem>>, vector<1x64xf32>
    tpu.vector_store %arg22[%c1_161, %c0_162], %329 {strides = array<i32>} : memref<10x64xf32, #tpu.memory_space<vmem>>, vector<1x64xf32>,
    %c0_163 = arith.constant 0 : index
    %c0_164 = arith.constant 0 : index
    %331 = vector.load %arg22[%c0_163, %c0_164] : memref<10x64xf32, #tpu.memory_space<vmem>>, vector<2x64xf32>
    %c0_165 = arith.constant 0 : index
    %c0_166 = arith.constant 0 : index
    %332 = vector.load %arg18[%c0_165, %c0_166] : memref<1x64xf32, #tpu.memory_space<vmem>>, vector<1x64xf32>
    %c0_167 = arith.constant 0 : index
    %c0_168 = arith.constant 0 : index
    %333 = vector.load %arg19[%c0_167, %c0_168] : memref<1x64xf32, #tpu.memory_space<vmem>>, vector<1x64xf32>
    %cst_169 = arith.constant dense<0.000000e+00> : vector<2xf32>
    %334 = vector.multi_reduction <add>, %331, %cst_169 [1] : vector<2x64xf32> to vector<2xf32>
    %335 = vector.shape_cast %334 : vector<2xf32> to vector<2x1xf32>
    %cst_170 = arith.constant 6.400000e+01 : f32
    %336 = vector.broadcast %cst_170 : f32 to vector<2x1xf32>
    %337 = arith.divf %335, %336 : vector<2x1xf32>
    %338 = vector.broadcast %337 : vector<2x1xf32> to vector<2x64xf32>
    %339 = arith.subf %331, %338 : vector<2x64xf32>
    %340 = arith.mulf %339, %339 : vector<2x64xf32>
    %cst_171 = arith.constant dense<0.000000e+00> : vector<2xf32>
    %341 = vector.multi_reduction <add>, %340, %cst_171 [1] : vector<2x64xf32> to vector<2xf32>
    %342 = vector.shape_cast %341 : vector<2xf32> to vector<2x1xf32>
    %cst_172 = arith.constant 6.400000e+01 : f32
    %343 = vector.broadcast %cst_172 : f32 to vector<2x1xf32>
    %344 = arith.divf %342, %343 : vector<2x1xf32>
    %345 = vector.broadcast %337 : vector<2x1xf32> to vector<2x64xf32>
    %346 = arith.subf %331, %345 : vector<2x64xf32>
    %cst_173 = arith.constant 9.99999974E-6 : f32
    %347 = vector.broadcast %cst_173 : f32 to vector<2x1xf32>
    %348 = arith.addf %344, %347 : vector<2x1xf32>
    %349 = math.rsqrt %348 : vector<2x1xf32>
    %350 = vector.broadcast %349 : vector<2x1xf32> to vector<2x64xf32>
    %351 = arith.mulf %346, %350 : vector<2x64xf32>
    %352 = vector.broadcast %332 : vector<1x64xf32> to vector<2x64xf32>
    %353 = arith.mulf %351, %352 : vector<2x64xf32>
    %354 = vector.broadcast %333 : vector<1x64xf32> to vector<2x64xf32>
    %355 = arith.addf %353, %354 : vector<2x64xf32>
    %c0_174 = arith.constant 0 : index
    %c0_175 = arith.constant 0 : index
    %356 = vector.load %arg20[%c0_174, %c0_175] : memref<64x64xbf16, #tpu.memory_space<vmem>>, vector<64x64xbf16>
    %357 = arith.truncf %355 : vector<2x64xf32> to vector<2x64xbf16>
    %cst_176 = arith.constant dense<0.000000e+00> : vector<2x64xf32>
    %358 = tpu.matmul %357, %356, %cst_176 {dimension_numbers = #tpu.dot_dimension_numbers<[1], [0], [0], [1], [0, 0, 1, 1], [], []>} : vector<2x64xbf16>, vector<64x64xbf16>, vector<2x64xf32> -> vector<2x64xf32>
    %359 = arith.mulf %358, %358 : vector<2x64xf32>
    %cst_177 = arith.constant dense<0.000000e+00> : vector<2xf32>
    %360 = vector.multi_reduction <add>, %359, %cst_177 [1] : vector<2x64xf32> to vector<2xf32>
    %361 = vector.shape_cast %360 : vector<2xf32> to vector<2x1xf32>
    %cst_178 = arith.constant 9.99999996E-13 : f32
    %362 = vector.broadcast %cst_178 : f32 to vector<2x1xf32>
    %363 = arith.addf %361, %362 : vector<2x1xf32>
    %364 = math.rsqrt %363 : vector<2x1xf32>
    %365 = vector.broadcast %364 : vector<2x1xf32> to vector<2x64xf32>
    %366 = arith.mulf %358, %365 : vector<2x64xf32>
    %c0_179 = arith.constant 0 : index
    %c0_180 = arith.constant 0 : index
    %367 = vector.load %arg21[%c0_179, %c0_180] : memref<2x64xf32, #tpu.memory_space<vmem>>, vector<2x64xf32>
    tpu.vector_store %arg21[%c0_179, %c0_180], %366 {strides = array<i32>} : memref<2x64xf32, #tpu.memory_space<vmem>>, vector<2x64xf32>,
    return
  }
}

module attributes {stable_mosaic.version = 11 : i64} {
  func.func @_text_head_kernel(%arg0: memref<16x64xf32, #tpu.memory_space<vmem>>, %arg1: memref<8x8xf32, #tpu.memory_space<vmem>>, %arg2: memref<2xi32, #tpu.memory_space<smem>>, %arg3: memref<2x1x64xf32, #tpu.memory_space<vmem>>, %arg4: memref<2x1x64xf32, #tpu.memory_space<vmem>>, %arg5: memref<2x64x192xbf16, #tpu.memory_space<vmem>>, %arg6: memref<2x1x192xf32, #tpu.memory_space<vmem>>, %arg7: memref<2x64x64xbf16, #tpu.memory_space<vmem>>, %arg8: memref<2x1x64xf32, #tpu.memory_space<vmem>>, %arg9: memref<2x1x64xf32, #tpu.memory_space<vmem>>, %arg10: memref<2x1x64xf32, #tpu.memory_space<vmem>>, %arg11: memref<2x64x256xbf16, #tpu.memory_space<vmem>>, %arg12: memref<2x1x256xf32, #tpu.memory_space<vmem>>, %arg13: memref<2x256x64xbf16, #tpu.memory_space<vmem>>, %arg14: memref<2x1x64xf32, #tpu.memory_space<vmem>>, %arg15: memref<1x64xf32, #tpu.memory_space<vmem>>, %arg16: memref<1x64xf32, #tpu.memory_space<vmem>>, %arg17: memref<64x64xbf16, #tpu.memory_space<vmem>>, %arg18: memref<2x64xf32, #tpu.memory_space<vmem>>, %arg19: memref<1xf32, #tpu.memory_space<smem>>, %arg20: memref<2x2xf32, #tpu.memory_space<vmem>>, %arg21: memref<16x64xf32, #tpu.memory_space<vmem>>, %arg22: memref<2x64xf32, #tpu.memory_space<vmem>>) attributes {dimension_semantics = [], scalar_prefetch = 0 : i64, scratch_operands = 2 : i64, tpu.core_type = #tpu.core_type<tc>} {
    %c0 = arith.constant 0 : index
    %c0_0 = arith.constant 0 : index
    %0 = vector.load %arg0[%c0, %c0_0] : memref<16x64xf32, #tpu.memory_space<vmem>>, vector<16x64xf32>
    %c0_1 = arith.constant 0 : index
    %c0_2 = arith.constant 0 : index
    %1 = vector.load %arg1[%c0_1, %c0_2] : memref<8x8xf32, #tpu.memory_space<vmem>>, vector<8x8xf32>
    %c0_3 = arith.constant 0 : index
    %c0_4 = arith.constant 0 : index
    %c0_5 = arith.constant 0 : index
    %2 = vector.load %arg3[%c0_3, %c0_4, %c0_5] : memref<2x1x64xf32, #tpu.memory_space<vmem>>, vector<1x1x64xf32>
    %3 = vector.shape_cast %2 : vector<1x1x64xf32> to vector<1x64xf32>
    %c0_6 = arith.constant 0 : index
    %c0_7 = arith.constant 0 : index
    %c0_8 = arith.constant 0 : index
    %4 = vector.load %arg4[%c0_6, %c0_7, %c0_8] : memref<2x1x64xf32, #tpu.memory_space<vmem>>, vector<1x1x64xf32>
    %5 = vector.shape_cast %4 : vector<1x1x64xf32> to vector<1x64xf32>
    %cst = arith.constant dense<0.000000e+00> : vector<16xf32>
    %6 = vector.multi_reduction <add>, %0, %cst [1] : vector<16x64xf32> to vector<16xf32>
    %7 = vector.shape_cast %6 : vector<16xf32> to vector<16x1xf32>
    %cst_9 = arith.constant 6.400000e+01 : f32
    %8 = vector.broadcast %cst_9 : f32 to vector<16x1xf32>
    %9 = arith.divf %7, %8 : vector<16x1xf32>
    %10 = vector.broadcast %9 : vector<16x1xf32> to vector<16x64xf32>
    %11 = arith.subf %0, %10 : vector<16x64xf32>
    %12 = arith.mulf %11, %11 : vector<16x64xf32>
    %cst_10 = arith.constant dense<0.000000e+00> : vector<16xf32>
    %13 = vector.multi_reduction <add>, %12, %cst_10 [1] : vector<16x64xf32> to vector<16xf32>
    %14 = vector.shape_cast %13 : vector<16xf32> to vector<16x1xf32>
    %cst_11 = arith.constant 6.400000e+01 : f32
    %15 = vector.broadcast %cst_11 : f32 to vector<16x1xf32>
    %16 = arith.divf %14, %15 : vector<16x1xf32>
    %17 = vector.broadcast %9 : vector<16x1xf32> to vector<16x64xf32>
    %18 = arith.subf %0, %17 : vector<16x64xf32>
    %cst_12 = arith.constant 9.99999974E-6 : f32
    %19 = vector.broadcast %cst_12 : f32 to vector<16x1xf32>
    %20 = arith.addf %16, %19 : vector<16x1xf32>
    %21 = math.rsqrt %20 : vector<16x1xf32>
    %22 = vector.broadcast %21 : vector<16x1xf32> to vector<16x64xf32>
    %23 = arith.mulf %18, %22 : vector<16x64xf32>
    %24 = vector.broadcast %3 : vector<1x64xf32> to vector<16x64xf32>
    %25 = arith.mulf %23, %24 : vector<16x64xf32>
    %26 = vector.broadcast %5 : vector<1x64xf32> to vector<16x64xf32>
    %27 = arith.addf %25, %26 : vector<16x64xf32>
    %c0_13 = arith.constant 0 : index
    %c0_14 = arith.constant 0 : index
    %c0_15 = arith.constant 0 : index
    %28 = vector.load %arg5[%c0_13, %c0_14, %c0_15] : memref<2x64x192xbf16, #tpu.memory_space<vmem>>, vector<1x64x192xbf16>
    %29 = vector.shape_cast %28 : vector<1x64x192xbf16> to vector<64x192xbf16>
    %30 = arith.truncf %27 : vector<16x64xf32> to vector<16x64xbf16>
    %cst_16 = arith.constant dense<0.000000e+00> : vector<16x192xf32>
    %31 = tpu.matmul %30, %29, %cst_16 {dimension_numbers = #tpu.dot_dimension_numbers<[1], [0], [0], [1], [0, 0, 1, 1], [], []>} : vector<16x64xbf16>, vector<64x192xbf16>, vector<16x192xf32> -> vector<16x192xf32>
    %c0_17 = arith.constant 0 : index
    %c0_18 = arith.constant 0 : index
    %c0_19 = arith.constant 0 : index
    %32 = vector.load %arg6[%c0_17, %c0_18, %c0_19] : memref<2x1x192xf32, #tpu.memory_space<vmem>>, vector<1x1x192xf32>
    %33 = vector.shape_cast %32 : vector<1x1x192xf32> to vector<1x192xf32>
    %34 = vector.broadcast %33 : vector<1x192xf32> to vector<16x192xf32>
    %35 = arith.addf %31, %34 : vector<16x192xf32>
    %36 = vector.extract_strided_slice %35 {offsets = [0, 0], sizes = [8, 192], strides = [1, 1]} : vector<16x192xf32> to vector<8x192xf32>
    %37 = vector.extract_strided_slice %36 {offsets = [0, 0], sizes = [8, 32], strides = [1, 1]} : vector<8x192xf32> to vector<8x32xf32>
    %cst_20 = arith.constant 0.176776692 : f32
    %38 = vector.broadcast %cst_20 : f32 to vector<8x32xf32>
    %39 = arith.mulf %37, %38 : vector<8x32xf32>
    %40 = vector.extract_strided_slice %36 {offsets = [0, 64], sizes = [8, 32], strides = [1, 1]} : vector<8x192xf32> to vector<8x32xf32>
    %41 = vector.extract_strided_slice %36 {offsets = [0, 128], sizes = [8, 32], strides = [1, 1]} : vector<8x192xf32> to vector<8x32xf32>
    %42 = arith.truncf %39 : vector<8x32xf32> to vector<8x32xbf16>
    %43 = arith.truncf %40 : vector<8x32xf32> to vector<8x32xbf16>
    %cst_21 = arith.constant dense<0.000000e+00> : vector<8x8xf32>
    %44 = tpu.matmul %42, %43, %cst_21 {dimension_numbers = #tpu.dot_dimension_numbers<[1], [1], [0], [0], [0, 0, 1, 0], [], []>} : vector<8x32xbf16>, vector<8x32xbf16>, vector<8x8xf32> -> vector<8x8xf32>
    %45 = arith.addf %44, %1 : vector<8x8xf32>
    %cst_22 = arith.constant dense<0xFF800000> : vector<8xf32>
    %46 = vector.multi_reduction <maximumf>, %45, %cst_22 [1] : vector<8x8xf32> to vector<8xf32>
    %47 = vector.shape_cast %46 : vector<8xf32> to vector<8x1xf32>
    %48 = vector.broadcast %47 : vector<8x1xf32> to vector<8x8xf32>
    %49 = arith.subf %45, %48 : vector<8x8xf32>
    %50 = math.exp %49 : vector<8x8xf32>
    %cst_23 = arith.constant dense<0.000000e+00> : vector<8xf32>
    %51 = vector.multi_reduction <add>, %50, %cst_23 [1] : vector<8x8xf32> to vector<8xf32>
    %52 = vector.shape_cast %51 : vector<8xf32> to vector<8x1xf32>
    %53 = tpu.reciprocal %52 {approx = true} : vector<8x1xf32> -> vector<8x1xf32>
    %54 = vector.broadcast %53 : vector<8x1xf32> to vector<8x8xf32>
    %55 = arith.mulf %50, %54 : vector<8x8xf32>
    %56 = arith.truncf %55 : vector<8x8xf32> to vector<8x8xbf16>
    %57 = arith.truncf %41 : vector<8x32xf32> to vector<8x32xbf16>
    %cst_24 = arith.constant dense<0.000000e+00> : vector<8x32xf32>
    %58 = tpu.matmul %56, %57, %cst_24 {dimension_numbers = #tpu.dot_dimension_numbers<[1], [0], [0], [1], [0, 0, 1, 1], [], []>} : vector<8x8xbf16>, vector<8x32xbf16>, vector<8x32xf32> -> vector<8x32xf32>
    %c0_25 = arith.constant 0 : index
    %c0_26 = arith.constant 0 : index
    %59 = vector.load %arg21[%c0_25, %c0_26] : memref<16x64xf32, #tpu.memory_space<vmem>>, vector<8x32xf32>
    tpu.vector_store %arg21[%c0_25, %c0_26], %58 {strides = array<i32>} : memref<16x64xf32, #tpu.memory_space<vmem>>, vector<8x32xf32>,
    %60 = vector.extract_strided_slice %36 {offsets = [0, 32], sizes = [8, 32], strides = [1, 1]} : vector<8x192xf32> to vector<8x32xf32>
    %cst_27 = arith.constant 0.176776692 : f32
    %61 = vector.broadcast %cst_27 : f32 to vector<8x32xf32>
    %62 = arith.mulf %60, %61 : vector<8x32xf32>
    %63 = vector.extract_strided_slice %36 {offsets = [0, 96], sizes = [8, 32], strides = [1, 1]} : vector<8x192xf32> to vector<8x32xf32>
    %64 = vector.extract_strided_slice %36 {offsets = [0, 160], sizes = [8, 32], strides = [1, 1]} : vector<8x192xf32> to vector<8x32xf32>
    %65 = arith.truncf %62 : vector<8x32xf32> to vector<8x32xbf16>
    %66 = arith.truncf %63 : vector<8x32xf32> to vector<8x32xbf16>
    %cst_28 = arith.constant dense<0.000000e+00> : vector<8x8xf32>
    %67 = tpu.matmul %65, %66, %cst_28 {dimension_numbers = #tpu.dot_dimension_numbers<[1], [1], [0], [0], [0, 0, 1, 0], [], []>} : vector<8x32xbf16>, vector<8x32xbf16>, vector<8x8xf32> -> vector<8x8xf32>
    %68 = arith.addf %67, %1 : vector<8x8xf32>
    %cst_29 = arith.constant dense<0xFF800000> : vector<8xf32>
    %69 = vector.multi_reduction <maximumf>, %68, %cst_29 [1] : vector<8x8xf32> to vector<8xf32>
    %70 = vector.shape_cast %69 : vector<8xf32> to vector<8x1xf32>
    %71 = vector.broadcast %70 : vector<8x1xf32> to vector<8x8xf32>
    %72 = arith.subf %68, %71 : vector<8x8xf32>
    %73 = math.exp %72 : vector<8x8xf32>
    %cst_30 = arith.constant dense<0.000000e+00> : vector<8xf32>
    %74 = vector.multi_reduction <add>, %73, %cst_30 [1] : vector<8x8xf32> to vector<8xf32>
    %75 = vector.shape_cast %74 : vector<8xf32> to vector<8x1xf32>
    %76 = tpu.reciprocal %75 {approx = true} : vector<8x1xf32> -> vector<8x1xf32>
    %77 = vector.broadcast %76 : vector<8x1xf32> to vector<8x8xf32>
    %78 = arith.mulf %73, %77 : vector<8x8xf32>
    %79 = arith.truncf %78 : vector<8x8xf32> to vector<8x8xbf16>
    %80 = arith.truncf %64 : vector<8x32xf32> to vector<8x32xbf16>
    %cst_31 = arith.constant dense<0.000000e+00> : vector<8x32xf32>
    %81 = tpu.matmul %79, %80, %cst_31 {dimension_numbers = #tpu.dot_dimension_numbers<[1], [0], [0], [1], [0, 0, 1, 1], [], []>} : vector<8x8xbf16>, vector<8x32xbf16>, vector<8x32xf32> -> vector<8x32xf32>
    %c0_32 = arith.constant 0 : index
    %c32 = arith.constant 32 : index
    %82 = vector.load %arg21[%c0_32, %c32] : memref<16x64xf32, #tpu.memory_space<vmem>>, vector<8x32xf32>
    tpu.vector_store %arg21[%c0_32, %c32], %81 {strides = array<i32>} : memref<16x64xf32, #tpu.memory_space<vmem>>, vector<8x32xf32>,
    %83 = vector.extract_strided_slice %35 {offsets = [8, 0], sizes = [8, 192], strides = [1, 1]} : vector<16x192xf32> to vector<8x192xf32>
    %84 = vector.extract_strided_slice %83 {offsets = [0, 0], sizes = [8, 32], strides = [1, 1]} : vector<8x192xf32> to vector<8x32xf32>
    %cst_33 = arith.constant 0.176776692 : f32
    %85 = vector.broadcast %cst_33 : f32 to vector<8x32xf32>
    %86 = arith.mulf %84, %85 : vector<8x32xf32>
    %87 = vector.extract_strided_slice %83 {offsets = [0, 64], sizes = [8, 32], strides = [1, 1]} : vector<8x192xf32> to vector<8x32xf32>
    %88 = vector.extract_strided_slice %83 {offsets = [0, 128], sizes = [8, 32], strides = [1, 1]} : vector<8x192xf32> to vector<8x32xf32>
    %89 = arith.truncf %86 : vector<8x32xf32> to vector<8x32xbf16>
    %90 = arith.truncf %87 : vector<8x32xf32> to vector<8x32xbf16>
    %cst_34 = arith.constant dense<0.000000e+00> : vector<8x8xf32>
    %91 = tpu.matmul %89, %90, %cst_34 {dimension_numbers = #tpu.dot_dimension_numbers<[1], [1], [0], [0], [0, 0, 1, 0], [], []>} : vector<8x32xbf16>, vector<8x32xbf16>, vector<8x8xf32> -> vector<8x8xf32>
    %92 = arith.addf %91, %1 : vector<8x8xf32>
    %cst_35 = arith.constant dense<0xFF800000> : vector<8xf32>
    %93 = vector.multi_reduction <maximumf>, %92, %cst_35 [1] : vector<8x8xf32> to vector<8xf32>
    %94 = vector.shape_cast %93 : vector<8xf32> to vector<8x1xf32>
    %95 = vector.broadcast %94 : vector<8x1xf32> to vector<8x8xf32>
    %96 = arith.subf %92, %95 : vector<8x8xf32>
    %97 = math.exp %96 : vector<8x8xf32>
    %cst_36 = arith.constant dense<0.000000e+00> : vector<8xf32>
    %98 = vector.multi_reduction <add>, %97, %cst_36 [1] : vector<8x8xf32> to vector<8xf32>
    %99 = vector.shape_cast %98 : vector<8xf32> to vector<8x1xf32>
    %100 = tpu.reciprocal %99 {approx = true} : vector<8x1xf32> -> vector<8x1xf32>
    %101 = vector.broadcast %100 : vector<8x1xf32> to vector<8x8xf32>
    %102 = arith.mulf %97, %101 : vector<8x8xf32>
    %103 = arith.truncf %102 : vector<8x8xf32> to vector<8x8xbf16>
    %104 = arith.truncf %88 : vector<8x32xf32> to vector<8x32xbf16>
    %cst_37 = arith.constant dense<0.000000e+00> : vector<8x32xf32>
    %105 = tpu.matmul %103, %104, %cst_37 {dimension_numbers = #tpu.dot_dimension_numbers<[1], [0], [0], [1], [0, 0, 1, 1], [], []>} : vector<8x8xbf16>, vector<8x32xbf16>, vector<8x32xf32> -> vector<8x32xf32>
    %c8 = arith.constant 8 : index
    %c0_38 = arith.constant 0 : index
    %106 = vector.load %arg21[%c8, %c0_38] : memref<16x64xf32, #tpu.memory_space<vmem>>, vector<8x32xf32>
    tpu.vector_store %arg21[%c8, %c0_38], %105 {strides = array<i32>} : memref<16x64xf32, #tpu.memory_space<vmem>>, vector<8x32xf32>,
    %107 = vector.extract_strided_slice %83 {offsets = [0, 32], sizes = [8, 32], strides = [1, 1]} : vector<8x192xf32> to vector<8x32xf32>
    %cst_39 = arith.constant 0.176776692 : f32
    %108 = vector.broadcast %cst_39 : f32 to vector<8x32xf32>
    %109 = arith.mulf %107, %108 : vector<8x32xf32>
    %110 = vector.extract_strided_slice %83 {offsets = [0, 96], sizes = [8, 32], strides = [1, 1]} : vector<8x192xf32> to vector<8x32xf32>
    %111 = vector.extract_strided_slice %83 {offsets = [0, 160], sizes = [8, 32], strides = [1, 1]} : vector<8x192xf32> to vector<8x32xf32>
    %112 = arith.truncf %109 : vector<8x32xf32> to vector<8x32xbf16>
    %113 = arith.truncf %110 : vector<8x32xf32> to vector<8x32xbf16>
    %cst_40 = arith.constant dense<0.000000e+00> : vector<8x8xf32>
    %114 = tpu.matmul %112, %113, %cst_40 {dimension_numbers = #tpu.dot_dimension_numbers<[1], [1], [0], [0], [0, 0, 1, 0], [], []>} : vector<8x32xbf16>, vector<8x32xbf16>, vector<8x8xf32> -> vector<8x8xf32>
    %115 = arith.addf %114, %1 : vector<8x8xf32>
    %cst_41 = arith.constant dense<0xFF800000> : vector<8xf32>
    %116 = vector.multi_reduction <maximumf>, %115, %cst_41 [1] : vector<8x8xf32> to vector<8xf32>
    %117 = vector.shape_cast %116 : vector<8xf32> to vector<8x1xf32>
    %118 = vector.broadcast %117 : vector<8x1xf32> to vector<8x8xf32>
    %119 = arith.subf %115, %118 : vector<8x8xf32>
    %120 = math.exp %119 : vector<8x8xf32>
    %cst_42 = arith.constant dense<0.000000e+00> : vector<8xf32>
    %121 = vector.multi_reduction <add>, %120, %cst_42 [1] : vector<8x8xf32> to vector<8xf32>
    %122 = vector.shape_cast %121 : vector<8xf32> to vector<8x1xf32>
    %123 = tpu.reciprocal %122 {approx = true} : vector<8x1xf32> -> vector<8x1xf32>
    %124 = vector.broadcast %123 : vector<8x1xf32> to vector<8x8xf32>
    %125 = arith.mulf %120, %124 : vector<8x8xf32>
    %126 = arith.truncf %125 : vector<8x8xf32> to vector<8x8xbf16>
    %127 = arith.truncf %111 : vector<8x32xf32> to vector<8x32xbf16>
    %cst_43 = arith.constant dense<0.000000e+00> : vector<8x32xf32>
    %128 = tpu.matmul %126, %127, %cst_43 {dimension_numbers = #tpu.dot_dimension_numbers<[1], [0], [0], [1], [0, 0, 1, 1], [], []>} : vector<8x8xbf16>, vector<8x32xbf16>, vector<8x32xf32> -> vector<8x32xf32>
    %c8_44 = arith.constant 8 : index
    %c32_45 = arith.constant 32 : index
    %129 = vector.load %arg21[%c8_44, %c32_45] : memref<16x64xf32, #tpu.memory_space<vmem>>, vector<8x32xf32>
    tpu.vector_store %arg21[%c8_44, %c32_45], %128 {strides = array<i32>} : memref<16x64xf32, #tpu.memory_space<vmem>>, vector<8x32xf32>,
    %c0_46 = arith.constant 0 : index
    %c0_47 = arith.constant 0 : index
    %130 = vector.load %arg21[%c0_46, %c0_47] : memref<16x64xf32, #tpu.memory_space<vmem>>, vector<16x64xf32>
    %c0_48 = arith.constant 0 : index
    %c0_49 = arith.constant 0 : index
    %c0_50 = arith.constant 0 : index
    %131 = vector.load %arg7[%c0_48, %c0_49, %c0_50] : memref<2x64x64xbf16, #tpu.memory_space<vmem>>, vector<1x64x64xbf16>
    %132 = vector.shape_cast %131 : vector<1x64x64xbf16> to vector<64x64xbf16>
    %133 = arith.truncf %130 : vector<16x64xf32> to vector<16x64xbf16>
    %cst_51 = arith.constant dense<0.000000e+00> : vector<16x64xf32>
    %134 = tpu.matmul %133, %132, %cst_51 {dimension_numbers = #tpu.dot_dimension_numbers<[1], [0], [0], [1], [0, 0, 1, 1], [], []>} : vector<16x64xbf16>, vector<64x64xbf16>, vector<16x64xf32> -> vector<16x64xf32>
    %135 = arith.addf %0, %134 : vector<16x64xf32>
    %c0_52 = arith.constant 0 : index
    %c0_53 = arith.constant 0 : index
    %c0_54 = arith.constant 0 : index
    %136 = vector.load %arg8[%c0_52, %c0_53, %c0_54] : memref<2x1x64xf32, #tpu.memory_space<vmem>>, vector<1x1x64xf32>
    %137 = vector.shape_cast %136 : vector<1x1x64xf32> to vector<1x64xf32>
    %138 = vector.broadcast %137 : vector<1x64xf32> to vector<16x64xf32>
    %139 = arith.addf %135, %138 : vector<16x64xf32>
    %c0_55 = arith.constant 0 : index
    %c0_56 = arith.constant 0 : index
    %c0_57 = arith.constant 0 : index
    %140 = vector.load %arg9[%c0_55, %c0_56, %c0_57] : memref<2x1x64xf32, #tpu.memory_space<vmem>>, vector<1x1x64xf32>
    %141 = vector.shape_cast %140 : vector<1x1x64xf32> to vector<1x64xf32>
    %c0_58 = arith.constant 0 : index
    %c0_59 = arith.constant 0 : index
    %c0_60 = arith.constant 0 : index
    %142 = vector.load %arg10[%c0_58, %c0_59, %c0_60] : memref<2x1x64xf32, #tpu.memory_space<vmem>>, vector<1x1x64xf32>
    %143 = vector.shape_cast %142 : vector<1x1x64xf32> to vector<1x64xf32>
    %cst_61 = arith.constant dense<0.000000e+00> : vector<16xf32>
    %144 = vector.multi_reduction <add>, %139, %cst_61 [1] : vector<16x64xf32> to vector<16xf32>
    %145 = vector.shape_cast %144 : vector<16xf32> to vector<16x1xf32>
    %cst_62 = arith.constant 6.400000e+01 : f32
    %146 = vector.broadcast %cst_62 : f32 to vector<16x1xf32>
    %147 = arith.divf %145, %146 : vector<16x1xf32>
    %148 = vector.broadcast %147 : vector<16x1xf32> to vector<16x64xf32>
    %149 = arith.subf %139, %148 : vector<16x64xf32>
    %150 = arith.mulf %149, %149 : vector<16x64xf32>
    %cst_63 = arith.constant dense<0.000000e+00> : vector<16xf32>
    %151 = vector.multi_reduction <add>, %150, %cst_63 [1] : vector<16x64xf32> to vector<16xf32>
    %152 = vector.shape_cast %151 : vector<16xf32> to vector<16x1xf32>
    %cst_64 = arith.constant 6.400000e+01 : f32
    %153 = vector.broadcast %cst_64 : f32 to vector<16x1xf32>
    %154 = arith.divf %152, %153 : vector<16x1xf32>
    %155 = vector.broadcast %147 : vector<16x1xf32> to vector<16x64xf32>
    %156 = arith.subf %139, %155 : vector<16x64xf32>
    %cst_65 = arith.constant 9.99999974E-6 : f32
    %157 = vector.broadcast %cst_65 : f32 to vector<16x1xf32>
    %158 = arith.addf %154, %157 : vector<16x1xf32>
    %159 = math.rsqrt %158 : vector<16x1xf32>
    %160 = vector.broadcast %159 : vector<16x1xf32> to vector<16x64xf32>
    %161 = arith.mulf %156, %160 : vector<16x64xf32>
    %162 = vector.broadcast %141 : vector<1x64xf32> to vector<16x64xf32>
    %163 = arith.mulf %161, %162 : vector<16x64xf32>
    %164 = vector.broadcast %143 : vector<1x64xf32> to vector<16x64xf32>
    %165 = arith.addf %163, %164 : vector<16x64xf32>
    %c0_66 = arith.constant 0 : index
    %c0_67 = arith.constant 0 : index
    %c0_68 = arith.constant 0 : index
    %166 = vector.load %arg11[%c0_66, %c0_67, %c0_68] : memref<2x64x256xbf16, #tpu.memory_space<vmem>>, vector<1x64x256xbf16>
    %167 = vector.shape_cast %166 : vector<1x64x256xbf16> to vector<64x256xbf16>
    %168 = arith.truncf %165 : vector<16x64xf32> to vector<16x64xbf16>
    %cst_69 = arith.constant dense<0.000000e+00> : vector<16x256xf32>
    %169 = tpu.matmul %168, %167, %cst_69 {dimension_numbers = #tpu.dot_dimension_numbers<[1], [0], [0], [1], [0, 0, 1, 1], [], []>} : vector<16x64xbf16>, vector<64x256xbf16>, vector<16x256xf32> -> vector<16x256xf32>
    %c0_70 = arith.constant 0 : index
    %c0_71 = arith.constant 0 : index
    %c0_72 = arith.constant 0 : index
    %170 = vector.load %arg12[%c0_70, %c0_71, %c0_72] : memref<2x1x256xf32, #tpu.memory_space<vmem>>, vector<1x1x256xf32>
    %171 = vector.shape_cast %170 : vector<1x1x256xf32> to vector<1x256xf32>
    %172 = vector.broadcast %171 : vector<1x256xf32> to vector<16x256xf32>
    %173 = arith.addf %169, %172 : vector<16x256xf32>
    %cst_73 = arith.constant 1.702000e+00 : f32
    %174 = vector.broadcast %cst_73 : f32 to vector<16x256xf32>
    %175 = arith.mulf %174, %173 : vector<16x256xf32>
    %176 = arith.negf %175 : vector<16x256xf32>
    %177 = math.exp %176 : vector<16x256xf32>
    %cst_74 = arith.constant 1.000000e+00 : f32
    %178 = vector.broadcast %cst_74 : f32 to vector<16x256xf32>
    %179 = arith.addf %178, %177 : vector<16x256xf32>
    %180 = arith.divf %178, %179 : vector<16x256xf32>
    %181 = arith.mulf %173, %180 : vector<16x256xf32>
    %c0_75 = arith.constant 0 : index
    %c0_76 = arith.constant 0 : index
    %c0_77 = arith.constant 0 : index
    %182 = vector.load %arg13[%c0_75, %c0_76, %c0_77] : memref<2x256x64xbf16, #tpu.memory_space<vmem>>, vector<1x256x64xbf16>
    %183 = vector.shape_cast %182 : vector<1x256x64xbf16> to vector<256x64xbf16>
    %184 = arith.truncf %181 : vector<16x256xf32> to vector<16x256xbf16>
    %cst_78 = arith.constant dense<0.000000e+00> : vector<16x64xf32>
    %185 = tpu.matmul %184, %183, %cst_78 {dimension_numbers = #tpu.dot_dimension_numbers<[1], [0], [0], [1], [0, 0, 1, 1], [], []>} : vector<16x256xbf16>, vector<256x64xbf16>, vector<16x64xf32> -> vector<16x64xf32>
    %186 = arith.addf %139, %185 : vector<16x64xf32>
    %c0_79 = arith.constant 0 : index
    %c0_80 = arith.constant 0 : index
    %c0_81 = arith.constant 0 : index
    %187 = vector.load %arg14[%c0_79, %c0_80, %c0_81] : memref<2x1x64xf32, #tpu.memory_space<vmem>>, vector<1x1x64xf32>
    %188 = vector.shape_cast %187 : vector<1x1x64xf32> to vector<1x64xf32>
    %189 = vector.broadcast %188 : vector<1x64xf32> to vector<16x64xf32>
    %190 = arith.addf %186, %189 : vector<16x64xf32>
    %c1 = arith.constant 1 : index
    %c0_82 = arith.constant 0 : index
    %c0_83 = arith.constant 0 : index
    %191 = vector.load %arg3[%c1, %c0_82, %c0_83] : memref<2x1x64xf32, #tpu.memory_space<vmem>>, vector<1x1x64xf32>
    %192 = vector.shape_cast %191 : vector<1x1x64xf32> to vector<1x64xf32>
    %c1_84 = arith.constant 1 : index
    %c0_85 = arith.constant 0 : index
    %c0_86 = arith.constant 0 : index
    %193 = vector.load %arg4[%c1_84, %c0_85, %c0_86] : memref<2x1x64xf32, #tpu.memory_space<vmem>>, vector<1x1x64xf32>
    %194 = vector.shape_cast %193 : vector<1x1x64xf32> to vector<1x64xf32>
    %cst_87 = arith.constant dense<0.000000e+00> : vector<16xf32>
    %195 = vector.multi_reduction <add>, %190, %cst_87 [1] : vector<16x64xf32> to vector<16xf32>
    %196 = vector.shape_cast %195 : vector<16xf32> to vector<16x1xf32>
    %cst_88 = arith.constant 6.400000e+01 : f32
    %197 = vector.broadcast %cst_88 : f32 to vector<16x1xf32>
    %198 = arith.divf %196, %197 : vector<16x1xf32>
    %199 = vector.broadcast %198 : vector<16x1xf32> to vector<16x64xf32>
    %200 = arith.subf %190, %199 : vector<16x64xf32>
    %201 = arith.mulf %200, %200 : vector<16x64xf32>
    %cst_89 = arith.constant dense<0.000000e+00> : vector<16xf32>
    %202 = vector.multi_reduction <add>, %201, %cst_89 [1] : vector<16x64xf32> to vector<16xf32>
    %203 = vector.shape_cast %202 : vector<16xf32> to vector<16x1xf32>
    %cst_90 = arith.constant 6.400000e+01 : f32
    %204 = vector.broadcast %cst_90 : f32 to vector<16x1xf32>
    %205 = arith.divf %203, %204 : vector<16x1xf32>
    %206 = vector.broadcast %198 : vector<16x1xf32> to vector<16x64xf32>
    %207 = arith.subf %190, %206 : vector<16x64xf32>
    %cst_91 = arith.constant 9.99999974E-6 : f32
    %208 = vector.broadcast %cst_91 : f32 to vector<16x1xf32>
    %209 = arith.addf %205, %208 : vector<16x1xf32>
    %210 = math.rsqrt %209 : vector<16x1xf32>
    %211 = vector.broadcast %210 : vector<16x1xf32> to vector<16x64xf32>
    %212 = arith.mulf %207, %211 : vector<16x64xf32>
    %213 = vector.broadcast %192 : vector<1x64xf32> to vector<16x64xf32>
    %214 = arith.mulf %212, %213 : vector<16x64xf32>
    %215 = vector.broadcast %194 : vector<1x64xf32> to vector<16x64xf32>
    %216 = arith.addf %214, %215 : vector<16x64xf32>
    %c1_92 = arith.constant 1 : index
    %c0_93 = arith.constant 0 : index
    %c0_94 = arith.constant 0 : index
    %217 = vector.load %arg5[%c1_92, %c0_93, %c0_94] : memref<2x64x192xbf16, #tpu.memory_space<vmem>>, vector<1x64x192xbf16>
    %218 = vector.shape_cast %217 : vector<1x64x192xbf16> to vector<64x192xbf16>
    %219 = arith.truncf %216 : vector<16x64xf32> to vector<16x64xbf16>
    %cst_95 = arith.constant dense<0.000000e+00> : vector<16x192xf32>
    %220 = tpu.matmul %219, %218, %cst_95 {dimension_numbers = #tpu.dot_dimension_numbers<[1], [0], [0], [1], [0, 0, 1, 1], [], []>} : vector<16x64xbf16>, vector<64x192xbf16>, vector<16x192xf32> -> vector<16x192xf32>
    %c1_96 = arith.constant 1 : index
    %c0_97 = arith.constant 0 : index
    %c0_98 = arith.constant 0 : index
    %221 = vector.load %arg6[%c1_96, %c0_97, %c0_98] : memref<2x1x192xf32, #tpu.memory_space<vmem>>, vector<1x1x192xf32>
    %222 = vector.shape_cast %221 : vector<1x1x192xf32> to vector<1x192xf32>
    %223 = vector.broadcast %222 : vector<1x192xf32> to vector<16x192xf32>
    %224 = arith.addf %220, %223 : vector<16x192xf32>
    %225 = vector.extract_strided_slice %224 {offsets = [0, 0], sizes = [8, 192], strides = [1, 1]} : vector<16x192xf32> to vector<8x192xf32>
    %226 = vector.extract_strided_slice %225 {offsets = [0, 0], sizes = [8, 32], strides = [1, 1]} : vector<8x192xf32> to vector<8x32xf32>
    %cst_99 = arith.constant 0.176776692 : f32
    %227 = vector.broadcast %cst_99 : f32 to vector<8x32xf32>
    %228 = arith.mulf %226, %227 : vector<8x32xf32>
    %229 = vector.extract_strided_slice %225 {offsets = [0, 64], sizes = [8, 32], strides = [1, 1]} : vector<8x192xf32> to vector<8x32xf32>
    %230 = vector.extract_strided_slice %225 {offsets = [0, 128], sizes = [8, 32], strides = [1, 1]} : vector<8x192xf32> to vector<8x32xf32>
    %231 = arith.truncf %228 : vector<8x32xf32> to vector<8x32xbf16>
    %232 = arith.truncf %229 : vector<8x32xf32> to vector<8x32xbf16>
    %cst_100 = arith.constant dense<0.000000e+00> : vector<8x8xf32>
    %233 = tpu.matmul %231, %232, %cst_100 {dimension_numbers = #tpu.dot_dimension_numbers<[1], [1], [0], [0], [0, 0, 1, 0], [], []>} : vector<8x32xbf16>, vector<8x32xbf16>, vector<8x8xf32> -> vector<8x8xf32>
    %234 = arith.addf %233, %1 : vector<8x8xf32>
    %cst_101 = arith.constant dense<0xFF800000> : vector<8xf32>
    %235 = vector.multi_reduction <maximumf>, %234, %cst_101 [1] : vector<8x8xf32> to vector<8xf32>
    %236 = vector.shape_cast %235 : vector<8xf32> to vector<8x1xf32>
    %237 = vector.broadcast %236 : vector<8x1xf32> to vector<8x8xf32>
    %238 = arith.subf %234, %237 : vector<8x8xf32>
    %239 = math.exp %238 : vector<8x8xf32>
    %cst_102 = arith.constant dense<0.000000e+00> : vector<8xf32>
    %240 = vector.multi_reduction <add>, %239, %cst_102 [1] : vector<8x8xf32> to vector<8xf32>
    %241 = vector.shape_cast %240 : vector<8xf32> to vector<8x1xf32>
    %242 = tpu.reciprocal %241 {approx = true} : vector<8x1xf32> -> vector<8x1xf32>
    %243 = vector.broadcast %242 : vector<8x1xf32> to vector<8x8xf32>
    %244 = arith.mulf %239, %243 : vector<8x8xf32>
    %245 = arith.truncf %244 : vector<8x8xf32> to vector<8x8xbf16>
    %246 = arith.truncf %230 : vector<8x32xf32> to vector<8x32xbf16>
    %cst_103 = arith.constant dense<0.000000e+00> : vector<8x32xf32>
    %247 = tpu.matmul %245, %246, %cst_103 {dimension_numbers = #tpu.dot_dimension_numbers<[1], [0], [0], [1], [0, 0, 1, 1], [], []>} : vector<8x8xbf16>, vector<8x32xbf16>, vector<8x32xf32> -> vector<8x32xf32>
    %c0_104 = arith.constant 0 : index
    %c0_105 = arith.constant 0 : index
    %248 = vector.load %arg21[%c0_104, %c0_105] : memref<16x64xf32, #tpu.memory_space<vmem>>, vector<8x32xf32>
    tpu.vector_store %arg21[%c0_104, %c0_105], %247 {strides = array<i32>} : memref<16x64xf32, #tpu.memory_space<vmem>>, vector<8x32xf32>,
    %249 = vector.extract_strided_slice %225 {offsets = [0, 32], sizes = [8, 32], strides = [1, 1]} : vector<8x192xf32> to vector<8x32xf32>
    %cst_106 = arith.constant 0.176776692 : f32
    %250 = vector.broadcast %cst_106 : f32 to vector<8x32xf32>
    %251 = arith.mulf %249, %250 : vector<8x32xf32>
    %252 = vector.extract_strided_slice %225 {offsets = [0, 96], sizes = [8, 32], strides = [1, 1]} : vector<8x192xf32> to vector<8x32xf32>
    %253 = vector.extract_strided_slice %225 {offsets = [0, 160], sizes = [8, 32], strides = [1, 1]} : vector<8x192xf32> to vector<8x32xf32>
    %254 = arith.truncf %251 : vector<8x32xf32> to vector<8x32xbf16>
    %255 = arith.truncf %252 : vector<8x32xf32> to vector<8x32xbf16>
    %cst_107 = arith.constant dense<0.000000e+00> : vector<8x8xf32>
    %256 = tpu.matmul %254, %255, %cst_107 {dimension_numbers = #tpu.dot_dimension_numbers<[1], [1], [0], [0], [0, 0, 1, 0], [], []>} : vector<8x32xbf16>, vector<8x32xbf16>, vector<8x8xf32> -> vector<8x8xf32>
    %257 = arith.addf %256, %1 : vector<8x8xf32>
    %cst_108 = arith.constant dense<0xFF800000> : vector<8xf32>
    %258 = vector.multi_reduction <maximumf>, %257, %cst_108 [1] : vector<8x8xf32> to vector<8xf32>
    %259 = vector.shape_cast %258 : vector<8xf32> to vector<8x1xf32>
    %260 = vector.broadcast %259 : vector<8x1xf32> to vector<8x8xf32>
    %261 = arith.subf %257, %260 : vector<8x8xf32>
    %262 = math.exp %261 : vector<8x8xf32>
    %cst_109 = arith.constant dense<0.000000e+00> : vector<8xf32>
    %263 = vector.multi_reduction <add>, %262, %cst_109 [1] : vector<8x8xf32> to vector<8xf32>
    %264 = vector.shape_cast %263 : vector<8xf32> to vector<8x1xf32>
    %265 = tpu.reciprocal %264 {approx = true} : vector<8x1xf32> -> vector<8x1xf32>
    %266 = vector.broadcast %265 : vector<8x1xf32> to vector<8x8xf32>
    %267 = arith.mulf %262, %266 : vector<8x8xf32>
    %268 = arith.truncf %267 : vector<8x8xf32> to vector<8x8xbf16>
    %269 = arith.truncf %253 : vector<8x32xf32> to vector<8x32xbf16>
    %cst_110 = arith.constant dense<0.000000e+00> : vector<8x32xf32>
    %270 = tpu.matmul %268, %269, %cst_110 {dimension_numbers = #tpu.dot_dimension_numbers<[1], [0], [0], [1], [0, 0, 1, 1], [], []>} : vector<8x8xbf16>, vector<8x32xbf16>, vector<8x32xf32> -> vector<8x32xf32>
    %c0_111 = arith.constant 0 : index
    %c32_112 = arith.constant 32 : index
    %271 = vector.load %arg21[%c0_111, %c32_112] : memref<16x64xf32, #tpu.memory_space<vmem>>, vector<8x32xf32>
    tpu.vector_store %arg21[%c0_111, %c32_112], %270 {strides = array<i32>} : memref<16x64xf32, #tpu.memory_space<vmem>>, vector<8x32xf32>,
    %272 = vector.extract_strided_slice %224 {offsets = [8, 0], sizes = [8, 192], strides = [1, 1]} : vector<16x192xf32> to vector<8x192xf32>
    %273 = vector.extract_strided_slice %272 {offsets = [0, 0], sizes = [8, 32], strides = [1, 1]} : vector<8x192xf32> to vector<8x32xf32>
    %cst_113 = arith.constant 0.176776692 : f32
    %274 = vector.broadcast %cst_113 : f32 to vector<8x32xf32>
    %275 = arith.mulf %273, %274 : vector<8x32xf32>
    %276 = vector.extract_strided_slice %272 {offsets = [0, 64], sizes = [8, 32], strides = [1, 1]} : vector<8x192xf32> to vector<8x32xf32>
    %277 = vector.extract_strided_slice %272 {offsets = [0, 128], sizes = [8, 32], strides = [1, 1]} : vector<8x192xf32> to vector<8x32xf32>
    %278 = arith.truncf %275 : vector<8x32xf32> to vector<8x32xbf16>
    %279 = arith.truncf %276 : vector<8x32xf32> to vector<8x32xbf16>
    %cst_114 = arith.constant dense<0.000000e+00> : vector<8x8xf32>
    %280 = tpu.matmul %278, %279, %cst_114 {dimension_numbers = #tpu.dot_dimension_numbers<[1], [1], [0], [0], [0, 0, 1, 0], [], []>} : vector<8x32xbf16>, vector<8x32xbf16>, vector<8x8xf32> -> vector<8x8xf32>
    %281 = arith.addf %280, %1 : vector<8x8xf32>
    %cst_115 = arith.constant dense<0xFF800000> : vector<8xf32>
    %282 = vector.multi_reduction <maximumf>, %281, %cst_115 [1] : vector<8x8xf32> to vector<8xf32>
    %283 = vector.shape_cast %282 : vector<8xf32> to vector<8x1xf32>
    %284 = vector.broadcast %283 : vector<8x1xf32> to vector<8x8xf32>
    %285 = arith.subf %281, %284 : vector<8x8xf32>
    %286 = math.exp %285 : vector<8x8xf32>
    %cst_116 = arith.constant dense<0.000000e+00> : vector<8xf32>
    %287 = vector.multi_reduction <add>, %286, %cst_116 [1] : vector<8x8xf32> to vector<8xf32>
    %288 = vector.shape_cast %287 : vector<8xf32> to vector<8x1xf32>
    %289 = tpu.reciprocal %288 {approx = true} : vector<8x1xf32> -> vector<8x1xf32>
    %290 = vector.broadcast %289 : vector<8x1xf32> to vector<8x8xf32>
    %291 = arith.mulf %286, %290 : vector<8x8xf32>
    %292 = arith.truncf %291 : vector<8x8xf32> to vector<8x8xbf16>
    %293 = arith.truncf %277 : vector<8x32xf32> to vector<8x32xbf16>
    %cst_117 = arith.constant dense<0.000000e+00> : vector<8x32xf32>
    %294 = tpu.matmul %292, %293, %cst_117 {dimension_numbers = #tpu.dot_dimension_numbers<[1], [0], [0], [1], [0, 0, 1, 1], [], []>} : vector<8x8xbf16>, vector<8x32xbf16>, vector<8x32xf32> -> vector<8x32xf32>
    %c8_118 = arith.constant 8 : index
    %c0_119 = arith.constant 0 : index
    %295 = vector.load %arg21[%c8_118, %c0_119] : memref<16x64xf32, #tpu.memory_space<vmem>>, vector<8x32xf32>
    tpu.vector_store %arg21[%c8_118, %c0_119], %294 {strides = array<i32>} : memref<16x64xf32, #tpu.memory_space<vmem>>, vector<8x32xf32>,
    %296 = vector.extract_strided_slice %272 {offsets = [0, 32], sizes = [8, 32], strides = [1, 1]} : vector<8x192xf32> to vector<8x32xf32>
    %cst_120 = arith.constant 0.176776692 : f32
    %297 = vector.broadcast %cst_120 : f32 to vector<8x32xf32>
    %298 = arith.mulf %296, %297 : vector<8x32xf32>
    %299 = vector.extract_strided_slice %272 {offsets = [0, 96], sizes = [8, 32], strides = [1, 1]} : vector<8x192xf32> to vector<8x32xf32>
    %300 = vector.extract_strided_slice %272 {offsets = [0, 160], sizes = [8, 32], strides = [1, 1]} : vector<8x192xf32> to vector<8x32xf32>
    %301 = arith.truncf %298 : vector<8x32xf32> to vector<8x32xbf16>
    %302 = arith.truncf %299 : vector<8x32xf32> to vector<8x32xbf16>
    %cst_121 = arith.constant dense<0.000000e+00> : vector<8x8xf32>
    %303 = tpu.matmul %301, %302, %cst_121 {dimension_numbers = #tpu.dot_dimension_numbers<[1], [1], [0], [0], [0, 0, 1, 0], [], []>} : vector<8x32xbf16>, vector<8x32xbf16>, vector<8x8xf32> -> vector<8x8xf32>
    %304 = arith.addf %303, %1 : vector<8x8xf32>
    %cst_122 = arith.constant dense<0xFF800000> : vector<8xf32>
    %305 = vector.multi_reduction <maximumf>, %304, %cst_122 [1] : vector<8x8xf32> to vector<8xf32>
    %306 = vector.shape_cast %305 : vector<8xf32> to vector<8x1xf32>
    %307 = vector.broadcast %306 : vector<8x1xf32> to vector<8x8xf32>
    %308 = arith.subf %304, %307 : vector<8x8xf32>
    %309 = math.exp %308 : vector<8x8xf32>
    %cst_123 = arith.constant dense<0.000000e+00> : vector<8xf32>
    %310 = vector.multi_reduction <add>, %309, %cst_123 [1] : vector<8x8xf32> to vector<8xf32>
    %311 = vector.shape_cast %310 : vector<8xf32> to vector<8x1xf32>
    %312 = tpu.reciprocal %311 {approx = true} : vector<8x1xf32> -> vector<8x1xf32>
    %313 = vector.broadcast %312 : vector<8x1xf32> to vector<8x8xf32>
    %314 = arith.mulf %309, %313 : vector<8x8xf32>
    %315 = arith.truncf %314 : vector<8x8xf32> to vector<8x8xbf16>
    %316 = arith.truncf %300 : vector<8x32xf32> to vector<8x32xbf16>
    %cst_124 = arith.constant dense<0.000000e+00> : vector<8x32xf32>
    %317 = tpu.matmul %315, %316, %cst_124 {dimension_numbers = #tpu.dot_dimension_numbers<[1], [0], [0], [1], [0, 0, 1, 1], [], []>} : vector<8x8xbf16>, vector<8x32xbf16>, vector<8x32xf32> -> vector<8x32xf32>
    %c8_125 = arith.constant 8 : index
    %c32_126 = arith.constant 32 : index
    %318 = vector.load %arg21[%c8_125, %c32_126] : memref<16x64xf32, #tpu.memory_space<vmem>>, vector<8x32xf32>
    tpu.vector_store %arg21[%c8_125, %c32_126], %317 {strides = array<i32>} : memref<16x64xf32, #tpu.memory_space<vmem>>, vector<8x32xf32>,
    %c0_127 = arith.constant 0 : index
    %c0_128 = arith.constant 0 : index
    %319 = vector.load %arg21[%c0_127, %c0_128] : memref<16x64xf32, #tpu.memory_space<vmem>>, vector<16x64xf32>
    %c1_129 = arith.constant 1 : index
    %c0_130 = arith.constant 0 : index
    %c0_131 = arith.constant 0 : index
    %320 = vector.load %arg7[%c1_129, %c0_130, %c0_131] : memref<2x64x64xbf16, #tpu.memory_space<vmem>>, vector<1x64x64xbf16>
    %321 = vector.shape_cast %320 : vector<1x64x64xbf16> to vector<64x64xbf16>
    %322 = arith.truncf %319 : vector<16x64xf32> to vector<16x64xbf16>
    %cst_132 = arith.constant dense<0.000000e+00> : vector<16x64xf32>
    %323 = tpu.matmul %322, %321, %cst_132 {dimension_numbers = #tpu.dot_dimension_numbers<[1], [0], [0], [1], [0, 0, 1, 1], [], []>} : vector<16x64xbf16>, vector<64x64xbf16>, vector<16x64xf32> -> vector<16x64xf32>
    %324 = arith.addf %190, %323 : vector<16x64xf32>
    %c1_133 = arith.constant 1 : index
    %c0_134 = arith.constant 0 : index
    %c0_135 = arith.constant 0 : index
    %325 = vector.load %arg8[%c1_133, %c0_134, %c0_135] : memref<2x1x64xf32, #tpu.memory_space<vmem>>, vector<1x1x64xf32>
    %326 = vector.shape_cast %325 : vector<1x1x64xf32> to vector<1x64xf32>
    %327 = vector.broadcast %326 : vector<1x64xf32> to vector<16x64xf32>
    %328 = arith.addf %324, %327 : vector<16x64xf32>
    %c1_136 = arith.constant 1 : index
    %c0_137 = arith.constant 0 : index
    %c0_138 = arith.constant 0 : index
    %329 = vector.load %arg9[%c1_136, %c0_137, %c0_138] : memref<2x1x64xf32, #tpu.memory_space<vmem>>, vector<1x1x64xf32>
    %330 = vector.shape_cast %329 : vector<1x1x64xf32> to vector<1x64xf32>
    %c1_139 = arith.constant 1 : index
    %c0_140 = arith.constant 0 : index
    %c0_141 = arith.constant 0 : index
    %331 = vector.load %arg10[%c1_139, %c0_140, %c0_141] : memref<2x1x64xf32, #tpu.memory_space<vmem>>, vector<1x1x64xf32>
    %332 = vector.shape_cast %331 : vector<1x1x64xf32> to vector<1x64xf32>
    %cst_142 = arith.constant dense<0.000000e+00> : vector<16xf32>
    %333 = vector.multi_reduction <add>, %328, %cst_142 [1] : vector<16x64xf32> to vector<16xf32>
    %334 = vector.shape_cast %333 : vector<16xf32> to vector<16x1xf32>
    %cst_143 = arith.constant 6.400000e+01 : f32
    %335 = vector.broadcast %cst_143 : f32 to vector<16x1xf32>
    %336 = arith.divf %334, %335 : vector<16x1xf32>
    %337 = vector.broadcast %336 : vector<16x1xf32> to vector<16x64xf32>
    %338 = arith.subf %328, %337 : vector<16x64xf32>
    %339 = arith.mulf %338, %338 : vector<16x64xf32>
    %cst_144 = arith.constant dense<0.000000e+00> : vector<16xf32>
    %340 = vector.multi_reduction <add>, %339, %cst_144 [1] : vector<16x64xf32> to vector<16xf32>
    %341 = vector.shape_cast %340 : vector<16xf32> to vector<16x1xf32>
    %cst_145 = arith.constant 6.400000e+01 : f32
    %342 = vector.broadcast %cst_145 : f32 to vector<16x1xf32>
    %343 = arith.divf %341, %342 : vector<16x1xf32>
    %344 = vector.broadcast %336 : vector<16x1xf32> to vector<16x64xf32>
    %345 = arith.subf %328, %344 : vector<16x64xf32>
    %cst_146 = arith.constant 9.99999974E-6 : f32
    %346 = vector.broadcast %cst_146 : f32 to vector<16x1xf32>
    %347 = arith.addf %343, %346 : vector<16x1xf32>
    %348 = math.rsqrt %347 : vector<16x1xf32>
    %349 = vector.broadcast %348 : vector<16x1xf32> to vector<16x64xf32>
    %350 = arith.mulf %345, %349 : vector<16x64xf32>
    %351 = vector.broadcast %330 : vector<1x64xf32> to vector<16x64xf32>
    %352 = arith.mulf %350, %351 : vector<16x64xf32>
    %353 = vector.broadcast %332 : vector<1x64xf32> to vector<16x64xf32>
    %354 = arith.addf %352, %353 : vector<16x64xf32>
    %c1_147 = arith.constant 1 : index
    %c0_148 = arith.constant 0 : index
    %c0_149 = arith.constant 0 : index
    %355 = vector.load %arg11[%c1_147, %c0_148, %c0_149] : memref<2x64x256xbf16, #tpu.memory_space<vmem>>, vector<1x64x256xbf16>
    %356 = vector.shape_cast %355 : vector<1x64x256xbf16> to vector<64x256xbf16>
    %357 = arith.truncf %354 : vector<16x64xf32> to vector<16x64xbf16>
    %cst_150 = arith.constant dense<0.000000e+00> : vector<16x256xf32>
    %358 = tpu.matmul %357, %356, %cst_150 {dimension_numbers = #tpu.dot_dimension_numbers<[1], [0], [0], [1], [0, 0, 1, 1], [], []>} : vector<16x64xbf16>, vector<64x256xbf16>, vector<16x256xf32> -> vector<16x256xf32>
    %c1_151 = arith.constant 1 : index
    %c0_152 = arith.constant 0 : index
    %c0_153 = arith.constant 0 : index
    %359 = vector.load %arg12[%c1_151, %c0_152, %c0_153] : memref<2x1x256xf32, #tpu.memory_space<vmem>>, vector<1x1x256xf32>
    %360 = vector.shape_cast %359 : vector<1x1x256xf32> to vector<1x256xf32>
    %361 = vector.broadcast %360 : vector<1x256xf32> to vector<16x256xf32>
    %362 = arith.addf %358, %361 : vector<16x256xf32>
    %cst_154 = arith.constant 1.702000e+00 : f32
    %363 = vector.broadcast %cst_154 : f32 to vector<16x256xf32>
    %364 = arith.mulf %363, %362 : vector<16x256xf32>
    %365 = arith.negf %364 : vector<16x256xf32>
    %366 = math.exp %365 : vector<16x256xf32>
    %cst_155 = arith.constant 1.000000e+00 : f32
    %367 = vector.broadcast %cst_155 : f32 to vector<16x256xf32>
    %368 = arith.addf %367, %366 : vector<16x256xf32>
    %369 = arith.divf %367, %368 : vector<16x256xf32>
    %370 = arith.mulf %362, %369 : vector<16x256xf32>
    %c1_156 = arith.constant 1 : index
    %c0_157 = arith.constant 0 : index
    %c0_158 = arith.constant 0 : index
    %371 = vector.load %arg13[%c1_156, %c0_157, %c0_158] : memref<2x256x64xbf16, #tpu.memory_space<vmem>>, vector<1x256x64xbf16>
    %372 = vector.shape_cast %371 : vector<1x256x64xbf16> to vector<256x64xbf16>
    %373 = arith.truncf %370 : vector<16x256xf32> to vector<16x256xbf16>
    %cst_159 = arith.constant dense<0.000000e+00> : vector<16x64xf32>
    %374 = tpu.matmul %373, %372, %cst_159 {dimension_numbers = #tpu.dot_dimension_numbers<[1], [0], [0], [1], [0, 0, 1, 1], [], []>} : vector<16x256xbf16>, vector<256x64xbf16>, vector<16x64xf32> -> vector<16x64xf32>
    %375 = arith.addf %328, %374 : vector<16x64xf32>
    %c1_160 = arith.constant 1 : index
    %c0_161 = arith.constant 0 : index
    %c0_162 = arith.constant 0 : index
    %376 = vector.load %arg14[%c1_160, %c0_161, %c0_162] : memref<2x1x64xf32, #tpu.memory_space<vmem>>, vector<1x1x64xf32>
    %377 = vector.shape_cast %376 : vector<1x1x64xf32> to vector<1x64xf32>
    %378 = vector.broadcast %377 : vector<1x64xf32> to vector<16x64xf32>
    %379 = arith.addf %375, %378 : vector<16x64xf32>
    %380 = tpu.iota {dimensions = array<i32: 0>} : vector<8x1xi32>
    %c0_163 = arith.constant 0 : index
    %381 = memref.load %arg2[%c0_163] : memref<2xi32, #tpu.memory_space<smem>>
    %382 = vector.broadcast %381 : i32 to vector<8x1xi32>
    %383 = arith.cmpi eq, %380, %382 : vector<8x1xi32>
    %384 = vector.extract_strided_slice %379 {offsets = [0, 0], sizes = [8, 64], strides = [1, 1]} : vector<16x64xf32> to vector<8x64xf32>
    %cst_164 = arith.constant 0.000000e+00 : f32
    %385 = vector.shape_cast %383 : vector<8x1xi1> to vector<8x1xi1>
    %386 = vector.broadcast %385 : vector<8x1xi1> to vector<8x64xi1>
    %387 = vector.broadcast %cst_164 : f32 to vector<8x64xf32>
    %388 = arith.select %386, %384, %387 : vector<8x64xi1>, vector<8x64xf32>
    %cst_165 = arith.constant dense<0.000000e+00> : vector<64xf32>
    %389 = vector.multi_reduction <add>, %388, %cst_165 [0] : vector<8x64xf32> to vector<64xf32>
    %390 = vector.shape_cast %389 : vector<64xf32> to vector<1x64xf32>
    %c0_166 = arith.constant 0 : index
    %c0_167 = arith.constant 0 : index
    %391 = vector.load %arg22[%c0_166, %c0_167] : memref<2x64xf32, #tpu.memory_space<vmem>>, vector<1x64xf32>
    tpu.vector_store %arg22[%c0_166, %c0_167], %390 {strides = array<i32>} : memref<2x64xf32, #tpu.memory_space<vmem>>, vector<1x64xf32>,
    %c1_168 = arith.constant 1 : index
    %392 = memref.load %arg2[%c1_168] : memref<2xi32, #tpu.memory_space<smem>>
    %393 = vector.broadcast %392 : i32 to vector<8x1xi32>
    %394 = arith.cmpi eq, %380, %393 : vector<8x1xi32>
    %395 = vector.extract_strided_slice %379 {offsets = [8, 0], sizes = [8, 64], strides = [1, 1]} : vector<16x64xf32> to vector<8x64xf32>
    %cst_169 = arith.constant 0.000000e+00 : f32
    %396 = vector.shape_cast %394 : vector<8x1xi1> to vector<8x1xi1>
    %397 = vector.broadcast %396 : vector<8x1xi1> to vector<8x64xi1>
    %398 = vector.broadcast %cst_169 : f32 to vector<8x64xf32>
    %399 = arith.select %397, %395, %398 : vector<8x64xi1>, vector<8x64xf32>
    %cst_170 = arith.constant dense<0.000000e+00> : vector<64xf32>
    %400 = vector.multi_reduction <add>, %399, %cst_170 [0] : vector<8x64xf32> to vector<64xf32>
    %401 = vector.shape_cast %400 : vector<64xf32> to vector<1x64xf32>
    %c1_171 = arith.constant 1 : index
    %c0_172 = arith.constant 0 : index
    %402 = vector.load %arg22[%c1_171, %c0_172] : memref<2x64xf32, #tpu.memory_space<vmem>>, vector<1x64xf32>
    tpu.vector_store %arg22[%c1_171, %c0_172], %401 {strides = array<i32>} : memref<2x64xf32, #tpu.memory_space<vmem>>, vector<1x64xf32>,
    %c0_173 = arith.constant 0 : index
    %c0_174 = arith.constant 0 : index
    %403 = vector.load %arg22[%c0_173, %c0_174] : memref<2x64xf32, #tpu.memory_space<vmem>>, vector<2x64xf32>
    %c0_175 = arith.constant 0 : index
    %c0_176 = arith.constant 0 : index
    %404 = vector.load %arg15[%c0_175, %c0_176] : memref<1x64xf32, #tpu.memory_space<vmem>>, vector<1x64xf32>
    %c0_177 = arith.constant 0 : index
    %c0_178 = arith.constant 0 : index
    %405 = vector.load %arg16[%c0_177, %c0_178] : memref<1x64xf32, #tpu.memory_space<vmem>>, vector<1x64xf32>
    %cst_179 = arith.constant dense<0.000000e+00> : vector<2xf32>
    %406 = vector.multi_reduction <add>, %403, %cst_179 [1] : vector<2x64xf32> to vector<2xf32>
    %407 = vector.shape_cast %406 : vector<2xf32> to vector<2x1xf32>
    %cst_180 = arith.constant 6.400000e+01 : f32
    %408 = vector.broadcast %cst_180 : f32 to vector<2x1xf32>
    %409 = arith.divf %407, %408 : vector<2x1xf32>
    %410 = vector.broadcast %409 : vector<2x1xf32> to vector<2x64xf32>
    %411 = arith.subf %403, %410 : vector<2x64xf32>
    %412 = arith.mulf %411, %411 : vector<2x64xf32>
    %cst_181 = arith.constant dense<0.000000e+00> : vector<2xf32>
    %413 = vector.multi_reduction <add>, %412, %cst_181 [1] : vector<2x64xf32> to vector<2xf32>
    %414 = vector.shape_cast %413 : vector<2xf32> to vector<2x1xf32>
    %cst_182 = arith.constant 6.400000e+01 : f32
    %415 = vector.broadcast %cst_182 : f32 to vector<2x1xf32>
    %416 = arith.divf %414, %415 : vector<2x1xf32>
    %417 = vector.broadcast %409 : vector<2x1xf32> to vector<2x64xf32>
    %418 = arith.subf %403, %417 : vector<2x64xf32>
    %cst_183 = arith.constant 9.99999974E-6 : f32
    %419 = vector.broadcast %cst_183 : f32 to vector<2x1xf32>
    %420 = arith.addf %416, %419 : vector<2x1xf32>
    %421 = math.rsqrt %420 : vector<2x1xf32>
    %422 = vector.broadcast %421 : vector<2x1xf32> to vector<2x64xf32>
    %423 = arith.mulf %418, %422 : vector<2x64xf32>
    %424 = vector.broadcast %404 : vector<1x64xf32> to vector<2x64xf32>
    %425 = arith.mulf %423, %424 : vector<2x64xf32>
    %426 = vector.broadcast %405 : vector<1x64xf32> to vector<2x64xf32>
    %427 = arith.addf %425, %426 : vector<2x64xf32>
    %c0_184 = arith.constant 0 : index
    %c0_185 = arith.constant 0 : index
    %428 = vector.load %arg17[%c0_184, %c0_185] : memref<64x64xbf16, #tpu.memory_space<vmem>>, vector<64x64xbf16>
    %429 = arith.truncf %427 : vector<2x64xf32> to vector<2x64xbf16>
    %cst_186 = arith.constant dense<0.000000e+00> : vector<2x64xf32>
    %430 = tpu.matmul %429, %428, %cst_186 {dimension_numbers = #tpu.dot_dimension_numbers<[1], [0], [0], [1], [0, 0, 1, 1], [], []>} : vector<2x64xbf16>, vector<64x64xbf16>, vector<2x64xf32> -> vector<2x64xf32>
    %431 = arith.mulf %430, %430 : vector<2x64xf32>
    %cst_187 = arith.constant dense<0.000000e+00> : vector<2xf32>
    %432 = vector.multi_reduction <add>, %431, %cst_187 [1] : vector<2x64xf32> to vector<2xf32>
    %433 = vector.shape_cast %432 : vector<2xf32> to vector<2x1xf32>
    %cst_188 = arith.constant 9.99999996E-13 : f32
    %434 = vector.broadcast %cst_188 : f32 to vector<2x1xf32>
    %435 = arith.addf %433, %434 : vector<2x1xf32>
    %436 = math.rsqrt %435 : vector<2x1xf32>
    %437 = vector.broadcast %436 : vector<2x1xf32> to vector<2x64xf32>
    %438 = arith.mulf %430, %437 : vector<2x64xf32>
    %c0_189 = arith.constant 0 : index
    %c0_190 = arith.constant 0 : index
    %439 = vector.load %arg18[%c0_189, %c0_190] : memref<2x64xf32, #tpu.memory_space<vmem>>, vector<2x64xf32>
    %c0_191 = arith.constant 0 : index
    %440 = memref.load %arg19[%c0_191] : memref<1xf32, #tpu.memory_space<smem>>
    %441 = math.exp %440 : f32
    %cst_192 = arith.constant dense<0.000000e+00> : vector<2x2xf32>
    %442 = tpu.matmul %439, %438, %cst_192 {dimension_numbers = #tpu.dot_dimension_numbers<[1], [1], [0], [0], [0, 0, 1, 0], [], []>} : vector<2x64xf32>, vector<2x64xf32>, vector<2x2xf32> -> vector<2x2xf32>
    %443 = vector.broadcast %441 : f32 to vector<2x2xf32>
    %444 = arith.mulf %443, %442 : vector<2x2xf32>
    %c0_193 = arith.constant 0 : index
    %c0_194 = arith.constant 0 : index
    %445 = vector.load %arg20[%c0_193, %c0_194] : memref<2x2xf32, #tpu.memory_space<vmem>>, vector<2x2xf32>
    tpu.vector_store %arg20[%c0_193, %c0_194], %444 {strides = array<i32>} : memref<2x2xf32, #tpu.memory_space<vmem>>, vector<2x2xf32>,
    return
  }
}

</mosaic_0001>

<llo_original>
// kernel: clip_forward.3
$region0: #{clip_forward.3}
  #allocation0 [shape = 'u32[]', space=smem, size = 0x4, offset = 0x4, fixed_abs, tag = 'smem constant byte address 0x4 - core index']
  #allocation1 [shape = 'u32[144,128]{1,0:T(1,128)}', space=vmem, size = 0x12000, scoped, tag = 'internal scratch']
  #allocation2 [shape = 'f32[16,64]{1,0:T(8,128)}', space=vmem, size = 0x2000, scoped, tag = 'scratch operand']
  #allocation3 [shape = 'f32[2,64]{1,0:T(2,128)}', space=vmem, size = 0x400, scoped, tag = 'scratch operand']
  #allocation4 [shape = 'f32[1]{0:T(128)S(6)}', space=smem, size = 0x200, scoped, tag = 'scoped memory for clip_forward.3']
  %s0 = inlined_call_operand.vmem [shape: f32[16,64], index: 0, kind: input, shape index: {}]
  %s1 = inlined_call_operand.vmem [shape: f32[8,8], index: 1, kind: input, shape index: {}]
  %s2 = inlined_call_operand.vmem [shape: s32[2], index: 2, kind: input, shape index: {}]
  %s3 = inlined_call_operand.vmem [shape: f32[2,1,64], index: 3, kind: input, shape index: {}]
  %s4 = inlined_call_operand.vmem [shape: f32[2,1,64], index: 4, kind: input, shape index: {}]
  %s5 = inlined_call_operand.vmem [shape: bf16[2,64,192], index: 5, kind: input, shape index: {}]
  %s6 = inlined_call_operand.vmem [shape: f32[2,1,192], index: 6, kind: input, shape index: {}]
  %s7 = inlined_call_operand.vmem [shape: bf16[2,64,64], index: 7, kind: input, shape index: {}]
  %s8 = inlined_call_operand.vmem [shape: f32[2,1,64], index: 8, kind: input, shape index: {}]
  %s9 = inlined_call_operand.vmem [shape: f32[2,1,64], index: 9, kind: input, shape index: {}]
  %s10 = inlined_call_operand.vmem [shape: f32[2,1,64], index: 10, kind: input, shape index: {}]
  %s11 = inlined_call_operand.vmem [shape: bf16[2,64,256], index: 11, kind: input, shape index: {}]
  %s12 = inlined_call_operand.vmem [shape: f32[2,1,256], index: 12, kind: input, shape index: {}]
  %s13 = inlined_call_operand.vmem [shape: bf16[2,256,64], index: 13, kind: input, shape index: {}]
  %s14 = inlined_call_operand.vmem [shape: f32[2,1,64], index: 14, kind: input, shape index: {}]
  %s15 = inlined_call_operand.vmem [shape: f32[1,64], index: 15, kind: input, shape index: {}]
  %s16 = inlined_call_operand.vmem [shape: f32[1,64], index: 16, kind: input, shape index: {}]
  %s17 = inlined_call_operand.vmem [shape: bf16[64,64], index: 17, kind: input, shape index: {}]
  %s18 = inlined_call_operand.vmem [shape: f32[2,64], index: 18, kind: input, shape index: {}]
  %s19 = inlined_call_operand.<no memory space> [shape: f32[1], index: 19, kind: input, shape index: {}]
  %s20 = inlined_call_operand.vmem [shape: f32[2,2], index: 20, kind: output, shape index: {}]
  %s21 = sld [smem:[#allocation0]]
  $region94: #{clip_forward.3} parent=0
    _
  %s23 = ssub.s32 1, %s21
  %s24 = scalar_select 0, %s23, %s21
  %25 = sst [smem:[#allocation4]] %s19
  $region1: #{clip_forward.3} parent=0
    #allocation5 [shape = 'u8[512]{0}', space=smem, size = 0x200, scoped, tag = 'input window, operand 2, single buffered']
    #allocation6 [shape = 's32[1]{0}', space=sflag, size = 0x4, scoped, tag = 'scoped memory for clip_forward.3']
    %26 = vsyncpa [#allocation6], 0
    // Predicated region
    $region2: #{clip_forward.3} parent=1 // pred_check
      _
    $region3: #{clip_forward.3} parent=1 // pred_check_branch
      %28 = sbr.rel (0) target = $region5
    $region4: #{clip_forward.3} parent=1 // pred_region
      _
    $region5: #{clip_forward.3} parent=1 // pred_fallthru
      _
    // Predicated region
    $region6: #{clip_forward.3} parent=1 // pred_check
      _
    $region7: #{clip_forward.3} parent=1 // pred_check_branch
      %30 = sbr.rel (0) target = $region9
    $region8: #{clip_forward.3} parent=1 // pred_region
      _
    $region9: #{clip_forward.3} parent=1 // pred_fallthru
      _
    // Predicated region
    $region10: #{clip_forward.3} parent=1 // pred_check
      _
    $region11: #{clip_forward.3} parent=1 // pred_check_branch
      %32 = sbr.rel (0) target = $region13
    $region12: #{clip_forward.3} parent=1 // pred_region
      %s34 = ssub.s32 16, 16
      %35 = vsyncadd [#allocation6], %s34
      %s37 = sshll.u32 %s2, 4
      %s38 = int_to_ptr.vmem [resolvable:$true] %s37
      %40 = dma.vmem_to_smem %s38, 16, [#allocation5], [#allocation6]
    $region13: #{clip_forward.3} parent=1 // pred_fallthru
      _
    // Predicated region
    $region14: #{clip_forward.3} parent=1 // pred_check
      _
    $region15: #{clip_forward.3} parent=1 // pred_check_branch
      %42 = sbr.rel (0) target = $region17
    $region16: #{clip_forward.3} parent=1 // pred_region
      _
    $region17: #{clip_forward.3} parent=1 // pred_fallthru
      _
    // Predicated region
    $region18: #{clip_forward.3} parent=1 // pred_check
      _
    $region19: #{clip_forward.3} parent=1 // pred_check_branch
      %44 = sbr.rel (0) target = $region21
    $region20: #{clip_forward.3} parent=1 // pred_region
      _
    $region21: #{clip_forward.3} parent=1 // pred_fallthru
      _
    // Predicated region
    $region22: #{clip_forward.3} parent=1 // pred_check
      _
    $region23: #{clip_forward.3} parent=1 // pred_check_branch
      %46 = sbr.rel (0) target = $region25
    $region24: #{clip_forward.3} parent=1 // pred_region
      _
    $region25: #{clip_forward.3} parent=1 // pred_fallthru
      _
    // Predicated region
    $region26: #{clip_forward.3} parent=1 // pred_check
      _
    $region27: #{clip_forward.3} parent=1 // pred_check_branch
      %48 = sbr.rel (0) target = $region29
    $region28: #{clip_forward.3} parent=1 // pred_region
      _
    $region29: #{clip_forward.3} parent=1 // pred_fallthru
      _
    // Predicated region
    $region30: #{clip_forward.3} parent=1 // pred_check
      _
    $region31: #{clip_forward.3} parent=1 // pred_check_branch
      %50 = sbr.rel (0) target = $region33
    $region32: #{clip_forward.3} parent=1 // pred_region
      _
    $region33: #{clip_forward.3} parent=1 // pred_fallthru
      _
    // Predicated region
    $region34: #{clip_forward.3} parent=1 // pred_check
      _
    $region35: #{clip_forward.3} parent=1 // pred_check_branch
      %52 = sbr.rel (0) target = $region37
    $region36: #{clip_forward.3} parent=1 // pred_region
      _
    $region37: #{clip_forward.3} parent=1 // pred_fallthru
      _
    // Predicated region
    $region38: #{clip_forward.3} parent=1 // pred_check
      _
    $region39: #{clip_forward.3} parent=1 // pred_check_branch
      %54 = sbr.rel (0) target = $region41
    $region40: #{clip_forward.3} parent=1 // pred_region
      _
    $region41: #{clip_forward.3} parent=1 // pred_fallthru
      _
    // Predicated region
    $region42: #{clip_forward.3} parent=1 // pred_check
      _
    $region43: #{clip_forward.3} parent=1 // pred_check_branch
      %56 = sbr.rel (0) target = $region45
    $region44: #{clip_forward.3} parent=1 // pred_region
      _
    $region45: #{clip_forward.3} parent=1 // pred_fallthru
      _
    // Predicated region
    $region46: #{clip_forward.3} parent=1 // pred_check
      _
    $region47: #{clip_forward.3} parent=1 // pred_check_branch
      %58 = sbr.rel (0) target = $region49
    $region48: #{clip_forward.3} parent=1 // pred_region
      _
    $region49: #{clip_forward.3} parent=1 // pred_fallthru
      _
    // Predicated region
    $region50: #{clip_forward.3} parent=1 // pred_check
      _
    $region51: #{clip_forward.3} parent=1 // pred_check_branch
      %60 = sbr.rel (0) target = $region53
    $region52: #{clip_forward.3} parent=1 // pred_region
      _
    $region53: #{clip_forward.3} parent=1 // pred_fallthru
      _
    // Predicated region
    $region54: #{clip_forward.3} parent=1 // pred_check
      _
    $region55: #{clip_forward.3} parent=1 // pred_check_branch
      %62 = sbr.rel (0) target = $region57
    $region56: #{clip_forward.3} parent=1 // pred_region
      _
    $region57: #{clip_forward.3} parent=1 // pred_fallthru
      _
    // Predicated region
    $region58: #{clip_forward.3} parent=1 // pred_check
      _
    $region59: #{clip_forward.3} parent=1 // pred_check_branch
      %64 = sbr.rel (0) target = $region61
    $region60: #{clip_forward.3} parent=1 // pred_region
      _
    $region61: #{clip_forward.3} parent=1 // pred_fallthru
      _
    // Predicated region
    $region62: #{clip_forward.3} parent=1 // pred_check
      _
    $region63: #{clip_forward.3} parent=1 // pred_check_branch
      %66 = sbr.rel (0) target = $region65
    $region64: #{clip_forward.3} parent=1 // pred_region
      _
    $region65: #{clip_forward.3} parent=1 // pred_fallthru
      _
    // Predicated region
    $region66: #{clip_forward.3} parent=1 // pred_check
      _
    $region67: #{clip_forward.3} parent=1 // pred_check_branch
      %68 = sbr.rel (0) target = $region69
    $region68: #{clip_forward.3} parent=1 // pred_region
      _
    $region69: #{clip_forward.3} parent=1 // pred_fallthru
      _
    // Predicated region
    $region70: #{clip_forward.3} parent=1 // pred_check
      _
    $region71: #{clip_forward.3} parent=1 // pred_check_branch
      %70 = sbr.rel (0) target = $region73
    $region72: #{clip_forward.3} parent=1 // pred_region
      _
    $region73: #{clip_forward.3} parent=1 // pred_fallthru
      _
    // Predicated region
    $region74: #{clip_forward.3} parent=1 // pred_check
      _
    $region75: #{clip_forward.3} parent=1 // pred_check_branch
      %72 = sbr.rel (0) target = $region77
    $region76: #{clip_forward.3} parent=1 // pred_region
      _
    $region77: #{clip_forward.3} parent=1 // pred_fallthru
      _
    // Predicated region
    $region78: #{clip_forward.3} parent=1 // pred_check
      _
    $region79: #{clip_forward.3} parent=1 // pred_check_branch
      %74 = sbr.rel (0) target = $region81
    $region80: #{clip_forward.3} parent=1 // pred_region
      _
    $region81: #{clip_forward.3} parent=1 // pred_fallthru
      _
    // Predicated region
    $region82: #{clip_forward.3} parent=1 // pred_check
      _
    $region83: #{clip_forward.3} parent=1 // pred_check_branch
      %76 = sbr.rel (0) target = $region85
    $region84: #{clip_forward.3} parent=1 // pred_region
      %77 = dma.done [#allocation6], 16
    $region85: #{clip_forward.3} parent=1 // pred_fallthru
      _
    %78 = sfence
    %v80 = vld [vmem:[%s0] sm:$0xff]
    %v81 = vld [vmem:[%s0 + $0x8] sm:$0xff]
    %v82 = vld [vmem:[%s1] sm:$0xff]
    %v83 = vld [vmem:[%s3] sm:$0x1]
    %v84 = vld [vmem:[%s4] sm:$0x1]
    %vm85 = vcmask 523264
    %v86 = vsel %vm85, %v80, 0.0
    %87 = vadd.xlane.f32.xlu0 %v86
    %v88 = vpop.xlane.xlu0 %87
    %v89 = vsel %vm85, %v81, 0.0
    %90 = vadd.xlane.f32.xlu0 %v89
    %v91 = vpop.xlane.xlu0 %90
    %v92 = vrcp.pop 64.0
    %v93 = vmul.f32 %v88, %v92
    %v94 = vmul.f32 %v91, %v92
    %v95 = vsub.f32 %v80, %v93
    %v96 = vsub.f32 %v81, %v94
    %v97 = vmul.f32 %v95, %v95
    %v98 = vmul.f32 %v96, %v96
    %v99 = vsel %vm85, %v97, 0.0
    %100 = vadd.xlane.f32.xlu0 %v99
    %v101 = vpop.xlane.xlu0 %100
    %v102 = vsel %vm85, %v98, 0.0
    %103 = vadd.xlane.f32.xlu0 %v102
    %v104 = vpop.xlane.xlu0 %103
    %v105 = vmul.f32 %v101, %v92
    %v106 = vmul.f32 %v104, %v92
    %v107 = vadd.f32 %v105, 1e-05
    %v108 = vadd.f32 %v106, 1e-05
    %v109 = vrsqrt.pop %v107
    %v110 = vrsqrt.pop %v108
    %v111 = vmul.f32 %v95, %v109
    %v112 = vmul.f32 %v96, %v110
    %v114 = vlaneseq
    %v115 = vshrl.u32 %v114, 7
    %v116 = vsub.s32 0, %v115
    %v117 = vrot.slane %v83, %v116
    %v119 = vmul.f32 %v111, %v117
    %v120 = vmul.f32 %v112, %v117
    %v122 = vlaneseq
    %v123 = vshrl.u32 %v122, 7
    %v124 = vsub.s32 0, %v123
    %v125 = vrot.slane %v84, %v124
    %v127 = vadd.f32 %v119, %v125
    %v128 = vadd.f32 %v120, %v125
    %v129 = vld [vmem:[%s5] sm:$0xff]
    %v130 = vld [vmem:[%s5 + $0x8] sm:$0xff]
    %v131 = vld [vmem:[%s5 + $0x10] sm:$0xff]
    %v132 = vld [vmem:[%s5 + $0x18] sm:$0xff]
    %v133 = vld [vmem:[%s5 + $0x20] sm:$0xff]
    %v134 = vld [vmem:[%s5 + $0x28] sm:$0xff]
    %v135 = vld [vmem:[%s5 + $0x30] sm:$0xff]
    %v136 = vld [vmem:[%s5 + $0x38] sm:$0xff]
    %v137 = vpack.c.bf16 %v128, %v127
    %v138 = vld [vmem:[%s6] sm:$0x3]
    %v140 = vlaneseq
    %v141 = vshrl.u32 %v140, 7
    %v142 = vsub.s32 0, %v141
    %v143 = vrot.slane %v138, %v142
    %v144 = vlaneseq
    %v145 = vshrl.u32 %v144, 7
    %v146 = vsub.s32 1, %v145
    %v147 = vrot.slane %v138, %v146
    %v158 = vunpack.c.l.b16 %v129
    %v159 = vunpack.c.h.b16 %v129
    %v160 = vunpack.c.l.b16 %v130
    %v161 = vunpack.c.h.b16 %v130
    %v162 = vunpack.c.l.b16 %v131
    %v163 = vunpack.c.h.b16 %v131
    %v164 = vunpack.c.l.b16 %v132
    %v165 = vunpack.c.h.b16 %v132
    %v166 = vunpack.c.l.b16 %v133
    %v167 = vunpack.c.h.b16 %v133
    %v168 = vunpack.c.l.b16 %v134
    %v169 = vunpack.c.h.b16 %v134
    %v170 = vunpack.c.l.b16 %v135
    %v171 = vunpack.c.h.b16 %v135
    %v172 = vunpack.c.l.b16 %v136
    %v173 = vunpack.c.h.b16 %v136
    %v174 = vpack.c.b16 %v160, %v158
    %v175 = vpack.c.b16 %v161, %v159
    %v176 = vpack.c.b16 %v164, %v162
    %v177 = vpack.c.b16 %v165, %v163
    %v178 = vpack.c.b16 %v168, %v166
    %v179 = vpack.c.b16 %v169, %v167
    %v180 = vpack.c.b16 %v172, %v170
    %v181 = vpack.c.b16 %v173, %v171
    %v191 = vsel %vm85, %v137, 0
    %193 = vmatprep.subr.bf16.mxu0 0
    %194 = vmatpush1.bf16.msra.mxu0 0
    %195 = vmatprep.subr.bf16.mxu0 0
    %196 = vmatpush1.bf16.msra.mxu0 0
    %197 = vmatprep.subr.bf16.mxu0 0
    %198 = vmatpush1.bf16.msra.mxu0 0
    %199 = vmatprep.subr.bf16.mxu0 0
    %200 = vmatpush1.bf16.msra.mxu0 0
    %201 = vmatprep.subr.bf16.mxu0 %v181
    %202 = vmatpush1.bf16.msra.mxu0 %v180
    %203 = vmatprep.subr.bf16.mxu0 %v179
    %204 = vmatpush1.bf16.msra.mxu0 %v178
    %205 = vmatprep.subr.bf16.mxu0 %v177
    %206 = vmatpush1.bf16.msra.mxu0 %v176
    %207 = vmatprep.subr.bf16.mxu0 %v175
    %208 = vmatpush1.bf16.msra.mxu0 %v174
    %209 = vmatprep.subr.bf16.mxu0 0
    %210 = vmatpush2.bf16.msra.mxu0 0
    %211 = vmatprep.subr.bf16.mxu0 0
    %212 = vmatpush2.bf16.msra.mxu0 0
    %213 = vmatprep.subr.bf16.mxu0 0
    %214 = vmatpush2.bf16.msra.mxu0 0
    %215 = vmatprep.subr.bf16.mxu0 0
    %216 = vmatpush2.bf16.msra.mxu0 0
    %217 = vmatprep.subr.bf16.mxu0 0
    %218 = vmatpush2.bf16.msra.mxu0 0
    %219 = vmatprep.subr.bf16.mxu0 0
    %220 = vmatpush2.bf16.msra.mxu0 0
    %221 = vmatprep.subr.bf16.mxu0 0
    %222 = vmatpush2.bf16.msra.mxu0 0
    %223 = vmatprep.subr.bf16.mxu0 0
    %224 = vmatpush2.bf16.msra.mxu0 0
    %225 = vmatprep.mubr.bf16.mxu0 0
    %226 = vmatmul.mubr.bf16.gmra.mxu0 %v191
    %v227 = vpop.f32.mrf.mxu0
    %v228 = vadd.f32 %v143, %v227
    %v229 = vpop.f32.mrf.mxu0
    %v230 = vadd.f32 %v147, %v229
    %v231 = vpop.f32.mrf.mxu0
    %v232 = vadd.f32 %v143, %v231
    %v233 = vpop.f32.mrf.mxu0
    %v234 = vadd.f32 %v147, %v233
    %235 = vdwg.mxu0
    %v236 = vmul.f32 %v228, 0.17677669
    %v237 = vpack.c.bf16 %v236, %v236
    %v238 = vpack.c.bf16 %v228, %v228
    %240 = vrot.lane.b32.xlu0 %v238, 64
    %v241 = vpop.permute.xlu0 %240
    %vm242 = vcmask 261120
    %v244 = vsel %vm242, %v237, 0
    %v247 = vsel %vm242, %v241, 0
    %249 = vmatprep.subr.bf16.mxu0 0
    %250 = vmatpush1.bf16.xpose.msra.mxu0 0
    %251 = vmatprep.subr.bf16.mxu0 0
    %252 = vmatpush1.bf16.xpose.msra.mxu0 0
    %253 = vmatprep.subr.bf16.mxu0 0
    %254 = vmatpush1.bf16.xpose.msra.mxu0 0
    %255 = vmatprep.subr.bf16.mxu0 0
    %256 = vmatpush1.bf16.xpose.msra.mxu0 0
    %257 = vmatprep.subr.bf16.mxu0 0
    %258 = vmatpush1.bf16.xpose.msra.mxu0 0
    %259 = vmatprep.subr.bf16.mxu0 0
    %260 = vmatpush1.bf16.xpose.msra.mxu0 0
    %261 = vmatprep.subr.bf16.mxu0 0
    %262 = vmatpush1.bf16.xpose.msra.mxu0 0
    %263 = vmatprep.subr.bf16.mxu0 0
    %264 = vmatpush1.bf16.xpose.msra.mxu0 %v247
    %265 = vmatprep.subr.bf16.mxu0 0
    %266 = vmatpush2.bf16.xpose.msra.mxu0 0
    %267 = vmatprep.subr.bf16.mxu0 0
    %268 = vmatpush2.bf16.xpose.msra.mxu0 0
    %269 = vmatprep.subr.bf16.mxu0 0
    %270 = vmatpush2.bf16.xpose.msra.mxu0 0
    %271 = vmatprep.subr.bf16.mxu0 0
    %272 = vmatpush2.bf16.xpose.msra.mxu0 0
    %273 = vmatprep.subr.bf16.mxu0 0
    %274 = vmatpush2.bf16.xpose.msra.mxu0 0
    %275 = vmatprep.subr.bf16.mxu0 0
    %276 = vmatpush2.bf16.xpose.msra.mxu0 0
    %277 = vmatprep.subr.bf16.mxu0 0
    %278 = vmatpush2.bf16.xpose.msra.mxu0 0
    %279 = vmatprep.subr.bf16.mxu0 0
    %280 = vmatpush2.bf16.xpose.msra.mxu0 0
    %281 = vmatprep.mubr.bf16.mxu0 0
    %282 = vmatmul.mubr.bf16.gmra.mxu0 %v244
    %v283 = vpop.f32.mrf.mxu0
    %v284 = vadd.f32 %v82, %v283
    %v285 = vpop.f32.mrf.mxu0
    %v286 = vpop.f32.mrf.mxu0
    %v287 = vpop.f32.mrf.mxu0
    %288 = vdwg.mxu0
    %vm289 = vcmask 64512
    %v290 = vsel %vm289, %v284, -inf
    %291 = vmax.xlane.f32.xlu0 %v290
    %v292 = vpop.xlane.xlu0 %291
    %v293 = vsub.f32 %v284, %v292
    %v294 = vmul.f32 %v293, 1.442695
    %v295 = vpow.pop %v294
    %v296 = vsel %vm289, %v295, 0.0
    %297 = vadd.xlane.f32.xlu0 %v296
    %v298 = vpop.xlane.xlu0 %297
    %v299 = vrcp.pop %v298
    %v300 = vmul.f32 %v295, %v299
    %v301 = vpack.c.bf16 %v300, %v300
    %v302 = vpack.c.bf16 %v230, %v230
    %v304 = vsel %vm289, %v301, 0
    %vm306 = vcmask 1043456
    %v308 = vsel %vm306, %v302, 0
    %310 = vmatprep.subr.bf16.mxu0 0
    %311 = vmatpush1.bf16.msra.mxu0 0
    %312 = vmatprep.subr.bf16.mxu0 0
    %313 = vmatpush1.bf16.msra.mxu0 0
    %314 = vmatprep.subr.bf16.mxu0 0
    %315 = vmatpush1.bf16.msra.mxu0 0
    %316 = vmatprep.subr.bf16.mxu0 0
    %317 = vmatpush1.bf16.msra.mxu0 0
    %318 = vmatprep.subr.bf16.mxu0 0
    %319 = vmatpush1.bf16.msra.mxu0 0
    %320 = vmatprep.subr.bf16.mxu0 0
    %321 = vmatpush1.bf16.msra.mxu0 0
    %322 = vmatprep.subr.bf16.mxu0 0
    %323 = vmatpush1.bf16.msra.mxu0 0
    %324 = vmatprep.subr.bf16.mxu0 0
    %325 = vmatpush1.bf16.msra.mxu0 %v308
    %326 = vmatprep.subr.bf16.mxu0 0
    %327 = vmatpush2.bf16.msra.mxu0 0
    %328 = vmatprep.subr.bf16.mxu0 0
    %329 = vmatpush2.bf16.msra.mxu0 0
    %330 = vmatprep.subr.bf16.mxu0 0
    %331 = vmatpush2.bf16.msra.mxu0 0
    %332 = vmatprep.subr.bf16.mxu0 0
    %333 = vmatpush2.bf16.msra.mxu0 0
    %334 = vmatprep.subr.bf16.mxu0 0
    %335 = vmatpush2.bf16.msra.mxu0 0
    %336 = vmatprep.subr.bf16.mxu0 0
    %337 = vmatpush2.bf16.msra.mxu0 0
    %338 = vmatprep.subr.bf16.mxu0 0
    %339 = vmatpush2.bf16.msra.mxu0 0
    %340 = vmatprep.subr.bf16.mxu0 0
    %341 = vmatpush2.bf16.msra.mxu0 0
    %342 = vmatprep.mubr.bf16.mxu0 0
    %343 = vmatmul.mubr.bf16.gmra.mxu0 %v304
    %v344 = vpop.f32.mrf.mxu0
    %v345 = vadd.f32 0.0, %v344
    %v346 = vpop.f32.mrf.mxu0
    %v347 = vpop.f32.mrf.mxu0
    %v348 = vpop.f32.mrf.mxu0
    %349 = vdwg.mxu0
    %350 = vst.msk [vmem:[#allocation2] sm:$0xff] %vm242, %v345
    %352 = vrot.lane.b32.xlu0 %v237, 96
    %v353 = vpop.permute.xlu0 %352
    %354 = vrot.lane.b32.xlu0 %v238, 32
    %v355 = vpop.permute.xlu0 %354
    %v357 = vsel %vm242, %v353, 0
    %v360 = vsel %vm242, %v355, 0
    %362 = vmatprep.subr.bf16.mxu0 0
    %363 = vmatpush1.bf16.xpose.msra.mxu0 0
    %364 = vmatprep.subr.bf16.mxu0 0
    %365 = vmatpush1.bf16.xpose.msra.mxu0 0
    %366 = vmatprep.subr.bf16.mxu0 0
    %367 = vmatpush1.bf16.xpose.msra.mxu0 0
    %368 = vmatprep.subr.bf16.mxu0 0
    %369 = vmatpush1.bf16.xpose.msra.mxu0 0
    %370 = vmatprep.subr.bf16.mxu0 0
    %371 = vmatpush1.bf16.xpose.msra.mxu0 0
    %372 = vmatprep.subr.bf16.mxu0 0
    %373 = vmatpush1.bf16.xpose.msra.mxu0 0
    %374 = vmatprep.subr.bf16.mxu0 0
    %375 = vmatpush1.bf16.xpose.msra.mxu0 0
    %376 = vmatprep.subr.bf16.mxu0 0
    %377 = vmatpush1.bf16.xpose.msra.mxu0 %v360
    %378 = vmatprep.subr.bf16.mxu0 0
    %379 = vmatpush2.bf16.xpose.msra.mxu0 0
    %380 = vmatprep.subr.bf16.mxu0 0
    %381 = vmatpush2.bf16.xpose.msra.mxu0 0
    %382 = vmatprep.subr.bf16.mxu0 0
    %383 = vmatpush2.bf16.xpose.msra.mxu0 0
    %384 = vmatprep.subr.bf16.mxu0 0
    %385 = vmatpush2.bf16.xpose.msra.mxu0 0
    %386 = vmatprep.subr.bf16.mxu0 0
    %387 = vmatpush2.bf16.xpose.msra.mxu0 0
    %388 = vmatprep.subr.bf16.mxu0 0
    %389 = vmatpush2.bf16.xpose.msra.mxu0 0
    %390 = vmatprep.subr.bf16.mxu0 0
    %391 = vmatpush2.bf16.xpose.msra.mxu0 0
    %392 = vmatprep.subr.bf16.mxu0 0
    %393 = vmatpush2.bf16.xpose.msra.mxu0 0
    %394 = vmatprep.mubr.bf16.mxu0 0
    %395 = vmatmul.mubr.bf16.gmra.mxu0 %v357
    %v396 = vpop.f32.mrf.mxu0
    %v397 = vadd.f32 %v82, %v396
    %v398 = vpop.f32.mrf.mxu0
    %v399 = vpop.f32.mrf.mxu0
    %v400 = vpop.f32.mrf.mxu0
    %401 = vdwg.mxu0
    %v402 = vsel %vm289, %v397, -inf
    %403 = vmax.xlane.f32.xlu0 %v402
    %v404 = vpop.xlane.xlu0 %403
    %v405 = vsub.f32 %v397, %v404
    %v406 = vmul.f32 %v405, 1.442695
    %v407 = vpow.pop %v406
    %v408 = vsel %vm289, %v407, 0.0
    %409 = vadd.xlane.f32.xlu0 %v408
    %v410 = vpop.xlane.xlu0 %409
    %v411 = vrcp.pop %v410
    %v412 = vmul.f32 %v407, %v411
    %v413 = vpack.c.bf16 %v412, %v412
    %415 = vrot.lane.b32.xlu0 %v302, 96
    %v416 = vpop.permute.xlu0 %415
    %v418 = vsel %vm289, %v413, 0
    %v421 = vsel %vm306, %v416, 0
    %423 = vmatprep.subr.bf16.mxu0 0
    %424 = vmatpush1.bf16.msra.mxu0 0
    %425 = vmatprep.subr.bf16.mxu0 0
    %426 = vmatpush1.bf16.msra.mxu0 0
    %427 = vmatprep.subr.bf16.mxu0 0
    %428 = vmatpush1.bf16.msra.mxu0 0
    %429 = vmatprep.subr.bf16.mxu0 0
    %430 = vmatpush1.bf16.msra.mxu0 0
    %431 = vmatprep.subr.bf16.mxu0 0
    %432 = vmatpush1.bf16.msra.mxu0 0
    %433 = vmatprep.subr.bf16.mxu0 0
    %434 = vmatpush1.bf16.msra.mxu0 0
    %435 = vmatprep.subr.bf16.mxu0 0
    %436 = vmatpush1.bf16.msra.mxu0 0
    %437 = vmatprep.subr.bf16.mxu0 0
    %438 = vmatpush1.bf16.msra.mxu0 %v421
    %439 = vmatprep.subr.bf16.mxu0 0
    %440 = vmatpush2.bf16.msra.mxu0 0
    %441 = vmatprep.subr.bf16.mxu0 0
    %442 = vmatpush2.bf16.msra.mxu0 0
    %443 = vmatprep.subr.bf16.mxu0 0
    %444 = vmatpush2.bf16.msra.mxu0 0
    %445 = vmatprep.subr.bf16.mxu0 0
    %446 = vmatpush2.bf16.msra.mxu0 0
    %447 = vmatprep.subr.bf16.mxu0 0
    %448 = vmatpush2.bf16.msra.mxu0 0
    %449 = vmatprep.subr.bf16.mxu0 0
    %450 = vmatpush2.bf16.msra.mxu0 0
    %451 = vmatprep.subr.bf16.mxu0 0
    %452 = vmatpush2.bf16.msra.mxu0 0
    %453 = vmatprep.subr.bf16.mxu0 0
    %454 = vmatpush2.bf16.msra.mxu0 0
    %455 = vmatprep.mubr.bf16.mxu0 0
    %456 = vmatmul.mubr.bf16.gmra.mxu0 %v418
    %v457 = vpop.f32.mrf.mxu0
    %v458 = vadd.f32 0.0, %v457
    %v459 = vpop.f32.mrf.mxu0
    %v460 = vpop.f32.mrf.mxu0
    %v461 = vpop.f32.mrf.mxu0
    %462 = vdwg.mxu0
    %464 = vrot.lane.b32.xlu0 %v458, 32
    %v465 = vpop.permute.xlu0 %464
    %vm467 = vcmask 523520
    %468 = vst.msk [vmem:[#allocation2] sm:$0xff] %vm467, %v465
    %v469 = vmul.f32 %v232, 0.17677669
    %v470 = vpack.c.bf16 %v469, %v469
    %v471 = vpack.c.bf16 %v232, %v232
    %473 = vrot.lane.b32.xlu0 %v471, 64
    %v474 = vpop.permute.xlu0 %473
    %v476 = vsel %vm242, %v470, 0
    %v479 = vsel %vm242, %v474, 0
    %481 = vmatprep.subr.bf16.mxu0 0
    %482 = vmatpush1.bf16.xpose.msra.mxu0 0
    %483 = vmatprep.subr.bf16.mxu0 0
    %484 = vmatpush1.bf16.xpose.msra.mxu0 0
    %485 = vmatprep.subr.bf16.mxu0 0
    %486 = vmatpush1.bf16.xpose.msra.mxu0 0
    %487 = vmatprep.subr.bf16.mxu0 0
    %488 = vmatpush1.bf16.xpose.msra.mxu0 0
    %489 = vmatprep.subr.bf16.mxu0 0
    %490 = vmatpush1.bf16.xpose.msra.mxu0 0
    %491 = vmatprep.subr.bf16.mxu0 0
    %492 = vmatpush1.bf16.xpose.msra.mxu0 0
    %493 = vmatprep.subr.bf16.mxu0 0
    %494 = vmatpush1.bf16.xpose.msra.mxu0 0
    %495 = vmatprep.subr.bf16.mxu0 0
    %496 = vmatpush1.bf16.xpose.msra.mxu0 %v479
    %497 = vmatprep.subr.bf16.mxu0 0
    %498 = vmatpush2.bf16.xpose.msra.mxu0 0
    %499 = vmatprep.subr.bf16.mxu0 0
    %500 = vmatpush2.bf16.xpose.msra.mxu0 0
    %501 = vmatprep.subr.bf16.mxu0 0
    %502 = vmatpush2.bf16.xpose.msra.mxu0 0
    %503 = vmatprep.subr.bf16.mxu0 0
    %504 = vmatpush2.bf16.xpose.msra.mxu0 0
    %505 = vmatprep.subr.bf16.mxu0 0
    %506 = vmatpush2.bf16.xpose.msra.mxu0 0
    %507 = vmatprep.subr.bf16.mxu0 0
    %508 = vmatpush2.bf16.xpose.msra.mxu0 0
    %509 = vmatprep.subr.bf16.mxu0 0
    %510 = vmatpush2.bf16.xpose.msra.mxu0 0
    %511 = vmatprep.subr.bf16.mxu0 0
    %512 = vmatpush2.bf16.xpose.msra.mxu0 0
    %513 = vmatprep.mubr.bf16.mxu0 0
    %514 = vmatmul.mubr.bf16.gmra.mxu0 %v476
    %v515 = vpop.f32.mrf.mxu0
    %v516 = vadd.f32 %v82, %v515
    %v517 = vpop.f32.mrf.mxu0
    %v518 = vpop.f32.mrf.mxu0
    %v519 = vpop.f32.mrf.mxu0
    %520 = vdwg.mxu0
    %v521 = vsel %vm289, %v516, -inf
    %522 = vmax.xlane.f32.xlu0 %v521
    %v523 = vpop.xlane.xlu0 %522
    %v524 = vsub.f32 %v516, %v523
    %v525 = vmul.f32 %v524, 1.442695
    %v526 = vpow.pop %v525
    %v527 = vsel %vm289, %v526, 0.0
    %528 = vadd.xlane.f32.xlu0 %v527
    %v529 = vpop.xlane.xlu0 %528
    %v530 = vrcp.pop %v529
    %v531 = vmul.f32 %v526, %v530
    %v532 = vpack.c.bf16 %v531, %v531
    %v533 = vpack.c.bf16 %v234, %v234
    %v535 = vsel %vm289, %v532, 0
    %v538 = vsel %vm306, %v533, 0
    %540 = vmatprep.subr.bf16.mxu0 0
    %541 = vmatpush1.bf16.msra.mxu0 0
    %542 = vmatprep.subr.bf16.mxu0 0
    %543 = vmatpush1.bf16.msra.mxu0 0
    %544 = vmatprep.subr.bf16.mxu0 0
    %545 = vmatpush1.bf16.msra.mxu0 0
    %546 = vmatprep.subr.bf16.mxu0 0
    %547 = vmatpush1.bf16.msra.mxu0 0
    %548 = vmatprep.subr.bf16.mxu0 0
    %549 = vmatpush1.bf16.msra.mxu0 0
    %550 = vmatprep.subr.bf16.mxu0 0
    %551 = vmatpush1.bf16.msra.mxu0 0
    %552 = vmatprep.subr.bf16.mxu0 0
    %553 = vmatpush1.bf16.msra.mxu0 0
    %554 = vmatprep.subr.bf16.mxu0 0
    %555 = vmatpush1.bf16.msra.mxu0 %v538
    %556 = vmatprep.subr.bf16.mxu0 0
    %557 = vmatpush2.bf16.msra.mxu0 0
    %558 = vmatprep.subr.bf16.mxu0 0
    %559 = vmatpush2.bf16.msra.mxu0 0
    %560 = vmatprep.subr.bf16.mxu0 0
    %561 = vmatpush2.bf16.msra.mxu0 0
    %562 = vmatprep.subr.bf16.mxu0 0
    %563 = vmatpush2.bf16.msra.mxu0 0
    %564 = vmatprep.subr.bf16.mxu0 0
    %565 = vmatpush2.bf16.msra.mxu0 0
    %566 = vmatprep.subr.bf16.mxu0 0
    %567 = vmatpush2.bf16.msra.mxu0 0
    %568 = vmatprep.subr.bf16.mxu0 0
    %569 = vmatpush2.bf16.msra.mxu0 0
    %570 = vmatprep.subr.bf16.mxu0 0
    %571 = vmatpush2.bf16.msra.mxu0 0
    %572 = vmatprep.mubr.bf16.mxu0 0
    %573 = vmatmul.mubr.bf16.gmra.mxu0 %v535
    %v574 = vpop.f32.mrf.mxu0
    %v575 = vadd.f32 0.0, %v574
    %v576 = vpop.f32.mrf.mxu0
    %v577 = vpop.f32.mrf.mxu0
    %v578 = vpop.f32.mrf.mxu0
    %579 = vdwg.mxu0
    %580 = vst.msk [vmem:[#allocation2 + $0x8] sm:$0xff] %vm242, %v575
    %582 = vrot.lane.b32.xlu0 %v470, 96
    %v583 = vpop.permute.xlu0 %582
    %584 = vrot.lane.b32.xlu0 %v471, 32
    %v585 = vpop.permute.xlu0 %584
    %v587 = vsel %vm242, %v583, 0
    %v590 = vsel %vm242, %v585, 0
    %592 = vmatprep.subr.bf16.mxu0 0
    %593 = vmatpush1.bf16.xpose.msra.mxu0 0
    %594 = vmatprep.subr.bf16.mxu0 0
    %595 = vmatpush1.bf16.xpose.msra.mxu0 0
    %596 = vmatprep.subr.bf16.mxu0 0
    %597 = vmatpush1.bf16.xpose.msra.mxu0 0
    %598 = vmatprep.subr.bf16.mxu0 0
    %599 = vmatpush1.bf16.xpose.msra.mxu0 0
    %600 = vmatprep.subr.bf16.mxu0 0
    %601 = vmatpush1.bf16.xpose.msra.mxu0 0
    %602 = vmatprep.subr.bf16.mxu0 0
    %603 = vmatpush1.bf16.xpose.msra.mxu0 0
    %604 = vmatprep.subr.bf16.mxu0 0
    %605 = vmatpush1.bf16.xpose.msra.mxu0 0
    %606 = vmatprep.subr.bf16.mxu0 0
    %607 = vmatpush1.bf16.xpose.msra.mxu0 %v590
    %608 = vmatprep.subr.bf16.mxu0 0
    %609 = vmatpush2.bf16.xpose.msra.mxu0 0
    %610 = vmatprep.subr.bf16.mxu0 0
    %611 = vmatpush2.bf16.xpose.msra.mxu0 0
    %612 = vmatprep.subr.bf16.mxu0 0
    %613 = vmatpush2.bf16.xpose.msra.mxu0 0
    %614 = vmatprep.subr.bf16.mxu0 0
    %615 = vmatpush2.bf16.xpose.msra.mxu0 0
    %616 = vmatprep.subr.bf16.mxu0 0
    %617 = vmatpush2.bf16.xpose.msra.mxu0 0
    %618 = vmatprep.subr.bf16.mxu0 0
    %619 = vmatpush2.bf16.xpose.msra.mxu0 0
    %620 = vmatprep.subr.bf16.mxu0 0
    %621 = vmatpush2.bf16.xpose.msra.mxu0 0
    %622 = vmatprep.subr.bf16.mxu0 0
    %623 = vmatpush2.bf16.xpose.msra.mxu0 0
    %624 = vmatprep.mubr.bf16.mxu0 0
    %625 = vmatmul.mubr.bf16.gmra.mxu0 %v587
    %v626 = vpop.f32.mrf.mxu0
    %v627 = vadd.f32 %v82, %v626
    %v628 = vpop.f32.mrf.mxu0
    %v629 = vpop.f32.mrf.mxu0
    %v630 = vpop.f32.mrf.mxu0
    %631 = vdwg.mxu0
    %v632 = vsel %vm289, %v627, -inf
    %633 = vmax.xlane.f32.xlu0 %v632
    %v634 = vpop.xlane.xlu0 %633
    %v635 = vsub.f32 %v627, %v634
    %v636 = vmul.f32 %v635, 1.442695
    %v637 = vpow.pop %v636
    %v638 = vsel %vm289, %v637, 0.0
    %639 = vadd.xlane.f32.xlu0 %v638
    %v640 = vpop.xlane.xlu0 %639
    %v641 = vrcp.pop %v640
    %v642 = vmul.f32 %v637, %v641
    %v643 = vpack.c.bf16 %v642, %v642
    %645 = vrot.lane.b32.xlu0 %v533, 96
    %v646 = vpop.permute.xlu0 %645
    %v648 = vsel %vm289, %v643, 0
    %v651 = vsel %vm306, %v646, 0
    %653 = vmatprep.subr.bf16.mxu0 0
    %654 = vmatpush1.bf16.msra.mxu0 0
    %655 = vmatprep.subr.bf16.mxu0 0
    %656 = vmatpush1.bf16.msra.mxu0 0
    %657 = vmatprep.subr.bf16.mxu0 0
    %658 = vmatpush1.bf16.msra.mxu0 0
    %659 = vmatprep.subr.bf16.mxu0 0
    %660 = vmatpush1.bf16.msra.mxu0 0
    %661 = vmatprep.subr.bf16.mxu0 0
    %662 = vmatpush1.bf16.msra.mxu0 0
    %663 = vmatprep.subr.bf16.mxu0 0
    %664 = vmatpush1.bf16.msra.mxu0 0
    %665 = vmatprep.subr.bf16.mxu0 0
    %666 = vmatpush1.bf16.msra.mxu0 0
    %667 = vmatprep.subr.bf16.mxu0 0
    %668 = vmatpush1.bf16.msra.mxu0 %v651
    %669 = vmatprep.subr.bf16.mxu0 0
    %670 = vmatpush2.bf16.msra.mxu0 0
    %671 = vmatprep.subr.bf16.mxu0 0
    %672 = vmatpush2.bf16.msra.mxu0 0
    %673 = vmatprep.subr.bf16.mxu0 0
    %674 = vmatpush2.bf16.msra.mxu0 0
    %675 = vmatprep.subr.bf16.mxu0 0
    %676 = vmatpush2.bf16.msra.mxu0 0
    %677 = vmatprep.subr.bf16.mxu0 0
    %678 = vmatpush2.bf16.msra.mxu0 0
    %679 = vmatprep.subr.bf16.mxu0 0
    %680 = vmatpush2.bf16.msra.mxu0 0
    %681 = vmatprep.subr.bf16.mxu0 0
    %682 = vmatpush2.bf16.msra.mxu0 0
    %683 = vmatprep.subr.bf16.mxu0 0
    %684 = vmatpush2.bf16.msra.mxu0 0
    %685 = vmatprep.mubr.bf16.mxu0 0
    %686 = vmatmul.mubr.bf16.gmra.mxu0 %v648
    %v687 = vpop.f32.mrf.mxu0
    %v688 = vadd.f32 0.0, %v687
    %v689 = vpop.f32.mrf.mxu0
    %v690 = vpop.f32.mrf.mxu0
    %v691 = vpop.f32.mrf.mxu0
    %692 = vdwg.mxu0
    %694 = vrot.lane.b32.xlu0 %v688, 32
    %v695 = vpop.permute.xlu0 %694
    %697 = vst.msk [vmem:[#allocation2 + $0x8] sm:$0xff] %vm467, %v695
    %v698 = vld [vmem:[#allocation2] sm:$0xff]
    %v699 = vld [vmem:[#allocation2 + $0x8] sm:$0xff]
    %v700 = vld [vmem:[%s7] sm:$0xf]
    %v701 = vld [vmem:[%s7 + $0x4] sm:$0xf]
    %v702 = vld [vmem:[%s7 + $0x8] sm:$0xf]
    %v703 = vld [vmem:[%s7 + $0xc] sm:$0xf]
    %v704 = vld [vmem:[%s7 + $0x10] sm:$0xf]
    %v705 = vld [vmem:[%s7 + $0x14] sm:$0xf]
    %v706 = vld [vmem:[%s7 + $0x18] sm:$0xf]
    %v707 = vld [vmem:[%s7 + $0x1c] sm:$0xf]
    %v708 = vpack.c.bf16 %v699, %v698
    %v717 = vunpack.c.l.b16 %v700
    %v718 = vunpack.c.l.b16 %v701
    %v719 = vunpack.c.l.b16 %v702
    %v720 = vunpack.c.l.b16 %v703
    %v721 = vunpack.c.l.b16 %v704
    %v722 = vunpack.c.l.b16 %v705
    %v723 = vunpack.c.l.b16 %v706
    %v724 = vunpack.c.l.b16 %v707
    %v725 = vpack.c.b16 %v718, %v717
    %v726 = vpack.c.b16 %v720, %v719
    %v727 = vpack.c.b16 %v722, %v721
    %v728 = vpack.c.b16 %v724, %v723
    %v734 = vsel %vm85, %v708, 0
    %736 = vmatprep.subr.bf16.mxu0 0
    %737 = vmatpush1.bf16.msra.mxu0 0
    %738 = vmatprep.subr.bf16.mxu0 0
    %739 = vmatpush1.bf16.msra.mxu0 0
    %740 = vmatprep.subr.bf16.mxu0 0
    %741 = vmatpush1.bf16.msra.mxu0 0
    %742 = vmatprep.subr.bf16.mxu0 0
    %743 = vmatpush1.bf16.msra.mxu0 0
    %744 = vmatprep.subr.bf16.mxu0 0
    %745 = vmatpush1.bf16.msra.mxu0 %v728
    %746 = vmatprep.subr.bf16.mxu0 0
    %747 = vmatpush1.bf16.msra.mxu0 %v727
    %748 = vmatprep.subr.bf16.mxu0 0
    %749 = vmatpush1.bf16.msra.mxu0 %v726
    %750 = vmatprep.subr.bf16.mxu0 0
    %751 = vmatpush1.bf16.msra.mxu0 %v725
    %752 = vmatprep.subr.bf16.mxu0 0
    %753 = vmatpush2.bf16.msra.mxu0 0
    %754 = vmatprep.subr.bf16.mxu0 0
    %755 = vmatpush2.bf16.msra.mxu0 0
    %756 = vmatprep.subr.bf16.mxu0 0
    %757 = vmatpush2.bf16.msra.mxu0 0
    %758 = vmatprep.subr.bf16.mxu0 0
    %759 = vmatpush2.bf16.msra.mxu0 0
    %760 = vmatprep.subr.bf16.mxu0 0
    %761 = vmatpush2.bf16.msra.mxu0 0
    %762 = vmatprep.subr.bf16.mxu0 0
    %763 = vmatpush2.bf16.msra.mxu0 0
    %764 = vmatprep.subr.bf16.mxu0 0
    %765 = vmatpush2.bf16.msra.mxu0 0
    %766 = vmatprep.subr.bf16.mxu0 0
    %767 = vmatpush2.bf16.msra.mxu0 0
    %768 = vmatprep.mubr.bf16.mxu0 0
    %769 = vmatmul.mubr.bf16.gmra.mxu0 %v734
    %v770 = vpop.f32.mrf.mxu0
    %v771 = vadd.f32 0.0, %v770
    %v772 = vpop.f32.mrf.mxu0
    %v773 = vpop.f32.mrf.mxu0
    %v774 = vadd.f32 0.0, %v773
    %v775 = vpop.f32.mrf.mxu0
    %776 = vdwg.mxu0
    %v777 = vadd.f32 %v80, %v771
    %v778 = vadd.f32 %v81, %v774
    %v779 = vld [vmem:[%s8] sm:$0x1]
    %v781 = vlaneseq
    %v782 = vshrl.u32 %v781, 7
    %v783 = vsub.s32 0, %v782
    %v784 = vrot.slane %v779, %v783
    %v786 = vadd.f32 %v777, %v784
    %v787 = vadd.f32 %v778, %v784
    %v788 = vld [vmem:[%s9] sm:$0x1]
    %v789 = vld [vmem:[%s10] sm:$0x1]
    %v790 = vsel %vm85, %v786, 0.0
    %791 = vadd.xlane.f32.xlu0 %v790
    %v792 = vpop.xlane.xlu0 %791
    %v793 = vsel %vm85, %v787, 0.0
    %794 = vadd.xlane.f32.xlu0 %v793
    %v795 = vpop.xlane.xlu0 %794
    %v796 = vmul.f32 %v792, %v92
    %v797 = vmul.f32 %v795, %v92
    %v798 = vsub.f32 %v786, %v796
    %v799 = vsub.f32 %v787, %v797
    %v800 = vmul.f32 %v798, %v798
    %v801 = vmul.f32 %v799, %v799
    %v802 = vsel %vm85, %v800, 0.0
    %803 = vadd.xlane.f32.xlu0 %v802
    %v804 = vpop.xlane.xlu0 %803
    %v805 = vsel %vm85, %v801, 0.0
    %806 = vadd.xlane.f32.xlu0 %v805
    %v807 = vpop.xlane.xlu0 %806
    %v808 = vmul.f32 %v804, %v92
    %v809 = vmul.f32 %v807, %v92
    %v810 = vadd.f32 %v808, 1e-05
    %v811 = vadd.f32 %v809, 1e-05
    %v812 = vrsqrt.pop %v810
    %v813 = vrsqrt.pop %v811
    %v814 = vmul.f32 %v798, %v812
    %v815 = vmul.f32 %v799, %v813
    %v817 = vlaneseq
    %v818 = vshrl.u32 %v817, 7
    %v819 = vsub.s32 0, %v818
    %v820 = vrot.slane %v788, %v819
    %v822 = vmul.f32 %v814, %v820
    %v823 = vmul.f32 %v815, %v820
    %v825 = vlaneseq
    %v826 = vshrl.u32 %v825, 7
    %v827 = vsub.s32 0, %v826
    %v828 = vrot.slane %v789, %v827
    %v830 = vadd.f32 %v822, %v828
    %v831 = vadd.f32 %v823, %v828
    %v832 = vld [vmem:[%s11] sm:$0xff]
    %v833 = vld [vmem:[%s11 + $0x8] sm:$0xff]
    %v834 = vld [vmem:[%s11 + $0x10] sm:$0xff]
    %v835 = vld [vmem:[%s11 + $0x18] sm:$0xff]
    %v836 = vld [vmem:[%s11 + $0x20] sm:$0xff]
    %v837 = vld [vmem:[%s11 + $0x28] sm:$0xff]
    %v838 = vld [vmem:[%s11 + $0x30] sm:$0xff]
    %v839 = vld [vmem:[%s11 + $0x38] sm:$0xff]
    %v840 = vpack.c.bf16 %v831, %v830
    %v841 = vld [vmem:[%s12] sm:$0x3]
    %v843 = vlaneseq
    %v844 = vshrl.u32 %v843, 7
    %v845 = vsub.s32 0, %v844
    %v846 = vrot.slane %v841, %v845
    %v847 = vlaneseq
    %v848 = vshrl.u32 %v847, 7
    %v849 = vsub.s32 1, %v848
    %v850 = vrot.slane %v841, %v849
    %v861 = vunpack.c.l.b16 %v832
    %v862 = vunpack.c.h.b16 %v832
    %v863 = vunpack.c.l.b16 %v833
    %v864 = vunpack.c.h.b16 %v833
    %v865 = vunpack.c.l.b16 %v834
    %v866 = vunpack.c.h.b16 %v834
    %v867 = vunpack.c.l.b16 %v835
    %v868 = vunpack.c.h.b16 %v835
    %v869 = vunpack.c.l.b16 %v836
    %v870 = vunpack.c.h.b16 %v836
    %v871 = vunpack.c.l.b16 %v837
    %v872 = vunpack.c.h.b16 %v837
    %v873 = vunpack.c.l.b16 %v838
    %v874 = vunpack.c.h.b16 %v838
    %v875 = vunpack.c.l.b16 %v839
    %v876 = vunpack.c.h.b16 %v839
    %v877 = vpack.c.b16 %v863, %v861
    %v878 = vpack.c.b16 %v864, %v862
    %v879 = vpack.c.b16 %v867, %v865
    %v880 = vpack.c.b16 %v868, %v866
    %v881 = vpack.c.b16 %v871, %v869
    %v882 = vpack.c.b16 %v872, %v870
    %v883 = vpack.c.b16 %v875, %v873
    %v884 = vpack.c.b16 %v876, %v874
    %v894 = vsel %vm85, %v840, 0
    %896 = vmatprep.subr.bf16.mxu0 0
    %897 = vmatpush1.bf16.msra.mxu0 0
    %898 = vmatprep.subr.bf16.mxu0 0
    %899 = vmatpush1.bf16.msra.mxu0 0
    %900 = vmatprep.subr.bf16.mxu0 0
    %901 = vmatpush1.bf16.msra.mxu0 0
    %902 = vmatprep.subr.bf16.mxu0 0
    %903 = vmatpush1.bf16.msra.mxu0 0
    %904 = vmatprep.subr.bf16.mxu0 %v884
    %905 = vmatpush1.bf16.msra.mxu0 %v883
    %906 = vmatprep.subr.bf16.mxu0 %v882
    %907 = vmatpush1.bf16.msra.mxu0 %v881
    %908 = vmatprep.subr.bf16.mxu0 %v880
    %909 = vmatpush1.bf16.msra.mxu0 %v879
    %910 = vmatprep.subr.bf16.mxu0 %v878
    %911 = vmatpush1.bf16.msra.mxu0 %v877
    %912 = vmatprep.subr.bf16.mxu0 0
    %913 = vmatpush2.bf16.msra.mxu0 0
    %914 = vmatprep.subr.bf16.mxu0 0
    %915 = vmatpush2.bf16.msra.mxu0 0
    %916 = vmatprep.subr.bf16.mxu0 0
    %917 = vmatpush2.bf16.msra.mxu0 0
    %918 = vmatprep.subr.bf16.mxu0 0
    %919 = vmatpush2.bf16.msra.mxu0 0
    %920 = vmatprep.subr.bf16.mxu0 0
    %921 = vmatpush2.bf16.msra.mxu0 0
    %922 = vmatprep.subr.bf16.mxu0 0
    %923 = vmatpush2.bf16.msra.mxu0 0
    %924 = vmatprep.subr.bf16.mxu0 0
    %925 = vmatpush2.bf16.msra.mxu0 0
    %926 = vmatprep.subr.bf16.mxu0 0
    %927 = vmatpush2.bf16.msra.mxu0 0
    %928 = vmatprep.mubr.bf16.mxu0 0
    %929 = vmatmul.mubr.bf16.gmra.mxu0 %v894
    %v930 = vpop.f32.mrf.mxu0
    %v931 = vadd.f32 %v846, %v930
    %v932 = vpop.f32.mrf.mxu0
    %v933 = vadd.f32 %v850, %v932
    %v934 = vpop.f32.mrf.mxu0
    %v935 = vadd.f32 %v846, %v934
    %v936 = vpop.f32.mrf.mxu0
    %v937 = vadd.f32 %v850, %v936
    %938 = vdwg.mxu0
    %v939 = vmul.f32 %v931, 1.702
    %v940 = vmul.f32 %v933, 1.702
    %v941 = vmul.f32 %v935, 1.702
    %v942 = vmul.f32 %v937, 1.702
    %v943 = vxor.u32 %v939, 2147483648
    %v944 = vxor.u32 %v940, 2147483648
    %v945 = vxor.u32 %v941, 2147483648
    %v946 = vxor.u32 %v942, 2147483648
    %v947 = vmul.f32 %v943, 1.442695
    %v948 = vpow.pop %v947
    %v949 = vmul.f32 %v944, 1.442695
    %v950 = vpow.pop %v949
    %v951 = vmul.f32 %v945, 1.442695
    %v952 = vpow.pop %v951
    %v953 = vmul.f32 %v946, 1.442695
    %v954 = vpow.pop %v953
    %v955 = vadd.f32 %v948, 1.0
    %v956 = vadd.f32 %v950, 1.0
    %v957 = vadd.f32 %v952, 1.0
    %v958 = vadd.f32 %v954, 1.0
    %v959 = vrcp.pop %v955
    %v960 = vmul.f32 1.0, %v959
    %v961 = vrcp.pop %v956
    %v962 = vmul.f32 1.0, %v961
    %v963 = vrcp.pop %v957
    %v964 = vmul.f32 1.0, %v963
    %v965 = vrcp.pop %v958
    %v966 = vmul.f32 1.0, %v965
    %v967 = vmul.f32 %v931, %v960
    %v968 = vmul.f32 %v933, %v962
    %v969 = vmul.f32 %v935, %v964
    %v970 = vmul.f32 %v937, %v966
    %v971 = vld [vmem:[%s13] sm:$0xf]
    %v972 = vld [vmem:[%s13 + $0x4] sm:$0xf]
    %v973 = vld [vmem:[%s13 + $0x8] sm:$0xf]
    %v974 = vld [vmem:[%s13 + $0xc] sm:$0xf]
    %v975 = vld [vmem:[%s13 + $0x10] sm:$0xf]
    %v976 = vld [vmem:[%s13 + $0x14] sm:$0xf]
    %v977 = vld [vmem:[%s13 + $0x18] sm:$0xf]
    %v978 = vld [vmem:[%s13 + $0x1c] sm:$0xf]
    %v979 = vld [vmem:[%s13 + $0x20] sm:$0xf]
    %v980 = vld [vmem:[%s13 + $0x24] sm:$0xf]
    %v981 = vld [vmem:[%s13 + $0x28] sm:$0xf]
    %v982 = vld [vmem:[%s13 + $0x2c] sm:$0xf]
    %v983 = vld [vmem:[%s13 + $0x30] sm:$0xf]
    %v984 = vld [vmem:[%s13 + $0x34] sm:$0xf]
    %v985 = vld [vmem:[%s13 + $0x38] sm:$0xf]
    %v986 = vld [vmem:[%s13 + $0x3c] sm:$0xf]
    %v987 = vld [vmem:[%s13 + $0x40] sm:$0xf]
    %v988 = vld [vmem:[%s13 + $0x44] sm:$0xf]
    %v989 = vld [vmem:[%s13 + $0x48] sm:$0xf]
    %v990 = vld [vmem:[%s13 + $0x4c] sm:$0xf]
    %v991 = vld [vmem:[%s13 + $0x50] sm:$0xf]
    %v992 = vld [vmem:[%s13 + $0x54] sm:$0xf]
    %v993 = vld [vmem:[%s13 + $0x58] sm:$0xf]
    %v994 = vld [vmem:[%s13 + $0x5c] sm:$0xf]
    %v995 = vld [vmem:[%s13 + $0x60] sm:$0xf]
    %v996 = vld [vmem:[%s13 + $0x64] sm:$0xf]
    %v997 = vld [vmem:[%s13 + $0x68] sm:$0xf]
    %v998 = vld [vmem:[%s13 + $0x6c] sm:$0xf]
    %v999 = vld [vmem:[%s13 + $0x70] sm:$0xf]
    %v1000 = vld [vmem:[%s13 + $0x74] sm:$0xf]
    %v1001 = vld [vmem:[%s13 + $0x78] sm:$0xf]
    %v1002 = vld [vmem:[%s13 + $0x7c] sm:$0xf]
    %v1003 = vpack.c.bf16 %v969, %v967
    %v1004 = vpack.c.bf16 %v970, %v968
    %v1037 = vunpack.c.l.b16 %v971
    %v1038 = vunpack.c.l.b16 %v972
    %v1039 = vunpack.c.l.b16 %v973
    %v1040 = vunpack.c.l.b16 %v974
    %v1041 = vunpack.c.l.b16 %v975
    %v1042 = vunpack.c.l.b16 %v976
    %v1043 = vunpack.c.l.b16 %v977
    %v1044 = vunpack.c.l.b16 %v978
    %v1045 = vunpack.c.l.b16 %v979
    %v1046 = vunpack.c.l.b16 %v980
    %v1047 = vunpack.c.l.b16 %v981
    %v1048 = vunpack.c.l.b16 %v982
    %v1049 = vunpack.c.l.b16 %v983
    %v1050 = vunpack.c.l.b16 %v984
    %v1051 = vunpack.c.l.b16 %v985
    %v1052 = vunpack.c.l.b16 %v986
    %v1053 = vunpack.c.l.b16 %v987
    %v1054 = vunpack.c.l.b16 %v988
    %v1055 = vunpack.c.l.b16 %v989
    %v1056 = vunpack.c.l.b16 %v990
    %v1057 = vunpack.c.l.b16 %v991
    %v1058 = vunpack.c.l.b16 %v992
    %v1059 = vunpack.c.l.b16 %v993
    %v1060 = vunpack.c.l.b16 %v994
    %v1061 = vunpack.c.l.b16 %v995
    %v1062 = vunpack.c.l.b16 %v996
    %v1063 = vunpack.c.l.b16 %v997
    %v1064 = vunpack.c.l.b16 %v998
    %v1065 = vunpack.c.l.b16 %v999
    %v1066 = vunpack.c.l.b16 %v1000
    %v1067 = vunpack.c.l.b16 %v1001
    %v1068 = vunpack.c.l.b16 %v1002
    %v1069 = vpack.c.b16 %v1038, %v1037
    %v1070 = vpack.c.b16 %v1040, %v1039
    %v1071 = vpack.c.b16 %v1042, %v1041
    %v1072 = vpack.c.b16 %v1044, %v1043
    %v1073 = vpack.c.b16 %v1046, %v1045
    %v1074 = vpack.c.b16 %v1048, %v1047
    %v1075 = vpack.c.b16 %v1050, %v1049
    %v1076 = vpack.c.b16 %v1052, %v1051
    %v1077 = vpack.c.b16 %v1054, %v1053
    %v1078 = vpack.c.b16 %v1056, %v1055
    %v1079 = vpack.c.b16 %v1058, %v1057
    %v1080 = vpack.c.b16 %v1060, %v1059
    %v1081 = vpack.c.b16 %v1062, %v1061
    %v1082 = vpack.c.b16 %v1064, %v1063
    %v1083 = vpack.c.b16 %v1066, %v1065
    %v1084 = vpack.c.b16 %v1068, %v1067
    %1101 = vmatprep.subr.bf16.mxu0 0
    %1102 = vmatpush1.bf16.msra.mxu0 %v1076
    %1103 = vmatprep.subr.bf16.mxu0 0
    %1104 = vmatpush1.bf16.msra.mxu0 %v1075
    %1105 = vmatprep.subr.bf16.mxu0 0
    %1106 = vmatpush1.bf16.msra.mxu0 %v1074
    %1107 = vmatprep.subr.bf16.mxu0 0
    %1108 = vmatpush1.bf16.msra.mxu0 %v1073
    %1109 = vmatprep.subr.bf16.mxu0 0
    %1110 = vmatpush1.bf16.msra.mxu0 %v1072
    %1111 = vmatprep.subr.bf16.mxu0 0
    %1112 = vmatpush1.bf16.msra.mxu0 %v1071
    %1113 = vmatprep.subr.bf16.mxu0 0
    %1114 = vmatpush1.bf16.msra.mxu0 %v1070
    %1115 = vmatprep.subr.bf16.mxu0 0
    %1116 = vmatpush1.bf16.msra.mxu0 %v1069
    %1117 = vmatprep.subr.bf16.mxu0 0
    %1118 = vmatpush2.bf16.msra.mxu0 %v1084
    %1119 = vmatprep.subr.bf16.mxu0 0
    %1120 = vmatpush2.bf16.msra.mxu0 %v1083
    %1121 = vmatprep.subr.bf16.mxu0 0
    %1122 = vmatpush2.bf16.msra.mxu0 %v1082
    %1123 = vmatprep.subr.bf16.mxu0 0
    %1124 = vmatpush2.bf16.msra.mxu0 %v1081
    %1125 = vmatprep.subr.bf16.mxu0 0
    %1126 = vmatpush2.bf16.msra.mxu0 %v1080
    %1127 = vmatprep.subr.bf16.mxu0 0
    %1128 = vmatpush2.bf16.msra.mxu0 %v1079
    %1129 = vmatprep.subr.bf16.mxu0 0
    %1130 = vmatpush2.bf16.msra.mxu0 %v1078
    %1131 = vmatprep.subr.bf16.mxu0 0
    %1132 = vmatpush2.bf16.msra.mxu0 %v1077
    %1133 = vmatprep.mubr.bf16.mxu0 %v1004
    %1134 = vmatmul.mubr.bf16.gmra.mxu0 %v1003
    %v1135 = vpop.f32.mrf.mxu0
    %v1136 = vadd.f32 0.0, %v1135
    %v1137 = vpop.f32.mrf.mxu0
    %v1138 = vpop.f32.mrf.mxu0
    %v1139 = vadd.f32 0.0, %v1138
    %v1140 = vpop.f32.mrf.mxu0
    %1141 = vdwg.mxu0
    %v1142 = vadd.f32 %v786, %v1136
    %v1143 = vadd.f32 %v787, %v1139
    %v1144 = vld [vmem:[%s14] sm:$0x1]
    %v1146 = vlaneseq
    %v1147 = vshrl.u32 %v1146, 7
    %v1148 = vsub.s32 0, %v1147
    %v1149 = vrot.slane %v1144, %v1148
    %v1151 = vadd.f32 %v1142, %v1149
    %v1152 = vadd.f32 %v1143, %v1149
    %s1153 = scalar_lea.vmem %s3, 1
    %v1154 = vld [vmem:[%s1153] sm:$0x1]
    %s1155 = scalar_lea.vmem %s4, 1
    %v1156 = vld [vmem:[%s1155] sm:$0x1]
    %v1157 = vsel %vm85, %v1151, 0.0
    %1158 = vadd.xlane.f32.xlu0 %v1157
    %v1159 = vpop.xlane.xlu0 %1158
    %v1160 = vsel %vm85, %v1152, 0.0
    %1161 = vadd.xlane.f32.xlu0 %v1160
    %v1162 = vpop.xlane.xlu0 %1161
    %v1163 = vmul.f32 %v1159, %v92
    %v1164 = vmul.f32 %v1162, %v92
    %v1165 = vsub.f32 %v1151, %v1163
    %v1166 = vsub.f32 %v1152, %v1164
    %v1167 = vmul.f32 %v1165, %v1165
    %v1168 = vmul.f32 %v1166, %v1166
    %v1169 = vsel %vm85, %v1167, 0.0
    %1170 = vadd.xlane.f32.xlu0 %v1169
    %v1171 = vpop.xlane.xlu0 %1170
    %v1172 = vsel %vm85, %v1168, 0.0
    %1173 = vadd.xlane.f32.xlu0 %v1172
    %v1174 = vpop.xlane.xlu0 %1173
    %v1175 = vmul.f32 %v1171, %v92
    %v1176 = vmul.f32 %v1174, %v92
    %v1177 = vadd.f32 %v1175, 1e-05
    %v1178 = vadd.f32 %v1176, 1e-05
    %v1179 = vrsqrt.pop %v1177
    %v1180 = vrsqrt.pop %v1178
    %v1181 = vmul.f32 %v1165, %v1179
    %v1182 = vmul.f32 %v1166, %v1180
    %v1184 = vlaneseq
    %v1185 = vshrl.u32 %v1184, 7
    %v1186 = vsub.s32 0, %v1185
    %v1187 = vrot.slane %v1154, %v1186
    %v1189 = vmul.f32 %v1181, %v1187
    %v1190 = vmul.f32 %v1182, %v1187
    %v1192 = vlaneseq
    %v1193 = vshrl.u32 %v1192, 7
    %v1194 = vsub.s32 0, %v1193
    %v1195 = vrot.slane %v1156, %v1194
    %v1197 = vadd.f32 %v1189, %v1195
    %v1198 = vadd.f32 %v1190, %v1195
    %s1199 = scalar_lea.vmem %s5, 64
    %v1200 = vld [vmem:[%s1199] sm:$0xff]
    %v1201 = vld [vmem:[%s1199 + $0x8] sm:$0xff]
    %v1202 = vld [vmem:[%s1199 + $0x10] sm:$0xff]
    %v1203 = vld [vmem:[%s1199 + $0x18] sm:$0xff]
    %v1204 = vld [vmem:[%s1199 + $0x20] sm:$0xff]
    %v1205 = vld [vmem:[%s1199 + $0x28] sm:$0xff]
    %v1206 = vld [vmem:[%s1199 + $0x30] sm:$0xff]
    %v1207 = vld [vmem:[%s1199 + $0x38] sm:$0xff]
    %v1208 = vpack.c.bf16 %v1198, %v1197
    %s1209 = scalar_lea.vmem %s6, 2
    %v1210 = vld [vmem:[%s1209] sm:$0x3]
    %v1212 = vlaneseq
    %v1213 = vshrl.u32 %v1212, 7
    %v1214 = vsub.s32 0, %v1213
    %v1215 = vrot.slane %v1210, %v1214
    %v1216 = vlaneseq
    %v1217 = vshrl.u32 %v1216, 7
    %v1218 = vsub.s32 1, %v1217
    %v1219 = vrot.slane %v1210, %v1218
    %v1230 = vunpack.c.l.b16 %v1200
    %v1231 = vunpack.c.h.b16 %v1200
    %v1232 = vunpack.c.l.b16 %v1201
    %v1233 = vunpack.c.h.b16 %v1201
    %v1234 = vunpack.c.l.b16 %v1202
    %v1235 = vunpack.c.h.b16 %v1202
    %v1236 = vunpack.c.l.b16 %v1203
    %v1237 = vunpack.c.h.b16 %v1203
    %v1238 = vunpack.c.l.b16 %v1204
    %v1239 = vunpack.c.h.b16 %v1204
    %v1240 = vunpack.c.l.b16 %v1205
    %v1241 = vunpack.c.h.b16 %v1205
    %v1242 = vunpack.c.l.b16 %v1206
    %v1243 = vunpack.c.h.b16 %v1206
    %v1244 = vunpack.c.l.b16 %v1207
    %v1245 = vunpack.c.h.b16 %v1207
    %v1246 = vpack.c.b16 %v1232, %v1230
    %v1247 = vpack.c.b16 %v1233, %v1231
    %v1248 = vpack.c.b16 %v1236, %v1234
    %v1249 = vpack.c.b16 %v1237, %v1235
    %v1250 = vpack.c.b16 %v1240, %v1238
    %v1251 = vpack.c.b16 %v1241, %v1239
    %v1252 = vpack.c.b16 %v1244, %v1242
    %v1253 = vpack.c.b16 %v1245, %v1243
    %v1263 = vsel %vm85, %v1208, 0
    %1265 = vmatprep.subr.bf16.mxu0 0
    %1266 = vmatpush1.bf16.msra.mxu0 0
    %1267 = vmatprep.subr.bf16.mxu0 0
    %1268 = vmatpush1.bf16.msra.mxu0 0
    %1269 = vmatprep.subr.bf16.mxu0 0
    %1270 = vmatpush1.bf16.msra.mxu0 0
    %1271 = vmatprep.subr.bf16.mxu0 0
    %1272 = vmatpush1.bf16.msra.mxu0 0
    %1273 = vmatprep.subr.bf16.mxu0 %v1253
    %1274 = vmatpush1.bf16.msra.mxu0 %v1252
    %1275 = vmatprep.subr.bf16.mxu0 %v1251
    %1276 = vmatpush1.bf16.msra.mxu0 %v1250
    %1277 = vmatprep.subr.bf16.mxu0 %v1249
    %1278 = vmatpush1.bf16.msra.mxu0 %v1248
    %1279 = vmatprep.subr.bf16.mxu0 %v1247
    %1280 = vmatpush1.bf16.msra.mxu0 %v1246
    %1281 = vmatprep.subr.bf16.mxu0 0
    %1282 = vmatpush2.bf16.msra.mxu0 0
    %1283 = vmatprep.subr.bf16.mxu0 0
    %1284 = vmatpush2.bf16.msra.mxu0 0
    %1285 = vmatprep.subr.bf16.mxu0 0
    %1286 = vmatpush2.bf16.msra.mxu0 0
    %1287 = vmatprep.subr.bf16.mxu0 0
    %1288 = vmatpush2.bf16.msra.mxu0 0
    %1289 = vmatprep.subr.bf16.mxu0 0
    %1290 = vmatpush2.bf16.msra.mxu0 0
    %1291 = vmatprep.subr.bf16.mxu0 0
    %1292 = vmatpush2.bf16.msra.mxu0 0
    %1293 = vmatprep.subr.bf16.mxu0 0
    %1294 = vmatpush2.bf16.msra.mxu0 0
    %1295 = vmatprep.subr.bf16.mxu0 0
    %1296 = vmatpush2.bf16.msra.mxu0 0
    %1297 = vmatprep.mubr.bf16.mxu0 0
    %1298 = vmatmul.mubr.bf16.gmra.mxu0 %v1263
    %v1299 = vpop.f32.mrf.mxu0
    %v1300 = vadd.f32 %v1215, %v1299
    %v1301 = vpop.f32.mrf.mxu0
    %v1302 = vadd.f32 %v1219, %v1301
    %v1303 = vpop.f32.mrf.mxu0
    %v1304 = vadd.f32 %v1215, %v1303
    %v1305 = vpop.f32.mrf.mxu0
    %v1306 = vadd.f32 %v1219, %v1305
    %1307 = vdwg.mxu0
    %v1308 = vmul.f32 %v1300, 0.17677669
    %v1309 = vpack.c.bf16 %v1308, %v1308
    %v1310 = vpack.c.bf16 %v1300, %v1300
    %1312 = vrot.lane.b32.xlu0 %v1310, 64
    %v1313 = vpop.permute.xlu0 %1312
    %v1315 = vsel %vm242, %v1309, 0
    %v1318 = vsel %vm242, %v1313, 0
    %1320 = vmatprep.subr.bf16.mxu0 0
    %1321 = vmatpush1.bf16.xpose.msra.mxu0 0
    %1322 = vmatprep.subr.bf16.mxu0 0
    %1323 = vmatpush1.bf16.xpose.msra.mxu0 0
    %1324 = vmatprep.subr.bf16.mxu0 0
    %1325 = vmatpush1.bf16.xpose.msra.mxu0 0
    %1326 = vmatprep.subr.bf16.mxu0 0
    %1327 = vmatpush1.bf16.xpose.msra.mxu0 0
    %1328 = vmatprep.subr.bf16.mxu0 0
    %1329 = vmatpush1.bf16.xpose.msra.mxu0 0
    %1330 = vmatprep.subr.bf16.mxu0 0
    %1331 = vmatpush1.bf16.xpose.msra.mxu0 0
    %1332 = vmatprep.subr.bf16.mxu0 0
    %1333 = vmatpush1.bf16.xpose.msra.mxu0 0
    %1334 = vmatprep.subr.bf16.mxu0 0
    %1335 = vmatpush1.bf16.xpose.msra.mxu0 %v1318
    %1336 = vmatprep.subr.bf16.mxu0 0
    %1337 = vmatpush2.bf16.xpose.msra.mxu0 0
    %1338 = vmatprep.subr.bf16.mxu0 0
    %1339 = vmatpush2.bf16.xpose.msra.mxu0 0
    %1340 = vmatprep.subr.bf16.mxu0 0
    %1341 = vmatpush2.bf16.xpose.msra.mxu0 0
    %1342 = vmatprep.subr.bf16.mxu0 0
    %1343 = vmatpush2.bf16.xpose.msra.mxu0 0
    %1344 = vmatprep.subr.bf16.mxu0 0
    %1345 = vmatpush2.bf16.xpose.msra.mxu0 0
    %1346 = vmatprep.subr.bf16.mxu0 0
    %1347 = vmatpush2.bf16.xpose.msra.mxu0 0
    %1348 = vmatprep.subr.bf16.mxu0 0
    %1349 = vmatpush2.bf16.xpose.msra.mxu0 0
    %1350 = vmatprep.subr.bf16.mxu0 0
    %1351 = vmatpush2.bf16.xpose.msra.mxu0 0
    %1352 = vmatprep.mubr.bf16.mxu0 0
    %1353 = vmatmul.mubr.bf16.gmra.mxu0 %v1315
    %v1354 = vpop.f32.mrf.mxu0
    %v1355 = vadd.f32 %v82, %v1354
    %v1356 = vpop.f32.mrf.mxu0
    %v1357 = vpop.f32.mrf.mxu0
    %v1358 = vpop.f32.mrf.mxu0
    %1359 = vdwg.mxu0
    %v1360 = vsel %vm289, %v1355, -inf
    %1361 = vmax.xlane.f32.xlu0 %v1360
    %v1362 = vpop.xlane.xlu0 %1361
    %v1363 = vsub.f32 %v1355, %v1362
    %v1364 = vmul.f32 %v1363, 1.442695
    %v1365 = vpow.pop %v1364
    %v1366 = vsel %vm289, %v1365, 0.0
    %1367 = vadd.xlane.f32.xlu0 %v1366
    %v1368 = vpop.xlane.xlu0 %1367
    %v1369 = vrcp.pop %v1368
    %v1370 = vmul.f32 %v1365, %v1369
    %v1371 = vpack.c.bf16 %v1370, %v1370
    %v1372 = vpack.c.bf16 %v1302, %v1302
    %v1374 = vsel %vm289, %v1371, 0
    %v1377 = vsel %vm306, %v1372, 0
    %1379 = vmatprep.subr.bf16.mxu0 0
    %1380 = vmatpush1.bf16.msra.mxu0 0
    %1381 = vmatprep.subr.bf16.mxu0 0
    %1382 = vmatpush1.bf16.msra.mxu0 0
    %1383 = vmatprep.subr.bf16.mxu0 0
    %1384 = vmatpush1.bf16.msra.mxu0 0
    %1385 = vmatprep.subr.bf16.mxu0 0
    %1386 = vmatpush1.bf16.msra.mxu0 0
    %1387 = vmatprep.subr.bf16.mxu0 0
    %1388 = vmatpush1.bf16.msra.mxu0 0
    %1389 = vmatprep.subr.bf16.mxu0 0
    %1390 = vmatpush1.bf16.msra.mxu0 0
    %1391 = vmatprep.subr.bf16.mxu0 0
    %1392 = vmatpush1.bf16.msra.mxu0 0
    %1393 = vmatprep.subr.bf16.mxu0 0
    %1394 = vmatpush1.bf16.msra.mxu0 %v1377
    %1395 = vmatprep.subr.bf16.mxu0 0
    %1396 = vmatpush2.bf16.msra.mxu0 0
    %1397 = vmatprep.subr.bf16.mxu0 0
    %1398 = vmatpush2.bf16.msra.mxu0 0
    %1399 = vmatprep.subr.bf16.mxu0 0
    %1400 = vmatpush2.bf16.msra.mxu0 0
    %1401 = vmatprep.subr.bf16.mxu0 0
    %1402 = vmatpush2.bf16.msra.mxu0 0
    %1403 = vmatprep.subr.bf16.mxu0 0
    %1404 = vmatpush2.bf16.msra.mxu0 0
    %1405 = vmatprep.subr.bf16.mxu0 0
    %1406 = vmatpush2.bf16.msra.mxu0 0
    %1407 = vmatprep.subr.bf16.mxu0 0
    %1408 = vmatpush2.bf16.msra.mxu0 0
    %1409 = vmatprep.subr.bf16.mxu0 0
    %1410 = vmatpush2.bf16.msra.mxu0 0
    %1411 = vmatprep.mubr.bf16.mxu0 0
    %1412 = vmatmul.mubr.bf16.gmra.mxu0 %v1374
    %v1413 = vpop.f32.mrf.mxu0
    %v1414 = vadd.f32 0.0, %v1413
    %v1415 = vpop.f32.mrf.mxu0
    %v1416 = vpop.f32.mrf.mxu0
    %v1417 = vpop.f32.mrf.mxu0
    %1418 = vdwg.mxu0
    %1419 = vst.msk [vmem:[#allocation2] sm:$0xff] %vm242, %v1414
    %1421 = vrot.lane.b32.xlu0 %v1309, 96
    %v1422 = vpop.permute.xlu0 %1421
    %1423 = vrot.lane.b32.xlu0 %v1310, 32
    %v1424 = vpop.permute.xlu0 %1423
    %v1426 = vsel %vm242, %v1422, 0
    %v1429 = vsel %vm242, %v1424, 0
    %1431 = vmatprep.subr.bf16.mxu0 0
    %1432 = vmatpush1.bf16.xpose.msra.mxu0 0
    %1433 = vmatprep.subr.bf16.mxu0 0
    %1434 = vmatpush1.bf16.xpose.msra.mxu0 0
    %1435 = vmatprep.subr.bf16.mxu0 0
    %1436 = vmatpush1.bf16.xpose.msra.mxu0 0
    %1437 = vmatprep.subr.bf16.mxu0 0
    %1438 = vmatpush1.bf16.xpose.msra.mxu0 0
    %1439 = vmatprep.subr.bf16.mxu0 0
    %1440 = vmatpush1.bf16.xpose.msra.mxu0 0
    %1441 = vmatprep.subr.bf16.mxu0 0
    %1442 = vmatpush1.bf16.xpose.msra.mxu0 0
    %1443 = vmatprep.subr.bf16.mxu0 0
    %1444 = vmatpush1.bf16.xpose.msra.mxu0 0
    %1445 = vmatprep.subr.bf16.mxu0 0
    %1446 = vmatpush1.bf16.xpose.msra.mxu0 %v1429
    %1447 = vmatprep.subr.bf16.mxu0 0
    %1448 = vmatpush2.bf16.xpose.msra.mxu0 0
    %1449 = vmatprep.subr.bf16.mxu0 0
    %1450 = vmatpush2.bf16.xpose.msra.mxu0 0
    %1451 = vmatprep.subr.bf16.mxu0 0
    %1452 = vmatpush2.bf16.xpose.msra.mxu0 0
    %1453 = vmatprep.subr.bf16.mxu0 0
    %1454 = vmatpush2.bf16.xpose.msra.mxu0 0
    %1455 = vmatprep.subr.bf16.mxu0 0
    %1456 = vmatpush2.bf16.xpose.msra.mxu0 0
    %1457 = vmatprep.subr.bf16.mxu0 0
    %1458 = vmatpush2.bf16.xpose.msra.mxu0 0
    %1459 = vmatprep.subr.bf16.mxu0 0
    %1460 = vmatpush2.bf16.xpose.msra.mxu0 0
    %1461 = vmatprep.subr.bf16.mxu0 0
    %1462 = vmatpush2.bf16.xpose.msra.mxu0 0
    %1463 = vmatprep.mubr.bf16.mxu0 0
    %1464 = vmatmul.mubr.bf16.gmra.mxu0 %v1426
    %v1465 = vpop.f32.mrf.mxu0
    %v1466 = vadd.f32 %v82, %v1465
    %v1467 = vpop.f32.mrf.mxu0
    %v1468 = vpop.f32.mrf.mxu0
    %v1469 = vpop.f32.mrf.mxu0
    %1470 = vdwg.mxu0
    %v1471 = vsel %vm289, %v1466, -inf
    %1472 = vmax.xlane.f32.xlu0 %v1471
    %v1473 = vpop.xlane.xlu0 %1472
    %v1474 = vsub.f32 %v1466, %v1473
    %v1475 = vmul.f32 %v1474, 1.442695
    %v1476 = vpow.pop %v1475
    %v1477 = vsel %vm289, %v1476, 0.0
    %1478 = vadd.xlane.f32.xlu0 %v1477
    %v1479 = vpop.xlane.xlu0 %1478
    %v1480 = vrcp.pop %v1479
    %v1481 = vmul.f32 %v1476, %v1480
    %v1482 = vpack.c.bf16 %v1481, %v1481
    %1484 = vrot.lane.b32.xlu0 %v1372, 96
    %v1485 = vpop.permute.xlu0 %1484
    %v1487 = vsel %vm289, %v1482, 0
    %v1490 = vsel %vm306, %v1485, 0
    %1492 = vmatprep.subr.bf16.mxu0 0
    %1493 = vmatpush1.bf16.msra.mxu0 0
    %1494 = vmatprep.subr.bf16.mxu0 0
    %1495 = vmatpush1.bf16.msra.mxu0 0
    %1496 = vmatprep.subr.bf16.mxu0 0
    %1497 = vmatpush1.bf16.msra.mxu0 0
    %1498 = vmatprep.subr.bf16.mxu0 0
    %1499 = vmatpush1.bf16.msra.mxu0 0
    %1500 = vmatprep.subr.bf16.mxu0 0
    %1501 = vmatpush1.bf16.msra.mxu0 0
    %1502 = vmatprep.subr.bf16.mxu0 0
    %1503 = vmatpush1.bf16.msra.mxu0 0
    %1504 = vmatprep.subr.bf16.mxu0 0
    %1505 = vmatpush1.bf16.msra.mxu0 0
    %1506 = vmatprep.subr.bf16.mxu0 0
    %1507 = vmatpush1.bf16.msra.mxu0 %v1490
    %1508 = vmatprep.subr.bf16.mxu0 0
    %1509 = vmatpush2.bf16.msra.mxu0 0
    %1510 = vmatprep.subr.bf16.mxu0 0
    %1511 = vmatpush2.bf16.msra.mxu0 0
    %1512 = vmatprep.subr.bf16.mxu0 0
    %1513 = vmatpush2.bf16.msra.mxu0 0
    %1514 = vmatprep.subr.bf16.mxu0 0
    %1515 = vmatpush2.bf16.msra.mxu0 0
    %1516 = vmatprep.subr.bf16.mxu0 0
    %1517 = vmatpush2.bf16.msra.mxu0 0
    %1518 = vmatprep.subr.bf16.mxu0 0
    %1519 = vmatpush2.bf16.msra.mxu0 0
    %1520 = vmatprep.subr.bf16.mxu0 0
    %1521 = vmatpush2.bf16.msra.mxu0 0
    %1522 = vmatprep.subr.bf16.mxu0 0
    %1523 = vmatpush2.bf16.msra.mxu0 0
    %1524 = vmatprep.mubr.bf16.mxu0 0
    %1525 = vmatmul.mubr.bf16.gmra.mxu0 %v1487
    %v1526 = vpop.f32.mrf.mxu0
    %v1527 = vadd.f32 0.0, %v1526
    %v1528 = vpop.f32.mrf.mxu0
    %v1529 = vpop.f32.mrf.mxu0
    %v1530 = vpop.f32.mrf.mxu0
    %1531 = vdwg.mxu0
    %1533 = vrot.lane.b32.xlu0 %v1527, 32
    %v1534 = vpop.permute.xlu0 %1533
    %1536 = vst.msk [vmem:[#allocation2] sm:$0xff] %vm467, %v1534
    %v1537 = vmul.f32 %v1304, 0.17677669
    %v1538 = vpack.c.bf16 %v1537, %v1537
    %v1539 = vpack.c.bf16 %v1304, %v1304
    %1541 = vrot.lane.b32.xlu0 %v1539, 64
    %v1542 = vpop.permute.xlu0 %1541
    %v1544 = vsel %vm242, %v1538, 0
    %v1547 = vsel %vm242, %v1542, 0
    %1549 = vmatprep.subr.bf16.mxu0 0
    %1550 = vmatpush1.bf16.xpose.msra.mxu0 0
    %1551 = vmatprep.subr.bf16.mxu0 0
    %1552 = vmatpush1.bf16.xpose.msra.mxu0 0
    %1553 = vmatprep.subr.bf16.mxu0 0
    %1554 = vmatpush1.bf16.xpose.msra.mxu0 0
    %1555 = vmatprep.subr.bf16.mxu0 0
    %1556 = vmatpush1.bf16.xpose.msra.mxu0 0
    %1557 = vmatprep.subr.bf16.mxu0 0
    %1558 = vmatpush1.bf16.xpose.msra.mxu0 0
    %1559 = vmatprep.subr.bf16.mxu0 0
    %1560 = vmatpush1.bf16.xpose.msra.mxu0 0
    %1561 = vmatprep.subr.bf16.mxu0 0
    %1562 = vmatpush1.bf16.xpose.msra.mxu0 0
    %1563 = vmatprep.subr.bf16.mxu0 0
    %1564 = vmatpush1.bf16.xpose.msra.mxu0 %v1547
    %1565 = vmatprep.subr.bf16.mxu0 0
    %1566 = vmatpush2.bf16.xpose.msra.mxu0 0
    %1567 = vmatprep.subr.bf16.mxu0 0
    %1568 = vmatpush2.bf16.xpose.msra.mxu0 0
    %1569 = vmatprep.subr.bf16.mxu0 0
    %1570 = vmatpush2.bf16.xpose.msra.mxu0 0
    %1571 = vmatprep.subr.bf16.mxu0 0
    %1572 = vmatpush2.bf16.xpose.msra.mxu0 0
    %1573 = vmatprep.subr.bf16.mxu0 0
    %1574 = vmatpush2.bf16.xpose.msra.mxu0 0
    %1575 = vmatprep.subr.bf16.mxu0 0
    %1576 = vmatpush2.bf16.xpose.msra.mxu0 0
    %1577 = vmatprep.subr.bf16.mxu0 0
    %1578 = vmatpush2.bf16.xpose.msra.mxu0 0
    %1579 = vmatprep.subr.bf16.mxu0 0
    %1580 = vmatpush2.bf16.xpose.msra.mxu0 0
    %1581 = vmatprep.mubr.bf16.mxu0 0
    %1582 = vmatmul.mubr.bf16.gmra.mxu0 %v1544
    %v1583 = vpop.f32.mrf.mxu0
    %v1584 = vadd.f32 %v82, %v1583
    %v1585 = vpop.f32.mrf.mxu0
    %v1586 = vpop.f32.mrf.mxu0
    %v1587 = vpop.f32.mrf.mxu0
    %1588 = vdwg.mxu0
    %v1589 = vsel %vm289, %v1584, -inf
    %1590 = vmax.xlane.f32.xlu0 %v1589
    %v1591 = vpop.xlane.xlu0 %1590
    %v1592 = vsub.f32 %v1584, %v1591
    %v1593 = vmul.f32 %v1592, 1.442695
    %v1594 = vpow.pop %v1593
    %v1595 = vsel %vm289, %v1594, 0.0
    %1596 = vadd.xlane.f32.xlu0 %v1595
    %v1597 = vpop.xlane.xlu0 %1596
    %v1598 = vrcp.pop %v1597
    %v1599 = vmul.f32 %v1594, %v1598
    %v1600 = vpack.c.bf16 %v1599, %v1599
    %v1601 = vpack.c.bf16 %v1306, %v1306
    %v1603 = vsel %vm289, %v1600, 0
    %v1606 = vsel %vm306, %v1601, 0
    %1608 = vmatprep.subr.bf16.mxu0 0
    %1609 = vmatpush1.bf16.msra.mxu0 0
    %1610 = vmatprep.subr.bf16.mxu0 0
    %1611 = vmatpush1.bf16.msra.mxu0 0
    %1612 = vmatprep.subr.bf16.mxu0 0
    %1613 = vmatpush1.bf16.msra.mxu0 0
    %1614 = vmatprep.subr.bf16.mxu0 0
    %1615 = vmatpush1.bf16.msra.mxu0 0
    %1616 = vmatprep.subr.bf16.mxu0 0
    %1617 = vmatpush1.bf16.msra.mxu0 0
    %1618 = vmatprep.subr.bf16.mxu0 0
    %1619 = vmatpush1.bf16.msra.mxu0 0
    %1620 = vmatprep.subr.bf16.mxu0 0
    %1621 = vmatpush1.bf16.msra.mxu0 0
    %1622 = vmatprep.subr.bf16.mxu0 0
    %1623 = vmatpush1.bf16.msra.mxu0 %v1606
    %1624 = vmatprep.subr.bf16.mxu0 0
    %1625 = vmatpush2.bf16.msra.mxu0 0
    %1626 = vmatprep.subr.bf16.mxu0 0
    %1627 = vmatpush2.bf16.msra.mxu0 0
    %1628 = vmatprep.subr.bf16.mxu0 0
    %1629 = vmatpush2.bf16.msra.mxu0 0
    %1630 = vmatprep.subr.bf16.mxu0 0
    %1631 = vmatpush2.bf16.msra.mxu0 0
    %1632 = vmatprep.subr.bf16.mxu0 0
    %1633 = vmatpush2.bf16.msra.mxu0 0
    %1634 = vmatprep.subr.bf16.mxu0 0
    %1635 = vmatpush2.bf16.msra.mxu0 0
    %1636 = vmatprep.subr.bf16.mxu0 0
    %1637 = vmatpush2.bf16.msra.mxu0 0
    %1638 = vmatprep.subr.bf16.mxu0 0
    %1639 = vmatpush2.bf16.msra.mxu0 0
    %1640 = vmatprep.mubr.bf16.mxu0 0
    %1641 = vmatmul.mubr.bf16.gmra.mxu0 %v1603
    %v1642 = vpop.f32.mrf.mxu0
    %v1643 = vadd.f32 0.0, %v1642
    %v1644 = vpop.f32.mrf.mxu0
    %v1645 = vpop.f32.mrf.mxu0
    %v1646 = vpop.f32.mrf.mxu0
    %1647 = vdwg.mxu0
    %1648 = vst.msk [vmem:[#allocation2 + $0x8] sm:$0xff] %vm242, %v1643
    %1650 = vrot.lane.b32.xlu0 %v1538, 96
    %v1651 = vpop.permute.xlu0 %1650
    %1652 = vrot.lane.b32.xlu0 %v1539, 32
    %v1653 = vpop.permute.xlu0 %1652
    %v1655 = vsel %vm242, %v1651, 0
    %v1658 = vsel %vm242, %v1653, 0
    %1660 = vmatprep.subr.bf16.mxu0 0
    %1661 = vmatpush1.bf16.xpose.msra.mxu0 0
    %1662 = vmatprep.subr.bf16.mxu0 0
    %1663 = vmatpush1.bf16.xpose.msra.mxu0 0
    %1664 = vmatprep.subr.bf16.mxu0 0
    %1665 = vmatpush1.bf16.xpose.msra.mxu0 0
    %1666 = vmatprep.subr.bf16.mxu0 0
    %1667 = vmatpush1.bf16.xpose.msra.mxu0 0
    %1668 = vmatprep.subr.bf16.mxu0 0
    %1669 = vmatpush1.bf16.xpose.msra.mxu0 0
    %1670 = vmatprep.subr.bf16.mxu0 0
    %1671 = vmatpush1.bf16.xpose.msra.mxu0 0
    %1672 = vmatprep.subr.bf16.mxu0 0
    %1673 = vmatpush1.bf16.xpose.msra.mxu0 0
    %1674 = vmatprep.subr.bf16.mxu0 0
    %1675 = vmatpush1.bf16.xpose.msra.mxu0 %v1658
    %1676 = vmatprep.subr.bf16.mxu0 0
    %1677 = vmatpush2.bf16.xpose.msra.mxu0 0
    %1678 = vmatprep.subr.bf16.mxu0 0
    %1679 = vmatpush2.bf16.xpose.msra.mxu0 0
    %1680 = vmatprep.subr.bf16.mxu0 0
    %1681 = vmatpush2.bf16.xpose.msra.mxu0 0
    %1682 = vmatprep.subr.bf16.mxu0 0
    %1683 = vmatpush2.bf16.xpose.msra.mxu0 0
    %1684 = vmatprep.subr.bf16.mxu0 0
    %1685 = vmatpush2.bf16.xpose.msra.mxu0 0
    %1686 = vmatprep.subr.bf16.mxu0 0
    %1687 = vmatpush2.bf16.xpose.msra.mxu0 0
    %1688 = vmatprep.subr.bf16.mxu0 0
    %1689 = vmatpush2.bf16.xpose.msra.mxu0 0
    %1690 = vmatprep.subr.bf16.mxu0 0
    %1691 = vmatpush2.bf16.xpose.msra.mxu0 0
    %1692 = vmatprep.mubr.bf16.mxu0 0
    %1693 = vmatmul.mubr.bf16.gmra.mxu0 %v1655
    %v1694 = vpop.f32.mrf.mxu0
    %v1695 = vadd.f32 %v82, %v1694
    %v1696 = vpop.f32.mrf.mxu0
    %v1697 = vpop.f32.mrf.mxu0
    %v1698 = vpop.f32.mrf.mxu0
    %1699 = vdwg.mxu0
    %v1700 = vsel %vm289, %v1695, -inf
    %1701 = vmax.xlane.f32.xlu0 %v1700
    %v1702 = vpop.xlane.xlu0 %1701
    %v1703 = vsub.f32 %v1695, %v1702
    %v1704 = vmul.f32 %v1703, 1.442695
    %v1705 = vpow.pop %v1704
    %v1706 = vsel %vm289, %v1705, 0.0
    %1707 = vadd.xlane.f32.xlu0 %v1706
    %v1708 = vpop.xlane.xlu0 %1707
    %v1709 = vrcp.pop %v1708
    %v1710 = vmul.f32 %v1705, %v1709
    %v1711 = vpack.c.bf16 %v1710, %v1710
    %1713 = vrot.lane.b32.xlu0 %v1601, 96
    %v1714 = vpop.permute.xlu0 %1713
    %v1716 = vsel %vm289, %v1711, 0
    %v1719 = vsel %vm306, %v1714, 0
    %1721 = vmatprep.subr.bf16.mxu0 0
    %1722 = vmatpush1.bf16.msra.mxu0 0
    %1723 = vmatprep.subr.bf16.mxu0 0
    %1724 = vmatpush1.bf16.msra.mxu0 0
    %1725 = vmatprep.subr.bf16.mxu0 0
    %1726 = vmatpush1.bf16.msra.mxu0 0
    %1727 = vmatprep.subr.bf16.mxu0 0
    %1728 = vmatpush1.bf16.msra.mxu0 0
    %1729 = vmatprep.subr.bf16.mxu0 0
    %1730 = vmatpush1.bf16.msra.mxu0 0
    %1731 = vmatprep.subr.bf16.mxu0 0
    %1732 = vmatpush1.bf16.msra.mxu0 0
    %1733 = vmatprep.subr.bf16.mxu0 0
    %1734 = vmatpush1.bf16.msra.mxu0 0
    %1735 = vmatprep.subr.bf16.mxu0 0
    %1736 = vmatpush1.bf16.msra.mxu0 %v1719
    %1737 = vmatprep.subr.bf16.mxu0 0
    %1738 = vmatpush2.bf16.msra.mxu0 0
    %1739 = vmatprep.subr.bf16.mxu0 0
    %1740 = vmatpush2.bf16.msra.mxu0 0
    %1741 = vmatprep.subr.bf16.mxu0 0
    %1742 = vmatpush2.bf16.msra.mxu0 0
    %1743 = vmatprep.subr.bf16.mxu0 0
    %1744 = vmatpush2.bf16.msra.mxu0 0
    %1745 = vmatprep.subr.bf16.mxu0 0
    %1746 = vmatpush2.bf16.msra.mxu0 0
    %1747 = vmatprep.subr.bf16.mxu0 0
    %1748 = vmatpush2.bf16.msra.mxu0 0
    %1749 = vmatprep.subr.bf16.mxu0 0
    %1750 = vmatpush2.bf16.msra.mxu0 0
    %1751 = vmatprep.subr.bf16.mxu0 0
    %1752 = vmatpush2.bf16.msra.mxu0 0
    %1753 = vmatprep.mubr.bf16.mxu0 0
    %1754 = vmatmul.mubr.bf16.gmra.mxu0 %v1716
    %v1755 = vpop.f32.mrf.mxu0
    %v1756 = vadd.f32 0.0, %v1755
    %v1757 = vpop.f32.mrf.mxu0
    %v1758 = vpop.f32.mrf.mxu0
    %v1759 = vpop.f32.mrf.mxu0
    %1760 = vdwg.mxu0
    %1762 = vrot.lane.b32.xlu0 %v1756, 32
    %v1763 = vpop.permute.xlu0 %1762
    %1765 = vst.msk [vmem:[#allocation2 + $0x8] sm:$0xff] %vm467, %v1763
    %v1766 = vld [vmem:[#allocation2] sm:$0xff]
    %v1767 = vld [vmem:[#allocation2 + $0x8] sm:$0xff]
    %s1768 = scalar_lea.vmem %s7, 32
    %v1769 = vld [vmem:[%s1768] sm:$0xf]
    %v1770 = vld [vmem:[%s1768 + $0x4] sm:$0xf]
    %v1771 = vld [vmem:[%s1768 + $0x8] sm:$0xf]
    %v1772 = vld [vmem:[%s1768 + $0xc] sm:$0xf]
    %v1773 = vld [vmem:[%s1768 + $0x10] sm:$0xf]
    %v1774 = vld [vmem:[%s1768 + $0x14] sm:$0xf]
    %v1775 = vld [vmem:[%s1768 + $0x18] sm:$0xf]
    %v1776 = vld [vmem:[%s1768 + $0x1c] sm:$0xf]
    %v1777 = vpack.c.bf16 %v1767, %v1766
    %v1786 = vunpack.c.l.b16 %v1769
    %v1787 = vunpack.c.l.b16 %v1770
    %v1788 = vunpack.c.l.b16 %v1771
    %v1789 = vunpack.c.l.b16 %v1772
    %v1790 = vunpack.c.l.b16 %v1773
    %v1791 = vunpack.c.l.b16 %v1774
    %v1792 = vunpack.c.l.b16 %v1775
    %v1793 = vunpack.c.l.b16 %v1776
    %v1794 = vpack.c.b16 %v1787, %v1786
    %v1795 = vpack.c.b16 %v1789, %v1788
    %v1796 = vpack.c.b16 %v1791, %v1790
    %v1797 = vpack.c.b16 %v1793, %v1792
    %v1803 = vsel %vm85, %v1777, 0
    %1805 = vmatprep.subr.bf16.mxu0 0
    %1806 = vmatpush1.bf16.msra.mxu0 0
    %1807 = vmatprep.subr.bf16.mxu0 0
    %1808 = vmatpush1.bf16.msra.mxu0 0
    %1809 = vmatprep.subr.bf16.mxu0 0
    %1810 = vmatpush1.bf16.msra.mxu0 0
    %1811 = vmatprep.subr.bf16.mxu0 0
    %1812 = vmatpush1.bf16.msra.mxu0 0
    %1813 = vmatprep.subr.bf16.mxu0 0
    %1814 = vmatpush1.bf16.msra.mxu0 %v1797
    %1815 = vmatprep.subr.bf16.mxu0 0
    %1816 = vmatpush1.bf16.msra.mxu0 %v1796
    %1817 = vmatprep.subr.bf16.mxu0 0
    %1818 = vmatpush1.bf16.msra.mxu0 %v1795
    %1819 = vmatprep.subr.bf16.mxu0 0
    %1820 = vmatpush1.bf16.msra.mxu0 %v1794
    %1821 = vmatprep.subr.bf16.mxu0 0
    %1822 = vmatpush2.bf16.msra.mxu0 0
    %1823 = vmatprep.subr.bf16.mxu0 0
    %1824 = vmatpush2.bf16.msra.mxu0 0
    %1825 = vmatprep.subr.bf16.mxu0 0
    %1826 = vmatpush2.bf16.msra.mxu0 0
    %1827 = vmatprep.subr.bf16.mxu0 0
    %1828 = vmatpush2.bf16.msra.mxu0 0
    %1829 = vmatprep.subr.bf16.mxu0 0
    %1830 = vmatpush2.bf16.msra.mxu0 0
    %1831 = vmatprep.subr.bf16.mxu0 0
    %1832 = vmatpush2.bf16.msra.mxu0 0
    %1833 = vmatprep.subr.bf16.mxu0 0
    %1834 = vmatpush2.bf16.msra.mxu0 0
    %1835 = vmatprep.subr.bf16.mxu0 0
    %1836 = vmatpush2.bf16.msra.mxu0 0
    %1837 = vmatprep.mubr.bf16.mxu0 0
    %1838 = vmatmul.mubr.bf16.gmra.mxu0 %v1803
    %v1839 = vpop.f32.mrf.mxu0
    %v1840 = vadd.f32 0.0, %v1839
    %v1841 = vpop.f32.mrf.mxu0
    %v1842 = vpop.f32.mrf.mxu0
    %v1843 = vadd.f32 0.0, %v1842
    %v1844 = vpop.f32.mrf.mxu0
    %1845 = vdwg.mxu0
    %v1846 = vadd.f32 %v1151, %v1840
    %v1847 = vadd.f32 %v1152, %v1843
    %s1848 = scalar_lea.vmem %s8, 1
    %v1849 = vld [vmem:[%s1848] sm:$0x1]
    %v1851 = vlaneseq
    %v1852 = vshrl.u32 %v1851, 7
    %v1853 = vsub.s32 0, %v1852
    %v1854 = vrot.slane %v1849, %v1853
    %v1856 = vadd.f32 %v1846, %v1854
    %v1857 = vadd.f32 %v1847, %v1854
    %s1858 = scalar_lea.vmem %s9, 1
    %v1859 = vld [vmem:[%s1858] sm:$0x1]
    %s1860 = scalar_lea.vmem %s10, 1
    %v1861 = vld [vmem:[%s1860] sm:$0x1]
    %v1862 = vsel %vm85, %v1856, 0.0
    %1863 = vadd.xlane.f32.xlu0 %v1862
    %v1864 = vpop.xlane.xlu0 %1863
    %v1865 = vsel %vm85, %v1857, 0.0
    %1866 = vadd.xlane.f32.xlu0 %v1865
    %v1867 = vpop.xlane.xlu0 %1866
    %v1868 = vmul.f32 %v1864, %v92
    %v1869 = vmul.f32 %v1867, %v92
    %v1870 = vsub.f32 %v1856, %v1868
    %v1871 = vsub.f32 %v1857, %v1869
    %v1872 = vmul.f32 %v1870, %v1870
    %v1873 = vmul.f32 %v1871, %v1871
    %v1874 = vsel %vm85, %v1872, 0.0
    %1875 = vadd.xlane.f32.xlu0 %v1874
    %v1876 = vpop.xlane.xlu0 %1875
    %v1877 = vsel %vm85, %v1873, 0.0
    %1878 = vadd.xlane.f32.xlu0 %v1877
    %v1879 = vpop.xlane.xlu0 %1878
    %v1880 = vmul.f32 %v1876, %v92
    %v1881 = vmul.f32 %v1879, %v92
    %v1882 = vadd.f32 %v1880, 1e-05
    %v1883 = vadd.f32 %v1881, 1e-05
    %v1884 = vrsqrt.pop %v1882
    %v1885 = vrsqrt.pop %v1883
    %v1886 = vmul.f32 %v1870, %v1884
    %v1887 = vmul.f32 %v1871, %v1885
    %v1889 = vlaneseq
    %v1890 = vshrl.u32 %v1889, 7
    %v1891 = vsub.s32 0, %v1890
    %v1892 = vrot.slane %v1859, %v1891
    %v1894 = vmul.f32 %v1886, %v1892
    %v1895 = vmul.f32 %v1887, %v1892
    %v1897 = vlaneseq
    %v1898 = vshrl.u32 %v1897, 7
    %v1899 = vsub.s32 0, %v1898
    %v1900 = vrot.slane %v1861, %v1899
    %v1902 = vadd.f32 %v1894, %v1900
    %v1903 = vadd.f32 %v1895, %v1900
    %s1904 = scalar_lea.vmem %s11, 64
    %v1905 = vld [vmem:[%s1904] sm:$0xff]
    %v1906 = vld [vmem:[%s1904 + $0x8] sm:$0xff]
    %v1907 = vld [vmem:[%s1904 + $0x10] sm:$0xff]
    %v1908 = vld [vmem:[%s1904 + $0x18] sm:$0xff]
    %v1909 = vld [vmem:[%s1904 + $0x20] sm:$0xff]
    %v1910 = vld [vmem:[%s1904 + $0x28] sm:$0xff]
    %v1911 = vld [vmem:[%s1904 + $0x30] sm:$0xff]
    %v1912 = vld [vmem:[%s1904 + $0x38] sm:$0xff]
    %v1913 = vpack.c.bf16 %v1903, %v1902
    %s1914 = scalar_lea.vmem %s12, 2
    %v1915 = vld [vmem:[%s1914] sm:$0x3]
    %v1917 = vlaneseq
    %v1918 = vshrl.u32 %v1917, 7
    %v1919 = vsub.s32 0, %v1918
    %v1920 = vrot.slane %v1915, %v1919
    %v1921 = vlaneseq
    %v1922 = vshrl.u32 %v1921, 7
    %v1923 = vsub.s32 1, %v1922
    %v1924 = vrot.slane %v1915, %v1923
    %v1935 = vunpack.c.l.b16 %v1905
    %v1936 = vunpack.c.h.b16 %v1905
    %v1937 = vunpack.c.l.b16 %v1906
    %v1938 = vunpack.c.h.b16 %v1906
    %v1939 = vunpack.c.l.b16 %v1907
    %v1940 = vunpack.c.h.b16 %v1907
    %v1941 = vunpack.c.l.b16 %v1908
    %v1942 = vunpack.c.h.b16 %v1908
    %v1943 = vunpack.c.l.b16 %v1909
    %v1944 = vunpack.c.h.b16 %v1909
    %v1945 = vunpack.c.l.b16 %v1910
    %v1946 = vunpack.c.h.b16 %v1910
    %v1947 = vunpack.c.l.b16 %v1911
    %v1948 = vunpack.c.h.b16 %v1911
    %v1949 = vunpack.c.l.b16 %v1912
    %v1950 = vunpack.c.h.b16 %v1912
    %v1951 = vpack.c.b16 %v1937, %v1935
    %v1952 = vpack.c.b16 %v1938, %v1936
    %v1953 = vpack.c.b16 %v1941, %v1939
    %v1954 = vpack.c.b16 %v1942, %v1940
    %v1955 = vpack.c.b16 %v1945, %v1943
    %v1956 = vpack.c.b16 %v1946, %v1944
    %v1957 = vpack.c.b16 %v1949, %v1947
    %v1958 = vpack.c.b16 %v1950, %v1948
    %v1968 = vsel %vm85, %v1913, 0
    %1970 = vmatprep.subr.bf16.mxu0 0
    %1971 = vmatpush1.bf16.msra.mxu0 0
    %1972 = vmatprep.subr.bf16.mxu0 0
    %1973 = vmatpush1.bf16.msra.mxu0 0
    %1974 = vmatprep.subr.bf16.mxu0 0
    %1975 = vmatpush1.bf16.msra.mxu0 0
    %1976 = vmatprep.subr.bf16.mxu0 0
    %1977 = vmatpush1.bf16.msra.mxu0 0
    %1978 = vmatprep.subr.bf16.mxu0 %v1958
    %1979 = vmatpush1.bf16.msra.mxu0 %v1957
    %1980 = vmatprep.subr.bf16.mxu0 %v1956
    %1981 = vmatpush1.bf16.msra.mxu0 %v1955
    %1982 = vmatprep.subr.bf16.mxu0 %v1954
    %1983 = vmatpush1.bf16.msra.mxu0 %v1953
    %1984 = vmatprep.subr.bf16.mxu0 %v1952
    %1985 = vmatpush1.bf16.msra.mxu0 %v1951
    %1986 = vmatprep.subr.bf16.mxu0 0
    %1987 = vmatpush2.bf16.msra.mxu0 0
    %1988 = vmatprep.subr.bf16.mxu0 0
    %1989 = vmatpush2.bf16.msra.mxu0 0
    %1990 = vmatprep.subr.bf16.mxu0 0
    %1991 = vmatpush2.bf16.msra.mxu0 0
    %1992 = vmatprep.subr.bf16.mxu0 0
    %1993 = vmatpush2.bf16.msra.mxu0 0
    %1994 = vmatprep.subr.bf16.mxu0 0
    %1995 = vmatpush2.bf16.msra.mxu0 0
    %1996 = vmatprep.subr.bf16.mxu0 0
    %1997 = vmatpush2.bf16.msra.mxu0 0
    %1998 = vmatprep.subr.bf16.mxu0 0
    %1999 = vmatpush2.bf16.msra.mxu0 0
    %2000 = vmatprep.subr.bf16.mxu0 0
    %2001 = vmatpush2.bf16.msra.mxu0 0
    %2002 = vmatprep.mubr.bf16.mxu0 0
    %2003 = vmatmul.mubr.bf16.gmra.mxu0 %v1968
    %v2004 = vpop.f32.mrf.mxu0
    %v2005 = vadd.f32 %v1920, %v2004
    %v2006 = vpop.f32.mrf.mxu0
    %v2007 = vadd.f32 %v1924, %v2006
    %v2008 = vpop.f32.mrf.mxu0
    %v2009 = vadd.f32 %v1920, %v2008
    %v2010 = vpop.f32.mrf.mxu0
    %v2011 = vadd.f32 %v1924, %v2010
    %2012 = vdwg.mxu0
    %v2013 = vmul.f32 %v2005, 1.702
    %v2014 = vmul.f32 %v2007, 1.702
    %v2015 = vmul.f32 %v2009, 1.702
    %v2016 = vmul.f32 %v2011, 1.702
    %v2017 = vxor.u32 %v2013, 2147483648
    %v2018 = vxor.u32 %v2014, 2147483648
    %v2019 = vxor.u32 %v2015, 2147483648
    %v2020 = vxor.u32 %v2016, 2147483648
    %v2021 = vmul.f32 %v2017, 1.442695
    %v2022 = vpow.pop %v2021
    %v2023 = vmul.f32 %v2018, 1.442695
    %v2024 = vpow.pop %v2023
    %v2025 = vmul.f32 %v2019, 1.442695
    %v2026 = vpow.pop %v2025
    %v2027 = vmul.f32 %v2020, 1.442695
    %v2028 = vpow.pop %v2027
    %v2029 = vadd.f32 %v2022, 1.0
    %v2030 = vadd.f32 %v2024, 1.0
    %v2031 = vadd.f32 %v2026, 1.0
    %v2032 = vadd.f32 %v2028, 1.0
    %v2033 = vrcp.pop %v2029
    %v2034 = vmul.f32 1.0, %v2033
    %v2035 = vrcp.pop %v2030
    %v2036 = vmul.f32 1.0, %v2035
    %v2037 = vrcp.pop %v2031
    %v2038 = vmul.f32 1.0, %v2037
    %v2039 = vrcp.pop %v2032
    %v2040 = vmul.f32 1.0, %v2039
    %v2041 = vmul.f32 %v2005, %v2034
    %v2042 = vmul.f32 %v2007, %v2036
    %v2043 = vmul.f32 %v2009, %v2038
    %v2044 = vmul.f32 %v2011, %v2040
    %s2045 = scalar_lea.vmem %s13, 128
    %v2046 = vld [vmem:[%s2045] sm:$0xf]
    %v2047 = vld [vmem:[%s2045 + $0x4] sm:$0xf]
    %v2048 = vld [vmem:[%s2045 + $0x8] sm:$0xf]
    %v2049 = vld [vmem:[%s2045 + $0xc] sm:$0xf]
    %v2050 = vld [vmem:[%s2045 + $0x10] sm:$0xf]
    %v2051 = vld [vmem:[%s2045 + $0x14] sm:$0xf]
    %v2052 = vld [vmem:[%s2045 + $0x18] sm:$0xf]
    %v2053 = vld [vmem:[%s2045 + $0x1c] sm:$0xf]
    %v2054 = vld [vmem:[%s2045 + $0x20] sm:$0xf]
    %v2055 = vld [vmem:[%s2045 + $0x24] sm:$0xf]
    %v2056 = vld [vmem:[%s2045 + $0x28] sm:$0xf]
    %v2057 = vld [vmem:[%s2045 + $0x2c] sm:$0xf]
    %v2058 = vld [vmem:[%s2045 + $0x30] sm:$0xf]
    %v2059 = vld [vmem:[%s2045 + $0x34] sm:$0xf]
    %v2060 = vld [vmem:[%s2045 + $0x38] sm:$0xf]
    %v2061 = vld [vmem:[%s2045 + $0x3c] sm:$0xf]
    %v2062 = vld [vmem:[%s2045 + $0x40] sm:$0xf]
    %v2063 = vld [vmem:[%s2045 + $0x44] sm:$0xf]
    %v2064 = vld [vmem:[%s2045 + $0x48] sm:$0xf]
    %v2065 = vld [vmem:[%s2045 + $0x4c] sm:$0xf]
    %v2066 = vld [vmem:[%s2045 + $0x50] sm:$0xf]
    %v2067 = vld [vmem:[%s2045 + $0x54] sm:$0xf]
    %v2068 = vld [vmem:[%s2045 + $0x58] sm:$0xf]
    %v2069 = vld [vmem:[%s2045 + $0x5c] sm:$0xf]
    %v2070 = vld [vmem:[%s2045 + $0x60] sm:$0xf]
    %v2071 = vld [vmem:[%s2045 + $0x64] sm:$0xf]
    %v2072 = vld [vmem:[%s2045 + $0x68] sm:$0xf]
    %v2073 = vld [vmem:[%s2045 + $0x6c] sm:$0xf]
    %v2074 = vld [vmem:[%s2045 + $0x70] sm:$0xf]
    %v2075 = vld [vmem:[%s2045 + $0x74] sm:$0xf]
    %v2076 = vld [vmem:[%s2045 + $0x78] sm:$0xf]
    %v2077 = vld [vmem:[%s2045 + $0x7c] sm:$0xf]
    %v2078 = vpack.c.bf16 %v2043, %v2041
    %v2079 = vpack.c.bf16 %v2044, %v2042
    %v2112 = vunpack.c.l.b16 %v2046
    %v2113 = vunpack.c.l.b16 %v2047
    %v2114 = vunpack.c.l.b16 %v2048
    %v2115 = vunpack.c.l.b16 %v2049
    %v2116 = vunpack.c.l.b16 %v2050
    %v2117 = vunpack.c.l.b16 %v2051
    %v2118 = vunpack.c.l.b16 %v2052
    %v2119 = vunpack.c.l.b16 %v2053
    %v2120 = vunpack.c.l.b16 %v2054
    %v2121 = vunpack.c.l.b16 %v2055
    %v2122 = vunpack.c.l.b16 %v2056
    %v2123 = vunpack.c.l.b16 %v2057
    %v2124 = vunpack.c.l.b16 %v2058
    %v2125 = vunpack.c.l.b16 %v2059
    %v2126 = vunpack.c.l.b16 %v2060
    %v2127 = vunpack.c.l.b16 %v2061
    %v2128 = vunpack.c.l.b16 %v2062
    %v2129 = vunpack.c.l.b16 %v2063
    %v2130 = vunpack.c.l.b16 %v2064
    %v2131 = vunpack.c.l.b16 %v2065
    %v2132 = vunpack.c.l.b16 %v2066
    %v2133 = vunpack.c.l.b16 %v2067
    %v2134 = vunpack.c.l.b16 %v2068
    %v2135 = vunpack.c.l.b16 %v2069
    %v2136 = vunpack.c.l.b16 %v2070
    %v2137 = vunpack.c.l.b16 %v2071
    %v2138 = vunpack.c.l.b16 %v2072
    %v2139 = vunpack.c.l.b16 %v2073
    %v2140 = vunpack.c.l.b16 %v2074
    %v2141 = vunpack.c.l.b16 %v2075
    %v2142 = vunpack.c.l.b16 %v2076
    %v2143 = vunpack.c.l.b16 %v2077
    %v2144 = vpack.c.b16 %v2113, %v2112
    %v2145 = vpack.c.b16 %v2115, %v2114
    %v2146 = vpack.c.b16 %v2117, %v2116
    %v2147 = vpack.c.b16 %v2119, %v2118
    %v2148 = vpack.c.b16 %v2121, %v2120
    %v2149 = vpack.c.b16 %v2123, %v2122
    %v2150 = vpack.c.b16 %v2125, %v2124
    %v2151 = vpack.c.b16 %v2127, %v2126
    %v2152 = vpack.c.b16 %v2129, %v2128
    %v2153 = vpack.c.b16 %v2131, %v2130
    %v2154 = vpack.c.b16 %v2133, %v2132
    %v2155 = vpack.c.b16 %v2135, %v2134
    %v2156 = vpack.c.b16 %v2137, %v2136
    %v2157 = vpack.c.b16 %v2139, %v2138
    %v2158 = vpack.c.b16 %v2141, %v2140
    %v2159 = vpack.c.b16 %v2143, %v2142
    %2176 = vmatprep.subr.bf16.mxu0 0
    %2177 = vmatpush1.bf16.msra.mxu0 %v2151
    %2178 = vmatprep.subr.bf16.mxu0 0
    %2179 = vmatpush1.bf16.msra.mxu0 %v2150
    %2180 = vmatprep.subr.bf16.mxu0 0
    %2181 = vmatpush1.bf16.msra.mxu0 %v2149
    %2182 = vmatprep.subr.bf16.mxu0 0
    %2183 = vmatpush1.bf16.msra.mxu0 %v2148
    %2184 = vmatprep.subr.bf16.mxu0 0
    %2185 = vmatpush1.bf16.msra.mxu0 %v2147
    %2186 = vmatprep.subr.bf16.mxu0 0
    %2187 = vmatpush1.bf16.msra.mxu0 %v2146
    %2188 = vmatprep.subr.bf16.mxu0 0
    %2189 = vmatpush1.bf16.msra.mxu0 %v2145
    %2190 = vmatprep.subr.bf16.mxu0 0
    %2191 = vmatpush1.bf16.msra.mxu0 %v2144
    %2192 = vmatprep.subr.bf16.mxu0 0
    %2193 = vmatpush2.bf16.msra.mxu0 %v2159
    %2194 = vmatprep.subr.bf16.mxu0 0
    %2195 = vmatpush2.bf16.msra.mxu0 %v2158
    %2196 = vmatprep.subr.bf16.mxu0 0
    %2197 = vmatpush2.bf16.msra.mxu0 %v2157
    %2198 = vmatprep.subr.bf16.mxu0 0
    %2199 = vmatpush2.bf16.msra.mxu0 %v2156
    %2200 = vmatprep.subr.bf16.mxu0 0
    %2201 = vmatpush2.bf16.msra.mxu0 %v2155
    %2202 = vmatprep.subr.bf16.mxu0 0
    %2203 = vmatpush2.bf16.msra.mxu0 %v2154
    %2204 = vmatprep.subr.bf16.mxu0 0
    %2205 = vmatpush2.bf16.msra.mxu0 %v2153
    %2206 = vmatprep.subr.bf16.mxu0 0
    %2207 = vmatpush2.bf16.msra.mxu0 %v2152
    %2208 = vmatprep.mubr.bf16.mxu0 %v2079
    %2209 = vmatmul.mubr.bf16.gmra.mxu0 %v2078
    %v2210 = vpop.f32.mrf.mxu0
    %v2211 = vadd.f32 0.0, %v2210
    %v2212 = vpop.f32.mrf.mxu0
    %v2213 = vpop.f32.mrf.mxu0
    %v2214 = vadd.f32 0.0, %v2213
    %v2215 = vpop.f32.mrf.mxu0
    %2216 = vdwg.mxu0
    %v2217 = vadd.f32 %v1856, %v2211
    %v2218 = vadd.f32 %v1857, %v2214
    %s2219 = scalar_lea.vmem %s14, 1
    %v2220 = vld [vmem:[%s2219] sm:$0x1]
    %v2222 = vlaneseq
    %v2223 = vshrl.u32 %v2222, 7
    %v2224 = vsub.s32 0, %v2223
    %v2225 = vrot.slane %v2220, %v2224
    %v2227 = vadd.f32 %v2217, %v2225
    %v2228 = vadd.f32 %v2218, %v2225
    %v2229 = vlaneseq
    %v2230 = vshrl.u32 %v2229, 7
    %s2231 = sld [smem:[#allocation5]]
    %v2232 = vstv %s2231
    %vm2233 = vcmp.eq.s32.totalorder %v2230, %v2232
    %v2234 = vsel %vm2233, 1, 0
    %vm2235 = vcmp.eq.s32.totalorder %v2234, 1
    %v2236 = vsel %vm2235, %v2227, 0.0
    %v2237 = vsel %vm85, %v2236, 0.0
    %v2238 = vrot.slane %v2237, 4
    %v2239 = vadd.f32 %v2237, %v2238
    %v2240 = vrot.slane %v2239, 2
    %v2241 = vadd.f32 %v2239, %v2240
    %v2242 = vrot.slane %v2241, 1
    %v2243 = vadd.f32 %v2241, %v2242
    %vm2244 = vcmask 516096
    %2245 = vst.msk [vmem:[#allocation3] sm:$0x1] %vm2244, %v2243
    %s2246 = sld [smem:[#allocation5 + $0x1]]
    %v2247 = vstv %s2246
    %vm2248 = vcmp.eq.s32.totalorder %v2230, %v2247
    %v2249 = vsel %vm2248, 1, 0
    %vm2250 = vcmp.eq.s32.totalorder %v2249, 1
    %v2251 = vsel %vm2250, %v2228, 0.0
    %v2252 = vsel %vm85, %v2251, 0.0
    %v2253 = vrot.slane %v2252, 4
    %v2254 = vadd.f32 %v2252, %v2253
    %v2255 = vrot.slane %v2254, 2
    %v2256 = vadd.f32 %v2254, %v2255
    %v2257 = vrot.slane %v2256, 1
    %v2258 = vadd.f32 %v2256, %v2257
    %2259 = vst.msk [vmem:[#allocation3 + $0x1] sm:$0x1] %vm2244, %v2258
    %v2260 = vld [vmem:[#allocation3] sm:$0x3]
    %v2261 = vld [vmem:[%s15] sm:$0x1]
    %v2262 = vld [vmem:[%s16] sm:$0x1]
    %vm2263 = vcmask 517120
    %v2264 = vsel %vm2263, %v2260, 0.0
    %2265 = vadd.xlane.f32.xlu0 %v2264
    %v2266 = vpop.xlane.xlu0 %2265
    %v2267 = vmul.f32 %v2266, %v92
    %v2268 = vsub.f32 %v2260, %v2267
    %v2269 = vmul.f32 %v2268, %v2268
    %v2270 = vsel %vm2263, %v2269, 0.0
    %2271 = vadd.xlane.f32.xlu0 %v2270
    %v2272 = vpop.xlane.xlu0 %2271
    %v2273 = vmul.f32 %v2272, %v92
    %v2274 = vadd.f32 %v2273, 1e-05
    %v2275 = vrsqrt.pop %v2274
    %v2276 = vmul.f32 %v2268, %v2275
    %v2278 = vlaneseq
    %v2279 = vshrl.u32 %v2278, 7
    %v2280 = vsub.s32 0, %v2279
    %v2281 = vrot.slane %v2261, %v2280
    %v2283 = vmul.f32 %v2276, %v2281
    %v2285 = vlaneseq
    %v2286 = vshrl.u32 %v2285, 7
    %v2287 = vsub.s32 0, %v2286
    %v2288 = vrot.slane %v2262, %v2287
    %v2290 = vadd.f32 %v2283, %v2288
    %v2291 = vld [vmem:[%s17] sm:$0xf]
    %v2292 = vld [vmem:[%s17 + $0x4] sm:$0xf]
    %v2293 = vld [vmem:[%s17 + $0x8] sm:$0xf]
    %v2294 = vld [vmem:[%s17 + $0xc] sm:$0xf]
    %v2295 = vld [vmem:[%s17 + $0x10] sm:$0xf]
    %v2296 = vld [vmem:[%s17 + $0x14] sm:$0xf]
    %v2297 = vld [vmem:[%s17 + $0x18] sm:$0xf]
    %v2298 = vld [vmem:[%s17 + $0x1c] sm:$0xf]
    %v2299 = vpack.c.bf16 %v2290, %v2290
    %v2308 = vunpack.c.l.b16 %v2291
    %v2309 = vunpack.c.l.b16 %v2292
    %v2310 = vunpack.c.l.b16 %v2293
    %v2311 = vunpack.c.l.b16 %v2294
    %v2312 = vunpack.c.l.b16 %v2295
    %v2313 = vunpack.c.l.b16 %v2296
    %v2314 = vunpack.c.l.b16 %v2297
    %v2315 = vunpack.c.l.b16 %v2298
    %v2316 = vpack.c.b16 %v2309, %v2308
    %v2317 = vpack.c.b16 %v2311, %v2310
    %v2318 = vpack.c.b16 %v2313, %v2312
    %v2319 = vpack.c.b16 %v2315, %v2314
    %v2325 = vsel %vm85, %v2299, 0
    %2327 = vmatprep.subr.bf16.mxu0 0
    %2328 = vmatpush1.bf16.msra.mxu0 0
    %2329 = vmatprep.subr.bf16.mxu0 0
    %2330 = vmatpush1.bf16.msra.mxu0 0
    %2331 = vmatprep.subr.bf16.mxu0 0
    %2332 = vmatpush1.bf16.msra.mxu0 0
    %2333 = vmatprep.subr.bf16.mxu0 0
    %2334 = vmatpush1.bf16.msra.mxu0 0
    %2335 = vmatprep.subr.bf16.mxu0 0
    %2336 = vmatpush1.bf16.msra.mxu0 %v2319
    %2337 = vmatprep.subr.bf16.mxu0 0
    %2338 = vmatpush1.bf16.msra.mxu0 %v2318
    %2339 = vmatprep.subr.bf16.mxu0 0
    %2340 = vmatpush1.bf16.msra.mxu0 %v2317
    %2341 = vmatprep.subr.bf16.mxu0 0
    %2342 = vmatpush1.bf16.msra.mxu0 %v2316
    %2343 = vmatprep.subr.bf16.mxu0 0
    %2344 = vmatpush2.bf16.msra.mxu0 0
    %2345 = vmatprep.subr.bf16.mxu0 0
    %2346 = vmatpush2.bf16.msra.mxu0 0
    %2347 = vmatprep.subr.bf16.mxu0 0
    %2348 = vmatpush2.bf16.msra.mxu0 0
    %2349 = vmatprep.subr.bf16.mxu0 0
    %2350 = vmatpush2.bf16.msra.mxu0 0
    %2351 = vmatprep.subr.bf16.mxu0 0
    %2352 = vmatpush2.bf16.msra.mxu0 0
    %2353 = vmatprep.subr.bf16.mxu0 0
    %2354 = vmatpush2.bf16.msra.mxu0 0
    %2355 = vmatprep.subr.bf16.mxu0 0
    %2356 = vmatpush2.bf16.msra.mxu0 0
    %2357 = vmatprep.subr.bf16.mxu0 0
    %2358 = vmatpush2.bf16.msra.mxu0 0
    %2359 = vmatprep.mubr.bf16.mxu0 0
    %2360 = vmatmul.mubr.bf16.gmra.mxu0 %v2325
    %v2361 = vpop.f32.mrf.mxu0
    %v2362 = vadd.f32 0.0, %v2361
    %v2363 = vpop.f32.mrf.mxu0
    %v2364 = vpop.f32.mrf.mxu0
    %v2365 = vpop.f32.mrf.mxu0
    %2366 = vdwg.mxu0
    %v2367 = vmul.f32 %v2362, %v2362
    %v2368 = vsel %vm2263, %v2367, 0.0
    %2369 = vadd.xlane.f32.xlu0 %v2368
    %v2370 = vpop.xlane.xlu0 %2369
    %v2371 = vadd.f32 %v2370, 1e-12
    %v2372 = vrsqrt.pop %v2371
    %v2373 = vmul.f32 %v2362, %v2372
    %v2374 = vld [vmem:[%s18] sm:$0x3]
    %s2375 = sld [smem:[#allocation4]]
    %v2376 = vstv %s2375
    %v2377 = vmul.f32 %v2376, 1.442695
    %v2378 = vpow.pop %v2377
    %s2379 = vtos %v2378
    %v2381 = vsel %vm85, %v2374, 0
    %v2384 = vsel %vm85, %v2373, 0
    %2386 = vmatprep.subr.mxu0 0.0
    %2387 = vmatpush1.xpose.msra.mxu0 0.0
    %2388 = vmatprep.subr.mxu0 0.0
    %2389 = vmatpush1.xpose.msra.mxu0 0.0
    %2390 = vmatprep.subr.mxu0 0.0
    %2391 = vmatpush1.xpose.msra.mxu0 0.0
    %2392 = vmatprep.subr.mxu0 0.0
    %2393 = vmatpush1.xpose.msra.mxu0 0.0
    %2394 = vmatprep.subr.mxu0 0.0
    %2395 = vmatpush1.xpose.msra.mxu0 0.0
    %2396 = vmatprep.subr.mxu0 0.0
    %2397 = vmatpush1.xpose.msra.mxu0 0.0
    %2398 = vmatprep.subr.mxu0 0.0
    %2399 = vmatpush1.xpose.msra.mxu0 0.0
    %2400 = vmatprep.subr.mxu0 0.0
    %2401 = vmatpush1.xpose.msra.mxu0 0.0
    %2402 = vmatprep.subr.mxu0 0.0
    %2403 = vmatpush1.xpose.msra.mxu0 0.0
    %2404 = vmatprep.subr.mxu0 0.0
    %2405 = vmatpush1.xpose.msra.mxu0 0.0
    %2406 = vmatprep.subr.mxu0 0.0
    %2407 = vmatpush1.xpose.msra.mxu0 0.0
    %2408 = vmatprep.subr.mxu0 0.0
    %2409 = vmatpush1.xpose.msra.mxu0 0.0
    %2410 = vmatprep.subr.mxu0 0.0
    %2411 = vmatpush1.xpose.msra.mxu0 0.0
    %2412 = vmatprep.subr.mxu0 0.0
    %2413 = vmatpush1.xpose.msra.mxu0 0.0
    %2414 = vmatprep.subr.mxu0 0.0
    %2415 = vmatpush1.xpose.msra.mxu0 0.0
    %2416 = vmatprep.subr.mxu0 0.0
    %2417 = vmatpush1.xpose.msra.mxu0 %v2384
    %2418 = vmatprep.subr.mxu0 0.0
    %2419 = vmatpush2.xpose.msra.mxu0 0.0
    %2420 = vmatprep.subr.mxu0 0.0
    %2421 = vmatpush2.xpose.msra.mxu0 0.0
    %2422 = vmatprep.subr.mxu0 0.0
    %2423 = vmatpush2.xpose.msra.mxu0 0.0
    %2424 = vmatprep.subr.mxu0 0.0
    %2425 = vmatpush2.xpose.msra.mxu0 0.0
    %2426 = vmatprep.subr.mxu0 0.0
    %2427 = vmatpush2.xpose.msra.mxu0 0.0
    %2428 = vmatprep.subr.mxu0 0.0
    %2429 = vmatpush2.xpose.msra.mxu0 0.0
    %2430 = vmatprep.subr.mxu0 0.0
    %2431 = vmatpush2.xpose.msra.mxu0 0.0
    %2432 = vmatprep.subr.mxu0 0.0
    %2433 = vmatpush2.xpose.msra.mxu0 0.0
    %2434 = vmatprep.subr.mxu0 0.0
    %2435 = vmatpush2.xpose.msra.mxu0 0.0
    %2436 = vmatprep.subr.mxu0 0.0
    %2437 = vmatpush2.xpose.msra.mxu0 0.0
    %2438 = vmatprep.subr.mxu0 0.0
    %2439 = vmatpush2.xpose.msra.mxu0 0.0
    %2440 = vmatprep.subr.mxu0 0.0
    %2441 = vmatpush2.xpose.msra.mxu0 0.0
    %2442 = vmatprep.subr.mxu0 0.0
    %2443 = vmatpush2.xpose.msra.mxu0 0.0
    %2444 = vmatprep.subr.mxu0 0.0
    %2445 = vmatpush2.xpose.msra.mxu0 0.0
    %2446 = vmatprep.subr.mxu0 0.0
    %2447 = vmatpush2.xpose.msra.mxu0 0.0
    %2448 = vmatprep.subr.mxu0 0.0
    %2449 = vmatpush2.xpose.msra.mxu0 0.0
    %2450 = vmatprep.mubr.f32.mxu0 0.0
    %2451 = vmatmul.mubr.f32.gmra.mxu0 %v2381
    %v2452 = vpop.f32.mrf.mxu0
    %v2453 = vadd.f32 0.0, %v2452
    %v2454 = vpop.f32.mrf.mxu0
    %2455 = vdwg.mxu0
    %v2456 = vstv %s2379
    %v2457 = vmul.f32 %v2456, %v2453
    %vm2458 = vcmask 9216
    %2459 = vst.msk [vmem:[%s20] sm:$0x3] %vm2458, %v2457
    // Predicated region
    $region86: #{clip_forward.3} parent=1 // pred_check
      _
    $region87: #{clip_forward.3} parent=1 // pred_check_branch
      %2461 = sbr.rel (0) target = $region89
    $region88: #{clip_forward.3} parent=1 // pred_region
      _
    $region89: #{clip_forward.3} parent=1 // pred_fallthru
      _
    // Predicated region
    $region90: #{clip_forward.3} parent=1 // pred_check
      _
    $region91: #{clip_forward.3} parent=1 // pred_check_branch
      %2463 = sbr.rel (0) target = $region93
    $region92: #{clip_forward.3} parent=1 // pred_region
      _
    $region93: #{clip_forward.3} parent=1 // pred_fallthru
      _
    %2464 = vsyncpa [#allocation6], 1

// kernel: clip_forward.2
$region0: #{clip_forward.2}
  #allocation0 [shape = 'u32[]', space=smem, size = 0x4, offset = 0x4, fixed_abs, tag = 'smem constant byte address 0x4 - core index']
  #allocation1 [shape = 'u32[144,128]{1,0:T(1,128)}', space=vmem, size = 0x12000, scoped, tag = 'internal scratch']
  #allocation2 [shape = 'f32[10,64]{1,0:T(8,128)}', space=vmem, size = 0x2000, scoped, tag = 'scratch operand']
  #allocation3 [shape = 'f32[10,64]{1,0:T(8,128)}', space=vmem, size = 0x2000, scoped, tag = 'scratch operand']
  %s0 = inlined_call_operand.vmem [shape: f32[8,768], index: 0, kind: input, shape index: {}]
  %s1 = inlined_call_operand.vmem [shape: bf16[768,64], index: 1, kind: input, shape index: {}]
  %s2 = inlined_call_operand.vmem [shape: f32[1,64], index: 2, kind: input, shape index: {}]
  %s3 = inlined_call_operand.vmem [shape: f32[5,64], index: 3, kind: input, shape index: {}]
  %s4 = inlined_call_operand.vmem [shape: f32[1,64], index: 4, kind: input, shape index: {}]
  %s5 = inlined_call_operand.vmem [shape: f32[1,64], index: 5, kind: input, shape index: {}]
  %s6 = inlined_call_operand.vmem [shape: f32[2,1,64], index: 6, kind: input, shape index: {}]
  %s7 = inlined_call_operand.vmem [shape: f32[2,1,64], index: 7, kind: input, shape index: {}]
  %s8 = inlined_call_operand.vmem [shape: bf16[2,64,192], index: 8, kind: input, shape index: {}]
  %s9 = inlined_call_operand.vmem [shape: f32[2,1,192], index: 9, kind: input, shape index: {}]
  %s10 = inlined_call_operand.vmem [shape: bf16[2,64,64], index: 10, kind: input, shape index: {}]
  %s11 = inlined_call_operand.vmem [shape: f32[2,1,64], index: 11, kind: input, shape index: {}]
  %s12 = inlined_call_operand.vmem [shape: f32[2,1,64], index: 12, kind: input, shape index: {}]
  %s13 = inlined_call_operand.vmem [shape: f32[2,1,64], index: 13, kind: input, shape index: {}]
  %s14 = inlined_call_operand.vmem [shape: bf16[2,64,256], index: 14, kind: input, shape index: {}]
  %s15 = inlined_call_operand.vmem [shape: f32[2,1,256], index: 15, kind: input, shape index: {}]
  %s16 = inlined_call_operand.vmem [shape: bf16[2,256,64], index: 16, kind: input, shape index: {}]
  %s17 = inlined_call_operand.vmem [shape: f32[2,1,64], index: 17, kind: input, shape index: {}]
  %s18 = inlined_call_operand.vmem [shape: f32[1,64], index: 18, kind: input, shape index: {}]
  %s19 = inlined_call_operand.vmem [shape: f32[1,64], index: 19, kind: input, shape index: {}]
  %s20 = inlined_call_operand.vmem [shape: bf16[64,64], index: 20, kind: input, shape index: {}]
  %s21 = inlined_call_operand.vmem [shape: f32[2,64], index: 21, kind: output, shape index: {}]
  %s22 = sld [smem:[#allocation0]]
  $region94: #{clip_forward.2} parent=0
    _
  %s24 = ssub.s32 1, %s22
  %s25 = scalar_select 0, %s24, %s22
  // Predicated region
  $region2: #{clip_forward.2} parent=0 // pred_check
    _
  $region3: #{clip_forward.2} parent=0 // pred_check_branch
    %27 = sbr.rel (0) target = $region5
  $region4: #{clip_forward.2} parent=0 // pred_region
    _
  $region5: #{clip_forward.2} parent=0 // pred_fallthru
    _
  // Predicated region
  $region6: #{clip_forward.2} parent=0 // pred_check
    _
  $region7: #{clip_forward.2} parent=0 // pred_check_branch
    %29 = sbr.rel (0) target = $region9
  $region8: #{clip_forward.2} parent=0 // pred_region
    _
  $region9: #{clip_forward.2} parent=0 // pred_fallthru
    _
  // Predicated region
  $region10: #{clip_forward.2} parent=0 // pred_check
    _
  $region11: #{clip_forward.2} parent=0 // pred_check_branch
    %31 = sbr.rel (0) target = $region13
  $region12: #{clip_forward.2} parent=0 // pred_region
    _
  $region13: #{clip_forward.2} parent=0 // pred_fallthru
    _
  // Predicated region
  $region14: #{clip_forward.2} parent=0 // pred_check
    _
  $region15: #{clip_forward.2} parent=0 // pred_check_branch
    %33 = sbr.rel (0) target = $region17
  $region16: #{clip_forward.2} parent=0 // pred_region
    _
  $region17: #{clip_forward.2} parent=0 // pred_fallthru
    _
  // Predicated region
  $region18: #{clip_forward.2} parent=0 // pred_check
    _
  $region19: #{clip_forward.2} parent=0 // pred_check_branch
    %35 = sbr.rel (0) target = $region21
  $region20: #{clip_forward.2} parent=0 // pred_region
    _
  $region21: #{clip_forward.2} parent=0 // pred_fallthru
    _
  // Predicated region
  $region22: #{clip_forward.2} parent=0 // pred_check
    _
  $region23: #{clip_forward.2} parent=0 // pred_check_branch
    %37 = sbr.rel (0) target = $region25
  $region24: #{clip_forward.2} parent=0 // pred_region
    _
  $region25: #{clip_forward.2} parent=0 // pred_fallthru
    _
  // Predicated region
  $region26: #{clip_forward.2} parent=0 // pred_check
    _
  $region27: #{clip_forward.2} parent=0 // pred_check_branch
    %39 = sbr.rel (0) target = $region29
  $region28: #{clip_forward.2} parent=0 // pred_region
    _
  $region29: #{clip_forward.2} parent=0 // pred_fallthru
    _
  // Predicated region
  $region30: #{clip_forward.2} parent=0 // pred_check
    _
  $region31: #{clip_forward.2} parent=0 // pred_check_branch
    %41 = sbr.rel (0) target = $region33
  $region32: #{clip_forward.2} parent=0 // pred_region
    _
  $region33: #{clip_forward.2} parent=0 // pred_fallthru
    _
  // Predicated region
  $region34: #{clip_forward.2} parent=0 // pred_check
    _
  $region35: #{clip_forward.2} parent=0 // pred_check_branch
    %43 = sbr.rel (0) target = $region37
  $region36: #{clip_forward.2} parent=0 // pred_region
    _
  $region37: #{clip_forward.2} parent=0 // pred_fallthru
    _
  // Predicated region
  $region38: #{clip_forward.2} parent=0 // pred_check
    _
  $region39: #{clip_forward.2} parent=0 // pred_check_branch
    %45 = sbr.rel (0) target = $region41
  $region40: #{clip_forward.2} parent=0 // pred_region
    _
  $region41: #{clip_forward.2} parent=0 // pred_fallthru
    _
  // Predicated region
  $region42: #{clip_forward.2} parent=0 // pred_check
    _
  $region43: #{clip_forward.2} parent=0 // pred_check_branch
    %47 = sbr.rel (0) target = $region45
  $region44: #{clip_forward.2} parent=0 // pred_region
    _
  $region45: #{clip_forward.2} parent=0 // pred_fallthru
    _
  // Predicated region
  $region46: #{clip_forward.2} parent=0 // pred_check
    _
  $region47: #{clip_forward.2} parent=0 // pred_check_branch
    %49 = sbr.rel (0) target = $region49
  $region48: #{clip_forward.2} parent=0 // pred_region
    _
  $region49: #{clip_forward.2} parent=0 // pred_fallthru
    _
  // Predicated region
  $region50: #{clip_forward.2} parent=0 // pred_check
    _
  $region51: #{clip_forward.2} parent=0 // pred_check_branch
    %51 = sbr.rel (0) target = $region53
  $region52: #{clip_forward.2} parent=0 // pred_region
    _
  $region53: #{clip_forward.2} parent=0 // pred_fallthru
    _
  // Predicated region
  $region54: #{clip_forward.2} parent=0 // pred_check
    _
  $region55: #{clip_forward.2} parent=0 // pred_check_branch
    %53 = sbr.rel (0) target = $region57
  $region56: #{clip_forward.2} parent=0 // pred_region
    _
  $region57: #{clip_forward.2} parent=0 // pred_fallthru
    _
  // Predicated region
  $region58: #{clip_forward.2} parent=0 // pred_check
    _
  $region59: #{clip_forward.2} parent=0 // pred_check_branch
    %55 = sbr.rel (0) target = $region61
  $region60: #{clip_forward.2} parent=0 // pred_region
    _
  $region61: #{clip_forward.2} parent=0 // pred_fallthru
    _
  // Predicated region
  $region62: #{clip_forward.2} parent=0 // pred_check
    _
  $region63: #{clip_forward.2} parent=0 // pred_check_branch
    %57 = sbr.rel (0) target = $region65
  $region64: #{clip_forward.2} parent=0 // pred_region
    _
  $region65: #{clip_forward.2} parent=0 // pred_fallthru
    _
  // Predicated region
  $region66: #{clip_forward.2} parent=0 // pred_check
    _
  $region67: #{clip_forward.2} parent=0 // pred_check_branch
    %59 = sbr.rel (0) target = $region69
  $region68: #{clip_forward.2} parent=0 // pred_region
    _
  $region69: #{clip_forward.2} parent=0 // pred_fallthru
    _
  // Predicated region
  $region70: #{clip_forward.2} parent=0 // pred_check
    _
  $region71: #{clip_forward.2} parent=0 // pred_check_branch
    %61 = sbr.rel (0) target = $region73
  $region72: #{clip_forward.2} parent=0 // pred_region
    _
  $region73: #{clip_forward.2} parent=0 // pred_fallthru
    _
  // Predicated region
  $region74: #{clip_forward.2} parent=0 // pred_check
    _
  $region75: #{clip_forward.2} parent=0 // pred_check_branch
    %63 = sbr.rel (0) target = $region77
  $region76: #{clip_forward.2} parent=0 // pred_region
    _
  $region77: #{clip_forward.2} parent=0 // pred_fallthru
    _
  // Predicated region
  $region78: #{clip_forward.2} parent=0 // pred_check
    _
  $region79: #{clip_forward.2} parent=0 // pred_check_branch
    %65 = sbr.rel (0) target = $region81
  $region80: #{clip_forward.2} parent=0 // pred_region
    _
  $region81: #{clip_forward.2} parent=0 // pred_fallthru
    _
  // Predicated region
  $region82: #{clip_forward.2} parent=0 // pred_check
    _
  $region83: #{clip_forward.2} parent=0 // pred_check_branch
    %67 = sbr.rel (0) target = $region85
  $region84: #{clip_forward.2} parent=0 // pred_region
    _
  $region85: #{clip_forward.2} parent=0 // pred_fallthru
    _
  %v69 = vld [vmem:[%s0] sm:$0xff]
  %v70 = vld [vmem:[%s0 + $0x8] sm:$0xff]
  %v71 = vld [vmem:[%s0 + $0x10] sm:$0xff]
  %v72 = vld [vmem:[%s0 + $0x18] sm:$0xff]
  %v73 = vld [vmem:[%s0 + $0x20] sm:$0xff]
  %v74 = vld [vmem:[%s0 + $0x28] sm:$0xff]
  %v75 = vld [vmem:[%s1] sm:$0xf]
  %v76 = vld [vmem:[%s1 + $0x4] sm:$0xf]
  %v77 = vld [vmem:[%s1 + $0x8] sm:$0xf]
  %v78 = vld [vmem:[%s1 + $0xc] sm:$0xf]
  %v79 = vld [vmem:[%s1 + $0x10] sm:$0xf]
  %v80 = vld [vmem:[%s1 + $0x14] sm:$0xf]
  %v81 = vld [vmem:[%s1 + $0x18] sm:$0xf]
  %v82 = vld [vmem:[%s1 + $0x1c] sm:$0xf]
  %v83 = vld [vmem:[%s1 + $0x20] sm:$0xf]
  %v84 = vld [vmem:[%s1 + $0x24] sm:$0xf]
  %v85 = vld [vmem:[%s1 + $0x28] sm:$0xf]
  %v86 = vld [vmem:[%s1 + $0x2c] sm:$0xf]
  %v87 = vld [vmem:[%s1 + $0x30] sm:$0xf]
  %v88 = vld [vmem:[%s1 + $0x34] sm:$0xf]
  %v89 = vld [vmem:[%s1 + $0x38] sm:$0xf]
  %v90 = vld [vmem:[%s1 + $0x3c] sm:$0xf]
  %v91 = vld [vmem:[%s1 + $0x40] sm:$0xf]
  %v92 = vld [vmem:[%s1 + $0x44] sm:$0xf]
  %v93 = vld [vmem:[%s1 + $0x48] sm:$0xf]
  %v94 = vld [vmem:[%s1 + $0x4c] sm:$0xf]
  %v95 = vld [vmem:[%s1 + $0x50] sm:$0xf]
  %v96 = vld [vmem:[%s1 + $0x54] sm:$0xf]
  %v97 = vld [vmem:[%s1 + $0x58] sm:$0xf]
  %v98 = vld [vmem:[%s1 + $0x5c] sm:$0xf]
  %v99 = vld [vmem:[%s1 + $0x60] sm:$0xf]
  %v100 = vld [vmem:[%s1 + $0x64] sm:$0xf]
  %v101 = vld [vmem:[%s1 + $0x68] sm:$0xf]
  %v102 = vld [vmem:[%s1 + $0x6c] sm:$0xf]
  %v103 = vld [vmem:[%s1 + $0x70] sm:$0xf]
  %v104 = vld [vmem:[%s1 + $0x74] sm:$0xf]
  %v105 = vld [vmem:[%s1 + $0x78] sm:$0xf]
  %v106 = vld [vmem:[%s1 + $0x7c] sm:$0xf]
  %v107 = vld [vmem:[%s1 + $0x80] sm:$0xf]
  %v108 = vld [vmem:[%s1 + $0x84] sm:$0xf]
  %v109 = vld [vmem:[%s1 + $0x88] sm:$0xf]
  %v110 = vld [vmem:[%s1 + $0x8c] sm:$0xf]
  %v111 = vld [vmem:[%s1 + $0x90] sm:$0xf]
  %v112 = vld [vmem:[%s1 + $0x94] sm:$0xf]
  %v113 = vld [vmem:[%s1 + $0x98] sm:$0xf]
  %v114 = vld [vmem:[%s1 + $0x9c] sm:$0xf]
  %v115 = vld [vmem:[%s1 + $0xa0] sm:$0xf]
  %v116 = vld [vmem:[%s1 + $0xa4] sm:$0xf]
  %v117 = vld [vmem:[%s1 + $0xa8] sm:$0xf]
  %v118 = vld [vmem:[%s1 + $0xac] sm:$0xf]
  %v119 = vld [vmem:[%s1 + $0xb0] sm:$0xf]
  %v120 = vld [vmem:[%s1 + $0xb4] sm:$0xf]
  %v121 = vld [vmem:[%s1 + $0xb8] sm:$0xf]
  %v122 = vld [vmem:[%s1 + $0xbc] sm:$0xf]
  %v123 = vld [vmem:[%s1 + $0xc0] sm:$0xf]
  %v124 = vld [vmem:[%s1 + $0xc4] sm:$0xf]
  %v125 = vld [vmem:[%s1 + $0xc8] sm:$0xf]
  %v126 = vld [vmem:[%s1 + $0xcc] sm:$0xf]
  %v127 = vld [vmem:[%s1 + $0xd0] sm:$0xf]
  %v128 = vld [vmem:[%s1 + $0xd4] sm:$0xf]
  %v129 = vld [vmem:[%s1 + $0xd8] sm:$0xf]
  %v130 = vld [vmem:[%s1 + $0xdc] sm:$0xf]
  %v131 = vld [vmem:[%s1 + $0xe0] sm:$0xf]
  %v132 = vld [vmem:[%s1 + $0xe4] sm:$0xf]
  %v133 = vld [vmem:[%s1 + $0xe8] sm:$0xf]
  %v134 = vld [vmem:[%s1 + $0xec] sm:$0xf]
  %v135 = vld [vmem:[%s1 + $0xf0] sm:$0xf]
  %v136 = vld [vmem:[%s1 + $0xf4] sm:$0xf]
  %v137 = vld [vmem:[%s1 + $0xf8] sm:$0xf]
  %v138 = vld [vmem:[%s1 + $0xfc] sm:$0xf]
  %v139 = vld [vmem:[%s1 + $0x100] sm:$0xf]
  %v140 = vld [vmem:[%s1 + $0x104] sm:$0xf]
  %v141 = vld [vmem:[%s1 + $0x108] sm:$0xf]
  %v142 = vld [vmem:[%s1 + $0x10c] sm:$0xf]
  %v143 = vld [vmem:[%s1 + $0x110] sm:$0xf]
  %v144 = vld [vmem:[%s1 + $0x114] sm:$0xf]
  %v145 = vld [vmem:[%s1 + $0x118] sm:$0xf]
  %v146 = vld [vmem:[%s1 + $0x11c] sm:$0xf]
  %v147 = vld [vmem:[%s1 + $0x120] sm:$0xf]
  %v148 = vld [vmem:[%s1 + $0x124] sm:$0xf]
  %v149 = vld [vmem:[%s1 + $0x128] sm:$0xf]
  %v150 = vld [vmem:[%s1 + $0x12c] sm:$0xf]
  %v151 = vld [vmem:[%s1 + $0x130] sm:$0xf]
  %v152 = vld [vmem:[%s1 + $0x134] sm:$0xf]
  %v153 = vld [vmem:[%s1 + $0x138] sm:$0xf]
  %v154 = vld [vmem:[%s1 + $0x13c] sm:$0xf]
  %v155 = vld [vmem:[%s1 + $0x140] sm:$0xf]
  %v156 = vld [vmem:[%s1 + $0x144] sm:$0xf]
  %v157 = vld [vmem:[%s1 + $0x148] sm:$0xf]
  %v158 = vld [vmem:[%s1 + $0x14c] sm:$0xf]
  %v159 = vld [vmem:[%s1 + $0x150] sm:$0xf]
  %v160 = vld [vmem:[%s1 + $0x154] sm:$0xf]
  %v161 = vld [vmem:[%s1 + $0x158] sm:$0xf]
  %v162 = vld [vmem:[%s1 + $0x15c] sm:$0xf]
  %v163 = vld [vmem:[%s1 + $0x160] sm:$0xf]
  %v164 = vld [vmem:[%s1 + $0x164] sm:$0xf]
  %v165 = vld [vmem:[%s1 + $0x168] sm:$0xf]
  %v166 = vld [vmem:[%s1 + $0x16c] sm:$0xf]
  %v167 = vld [vmem:[%s1 + $0x170] sm:$0xf]
  %v168 = vld [vmem:[%s1 + $0x174] sm:$0xf]
  %v169 = vld [vmem:[%s1 + $0x178] sm:$0xf]
  %v170 = vld [vmem:[%s1 + $0x17c] sm:$0xf]
  %v171 = vpack.c.bf16 %v69, %v69
  %v172 = vpack.c.bf16 %v70, %v70
  %v173 = vpack.c.bf16 %v71, %v71
  %v174 = vpack.c.bf16 %v72, %v72
  %v175 = vpack.c.bf16 %v73, %v73
  %v176 = vpack.c.bf16 %v74, %v74
  %v273 = vunpack.c.l.b16 %v75
  %v274 = vunpack.c.l.b16 %v76
  %v275 = vunpack.c.l.b16 %v77
  %v276 = vunpack.c.l.b16 %v78
  %v277 = vunpack.c.l.b16 %v79
  %v278 = vunpack.c.l.b16 %v80
  %v279 = vunpack.c.l.b16 %v81
  %v280 = vunpack.c.l.b16 %v82
  %v281 = vunpack.c.l.b16 %v83
  %v282 = vunpack.c.l.b16 %v84
  %v283 = vunpack.c.l.b16 %v85
  %v284 = vunpack.c.l.b16 %v86
  %v285 = vunpack.c.l.b16 %v87
  %v286 = vunpack.c.l.b16 %v88
  %v287 = vunpack.c.l.b16 %v89
  %v288 = vunpack.c.l.b16 %v90
  %v289 = vunpack.c.l.b16 %v91
  %v290 = vunpack.c.l.b16 %v92
  %v291 = vunpack.c.l.b16 %v93
  %v292 = vunpack.c.l.b16 %v94
  %v293 = vunpack.c.l.b16 %v95
  %v294 = vunpack.c.l.b16 %v96
  %v295 = vunpack.c.l.b16 %v97
  %v296 = vunpack.c.l.b16 %v98
  %v297 = vunpack.c.l.b16 %v99
  %v298 = vunpack.c.l.b16 %v100
  %v299 = vunpack.c.l.b16 %v101
  %v300 = vunpack.c.l.b16 %v102
  %v301 = vunpack.c.l.b16 %v103
  %v302 = vunpack.c.l.b16 %v104
  %v303 = vunpack.c.l.b16 %v105
  %v304 = vunpack.c.l.b16 %v106
  %v305 = vunpack.c.l.b16 %v107
  %v306 = vunpack.c.l.b16 %v108
  %v307 = vunpack.c.l.b16 %v109
  %v308 = vunpack.c.l.b16 %v110
  %v309 = vunpack.c.l.b16 %v111
  %v310 = vunpack.c.l.b16 %v112
  %v311 = vunpack.c.l.b16 %v113
  %v312 = vunpack.c.l.b16 %v114
  %v313 = vunpack.c.l.b16 %v115
  %v314 = vunpack.c.l.b16 %v116
  %v315 = vunpack.c.l.b16 %v117
  %v316 = vunpack.c.l.b16 %v118
  %v317 = vunpack.c.l.b16 %v119
  %v318 = vunpack.c.l.b16 %v120
  %v319 = vunpack.c.l.b16 %v121
  %v320 = vunpack.c.l.b16 %v122
  %v321 = vunpack.c.l.b16 %v123
  %v322 = vunpack.c.l.b16 %v124
  %v323 = vunpack.c.l.b16 %v125
  %v324 = vunpack.c.l.b16 %v126
  %v325 = vunpack.c.l.b16 %v127
  %v326 = vunpack.c.l.b16 %v128
  %v327 = vunpack.c.l.b16 %v129
  %v328 = vunpack.c.l.b16 %v130
  %v329 = vunpack.c.l.b16 %v131
  %v330 = vunpack.c.l.b16 %v132
  %v331 = vunpack.c.l.b16 %v133
  %v332 = vunpack.c.l.b16 %v134
  %v333 = vunpack.c.l.b16 %v135
  %v334 = vunpack.c.l.b16 %v136
  %v335 = vunpack.c.l.b16 %v137
  %v336 = vunpack.c.l.b16 %v138
  %v337 = vunpack.c.l.b16 %v139
  %v338 = vunpack.c.l.b16 %v140
  %v339 = vunpack.c.l.b16 %v141
  %v340 = vunpack.c.l.b16 %v142
  %v341 = vunpack.c.l.b16 %v143
  %v342 = vunpack.c.l.b16 %v144
  %v343 = vunpack.c.l.b16 %v145
  %v344 = vunpack.c.l.b16 %v146
  %v345 = vunpack.c.l.b16 %v147
  %v346 = vunpack.c.l.b16 %v148
  %v347 = vunpack.c.l.b16 %v149
  %v348 = vunpack.c.l.b16 %v150
  %v349 = vunpack.c.l.b16 %v151
  %v350 = vunpack.c.l.b16 %v152
  %v351 = vunpack.c.l.b16 %v153
  %v352 = vunpack.c.l.b16 %v154
  %v353 = vunpack.c.l.b16 %v155
  %v354 = vunpack.c.l.b16 %v156
  %v355 = vunpack.c.l.b16 %v157
  %v356 = vunpack.c.l.b16 %v158
  %v357 = vunpack.c.l.b16 %v159
  %v358 = vunpack.c.l.b16 %v160
  %v359 = vunpack.c.l.b16 %v161
  %v360 = vunpack.c.l.b16 %v162
  %v361 = vunpack.c.l.b16 %v163
  %v362 = vunpack.c.l.b16 %v164
  %v363 = vunpack.c.l.b16 %v165
  %v364 = vunpack.c.l.b16 %v166
  %v365 = vunpack.c.l.b16 %v167
  %v366 = vunpack.c.l.b16 %v168
  %v367 = vunpack.c.l.b16 %v169
  %v368 = vunpack.c.l.b16 %v170
  %v369 = vpack.c.b16 %v274, %v273
  %v370 = vpack.c.b16 %v276, %v275
  %v371 = vpack.c.b16 %v278, %v277
  %v372 = vpack.c.b16 %v280, %v279
  %v373 = vpack.c.b16 %v282, %v281
  %v374 = vpack.c.b16 %v284, %v283
  %v375 = vpack.c.b16 %v286, %v285
  %v376 = vpack.c.b16 %v288, %v287
  %v377 = vpack.c.b16 %v290, %v289
  %v378 = vpack.c.b16 %v292, %v291
  %v379 = vpack.c.b16 %v294, %v293
  %v380 = vpack.c.b16 %v296, %v295
  %v381 = vpack.c.b16 %v298, %v297
  %v382 = vpack.c.b16 %v300, %v299
  %v383 = vpack.c.b16 %v302, %v301
  %v384 = vpack.c.b16 %v304, %v303
  %v385 = vpack.c.b16 %v306, %v305
  %v386 = vpack.c.b16 %v308, %v307
  %v387 = vpack.c.b16 %v310, %v309
  %v388 = vpack.c.b16 %v312, %v311
  %v389 = vpack.c.b16 %v314, %v313
  %v390 = vpack.c.b16 %v316, %v315
  %v391 = vpack.c.b16 %v318, %v317
  %v392 = vpack.c.b16 %v320, %v319
  %v393 = vpack.c.b16 %v322, %v321
  %v394 = vpack.c.b16 %v324, %v323
  %v395 = vpack.c.b16 %v326, %v325
  %v396 = vpack.c.b16 %v328, %v327
  %v397 = vpack.c.b16 %v330, %v329
  %v398 = vpack.c.b16 %v332, %v331
  %v399 = vpack.c.b16 %v334, %v333
  %v400 = vpack.c.b16 %v336, %v335
  %v401 = vpack.c.b16 %v338, %v337
  %v402 = vpack.c.b16 %v340, %v339
  %v403 = vpack.c.b16 %v342, %v341
  %v404 = vpack.c.b16 %v344, %v343
  %v405 = vpack.c.b16 %v346, %v345
  %v406 = vpack.c.b16 %v348, %v347
  %v407 = vpack.c.b16 %v350, %v349
  %v408 = vpack.c.b16 %v352, %v351
  %v409 = vpack.c.b16 %v354, %v353
  %v410 = vpack.c.b16 %v356, %v355
  %v411 = vpack.c.b16 %v358, %v357
  %v412 = vpack.c.b16 %v360, %v359
  %v413 = vpack.c.b16 %v362, %v361
  %v414 = vpack.c.b16 %v364, %v363
  %v415 = vpack.c.b16 %v366, %v365
  %v416 = vpack.c.b16 %v368, %v367
  %465 = vmatprep.subr.bf16.mxu0 0
  %466 = vmatpush1.bf16.msra.mxu0 %v376
  %467 = vmatprep.subr.bf16.mxu0 0
  %468 = vmatpush1.bf16.msra.mxu0 %v375
  %469 = vmatprep.subr.bf16.mxu0 0
  %470 = vmatpush1.bf16.msra.mxu0 %v374
  %471 = vmatprep.subr.bf16.mxu0 0
  %472 = vmatpush1.bf16.msra.mxu0 %v373
  %473 = vmatprep.subr.bf16.mxu0 0
  %474 = vmatpush1.bf16.msra.mxu0 %v372
  %475 = vmatprep.subr.bf16.mxu0 0
  %476 = vmatpush1.bf16.msra.mxu0 %v371
  %477 = vmatprep.subr.bf16.mxu0 0
  %478 = vmatpush1.bf16.msra.mxu0 %v370
  %479 = vmatprep.subr.bf16.mxu0 0
  %480 = vmatpush1.bf16.msra.mxu0 %v369
  %481 = vmatprep.subr.bf16.mxu0 0
  %482 = vmatpush2.bf16.msra.mxu0 %v384
  %483 = vmatprep.subr.bf16.mxu0 0
  %484 = vmatpush2.bf16.msra.mxu0 %v383
  %485 = vmatprep.subr.bf16.mxu0 0
  %486 = vmatpush2.bf16.msra.mxu0 %v382
  %487 = vmatprep.subr.bf16.mxu0 0
  %488 = vmatpush2.bf16.msra.mxu0 %v381
  %489 = vmatprep.subr.bf16.mxu0 0
  %490 = vmatpush2.bf16.msra.mxu0 %v380
  %491 = vmatprep.subr.bf16.mxu0 0
  %492 = vmatpush2.bf16.msra.mxu0 %v379
  %493 = vmatprep.subr.bf16.mxu0 0
  %494 = vmatpush2.bf16.msra.mxu0 %v378
  %495 = vmatprep.subr.bf16.mxu0 0
  %496 = vmatpush2.bf16.msra.mxu0 %v377
  %497 = vmatprep.mubr.bf16.mxu0 %v172
  %498 = vmatmul.mubr.bf16.gmra.mxu0 %v171
  %v499 = vpop.f32.mrf.mxu0
  %v500 = vadd.f32 0.0, %v499
  %v501 = vpop.f32.mrf.mxu0
  %v502 = vpop.f32.mrf.mxu0
  %v503 = vpop.f32.mrf.mxu0
  %504 = vdwg.mxu0
  %505 = vmatprep.subr.bf16.mxu0 0
  %506 = vmatpush1.bf16.msra.mxu0 %v392
  %507 = vmatprep.subr.bf16.mxu0 0
  %508 = vmatpush1.bf16.msra.mxu0 %v391
  %509 = vmatprep.subr.bf16.mxu0 0
  %510 = vmatpush1.bf16.msra.mxu0 %v390
  %511 = vmatprep.subr.bf16.mxu0 0
  %512 = vmatpush1.bf16.msra.mxu0 %v389
  %513 = vmatprep.subr.bf16.mxu0 0
  %514 = vmatpush1.bf16.msra.mxu0 %v388
  %515 = vmatprep.subr.bf16.mxu0 0
  %516 = vmatpush1.bf16.msra.mxu0 %v387
  %517 = vmatprep.subr.bf16.mxu0 0
  %518 = vmatpush1.bf16.msra.mxu0 %v386
  %519 = vmatprep.subr.bf16.mxu0 0
  %520 = vmatpush1.bf16.msra.mxu0 %v385
  %521 = vmatprep.subr.bf16.mxu0 0
  %522 = vmatpush2.bf16.msra.mxu0 %v400
  %523 = vmatprep.subr.bf16.mxu0 0
  %524 = vmatpush2.bf16.msra.mxu0 %v399
  %525 = vmatprep.subr.bf16.mxu0 0
  %526 = vmatpush2.bf16.msra.mxu0 %v398
  %527 = vmatprep.subr.bf16.mxu0 0
  %528 = vmatpush2.bf16.msra.mxu0 %v397
  %529 = vmatprep.subr.bf16.mxu0 0
  %530 = vmatpush2.bf16.msra.mxu0 %v396
  %531 = vmatprep.subr.bf16.mxu0 0
  %532 = vmatpush2.bf16.msra.mxu0 %v395
  %533 = vmatprep.subr.bf16.mxu0 0
  %534 = vmatpush2.bf16.msra.mxu0 %v394
  %535 = vmatprep.subr.bf16.mxu0 0
  %536 = vmatpush2.bf16.msra.mxu0 %v393
  %537 = vmatprep.mubr.bf16.mxu0 %v174
  %538 = vmatmul.mubr.bf16.gmra.mxu0 %v173
  %v539 = vpop.f32.mrf.mxu0
  %v540 = vadd.f32 %v500, %v539
  %v541 = vpop.f32.mrf.mxu0
  %v542 = vpop.f32.mrf.mxu0
  %v543 = vpop.f32.mrf.mxu0
  %544 = vdwg.mxu0
  %545 = vmatprep.subr.bf16.mxu0 0
  %546 = vmatpush1.bf16.msra.mxu0 %v408
  %547 = vmatprep.subr.bf16.mxu0 0
  %548 = vmatpush1.bf16.msra.mxu0 %v407
  %549 = vmatprep.subr.bf16.mxu0 0
  %550 = vmatpush1.bf16.msra.mxu0 %v406
  %551 = vmatprep.subr.bf16.mxu0 0
  %552 = vmatpush1.bf16.msra.mxu0 %v405
  %553 = vmatprep.subr.bf16.mxu0 0
  %554 = vmatpush1.bf16.msra.mxu0 %v404
  %555 = vmatprep.subr.bf16.mxu0 0
  %556 = vmatpush1.bf16.msra.mxu0 %v403
  %557 = vmatprep.subr.bf16.mxu0 0
  %558 = vmatpush1.bf16.msra.mxu0 %v402
  %559 = vmatprep.subr.bf16.mxu0 0
  %560 = vmatpush1.bf16.msra.mxu0 %v401
  %561 = vmatprep.subr.bf16.mxu0 0
  %562 = vmatpush2.bf16.msra.mxu0 %v416
  %563 = vmatprep.subr.bf16.mxu0 0
  %564 = vmatpush2.bf16.msra.mxu0 %v415
  %565 = vmatprep.subr.bf16.mxu0 0
  %566 = vmatpush2.bf16.msra.mxu0 %v414
  %567 = vmatprep.subr.bf16.mxu0 0
  %568 = vmatpush2.bf16.msra.mxu0 %v413
  %569 = vmatprep.subr.bf16.mxu0 0
  %570 = vmatpush2.bf16.msra.mxu0 %v412
  %571 = vmatprep.subr.bf16.mxu0 0
  %572 = vmatpush2.bf16.msra.mxu0 %v411
  %573 = vmatprep.subr.bf16.mxu0 0
  %574 = vmatpush2.bf16.msra.mxu0 %v410
  %575 = vmatprep.subr.bf16.mxu0 0
  %576 = vmatpush2.bf16.msra.mxu0 %v409
  %577 = vmatprep.mubr.bf16.mxu0 %v176
  %578 = vmatmul.mubr.bf16.gmra.mxu0 %v175
  %v579 = vpop.f32.mrf.mxu0
  %v580 = vadd.f32 %v540, %v579
  %v581 = vpop.f32.mrf.mxu0
  %v582 = vpop.f32.mrf.mxu0
  %v583 = vpop.f32.mrf.mxu0
  %584 = vdwg.mxu0
  %v585 = vld [vmem:[%s2] sm:$0x1]
  %v586 = vld [vmem:[%s3] sm:$0x1f]
  %v587 = vadd.f32 %v585, %v586
  %vm588 = vcmask 516096
  %589 = vst.msk [vmem:[#allocation2] sm:$0x1] %vm588, %v587
  %v591 = vrot.slane %v586, 1
  %v593 = vadd.f32 %v580, %v591
  %vm594 = vcmask 519168
  %595 = vst.msk [vmem:[#allocation2 + $0x1] sm:$0xf] %vm594, %v593
  %596 = vst.msk [vmem:[#allocation2 + $0x5] sm:$0x1] %vm588, %v587
  %v597 = vrot.slane %v586, 5
  %v599 = vadd.f32 %v580, %v597
  %vm600 = vcmask 523268
  %601 = vst.msk [vmem:[#allocation2 + $0x2] sm:$0xf0] %vm600, %v599
  %v602 = vld [vmem:[#allocation2] sm:$0xff]
  %v603 = vld [vmem:[#allocation2 + $0x8] sm:$0x3]
  %v604 = vld [vmem:[%s4] sm:$0x1]
  %v605 = vld [vmem:[%s5] sm:$0x1]
  %vm606 = vcmask 523264
  %v607 = vsel %vm606, %v602, 0.0
  %608 = vadd.xlane.f32.xlu0 %v607
  %v609 = vpop.xlane.xlu0 %608
  %vm610 = vcmask 517120
  %v611 = vsel %vm610, %v603, 0.0
  %612 = vadd.xlane.f32.xlu0 %v611
  %v613 = vpop.xlane.xlu0 %612
  %v614 = vrcp.pop 64.0
  %v615 = vmul.f32 %v609, %v614
  %v616 = vmul.f32 %v613, %v614
  %v617 = vsub.f32 %v602, %v615
  %v618 = vsub.f32 %v603, %v616
  %v619 = vmul.f32 %v617, %v617
  %v620 = vmul.f32 %v618, %v618
  %v621 = vsel %vm606, %v619, 0.0
  %622 = vadd.xlane.f32.xlu0 %v621
  %v623 = vpop.xlane.xlu0 %622
  %v624 = vsel %vm610, %v620, 0.0
  %625 = vadd.xlane.f32.xlu0 %v624
  %v626 = vpop.xlane.xlu0 %625
  %v627 = vmul.f32 %v623, %v614
  %v628 = vmul.f32 %v626, %v614
  %v629 = vadd.f32 %v627, 1e-05
  %v630 = vadd.f32 %v628, 1e-05
  %v631 = vrsqrt.pop %v629
  %v632 = vrsqrt.pop %v630
  %v633 = vmul.f32 %v617, %v631
  %v634 = vmul.f32 %v618, %v632
  %v636 = vlaneseq
  %v637 = vshrl.u32 %v636, 7
  %v638 = vsub.s32 0, %v637
  %v639 = vrot.slane %v604, %v638
  %v641 = vmul.f32 %v633, %v639
  %v642 = vmul.f32 %v634, %v639
  %v644 = vlaneseq
  %v645 = vshrl.u32 %v644, 7
  %v646 = vsub.s32 0, %v645
  %v647 = vrot.slane %v605, %v646
  %v649 = vadd.f32 %v641, %v647
  %v650 = vadd.f32 %v642, %v647
  %v651 = vld [vmem:[%s6] sm:$0x1]
  %v652 = vld [vmem:[%s7] sm:$0x1]
  %v653 = vsel %vm606, %v649, 0.0
  %654 = vadd.xlane.f32.xlu0 %v653
  %v655 = vpop.xlane.xlu0 %654
  %v656 = vsel %vm610, %v650, 0.0
  %657 = vadd.xlane.f32.xlu0 %v656
  %v658 = vpop.xlane.xlu0 %657
  %v659 = vmul.f32 %v655, %v614
  %v660 = vmul.f32 %v658, %v614
  %v661 = vsub.f32 %v649, %v659
  %v662 = vsub.f32 %v650, %v660
  %v663 = vmul.f32 %v661, %v661
  %v664 = vmul.f32 %v662, %v662
  %v665 = vsel %vm606, %v663, 0.0
  %666 = vadd.xlane.f32.xlu0 %v665
  %v667 = vpop.xlane.xlu0 %666
  %v668 = vsel %vm610, %v664, 0.0
  %669 = vadd.xlane.f32.xlu0 %v668
  %v670 = vpop.xlane.xlu0 %669
  %v671 = vmul.f32 %v667, %v614
  %v672 = vmul.f32 %v670, %v614
  %v673 = vadd.f32 %v671, 1e-05
  %v674 = vadd.f32 %v672, 1e-05
  %v675 = vrsqrt.pop %v673
  %v676 = vrsqrt.pop %v674
  %v677 = vmul.f32 %v661, %v675
  %v678 = vmul.f32 %v662, %v676
  %v680 = vlaneseq
  %v681 = vshrl.u32 %v680, 7
  %v682 = vsub.s32 0, %v681
  %v683 = vrot.slane %v651, %v682
  %v685 = vmul.f32 %v677, %v683
  %v686 = vmul.f32 %v678, %v683
  %v688 = vlaneseq
  %v689 = vshrl.u32 %v688, 7
  %v690 = vsub.s32 0, %v689
  %v691 = vrot.slane %v652, %v690
  %v693 = vadd.f32 %v685, %v691
  %v694 = vadd.f32 %v686, %v691
  %v695 = vld [vmem:[%s8] sm:$0xff]
  %v696 = vld [vmem:[%s8 + $0x8] sm:$0xff]
  %v697 = vld [vmem:[%s8 + $0x10] sm:$0xff]
  %v698 = vld [vmem:[%s8 + $0x18] sm:$0xff]
  %v699 = vld [vmem:[%s8 + $0x20] sm:$0xff]
  %v700 = vld [vmem:[%s8 + $0x28] sm:$0xff]
  %v701 = vld [vmem:[%s8 + $0x30] sm:$0xff]
  %v702 = vld [vmem:[%s8 + $0x38] sm:$0xff]
  %v703 = vpack.c.bf16 %v694, %v693
  %v704 = vld [vmem:[%s9] sm:$0x3]
  %v706 = vlaneseq
  %v707 = vshrl.u32 %v706, 7
  %v708 = vsub.s32 0, %v707
  %v709 = vrot.slane %v704, %v708
  %v710 = vlaneseq
  %v711 = vshrl.u32 %v710, 7
  %v712 = vsub.s32 1, %v711
  %v713 = vrot.slane %v704, %v712
  %v724 = vunpack.c.l.b16 %v695
  %v725 = vunpack.c.h.b16 %v695
  %v726 = vunpack.c.l.b16 %v696
  %v727 = vunpack.c.h.b16 %v696
  %v728 = vunpack.c.l.b16 %v697
  %v729 = vunpack.c.h.b16 %v697
  %v730 = vunpack.c.l.b16 %v698
  %v731 = vunpack.c.h.b16 %v698
  %v732 = vunpack.c.l.b16 %v699
  %v733 = vunpack.c.h.b16 %v699
  %v734 = vunpack.c.l.b16 %v700
  %v735 = vunpack.c.h.b16 %v700
  %v736 = vunpack.c.l.b16 %v701
  %v737 = vunpack.c.h.b16 %v701
  %v738 = vunpack.c.l.b16 %v702
  %v739 = vunpack.c.h.b16 %v702
  %v740 = vpack.c.b16 %v726, %v724
  %v741 = vpack.c.b16 %v727, %v725
  %v742 = vpack.c.b16 %v730, %v728
  %v743 = vpack.c.b16 %v731, %v729
  %v744 = vpack.c.b16 %v734, %v732
  %v745 = vpack.c.b16 %v735, %v733
  %v746 = vpack.c.b16 %v738, %v736
  %v747 = vpack.c.b16 %v739, %v737
  %v757 = vsel %vm606, %v703, 0
  %759 = vmatprep.subr.bf16.mxu0 0
  %760 = vmatpush1.bf16.msra.mxu0 0
  %761 = vmatprep.subr.bf16.mxu0 0
  %762 = vmatpush1.bf16.msra.mxu0 0
  %763 = vmatprep.subr.bf16.mxu0 0
  %764 = vmatpush1.bf16.msra.mxu0 0
  %765 = vmatprep.subr.bf16.mxu0 0
  %766 = vmatpush1.bf16.msra.mxu0 0
  %767 = vmatprep.subr.bf16.mxu0 %v747
  %768 = vmatpush1.bf16.msra.mxu0 %v746
  %769 = vmatprep.subr.bf16.mxu0 %v745
  %770 = vmatpush1.bf16.msra.mxu0 %v744
  %771 = vmatprep.subr.bf16.mxu0 %v743
  %772 = vmatpush1.bf16.msra.mxu0 %v742
  %773 = vmatprep.subr.bf16.mxu0 %v741
  %774 = vmatpush1.bf16.msra.mxu0 %v740
  %775 = vmatprep.subr.bf16.mxu0 0
  %776 = vmatpush2.bf16.msra.mxu0 0
  %777 = vmatprep.subr.bf16.mxu0 0
  %778 = vmatpush2.bf16.msra.mxu0 0
  %779 = vmatprep.subr.bf16.mxu0 0
  %780 = vmatpush2.bf16.msra.mxu0 0
  %781 = vmatprep.subr.bf16.mxu0 0
  %782 = vmatpush2.bf16.msra.mxu0 0
  %783 = vmatprep.subr.bf16.mxu0 0
  %784 = vmatpush2.bf16.msra.mxu0 0
  %785 = vmatprep.subr.bf16.mxu0 0
  %786 = vmatpush2.bf16.msra.mxu0 0
  %787 = vmatprep.subr.bf16.mxu0 0
  %788 = vmatpush2.bf16.msra.mxu0 0
  %789 = vmatprep.subr.bf16.mxu0 0
  %790 = vmatpush2.bf16.msra.mxu0 0
  %791 = vmatprep.mubr.bf16.mxu0 0
  %792 = vmatmul.mubr.bf16.gmra.mxu0 %v757
  %v793 = vpop.f32.mrf.mxu0
  %v794 = vadd.f32 %v709, %v793
  %v795 = vpop.f32.mrf.mxu0
  %v796 = vadd.f32 %v713, %v795
  %v797 = vpop.f32.mrf.mxu0
  %v798 = vadd.f32 %v709, %v797
  %v799 = vpop.f32.mrf.mxu0
  %v800 = vadd.f32 %v713, %v799
  %801 = vdwg.mxu0
  %v802 = vmul.f32 %v794, 0.125
  %v803 = vpack.c.bf16 %v802, %v802
  %v804 = vpack.c.bf16 %v794, %v794
  %806 = vrot.lane.b32.xlu0 %v804, 64
  %v807 = vpop.permute.xlu0 %806
  %v809 = vsel %vm606, %v803, 0
  %v812 = vsel %vm606, %v807, 0
  %814 = vmatprep.subr.bf16.mxu0 0
  %815 = vmatpush1.bf16.xpose.msra.mxu0 0
  %816 = vmatprep.subr.bf16.mxu0 0
  %817 = vmatpush1.bf16.xpose.msra.mxu0 0
  %818 = vmatprep.subr.bf16.mxu0 0
  %819 = vmatpush1.bf16.xpose.msra.mxu0 0
  %820 = vmatprep.subr.bf16.mxu0 0
  %821 = vmatpush1.bf16.xpose.msra.mxu0 0
  %822 = vmatprep.subr.bf16.mxu0 0
  %823 = vmatpush1.bf16.xpose.msra.mxu0 0
  %824 = vmatprep.subr.bf16.mxu0 0
  %825 = vmatpush1.bf16.xpose.msra.mxu0 0
  %826 = vmatprep.subr.bf16.mxu0 0
  %827 = vmatpush1.bf16.xpose.msra.mxu0 0
  %828 = vmatprep.subr.bf16.mxu0 0
  %829 = vmatpush1.bf16.xpose.msra.mxu0 %v812
  %830 = vmatprep.subr.bf16.mxu0 0
  %831 = vmatpush2.bf16.xpose.msra.mxu0 0
  %832 = vmatprep.subr.bf16.mxu0 0
  %833 = vmatpush2.bf16.xpose.msra.mxu0 0
  %834 = vmatprep.subr.bf16.mxu0 0
  %835 = vmatpush2.bf16.xpose.msra.mxu0 0
  %836 = vmatprep.subr.bf16.mxu0 0
  %837 = vmatpush2.bf16.xpose.msra.mxu0 0
  %838 = vmatprep.subr.bf16.mxu0 0
  %839 = vmatpush2.bf16.xpose.msra.mxu0 0
  %840 = vmatprep.subr.bf16.mxu0 0
  %841 = vmatpush2.bf16.xpose.msra.mxu0 0
  %842 = vmatprep.subr.bf16.mxu0 0
  %843 = vmatpush2.bf16.xpose.msra.mxu0 0
  %844 = vmatprep.subr.bf16.mxu0 0
  %845 = vmatpush2.bf16.xpose.msra.mxu0 0
  %846 = vmatprep.mubr.bf16.mxu0 0
  %847 = vmatmul.mubr.bf16.gmra.mxu0 %v809
  %v848 = vpop.f32.mrf.mxu0
  %v849 = vadd.f32 0.0, %v848
  %v850 = vpop.f32.mrf.mxu0
  %v851 = vpop.f32.mrf.mxu0
  %v852 = vpop.f32.mrf.mxu0
  %853 = vdwg.mxu0
  %vm854 = vcmask 36864
  %v855 = vsel %vm854, %v849, -inf
  %856 = vmax.xlane.f32.xlu0 %v855
  %v857 = vpop.xlane.xlu0 %856
  %v858 = vsub.f32 %v849, %v857
  %v859 = vmul.f32 %v858, 1.442695
  %v860 = vpow.pop %v859
  %v861 = vsel %vm854, %v860, 0.0
  %862 = vadd.xlane.f32.xlu0 %v861
  %v863 = vpop.xlane.xlu0 %862
  %v864 = vrcp.pop %v863
  %v865 = vmul.f32 %v860, %v864
  %v866 = vpack.c.bf16 %v865, %v865
  %v867 = vpack.c.bf16 %v796, %v796
  %vm868 = vcmask 39936
  %v870 = vsel %vm868, %v866, 0
  %vm872 = vcmask 1041408
  %vm873 = vcmask 1042432
  %v874 = vsel %vm872, 4294967295, 65535
  %v875 = vsel %vm873, %v874, 0
  %v877 = vand.u32 %v867, %v875
  %879 = vmatprep.subr.bf16.mxu0 0
  %880 = vmatpush1.bf16.msra.mxu0 0
  %881 = vmatprep.subr.bf16.mxu0 0
  %882 = vmatpush1.bf16.msra.mxu0 0
  %883 = vmatprep.subr.bf16.mxu0 0
  %884 = vmatpush1.bf16.msra.mxu0 0
  %885 = vmatprep.subr.bf16.mxu0 0
  %886 = vmatpush1.bf16.msra.mxu0 0
  %887 = vmatprep.subr.bf16.mxu0 0
  %888 = vmatpush1.bf16.msra.mxu0 0
  %889 = vmatprep.subr.bf16.mxu0 0
  %890 = vmatpush1.bf16.msra.mxu0 0
  %891 = vmatprep.subr.bf16.mxu0 0
  %892 = vmatpush1.bf16.msra.mxu0 0
  %893 = vmatprep.subr.bf16.mxu0 0
  %894 = vmatpush1.bf16.msra.mxu0 %v877
  %895 = vmatprep.subr.bf16.mxu0 0
  %896 = vmatpush2.bf16.msra.mxu0 0
  %897 = vmatprep.subr.bf16.mxu0 0
  %898 = vmatpush2.bf16.msra.mxu0 0
  %899 = vmatprep.subr.bf16.mxu0 0
  %900 = vmatpush2.bf16.msra.mxu0 0
  %901 = vmatprep.subr.bf16.mxu0 0
  %902 = vmatpush2.bf16.msra.mxu0 0
  %903 = vmatprep.subr.bf16.mxu0 0
  %904 = vmatpush2.bf16.msra.mxu0 0
  %905 = vmatprep.subr.bf16.mxu0 0
  %906 = vmatpush2.bf16.msra.mxu0 0
  %907 = vmatprep.subr.bf16.mxu0 0
  %908 = vmatpush2.bf16.msra.mxu0 0
  %909 = vmatprep.subr.bf16.mxu0 0
  %910 = vmatpush2.bf16.msra.mxu0 0
  %911 = vmatprep.mubr.bf16.mxu0 0
  %912 = vmatmul.mubr.bf16.gmra.mxu0 %v870
  %v913 = vpop.f32.mrf.mxu0
  %v914 = vadd.f32 0.0, %v913
  %v915 = vpop.f32.mrf.mxu0
  %v916 = vpop.f32.mrf.mxu0
  %v917 = vpop.f32.mrf.mxu0
  %918 = vdwg.mxu0
  %vm919 = vcmask 520192
  %920 = vst.msk [vmem:[#allocation3] sm:$0x1f] %vm919, %v914
  %v921 = vmul.f32 %v798, 0.125
  %v922 = vpack.c.bf16 %v921, %v802
  %v923 = vpack.c.bf16 %v798, %v794
  %v925 = vshrl.u32 %v922, 16
  %v927 = vrot.slane %v925, 2
  %v928 = vshll.u32 %v922, 16
  %v930 = vrot.slane %v928, 3
  %v931 = vor.u32 %v927, %v930
  %v933 = vshrl.u32 %v923, 16
  %v935 = vrot.slane %v933, 2
  %v936 = vshll.u32 %v923, 16
  %v938 = vrot.slane %v936, 3
  %v939 = vor.u32 %v935, %v938
  %940 = vrot.lane.b32.xlu0 %v939, 64
  %v941 = vpop.permute.xlu0 %940
  %v943 = vsel %vm606, %v931, 0
  %v946 = vsel %vm606, %v941, 0
  %948 = vmatprep.subr.bf16.mxu0 0
  %949 = vmatpush1.bf16.xpose.msra.mxu0 0
  %950 = vmatprep.subr.bf16.mxu0 0
  %951 = vmatpush1.bf16.xpose.msra.mxu0 0
  %952 = vmatprep.subr.bf16.mxu0 0
  %953 = vmatpush1.bf16.xpose.msra.mxu0 0
  %954 = vmatprep.subr.bf16.mxu0 0
  %955 = vmatpush1.bf16.xpose.msra.mxu0 0
  %956 = vmatprep.subr.bf16.mxu0 0
  %957 = vmatpush1.bf16.xpose.msra.mxu0 0
  %958 = vmatprep.subr.bf16.mxu0 0
  %959 = vmatpush1.bf16.xpose.msra.mxu0 0
  %960 = vmatprep.subr.bf16.mxu0 0
  %961 = vmatpush1.bf16.xpose.msra.mxu0 0
  %962 = vmatprep.subr.bf16.mxu0 0
  %963 = vmatpush1.bf16.xpose.msra.mxu0 %v946
  %964 = vmatprep.subr.bf16.mxu0 0
  %965 = vmatpush2.bf16.xpose.msra.mxu0 0
  %966 = vmatprep.subr.bf16.mxu0 0
  %967 = vmatpush2.bf16.xpose.msra.mxu0 0
  %968 = vmatprep.subr.bf16.mxu0 0
  %969 = vmatpush2.bf16.xpose.msra.mxu0 0
  %970 = vmatprep.subr.bf16.mxu0 0
  %971 = vmatpush2.bf16.xpose.msra.mxu0 0
  %972 = vmatprep.subr.bf16.mxu0 0
  %973 = vmatpush2.bf16.xpose.msra.mxu0 0
  %974 = vmatprep.subr.bf16.mxu0 0
  %975 = vmatpush2.bf16.xpose.msra.mxu0 0
  %976 = vmatprep.subr.bf16.mxu0 0
  %977 = vmatpush2.bf16.xpose.msra.mxu0 0
  %978 = vmatprep.subr.bf16.mxu0 0
  %979 = vmatpush2.bf16.xpose.msra.mxu0 0
  %980 = vmatprep.mubr.bf16.mxu0 0
  %981 = vmatmul.mubr.bf16.gmra.mxu0 %v943
  %v982 = vpop.f32.mrf.mxu0
  %v983 = vadd.f32 0.0, %v982
  %v984 = vpop.f32.mrf.mxu0
  %v985 = vpop.f32.mrf.mxu0
  %v986 = vpop.f32.mrf.mxu0
  %987 = vdwg.mxu0
  %v988 = vsel %vm854, %v983, -inf
  %989 = vmax.xlane.f32.xlu0 %v988
  %v990 = vpop.xlane.xlu0 %989
  %v991 = vsub.f32 %v983, %v990
  %v992 = vmul.f32 %v991, 1.442695
  %v993 = vpow.pop %v992
  %v994 = vsel %vm854, %v993, 0.0
  %995 = vadd.xlane.f32.xlu0 %v994
  %v996 = vpop.xlane.xlu0 %995
  %v997 = vrcp.pop %v996
  %v998 = vmul.f32 %v993, %v997
  %v999 = vpack.c.bf16 %v998, %v998
  %v1000 = vpack.c.bf16 %v800, %v796
  %v1002 = vshrl.u32 %v1000, 16
  %v1004 = vrot.slane %v1002, 2
  %v1005 = vshll.u32 %v1000, 16
  %v1007 = vrot.slane %v1005, 3
  %v1008 = vor.u32 %v1004, %v1007
  %v1010 = vsel %vm868, %v999, 0
  %v1013 = vand.u32 %v1008, %v875
  %1015 = vmatprep.subr.bf16.mxu0 0
  %1016 = vmatpush1.bf16.msra.mxu0 0
  %1017 = vmatprep.subr.bf16.mxu0 0
  %1018 = vmatpush1.bf16.msra.mxu0 0
  %1019 = vmatprep.subr.bf16.mxu0 0
  %1020 = vmatpush1.bf16.msra.mxu0 0
  %1021 = vmatprep.subr.bf16.mxu0 0
  %1022 = vmatpush1.bf16.msra.mxu0 0
  %1023 = vmatprep.subr.bf16.mxu0 0
  %1024 = vmatpush1.bf16.msra.mxu0 0
  %1025 = vmatprep.subr.bf16.mxu0 0
  %1026 = vmatpush1.bf16.msra.mxu0 0
  %1027 = vmatprep.subr.bf16.mxu0 0
  %1028 = vmatpush1.bf16.msra.mxu0 0
  %1029 = vmatprep.subr.bf16.mxu0 0
  %1030 = vmatpush1.bf16.msra.mxu0 %v1013
  %1031 = vmatprep.subr.bf16.mxu0 0
  %1032 = vmatpush2.bf16.msra.mxu0 0
  %1033 = vmatprep.subr.bf16.mxu0 0
  %1034 = vmatpush2.bf16.msra.mxu0 0
  %1035 = vmatprep.subr.bf16.mxu0 0
  %1036 = vmatpush2.bf16.msra.mxu0 0
  %1037 = vmatprep.subr.bf16.mxu0 0
  %1038 = vmatpush2.bf16.msra.mxu0 0
  %1039 = vmatprep.subr.bf16.mxu0 0
  %1040 = vmatpush2.bf16.msra.mxu0 0
  %1041 = vmatprep.subr.bf16.mxu0 0
  %1042 = vmatpush2.bf16.msra.mxu0 0
  %1043 = vmatprep.subr.bf16.mxu0 0
  %1044 = vmatpush2.bf16.msra.mxu0 0
  %1045 = vmatprep.subr.bf16.mxu0 0
  %1046 = vmatpush2.bf16.msra.mxu0 0
  %1047 = vmatprep.mubr.bf16.mxu0 0
  %1048 = vmatmul.mubr.bf16.gmra.mxu0 %v1010
  %v1049 = vpop.f32.mrf.mxu0
  %v1050 = vadd.f32 0.0, %v1049
  %v1051 = vpop.f32.mrf.mxu0
  %v1052 = vpop.f32.mrf.mxu0
  %v1053 = vpop.f32.mrf.mxu0
  %1054 = vdwg.mxu0
  %1055 = vst.msk [vmem:[#allocation3 + $0x5] sm:$0x1f] %vm919, %v1050
  %v1056 = vld [vmem:[#allocation3] sm:$0xff]
  %v1057 = vld [vmem:[#allocation3 + $0x8] sm:$0x3]
  %v1058 = vld [vmem:[%s10] sm:$0xf]
  %v1059 = vld [vmem:[%s10 + $0x4] sm:$0xf]
  %v1060 = vld [vmem:[%s10 + $0x8] sm:$0xf]
  %v1061 = vld [vmem:[%s10 + $0xc] sm:$0xf]
  %v1062 = vld [vmem:[%s10 + $0x10] sm:$0xf]
  %v1063 = vld [vmem:[%s10 + $0x14] sm:$0xf]
  %v1064 = vld [vmem:[%s10 + $0x18] sm:$0xf]
  %v1065 = vld [vmem:[%s10 + $0x1c] sm:$0xf]
  %v1066 = vpack.c.bf16 %v1057, %v1056
  %v1075 = vunpack.c.l.b16 %v1058
  %v1076 = vunpack.c.l.b16 %v1059
  %v1077 = vunpack.c.l.b16 %v1060
  %v1078 = vunpack.c.l.b16 %v1061
  %v1079 = vunpack.c.l.b16 %v1062
  %v1080 = vunpack.c.l.b16 %v1063
  %v1081 = vunpack.c.l.b16 %v1064
  %v1082 = vunpack.c.l.b16 %v1065
  %v1083 = vpack.c.b16 %v1076, %v1075
  %v1084 = vpack.c.b16 %v1078, %v1077
  %v1085 = vpack.c.b16 %v1080, %v1079
  %v1086 = vpack.c.b16 %v1082, %v1081
  %v1092 = vsel %vm606, %v1066, 0
  %1094 = vmatprep.subr.bf16.mxu0 0
  %1095 = vmatpush1.bf16.msra.mxu0 0
  %1096 = vmatprep.subr.bf16.mxu0 0
  %1097 = vmatpush1.bf16.msra.mxu0 0
  %1098 = vmatprep.subr.bf16.mxu0 0
  %1099 = vmatpush1.bf16.msra.mxu0 0
  %1100 = vmatprep.subr.bf16.mxu0 0
  %1101 = vmatpush1.bf16.msra.mxu0 0
  %1102 = vmatprep.subr.bf16.mxu0 0
  %1103 = vmatpush1.bf16.msra.mxu0 %v1086
  %1104 = vmatprep.subr.bf16.mxu0 0
  %1105 = vmatpush1.bf16.msra.mxu0 %v1085
  %1106 = vmatprep.subr.bf16.mxu0 0
  %1107 = vmatpush1.bf16.msra.mxu0 %v1084
  %1108 = vmatprep.subr.bf16.mxu0 0
  %1109 = vmatpush1.bf16.msra.mxu0 %v1083
  %1110 = vmatprep.subr.bf16.mxu0 0
  %1111 = vmatpush2.bf16.msra.mxu0 0
  %1112 = vmatprep.subr.bf16.mxu0 0
  %1113 = vmatpush2.bf16.msra.mxu0 0
  %1114 = vmatprep.subr.bf16.mxu0 0
  %1115 = vmatpush2.bf16.msra.mxu0 0
  %1116 = vmatprep.subr.bf16.mxu0 0
  %1117 = vmatpush2.bf16.msra.mxu0 0
  %1118 = vmatprep.subr.bf16.mxu0 0
  %1119 = vmatpush2.bf16.msra.mxu0 0
  %1120 = vmatprep.subr.bf16.mxu0 0
  %1121 = vmatpush2.bf16.msra.mxu0 0
  %1122 = vmatprep.subr.bf16.mxu0 0
  %1123 = vmatpush2.bf16.msra.mxu0 0
  %1124 = vmatprep.subr.bf16.mxu0 0
  %1125 = vmatpush2.bf16.msra.mxu0 0
  %1126 = vmatprep.mubr.bf16.mxu0 0
  %1127 = vmatmul.mubr.bf16.gmra.mxu0 %v1092
  %v1128 = vpop.f32.mrf.mxu0
  %v1129 = vadd.f32 0.0, %v1128
  %v1130 = vpop.f32.mrf.mxu0
  %v1131 = vpop.f32.mrf.mxu0
  %v1132 = vadd.f32 0.0, %v1131
  %v1133 = vpop.f32.mrf.mxu0
  %1134 = vdwg.mxu0
  %v1135 = vadd.f32 %v649, %v1129
  %v1136 = vadd.f32 %v650, %v1132
  %v1137 = vld [vmem:[%s11] sm:$0x1]
  %v1139 = vlaneseq
  %v1140 = vshrl.u32 %v1139, 7
  %v1141 = vsub.s32 0, %v1140
  %v1142 = vrot.slane %v1137, %v1141
  %v1144 = vadd.f32 %v1135, %v1142
  %v1145 = vadd.f32 %v1136, %v1142
  %v1146 = vld [vmem:[%s12] sm:$0x1]
  %v1147 = vld [vmem:[%s13] sm:$0x1]
  %v1148 = vsel %vm606, %v1144, 0.0
  %1149 = vadd.xlane.f32.xlu0 %v1148
  %v1150 = vpop.xlane.xlu0 %1149
  %v1151 = vsel %vm610, %v1145, 0.0
  %1152 = vadd.xlane.f32.xlu0 %v1151
  %v1153 = vpop.xlane.xlu0 %1152
  %v1154 = vmul.f32 %v1150, %v614
  %v1155 = vmul.f32 %v1153, %v614
  %v1156 = vsub.f32 %v1144, %v1154
  %v1157 = vsub.f32 %v1145, %v1155
  %v1158 = vmul.f32 %v1156, %v1156
  %v1159 = vmul.f32 %v1157, %v1157
  %v1160 = vsel %vm606, %v1158, 0.0
  %1161 = vadd.xlane.f32.xlu0 %v1160
  %v1162 = vpop.xlane.xlu0 %1161
  %v1163 = vsel %vm610, %v1159, 0.0
  %1164 = vadd.xlane.f32.xlu0 %v1163
  %v1165 = vpop.xlane.xlu0 %1164
  %v1166 = vmul.f32 %v1162, %v614
  %v1167 = vmul.f32 %v1165, %v614
  %v1168 = vadd.f32 %v1166, 1e-05
  %v1169 = vadd.f32 %v1167, 1e-05
  %v1170 = vrsqrt.pop %v1168
  %v1171 = vrsqrt.pop %v1169
  %v1172 = vmul.f32 %v1156, %v1170
  %v1173 = vmul.f32 %v1157, %v1171
  %v1175 = vlaneseq
  %v1176 = vshrl.u32 %v1175, 7
  %v1177 = vsub.s32 0, %v1176
  %v1178 = vrot.slane %v1146, %v1177
  %v1180 = vmul.f32 %v1172, %v1178
  %v1181 = vmul.f32 %v1173, %v1178
  %v1183 = vlaneseq
  %v1184 = vshrl.u32 %v1183, 7
  %v1185 = vsub.s32 0, %v1184
  %v1186 = vrot.slane %v1147, %v1185
  %v1188 = vadd.f32 %v1180, %v1186
  %v1189 = vadd.f32 %v1181, %v1186
  %v1190 = vld [vmem:[%s14] sm:$0xff]
  %v1191 = vld [vmem:[%s14 + $0x8] sm:$0xff]
  %v1192 = vld [vmem:[%s14 + $0x10] sm:$0xff]
  %v1193 = vld [vmem:[%s14 + $0x18] sm:$0xff]
  %v1194 = vld [vmem:[%s14 + $0x20] sm:$0xff]
  %v1195 = vld [vmem:[%s14 + $0x28] sm:$0xff]
  %v1196 = vld [vmem:[%s14 + $0x30] sm:$0xff]
  %v1197 = vld [vmem:[%s14 + $0x38] sm:$0xff]
  %v1198 = vpack.c.bf16 %v1189, %v1188
  %v1199 = vld [vmem:[%s15] sm:$0x3]
  %v1201 = vlaneseq
  %v1202 = vshrl.u32 %v1201, 7
  %v1203 = vsub.s32 0, %v1202
  %v1204 = vrot.slane %v1199, %v1203
  %v1205 = vlaneseq
  %v1206 = vshrl.u32 %v1205, 7
  %v1207 = vsub.s32 1, %v1206
  %v1208 = vrot.slane %v1199, %v1207
  %v1219 = vunpack.c.l.b16 %v1190
  %v1220 = vunpack.c.h.b16 %v1190
  %v1221 = vunpack.c.l.b16 %v1191
  %v1222 = vunpack.c.h.b16 %v1191
  %v1223 = vunpack.c.l.b16 %v1192
  %v1224 = vunpack.c.h.b16 %v1192
  %v1225 = vunpack.c.l.b16 %v1193
  %v1226 = vunpack.c.h.b16 %v1193
  %v1227 = vunpack.c.l.b16 %v1194
  %v1228 = vunpack.c.h.b16 %v1194
  %v1229 = vunpack.c.l.b16 %v1195
  %v1230 = vunpack.c.h.b16 %v1195
  %v1231 = vunpack.c.l.b16 %v1196
  %v1232 = vunpack.c.h.b16 %v1196
  %v1233 = vunpack.c.l.b16 %v1197
  %v1234 = vunpack.c.h.b16 %v1197
  %v1235 = vpack.c.b16 %v1221, %v1219
  %v1236 = vpack.c.b16 %v1222, %v1220
  %v1237 = vpack.c.b16 %v1225, %v1223
  %v1238 = vpack.c.b16 %v1226, %v1224
  %v1239 = vpack.c.b16 %v1229, %v1227
  %v1240 = vpack.c.b16 %v1230, %v1228
  %v1241 = vpack.c.b16 %v1233, %v1231
  %v1242 = vpack.c.b16 %v1234, %v1232
  %v1252 = vsel %vm606, %v1198, 0
  %1254 = vmatprep.subr.bf16.mxu0 0
  %1255 = vmatpush1.bf16.msra.mxu0 0
  %1256 = vmatprep.subr.bf16.mxu0 0
  %1257 = vmatpush1.bf16.msra.mxu0 0
  %1258 = vmatprep.subr.bf16.mxu0 0
  %1259 = vmatpush1.bf16.msra.mxu0 0
  %1260 = vmatprep.subr.bf16.mxu0 0
  %1261 = vmatpush1.bf16.msra.mxu0 0
  %1262 = vmatprep.subr.bf16.mxu0 %v1242
  %1263 = vmatpush1.bf16.msra.mxu0 %v1241
  %1264 = vmatprep.subr.bf16.mxu0 %v1240
  %1265 = vmatpush1.bf16.msra.mxu0 %v1239
  %1266 = vmatprep.subr.bf16.mxu0 %v1238
  %1267 = vmatpush1.bf16.msra.mxu0 %v1237
  %1268 = vmatprep.subr.bf16.mxu0 %v1236
  %1269 = vmatpush1.bf16.msra.mxu0 %v1235
  %1270 = vmatprep.subr.bf16.mxu0 0
  %1271 = vmatpush2.bf16.msra.mxu0 0
  %1272 = vmatprep.subr.bf16.mxu0 0
  %1273 = vmatpush2.bf16.msra.mxu0 0
  %1274 = vmatprep.subr.bf16.mxu0 0
  %1275 = vmatpush2.bf16.msra.mxu0 0
  %1276 = vmatprep.subr.bf16.mxu0 0
  %1277 = vmatpush2.bf16.msra.mxu0 0
  %1278 = vmatprep.subr.bf16.mxu0 0
  %1279 = vmatpush2.bf16.msra.mxu0 0
  %1280 = vmatprep.subr.bf16.mxu0 0
  %1281 = vmatpush2.bf16.msra.mxu0 0
  %1282 = vmatprep.subr.bf16.mxu0 0
  %1283 = vmatpush2.bf16.msra.mxu0 0
  %1284 = vmatprep.subr.bf16.mxu0 0
  %1285 = vmatpush2.bf16.msra.mxu0 0
  %1286 = vmatprep.mubr.bf16.mxu0 0
  %1287 = vmatmul.mubr.bf16.gmra.mxu0 %v1252
  %v1288 = vpop.f32.mrf.mxu0
  %v1289 = vadd.f32 %v1204, %v1288
  %v1290 = vpop.f32.mrf.mxu0
  %v1291 = vadd.f32 %v1208, %v1290
  %v1292 = vpop.f32.mrf.mxu0
  %v1293 = vadd.f32 %v1204, %v1292
  %v1294 = vpop.f32.mrf.mxu0
  %v1295 = vadd.f32 %v1208, %v1294
  %1296 = vdwg.mxu0
  %v1297 = vmul.f32 %v1289, 1.702
  %v1298 = vmul.f32 %v1291, 1.702
  %v1299 = vmul.f32 %v1293, 1.702
  %v1300 = vmul.f32 %v1295, 1.702
  %v1301 = vxor.u32 %v1297, 2147483648
  %v1302 = vxor.u32 %v1298, 2147483648
  %v1303 = vxor.u32 %v1299, 2147483648
  %v1304 = vxor.u32 %v1300, 2147483648
  %v1305 = vmul.f32 %v1301, 1.442695
  %v1306 = vpow.pop %v1305
  %v1307 = vmul.f32 %v1302, 1.442695
  %v1308 = vpow.pop %v1307
  %v1309 = vmul.f32 %v1303, 1.442695
  %v1310 = vpow.pop %v1309
  %v1311 = vmul.f32 %v1304, 1.442695
  %v1312 = vpow.pop %v1311
  %v1313 = vadd.f32 %v1306, 1.0
  %v1314 = vadd.f32 %v1308, 1.0
  %v1315 = vadd.f32 %v1310, 1.0
  %v1316 = vadd.f32 %v1312, 1.0
  %v1317 = vrcp.pop %v1313
  %v1318 = vmul.f32 1.0, %v1317
  %v1319 = vrcp.pop %v1314
  %v1320 = vmul.f32 1.0, %v1319
  %v1321 = vrcp.pop %v1315
  %v1322 = vmul.f32 1.0, %v1321
  %v1323 = vrcp.pop %v1316
  %v1324 = vmul.f32 1.0, %v1323
  %v1325 = vmul.f32 %v1289, %v1318
  %v1326 = vmul.f32 %v1291, %v1320
  %v1327 = vmul.f32 %v1293, %v1322
  %v1328 = vmul.f32 %v1295, %v1324
  %v1329 = vld [vmem:[%s16] sm:$0xf]
  %v1330 = vld [vmem:[%s16 + $0x4] sm:$0xf]
  %v1331 = vld [vmem:[%s16 + $0x8] sm:$0xf]
  %v1332 = vld [vmem:[%s16 + $0xc] sm:$0xf]
  %v1333 = vld [vmem:[%s16 + $0x10] sm:$0xf]
  %v1334 = vld [vmem:[%s16 + $0x14] sm:$0xf]
  %v1335 = vld [vmem:[%s16 + $0x18] sm:$0xf]
  %v1336 = vld [vmem:[%s16 + $0x1c] sm:$0xf]
  %v1337 = vld [vmem:[%s16 + $0x20] sm:$0xf]
  %v1338 = vld [vmem:[%s16 + $0x24] sm:$0xf]
  %v1339 = vld [vmem:[%s16 + $0x28] sm:$0xf]
  %v1340 = vld [vmem:[%s16 + $0x2c] sm:$0xf]
  %v1341 = vld [vmem:[%s16 + $0x30] sm:$0xf]
  %v1342 = vld [vmem:[%s16 + $0x34] sm:$0xf]
  %v1343 = vld [vmem:[%s16 + $0x38] sm:$0xf]
  %v1344 = vld [vmem:[%s16 + $0x3c] sm:$0xf]
  %v1345 = vld [vmem:[%s16 + $0x40] sm:$0xf]
  %v1346 = vld [vmem:[%s16 + $0x44] sm:$0xf]
  %v1347 = vld [vmem:[%s16 + $0x48] sm:$0xf]
  %v1348 = vld [vmem:[%s16 + $0x4c] sm:$0xf]
  %v1349 = vld [vmem:[%s16 + $0x50] sm:$0xf]
  %v1350 = vld [vmem:[%s16 + $0x54] sm:$0xf]
  %v1351 = vld [vmem:[%s16 + $0x58] sm:$0xf]
  %v1352 = vld [vmem:[%s16 + $0x5c] sm:$0xf]
  %v1353 = vld [vmem:[%s16 + $0x60] sm:$0xf]
  %v1354 = vld [vmem:[%s16 + $0x64] sm:$0xf]
  %v1355 = vld [vmem:[%s16 + $0x68] sm:$0xf]
  %v1356 = vld [vmem:[%s16 + $0x6c] sm:$0xf]
  %v1357 = vld [vmem:[%s16 + $0x70] sm:$0xf]
  %v1358 = vld [vmem:[%s16 + $0x74] sm:$0xf]
  %v1359 = vld [vmem:[%s16 + $0x78] sm:$0xf]
  %v1360 = vld [vmem:[%s16 + $0x7c] sm:$0xf]
  %v1361 = vpack.c.bf16 %v1327, %v1325
  %v1362 = vpack.c.bf16 %v1328, %v1326
  %v1395 = vunpack.c.l.b16 %v1329
  %v1396 = vunpack.c.l.b16 %v1330
  %v1397 = vunpack.c.l.b16 %v1331
  %v1398 = vunpack.c.l.b16 %v1332
  %v1399 = vunpack.c.l.b16 %v1333
  %v1400 = vunpack.c.l.b16 %v1334
  %v1401 = vunpack.c.l.b16 %v1335
  %v1402 = vunpack.c.l.b16 %v1336
  %v1403 = vunpack.c.l.b16 %v1337
  %v1404 = vunpack.c.l.b16 %v1338
  %v1405 = vunpack.c.l.b16 %v1339
  %v1406 = vunpack.c.l.b16 %v1340
  %v1407 = vunpack.c.l.b16 %v1341
  %v1408 = vunpack.c.l.b16 %v1342
  %v1409 = vunpack.c.l.b16 %v1343
  %v1410 = vunpack.c.l.b16 %v1344
  %v1411 = vunpack.c.l.b16 %v1345
  %v1412 = vunpack.c.l.b16 %v1346
  %v1413 = vunpack.c.l.b16 %v1347
  %v1414 = vunpack.c.l.b16 %v1348
  %v1415 = vunpack.c.l.b16 %v1349
  %v1416 = vunpack.c.l.b16 %v1350
  %v1417 = vunpack.c.l.b16 %v1351
  %v1418 = vunpack.c.l.b16 %v1352
  %v1419 = vunpack.c.l.b16 %v1353
  %v1420 = vunpack.c.l.b16 %v1354
  %v1421 = vunpack.c.l.b16 %v1355
  %v1422 = vunpack.c.l.b16 %v1356
  %v1423 = vunpack.c.l.b16 %v1357
  %v1424 = vunpack.c.l.b16 %v1358
  %v1425 = vunpack.c.l.b16 %v1359
  %v1426 = vunpack.c.l.b16 %v1360
  %v1427 = vpack.c.b16 %v1396, %v1395
  %v1428 = vpack.c.b16 %v1398, %v1397
  %v1429 = vpack.c.b16 %v1400, %v1399
  %v1430 = vpack.c.b16 %v1402, %v1401
  %v1431 = vpack.c.b16 %v1404, %v1403
  %v1432 = vpack.c.b16 %v1406, %v1405
  %v1433 = vpack.c.b16 %v1408, %v1407
  %v1434 = vpack.c.b16 %v1410, %v1409
  %v1435 = vpack.c.b16 %v1412, %v1411
  %v1436 = vpack.c.b16 %v1414, %v1413
  %v1437 = vpack.c.b16 %v1416, %v1415
  %v1438 = vpack.c.b16 %v1418, %v1417
  %v1439 = vpack.c.b16 %v1420, %v1419
  %v1440 = vpack.c.b16 %v1422, %v1421
  %v1441 = vpack.c.b16 %v1424, %v1423
  %v1442 = vpack.c.b16 %v1426, %v1425
  %1459 = vmatprep.subr.bf16.mxu0 0
  %1460 = vmatpush1.bf16.msra.mxu0 %v1434
  %1461 = vmatprep.subr.bf16.mxu0 0
  %1462 = vmatpush1.bf16.msra.mxu0 %v1433
  %1463 = vmatprep.subr.bf16.mxu0 0
  %1464 = vmatpush1.bf16.msra.mxu0 %v1432
  %1465 = vmatprep.subr.bf16.mxu0 0
  %1466 = vmatpush1.bf16.msra.mxu0 %v1431
  %1467 = vmatprep.subr.bf16.mxu0 0
  %1468 = vmatpush1.bf16.msra.mxu0 %v1430
  %1469 = vmatprep.subr.bf16.mxu0 0
  %1470 = vmatpush1.bf16.msra.mxu0 %v1429
  %1471 = vmatprep.subr.bf16.mxu0 0
  %1472 = vmatpush1.bf16.msra.mxu0 %v1428
  %1473 = vmatprep.subr.bf16.mxu0 0
  %1474 = vmatpush1.bf16.msra.mxu0 %v1427
  %1475 = vmatprep.subr.bf16.mxu0 0
  %1476 = vmatpush2.bf16.msra.mxu0 %v1442
  %1477 = vmatprep.subr.bf16.mxu0 0
  %1478 = vmatpush2.bf16.msra.mxu0 %v1441
  %1479 = vmatprep.subr.bf16.mxu0 0
  %1480 = vmatpush2.bf16.msra.mxu0 %v1440
  %1481 = vmatprep.subr.bf16.mxu0 0
  %1482 = vmatpush2.bf16.msra.mxu0 %v1439
  %1483 = vmatprep.subr.bf16.mxu0 0
  %1484 = vmatpush2.bf16.msra.mxu0 %v1438
  %1485 = vmatprep.subr.bf16.mxu0 0
  %1486 = vmatpush2.bf16.msra.mxu0 %v1437
  %1487 = vmatprep.subr.bf16.mxu0 0
  %1488 = vmatpush2.bf16.msra.mxu0 %v1436
  %1489 = vmatprep.subr.bf16.mxu0 0
  %1490 = vmatpush2.bf16.msra.mxu0 %v1435
  %1491 = vmatprep.mubr.bf16.mxu0 %v1362
  %1492 = vmatmul.mubr.bf16.gmra.mxu0 %v1361
  %v1493 = vpop.f32.mrf.mxu0
  %v1494 = vadd.f32 0.0, %v1493
  %v1495 = vpop.f32.mrf.mxu0
  %v1496 = vpop.f32.mrf.mxu0
  %v1497 = vadd.f32 0.0, %v1496
  %v1498 = vpop.f32.mrf.mxu0
  %1499 = vdwg.mxu0
  %v1500 = vadd.f32 %v1144, %v1494
  %v1501 = vadd.f32 %v1145, %v1497
  %v1502 = vld [vmem:[%s17] sm:$0x1]
  %v1504 = vlaneseq
  %v1505 = vshrl.u32 %v1504, 7
  %v1506 = vsub.s32 0, %v1505
  %v1507 = vrot.slane %v1502, %v1506
  %v1509 = vadd.f32 %v1500, %v1507
  %v1510 = vadd.f32 %v1501, %v1507
  %s1511 = scalar_lea.vmem %s6, 1
  %v1512 = vld [vmem:[%s1511] sm:$0x1]
  %s1513 = scalar_lea.vmem %s7, 1
  %v1514 = vld [vmem:[%s1513] sm:$0x1]
  %v1515 = vsel %vm606, %v1509, 0.0
  %1516 = vadd.xlane.f32.xlu0 %v1515
  %v1517 = vpop.xlane.xlu0 %1516
  %v1518 = vsel %vm610, %v1510, 0.0
  %1519 = vadd.xlane.f32.xlu0 %v1518
  %v1520 = vpop.xlane.xlu0 %1519
  %v1521 = vmul.f32 %v1517, %v614
  %v1522 = vmul.f32 %v1520, %v614
  %v1523 = vsub.f32 %v1509, %v1521
  %v1524 = vsub.f32 %v1510, %v1522
  %v1525 = vmul.f32 %v1523, %v1523
  %v1526 = vmul.f32 %v1524, %v1524
  %v1527 = vsel %vm606, %v1525, 0.0
  %1528 = vadd.xlane.f32.xlu0 %v1527
  %v1529 = vpop.xlane.xlu0 %1528
  %v1530 = vsel %vm610, %v1526, 0.0
  %1531 = vadd.xlane.f32.xlu0 %v1530
  %v1532 = vpop.xlane.xlu0 %1531
  %v1533 = vmul.f32 %v1529, %v614
  %v1534 = vmul.f32 %v1532, %v614
  %v1535 = vadd.f32 %v1533, 1e-05
  %v1536 = vadd.f32 %v1534, 1e-05
  %v1537 = vrsqrt.pop %v1535
  %v1538 = vrsqrt.pop %v1536
  %v1539 = vmul.f32 %v1523, %v1537
  %v1540 = vmul.f32 %v1524, %v1538
  %v1542 = vlaneseq
  %v1543 = vshrl.u32 %v1542, 7
  %v1544 = vsub.s32 0, %v1543
  %v1545 = vrot.slane %v1512, %v1544
  %v1547 = vmul.f32 %v1539, %v1545
  %v1548 = vmul.f32 %v1540, %v1545
  %v1550 = vlaneseq
  %v1551 = vshrl.u32 %v1550, 7
  %v1552 = vsub.s32 0, %v1551
  %v1553 = vrot.slane %v1514, %v1552
  %v1555 = vadd.f32 %v1547, %v1553
  %v1556 = vadd.f32 %v1548, %v1553
  %s1557 = scalar_lea.vmem %s8, 64
  %v1558 = vld [vmem:[%s1557] sm:$0xff]
  %v1559 = vld [vmem:[%s1557 + $0x8] sm:$0xff]
  %v1560 = vld [vmem:[%s1557 + $0x10] sm:$0xff]
  %v1561 = vld [vmem:[%s1557 + $0x18] sm:$0xff]
  %v1562 = vld [vmem:[%s1557 + $0x20] sm:$0xff]
  %v1563 = vld [vmem:[%s1557 + $0x28] sm:$0xff]
  %v1564 = vld [vmem:[%s1557 + $0x30] sm:$0xff]
  %v1565 = vld [vmem:[%s1557 + $0x38] sm:$0xff]
  %v1566 = vpack.c.bf16 %v1556, %v1555
  %s1567 = scalar_lea.vmem %s9, 2
  %v1568 = vld [vmem:[%s1567] sm:$0x3]
  %v1570 = vlaneseq
  %v1571 = vshrl.u32 %v1570, 7
  %v1572 = vsub.s32 0, %v1571
  %v1573 = vrot.slane %v1568, %v1572
  %v1574 = vlaneseq
  %v1575 = vshrl.u32 %v1574, 7
  %v1576 = vsub.s32 1, %v1575
  %v1577 = vrot.slane %v1568, %v1576
  %v1588 = vunpack.c.l.b16 %v1558
  %v1589 = vunpack.c.h.b16 %v1558
  %v1590 = vunpack.c.l.b16 %v1559
  %v1591 = vunpack.c.h.b16 %v1559
  %v1592 = vunpack.c.l.b16 %v1560
  %v1593 = vunpack.c.h.b16 %v1560
  %v1594 = vunpack.c.l.b16 %v1561
  %v1595 = vunpack.c.h.b16 %v1561
  %v1596 = vunpack.c.l.b16 %v1562
  %v1597 = vunpack.c.h.b16 %v1562
  %v1598 = vunpack.c.l.b16 %v1563
  %v1599 = vunpack.c.h.b16 %v1563
  %v1600 = vunpack.c.l.b16 %v1564
  %v1601 = vunpack.c.h.b16 %v1564
  %v1602 = vunpack.c.l.b16 %v1565
  %v1603 = vunpack.c.h.b16 %v1565
  %v1604 = vpack.c.b16 %v1590, %v1588
  %v1605 = vpack.c.b16 %v1591, %v1589
  %v1606 = vpack.c.b16 %v1594, %v1592
  %v1607 = vpack.c.b16 %v1595, %v1593
  %v1608 = vpack.c.b16 %v1598, %v1596
  %v1609 = vpack.c.b16 %v1599, %v1597
  %v1610 = vpack.c.b16 %v1602, %v1600
  %v1611 = vpack.c.b16 %v1603, %v1601
  %v1621 = vsel %vm606, %v1566, 0
  %1623 = vmatprep.subr.bf16.mxu0 0
  %1624 = vmatpush1.bf16.msra.mxu0 0
  %1625 = vmatprep.subr.bf16.mxu0 0
  %1626 = vmatpush1.bf16.msra.mxu0 0
  %1627 = vmatprep.subr.bf16.mxu0 0
  %1628 = vmatpush1.bf16.msra.mxu0 0
  %1629 = vmatprep.subr.bf16.mxu0 0
  %1630 = vmatpush1.bf16.msra.mxu0 0
  %1631 = vmatprep.subr.bf16.mxu0 %v1611
  %1632 = vmatpush1.bf16.msra.mxu0 %v1610
  %1633 = vmatprep.subr.bf16.mxu0 %v1609
  %1634 = vmatpush1.bf16.msra.mxu0 %v1608
  %1635 = vmatprep.subr.bf16.mxu0 %v1607
  %1636 = vmatpush1.bf16.msra.mxu0 %v1606
  %1637 = vmatprep.subr.bf16.mxu0 %v1605
  %1638 = vmatpush1.bf16.msra.mxu0 %v1604
  %1639 = vmatprep.subr.bf16.mxu0 0
  %1640 = vmatpush2.bf16.msra.mxu0 0
  %1641 = vmatprep.subr.bf16.mxu0 0
  %1642 = vmatpush2.bf16.msra.mxu0 0
  %1643 = vmatprep.subr.bf16.mxu0 0
  %1644 = vmatpush2.bf16.msra.mxu0 0
  %1645 = vmatprep.subr.bf16.mxu0 0
  %1646 = vmatpush2.bf16.msra.mxu0 0
  %1647 = vmatprep.subr.bf16.mxu0 0
  %1648 = vmatpush2.bf16.msra.mxu0 0
  %1649 = vmatprep.subr.bf16.mxu0 0
  %1650 = vmatpush2.bf16.msra.mxu0 0
  %1651 = vmatprep.subr.bf16.mxu0 0
  %1652 = vmatpush2.bf16.msra.mxu0 0
  %1653 = vmatprep.subr.bf16.mxu0 0
  %1654 = vmatpush2.bf16.msra.mxu0 0
  %1655 = vmatprep.mubr.bf16.mxu0 0
  %1656 = vmatmul.mubr.bf16.gmra.mxu0 %v1621
  %v1657 = vpop.f32.mrf.mxu0
  %v1658 = vadd.f32 %v1573, %v1657
  %v1659 = vpop.f32.mrf.mxu0
  %v1660 = vadd.f32 %v1577, %v1659
  %v1661 = vpop.f32.mrf.mxu0
  %v1662 = vadd.f32 %v1573, %v1661
  %v1663 = vpop.f32.mrf.mxu0
  %v1664 = vadd.f32 %v1577, %v1663
  %1665 = vdwg.mxu0
  %v1666 = vmul.f32 %v1658, 0.125
  %v1667 = vpack.c.bf16 %v1666, %v1666
  %v1668 = vpack.c.bf16 %v1658, %v1658
  %1670 = vrot.lane.b32.xlu0 %v1668, 64
  %v1671 = vpop.permute.xlu0 %1670
  %v1673 = vsel %vm606, %v1667, 0
  %v1676 = vsel %vm606, %v1671, 0
  %1678 = vmatprep.subr.bf16.mxu0 0
  %1679 = vmatpush1.bf16.xpose.msra.mxu0 0
  %1680 = vmatprep.subr.bf16.mxu0 0
  %1681 = vmatpush1.bf16.xpose.msra.mxu0 0
  %1682 = vmatprep.subr.bf16.mxu0 0
  %1683 = vmatpush1.bf16.xpose.msra.mxu0 0
  %1684 = vmatprep.subr.bf16.mxu0 0
  %1685 = vmatpush1.bf16.xpose.msra.mxu0 0
  %1686 = vmatprep.subr.bf16.mxu0 0
  %1687 = vmatpush1.bf16.xpose.msra.mxu0 0
  %1688 = vmatprep.subr.bf16.mxu0 0
  %1689 = vmatpush1.bf16.xpose.msra.mxu0 0
  %1690 = vmatprep.subr.bf16.mxu0 0
  %1691 = vmatpush1.bf16.xpose.msra.mxu0 0
  %1692 = vmatprep.subr.bf16.mxu0 0
  %1693 = vmatpush1.bf16.xpose.msra.mxu0 %v1676
  %1694 = vmatprep.subr.bf16.mxu0 0
  %1695 = vmatpush2.bf16.xpose.msra.mxu0 0
  %1696 = vmatprep.subr.bf16.mxu0 0
  %1697 = vmatpush2.bf16.xpose.msra.mxu0 0
  %1698 = vmatprep.subr.bf16.mxu0 0
  %1699 = vmatpush2.bf16.xpose.msra.mxu0 0
  %1700 = vmatprep.subr.bf16.mxu0 0
  %1701 = vmatpush2.bf16.xpose.msra.mxu0 0
  %1702 = vmatprep.subr.bf16.mxu0 0
  %1703 = vmatpush2.bf16.xpose.msra.mxu0 0
  %1704 = vmatprep.subr.bf16.mxu0 0
  %1705 = vmatpush2.bf16.xpose.msra.mxu0 0
  %1706 = vmatprep.subr.bf16.mxu0 0
  %1707 = vmatpush2.bf16.xpose.msra.mxu0 0
  %1708 = vmatprep.subr.bf16.mxu0 0
  %1709 = vmatpush2.bf16.xpose.msra.mxu0 0
  %1710 = vmatprep.mubr.bf16.mxu0 0
  %1711 = vmatmul.mubr.bf16.gmra.mxu0 %v1673
  %v1712 = vpop.f32.mrf.mxu0
  %v1713 = vadd.f32 0.0, %v1712
  %v1714 = vpop.f32.mrf.mxu0
  %v1715 = vpop.f32.mrf.mxu0
  %v1716 = vpop.f32.mrf.mxu0
  %1717 = vdwg.mxu0
  %v1718 = vsel %vm854, %v1713, -inf
  %1719 = vmax.xlane.f32.xlu0 %v1718
  %v1720 = vpop.xlane.xlu0 %1719
  %v1721 = vsub.f32 %v1713, %v1720
  %v1722 = vmul.f32 %v1721, 1.442695
  %v1723 = vpow.pop %v1722
  %v1724 = vsel %vm854, %v1723, 0.0
  %1725 = vadd.xlane.f32.xlu0 %v1724
  %v1726 = vpop.xlane.xlu0 %1725
  %v1727 = vrcp.pop %v1726
  %v1728 = vmul.f32 %v1723, %v1727
  %v1729 = vpack.c.bf16 %v1728, %v1728
  %v1730 = vpack.c.bf16 %v1660, %v1660
  %v1732 = vsel %vm868, %v1729, 0
  %v1735 = vand.u32 %v1730, %v875
  %1737 = vmatprep.subr.bf16.mxu0 0
  %1738 = vmatpush1.bf16.msra.mxu0 0
  %1739 = vmatprep.subr.bf16.mxu0 0
  %1740 = vmatpush1.bf16.msra.mxu0 0
  %1741 = vmatprep.subr.bf16.mxu0 0
  %1742 = vmatpush1.bf16.msra.mxu0 0
  %1743 = vmatprep.subr.bf16.mxu0 0
  %1744 = vmatpush1.bf16.msra.mxu0 0
  %1745 = vmatprep.subr.bf16.mxu0 0
  %1746 = vmatpush1.bf16.msra.mxu0 0
  %1747 = vmatprep.subr.bf16.mxu0 0
  %1748 = vmatpush1.bf16.msra.mxu0 0
  %1749 = vmatprep.subr.bf16.mxu0 0
  %1750 = vmatpush1.bf16.msra.mxu0 0
  %1751 = vmatprep.subr.bf16.mxu0 0
  %1752 = vmatpush1.bf16.msra.mxu0 %v1735
  %1753 = vmatprep.subr.bf16.mxu0 0
  %1754 = vmatpush2.bf16.msra.mxu0 0
  %1755 = vmatprep.subr.bf16.mxu0 0
  %1756 = vmatpush2.bf16.msra.mxu0 0
  %1757 = vmatprep.subr.bf16.mxu0 0
  %1758 = vmatpush2.bf16.msra.mxu0 0
  %1759 = vmatprep.subr.bf16.mxu0 0
  %1760 = vmatpush2.bf16.msra.mxu0 0
  %1761 = vmatprep.subr.bf16.mxu0 0
  %1762 = vmatpush2.bf16.msra.mxu0 0
  %1763 = vmatprep.subr.bf16.mxu0 0
  %1764 = vmatpush2.bf16.msra.mxu0 0
  %1765 = vmatprep.subr.bf16.mxu0 0
  %1766 = vmatpush2.bf16.msra.mxu0 0
  %1767 = vmatprep.subr.bf16.mxu0 0
  %1768 = vmatpush2.bf16.msra.mxu0 0
  %1769 = vmatprep.mubr.bf16.mxu0 0
  %1770 = vmatmul.mubr.bf16.gmra.mxu0 %v1732
  %v1771 = vpop.f32.mrf.mxu0
  %v1772 = vadd.f32 0.0, %v1771
  %v1773 = vpop.f32.mrf.mxu0
  %v1774 = vpop.f32.mrf.mxu0
  %v1775 = vpop.f32.mrf.mxu0
  %1776 = vdwg.mxu0
  %1777 = vst.msk [vmem:[#allocation3] sm:$0x1f] %vm919, %v1772
  %v1778 = vmul.f32 %v1662, 0.125
  %v1779 = vpack.c.bf16 %v1778, %v1666
  %v1780 = vpack.c.bf16 %v1662, %v1658
  %v1782 = vshrl.u32 %v1779, 16
  %v1784 = vrot.slane %v1782, 2
  %v1785 = vshll.u32 %v1779, 16
  %v1787 = vrot.slane %v1785, 3
  %v1788 = vor.u32 %v1784, %v1787
  %v1790 = vshrl.u32 %v1780, 16
  %v1792 = vrot.slane %v1790, 2
  %v1793 = vshll.u32 %v1780, 16
  %v1795 = vrot.slane %v1793, 3
  %v1796 = vor.u32 %v1792, %v1795
  %1797 = vrot.lane.b32.xlu0 %v1796, 64
  %v1798 = vpop.permute.xlu0 %1797
  %v1800 = vsel %vm606, %v1788, 0
  %v1803 = vsel %vm606, %v1798, 0
  %1805 = vmatprep.subr.bf16.mxu0 0
  %1806 = vmatpush1.bf16.xpose.msra.mxu0 0
  %1807 = vmatprep.subr.bf16.mxu0 0
  %1808 = vmatpush1.bf16.xpose.msra.mxu0 0
  %1809 = vmatprep.subr.bf16.mxu0 0
  %1810 = vmatpush1.bf16.xpose.msra.mxu0 0
  %1811 = vmatprep.subr.bf16.mxu0 0
  %1812 = vmatpush1.bf16.xpose.msra.mxu0 0
  %1813 = vmatprep.subr.bf16.mxu0 0
  %1814 = vmatpush1.bf16.xpose.msra.mxu0 0
  %1815 = vmatprep.subr.bf16.mxu0 0
  %1816 = vmatpush1.bf16.xpose.msra.mxu0 0
  %1817 = vmatprep.subr.bf16.mxu0 0
  %1818 = vmatpush1.bf16.xpose.msra.mxu0 0
  %1819 = vmatprep.subr.bf16.mxu0 0
  %1820 = vmatpush1.bf16.xpose.msra.mxu0 %v1803
  %1821 = vmatprep.subr.bf16.mxu0 0
  %1822 = vmatpush2.bf16.xpose.msra.mxu0 0
  %1823 = vmatprep.subr.bf16.mxu0 0
  %1824 = vmatpush2.bf16.xpose.msra.mxu0 0
  %1825 = vmatprep.subr.bf16.mxu0 0
  %1826 = vmatpush2.bf16.xpose.msra.mxu0 0
  %1827 = vmatprep.subr.bf16.mxu0 0
  %1828 = vmatpush2.bf16.xpose.msra.mxu0 0
  %1829 = vmatprep.subr.bf16.mxu0 0
  %1830 = vmatpush2.bf16.xpose.msra.mxu0 0
  %1831 = vmatprep.subr.bf16.mxu0 0
  %1832 = vmatpush2.bf16.xpose.msra.mxu0 0
  %1833 = vmatprep.subr.bf16.mxu0 0
  %1834 = vmatpush2.bf16.xpose.msra.mxu0 0
  %1835 = vmatprep.subr.bf16.mxu0 0
  %1836 = vmatpush2.bf16.xpose.msra.mxu0 0
  %1837 = vmatprep.mubr.bf16.mxu0 0
  %1838 = vmatmul.mubr.bf16.gmra.mxu0 %v1800
  %v1839 = vpop.f32.mrf.mxu0
  %v1840 = vadd.f32 0.0, %v1839
  %v1841 = vpop.f32.mrf.mxu0
  %v1842 = vpop.f32.mrf.mxu0
  %v1843 = vpop.f32.mrf.mxu0
  %1844 = vdwg.mxu0
  %v1845 = vsel %vm854, %v1840, -inf
  %1846 = vmax.xlane.f32.xlu0 %v1845
  %v1847 = vpop.xlane.xlu0 %1846
  %v1848 = vsub.f32 %v1840, %v1847
  %v1849 = vmul.f32 %v1848, 1.442695
  %v1850 = vpow.pop %v1849
  %v1851 = vsel %vm854, %v1850, 0.0
  %1852 = vadd.xlane.f32.xlu0 %v1851
  %v1853 = vpop.xlane.xlu0 %1852
  %v1854 = vrcp.pop %v1853
  %v1855 = vmul.f32 %v1850, %v1854
  %v1856 = vpack.c.bf16 %v1855, %v1855
  %v1857 = vpack.c.bf16 %v1664, %v1660
  %v1859 = vshrl.u32 %v1857, 16
  %v1861 = vrot.slane %v1859, 2
  %v1862 = vshll.u32 %v1857, 16
  %v1864 = vrot.slane %v1862, 3
  %v1865 = vor.u32 %v1861, %v1864
  %v1867 = vsel %vm868, %v1856, 0
  %v1870 = vand.u32 %v1865, %v875
  %1872 = vmatprep.subr.bf16.mxu0 0
  %1873 = vmatpush1.bf16.msra.mxu0 0
  %1874 = vmatprep.subr.bf16.mxu0 0
  %1875 = vmatpush1.bf16.msra.mxu0 0
  %1876 = vmatprep.subr.bf16.mxu0 0
  %1877 = vmatpush1.bf16.msra.mxu0 0
  %1878 = vmatprep.subr.bf16.mxu0 0
  %1879 = vmatpush1.bf16.msra.mxu0 0
  %1880 = vmatprep.subr.bf16.mxu0 0
  %1881 = vmatpush1.bf16.msra.mxu0 0
  %1882 = vmatprep.subr.bf16.mxu0 0
  %1883 = vmatpush1.bf16.msra.mxu0 0
  %1884 = vmatprep.subr.bf16.mxu0 0
  %1885 = vmatpush1.bf16.msra.mxu0 0
  %1886 = vmatprep.subr.bf16.mxu0 0
  %1887 = vmatpush1.bf16.msra.mxu0 %v1870
  %1888 = vmatprep.subr.bf16.mxu0 0
  %1889 = vmatpush2.bf16.msra.mxu0 0
  %1890 = vmatprep.subr.bf16.mxu0 0
  %1891 = vmatpush2.bf16.msra.mxu0 0
  %1892 = vmatprep.subr.bf16.mxu0 0
  %1893 = vmatpush2.bf16.msra.mxu0 0
  %1894 = vmatprep.subr.bf16.mxu0 0
  %1895 = vmatpush2.bf16.msra.mxu0 0
  %1896 = vmatprep.subr.bf16.mxu0 0
  %1897 = vmatpush2.bf16.msra.mxu0 0
  %1898 = vmatprep.subr.bf16.mxu0 0
  %1899 = vmatpush2.bf16.msra.mxu0 0
  %1900 = vmatprep.subr.bf16.mxu0 0
  %1901 = vmatpush2.bf16.msra.mxu0 0
  %1902 = vmatprep.subr.bf16.mxu0 0
  %1903 = vmatpush2.bf16.msra.mxu0 0
  %1904 = vmatprep.mubr.bf16.mxu0 0
  %1905 = vmatmul.mubr.bf16.gmra.mxu0 %v1867
  %v1906 = vpop.f32.mrf.mxu0
  %v1907 = vadd.f32 0.0, %v1906
  %v1908 = vpop.f32.mrf.mxu0
  %v1909 = vpop.f32.mrf.mxu0
  %v1910 = vpop.f32.mrf.mxu0
  %1911 = vdwg.mxu0
  %1912 = vst.msk [vmem:[#allocation3 + $0x5] sm:$0x1f] %vm919, %v1907
  %v1913 = vld [vmem:[#allocation3] sm:$0xff]
  %v1914 = vld [vmem:[#allocation3 + $0x8] sm:$0x3]
  %s1915 = scalar_lea.vmem %s10, 32
  %v1916 = vld [vmem:[%s1915] sm:$0xf]
  %v1917 = vld [vmem:[%s1915 + $0x4] sm:$0xf]
  %v1918 = vld [vmem:[%s1915 + $0x8] sm:$0xf]
  %v1919 = vld [vmem:[%s1915 + $0xc] sm:$0xf]
  %v1920 = vld [vmem:[%s1915 + $0x10] sm:$0xf]
  %v1921 = vld [vmem:[%s1915 + $0x14] sm:$0xf]
  %v1922 = vld [vmem:[%s1915 + $0x18] sm:$0xf]
  %v1923 = vld [vmem:[%s1915 + $0x1c] sm:$0xf]
  %v1924 = vpack.c.bf16 %v1914, %v1913
  %v1933 = vunpack.c.l.b16 %v1916
  %v1934 = vunpack.c.l.b16 %v1917
  %v1935 = vunpack.c.l.b16 %v1918
  %v1936 = vunpack.c.l.b16 %v1919
  %v1937 = vunpack.c.l.b16 %v1920
  %v1938 = vunpack.c.l.b16 %v1921
  %v1939 = vunpack.c.l.b16 %v1922
  %v1940 = vunpack.c.l.b16 %v1923
  %v1941 = vpack.c.b16 %v1934, %v1933
  %v1942 = vpack.c.b16 %v1936, %v1935
  %v1943 = vpack.c.b16 %v1938, %v1937
  %v1944 = vpack.c.b16 %v1940, %v1939
  %v1950 = vsel %vm606, %v1924, 0
  %1952 = vmatprep.subr.bf16.mxu0 0
  %1953 = vmatpush1.bf16.msra.mxu0 0
  %1954 = vmatprep.subr.bf16.mxu0 0
  %1955 = vmatpush1.bf16.msra.mxu0 0
  %1956 = vmatprep.subr.bf16.mxu0 0
  %1957 = vmatpush1.bf16.msra.mxu0 0
  %1958 = vmatprep.subr.bf16.mxu0 0
  %1959 = vmatpush1.bf16.msra.mxu0 0
  %1960 = vmatprep.subr.bf16.mxu0 0
  %1961 = vmatpush1.bf16.msra.mxu0 %v1944
  %1962 = vmatprep.subr.bf16.mxu0 0
  %1963 = vmatpush1.bf16.msra.mxu0 %v1943
  %1964 = vmatprep.subr.bf16.mxu0 0
  %1965 = vmatpush1.bf16.msra.mxu0 %v1942
  %1966 = vmatprep.subr.bf16.mxu0 0
  %1967 = vmatpush1.bf16.msra.mxu0 %v1941
  %1968 = vmatprep.subr.bf16.mxu0 0
  %1969 = vmatpush2.bf16.msra.mxu0 0
  %1970 = vmatprep.subr.bf16.mxu0 0
  %1971 = vmatpush2.bf16.msra.mxu0 0
  %1972 = vmatprep.subr.bf16.mxu0 0
  %1973 = vmatpush2.bf16.msra.mxu0 0
  %1974 = vmatprep.subr.bf16.mxu0 0
  %1975 = vmatpush2.bf16.msra.mxu0 0
  %1976 = vmatprep.subr.bf16.mxu0 0
  %1977 = vmatpush2.bf16.msra.mxu0 0
  %1978 = vmatprep.subr.bf16.mxu0 0
  %1979 = vmatpush2.bf16.msra.mxu0 0
  %1980 = vmatprep.subr.bf16.mxu0 0
  %1981 = vmatpush2.bf16.msra.mxu0 0
  %1982 = vmatprep.subr.bf16.mxu0 0
  %1983 = vmatpush2.bf16.msra.mxu0 0
  %1984 = vmatprep.mubr.bf16.mxu0 0
  %1985 = vmatmul.mubr.bf16.gmra.mxu0 %v1950
  %v1986 = vpop.f32.mrf.mxu0
  %v1987 = vadd.f32 0.0, %v1986
  %v1988 = vpop.f32.mrf.mxu0
  %v1989 = vpop.f32.mrf.mxu0
  %v1990 = vadd.f32 0.0, %v1989
  %v1991 = vpop.f32.mrf.mxu0
  %1992 = vdwg.mxu0
  %v1993 = vadd.f32 %v1509, %v1987
  %v1994 = vadd.f32 %v1510, %v1990
  %s1995 = scalar_lea.vmem %s11, 1
  %v1996 = vld [vmem:[%s1995] sm:$0x1]
  %v1998 = vlaneseq
  %v1999 = vshrl.u32 %v1998, 7
  %v2000 = vsub.s32 0, %v1999
  %v2001 = vrot.slane %v1996, %v2000
  %v2003 = vadd.f32 %v1993, %v2001
  %v2004 = vadd.f32 %v1994, %v2001
  %s2005 = scalar_lea.vmem %s12, 1
  %v2006 = vld [vmem:[%s2005] sm:$0x1]
  %s2007 = scalar_lea.vmem %s13, 1
  %v2008 = vld [vmem:[%s2007] sm:$0x1]
  %v2009 = vsel %vm606, %v2003, 0.0
  %2010 = vadd.xlane.f32.xlu0 %v2009
  %v2011 = vpop.xlane.xlu0 %2010
  %v2012 = vsel %vm610, %v2004, 0.0
  %2013 = vadd.xlane.f32.xlu0 %v2012
  %v2014 = vpop.xlane.xlu0 %2013
  %v2015 = vmul.f32 %v2011, %v614
  %v2016 = vmul.f32 %v2014, %v614
  %v2017 = vsub.f32 %v2003, %v2015
  %v2018 = vsub.f32 %v2004, %v2016
  %v2019 = vmul.f32 %v2017, %v2017
  %v2020 = vmul.f32 %v2018, %v2018
  %v2021 = vsel %vm606, %v2019, 0.0
  %2022 = vadd.xlane.f32.xlu0 %v2021
  %v2023 = vpop.xlane.xlu0 %2022
  %v2024 = vsel %vm610, %v2020, 0.0
  %2025 = vadd.xlane.f32.xlu0 %v2024
  %v2026 = vpop.xlane.xlu0 %2025
  %v2027 = vmul.f32 %v2023, %v614
  %v2028 = vmul.f32 %v2026, %v614
  %v2029 = vadd.f32 %v2027, 1e-05
  %v2030 = vadd.f32 %v2028, 1e-05
  %v2031 = vrsqrt.pop %v2029
  %v2032 = vrsqrt.pop %v2030
  %v2033 = vmul.f32 %v2017, %v2031
  %v2034 = vmul.f32 %v2018, %v2032
  %v2036 = vlaneseq
  %v2037 = vshrl.u32 %v2036, 7
  %v2038 = vsub.s32 0, %v2037
  %v2039 = vrot.slane %v2006, %v2038
  %v2041 = vmul.f32 %v2033, %v2039
  %v2042 = vmul.f32 %v2034, %v2039
  %v2044 = vlaneseq
  %v2045 = vshrl.u32 %v2044, 7
  %v2046 = vsub.s32 0, %v2045
  %v2047 = vrot.slane %v2008, %v2046
  %v2049 = vadd.f32 %v2041, %v2047
  %v2050 = vadd.f32 %v2042, %v2047
  %s2051 = scalar_lea.vmem %s14, 64
  %v2052 = vld [vmem:[%s2051] sm:$0xff]
  %v2053 = vld [vmem:[%s2051 + $0x8] sm:$0xff]
  %v2054 = vld [vmem:[%s2051 + $0x10] sm:$0xff]
  %v2055 = vld [vmem:[%s2051 + $0x18] sm:$0xff]
  %v2056 = vld [vmem:[%s2051 + $0x20] sm:$0xff]
  %v2057 = vld [vmem:[%s2051 + $0x28] sm:$0xff]
  %v2058 = vld [vmem:[%s2051 + $0x30] sm:$0xff]
  %v2059 = vld [vmem:[%s2051 + $0x38] sm:$0xff]
  %v2060 = vpack.c.bf16 %v2050, %v2049
  %s2061 = scalar_lea.vmem %s15, 2
  %v2062 = vld [vmem:[%s2061] sm:$0x3]
  %v2064 = vlaneseq
  %v2065 = vshrl.u32 %v2064, 7
  %v2066 = vsub.s32 0, %v2065
  %v2067 = vrot.slane %v2062, %v2066
  %v2068 = vlaneseq
  %v2069 = vshrl.u32 %v2068, 7
  %v2070 = vsub.s32 1, %v2069
  %v2071 = vrot.slane %v2062, %v2070
  %v2082 = vunpack.c.l.b16 %v2052
  %v2083 = vunpack.c.h.b16 %v2052
  %v2084 = vunpack.c.l.b16 %v2053
  %v2085 = vunpack.c.h.b16 %v2053
  %v2086 = vunpack.c.l.b16 %v2054
  %v2087 = vunpack.c.h.b16 %v2054
  %v2088 = vunpack.c.l.b16 %v2055
  %v2089 = vunpack.c.h.b16 %v2055
  %v2090 = vunpack.c.l.b16 %v2056
  %v2091 = vunpack.c.h.b16 %v2056
  %v2092 = vunpack.c.l.b16 %v2057
  %v2093 = vunpack.c.h.b16 %v2057
  %v2094 = vunpack.c.l.b16 %v2058
  %v2095 = vunpack.c.h.b16 %v2058
  %v2096 = vunpack.c.l.b16 %v2059
  %v2097 = vunpack.c.h.b16 %v2059
  %v2098 = vpack.c.b16 %v2084, %v2082
  %v2099 = vpack.c.b16 %v2085, %v2083
  %v2100 = vpack.c.b16 %v2088, %v2086
  %v2101 = vpack.c.b16 %v2089, %v2087
  %v2102 = vpack.c.b16 %v2092, %v2090
  %v2103 = vpack.c.b16 %v2093, %v2091
  %v2104 = vpack.c.b16 %v2096, %v2094
  %v2105 = vpack.c.b16 %v2097, %v2095
  %v2115 = vsel %vm606, %v2060, 0
  %2117 = vmatprep.subr.bf16.mxu0 0
  %2118 = vmatpush1.bf16.msra.mxu0 0
  %2119 = vmatprep.subr.bf16.mxu0 0
  %2120 = vmatpush1.bf16.msra.mxu0 0
  %2121 = vmatprep.subr.bf16.mxu0 0
  %2122 = vmatpush1.bf16.msra.mxu0 0
  %2123 = vmatprep.subr.bf16.mxu0 0
  %2124 = vmatpush1.bf16.msra.mxu0 0
  %2125 = vmatprep.subr.bf16.mxu0 %v2105
  %2126 = vmatpush1.bf16.msra.mxu0 %v2104
  %2127 = vmatprep.subr.bf16.mxu0 %v2103
  %2128 = vmatpush1.bf16.msra.mxu0 %v2102
  %2129 = vmatprep.subr.bf16.mxu0 %v2101
  %2130 = vmatpush1.bf16.msra.mxu0 %v2100
  %2131 = vmatprep.subr.bf16.mxu0 %v2099
  %2132 = vmatpush1.bf16.msra.mxu0 %v2098
  %2133 = vmatprep.subr.bf16.mxu0 0
  %2134 = vmatpush2.bf16.msra.mxu0 0
  %2135 = vmatprep.subr.bf16.mxu0 0
  %2136 = vmatpush2.bf16.msra.mxu0 0
  %2137 = vmatprep.subr.bf16.mxu0 0
  %2138 = vmatpush2.bf16.msra.mxu0 0
  %2139 = vmatprep.subr.bf16.mxu0 0
  %2140 = vmatpush2.bf16.msra.mxu0 0
  %2141 = vmatprep.subr.bf16.mxu0 0
  %2142 = vmatpush2.bf16.msra.mxu0 0
  %2143 = vmatprep.subr.bf16.mxu0 0
  %2144 = vmatpush2.bf16.msra.mxu0 0
  %2145 = vmatprep.subr.bf16.mxu0 0
  %2146 = vmatpush2.bf16.msra.mxu0 0
  %2147 = vmatprep.subr.bf16.mxu0 0
  %2148 = vmatpush2.bf16.msra.mxu0 0
  %2149 = vmatprep.mubr.bf16.mxu0 0
  %2150 = vmatmul.mubr.bf16.gmra.mxu0 %v2115
  %v2151 = vpop.f32.mrf.mxu0
  %v2152 = vadd.f32 %v2067, %v2151
  %v2153 = vpop.f32.mrf.mxu0
  %v2154 = vadd.f32 %v2071, %v2153
  %v2155 = vpop.f32.mrf.mxu0
  %v2156 = vadd.f32 %v2067, %v2155
  %v2157 = vpop.f32.mrf.mxu0
  %v2158 = vadd.f32 %v2071, %v2157
  %2159 = vdwg.mxu0
  %v2160 = vmul.f32 %v2152, 1.702
  %v2161 = vmul.f32 %v2154, 1.702
  %v2162 = vmul.f32 %v2156, 1.702
  %v2163 = vmul.f32 %v2158, 1.702
  %v2164 = vxor.u32 %v2160, 2147483648
  %v2165 = vxor.u32 %v2161, 2147483648
  %v2166 = vxor.u32 %v2162, 2147483648
  %v2167 = vxor.u32 %v2163, 2147483648
  %v2168 = vmul.f32 %v2164, 1.442695
  %v2169 = vpow.pop %v2168
  %v2170 = vmul.f32 %v2165, 1.442695
  %v2171 = vpow.pop %v2170
  %v2172 = vmul.f32 %v2166, 1.442695
  %v2173 = vpow.pop %v2172
  %v2174 = vmul.f32 %v2167, 1.442695
  %v2175 = vpow.pop %v2174
  %v2176 = vadd.f32 %v2169, 1.0
  %v2177 = vadd.f32 %v2171, 1.0
  %v2178 = vadd.f32 %v2173, 1.0
  %v2179 = vadd.f32 %v2175, 1.0
  %v2180 = vrcp.pop %v2176
  %v2181 = vmul.f32 1.0, %v2180
  %v2182 = vrcp.pop %v2177
  %v2183 = vmul.f32 1.0, %v2182
  %v2184 = vrcp.pop %v2178
  %v2185 = vmul.f32 1.0, %v2184
  %v2186 = vrcp.pop %v2179
  %v2187 = vmul.f32 1.0, %v2186
  %v2188 = vmul.f32 %v2152, %v2181
  %v2189 = vmul.f32 %v2154, %v2183
  %v2190 = vmul.f32 %v2156, %v2185
  %v2191 = vmul.f32 %v2158, %v2187
  %s2192 = scalar_lea.vmem %s16, 128
  %v2193 = vld [vmem:[%s2192] sm:$0xf]
  %v2194 = vld [vmem:[%s2192 + $0x4] sm:$0xf]
  %v2195 = vld [vmem:[%s2192 + $0x8] sm:$0xf]
  %v2196 = vld [vmem:[%s2192 + $0xc] sm:$0xf]
  %v2197 = vld [vmem:[%s2192 + $0x10] sm:$0xf]
  %v2198 = vld [vmem:[%s2192 + $0x14] sm:$0xf]
  %v2199 = vld [vmem:[%s2192 + $0x18] sm:$0xf]
  %v2200 = vld [vmem:[%s2192 + $0x1c] sm:$0xf]
  %v2201 = vld [vmem:[%s2192 + $0x20] sm:$0xf]
  %v2202 = vld [vmem:[%s2192 + $0x24] sm:$0xf]
  %v2203 = vld [vmem:[%s2192 + $0x28] sm:$0xf]
  %v2204 = vld [vmem:[%s2192 + $0x2c] sm:$0xf]
  %v2205 = vld [vmem:[%s2192 + $0x30] sm:$0xf]
  %v2206 = vld [vmem:[%s2192 + $0x34] sm:$0xf]
  %v2207 = vld [vmem:[%s2192 + $0x38] sm:$0xf]
  %v2208 = vld [vmem:[%s2192 + $0x3c] sm:$0xf]
  %v2209 = vld [vmem:[%s2192 + $0x40] sm:$0xf]
  %v2210 = vld [vmem:[%s2192 + $0x44] sm:$0xf]
  %v2211 = vld [vmem:[%s2192 + $0x48] sm:$0xf]
  %v2212 = vld [vmem:[%s2192 + $0x4c] sm:$0xf]
  %v2213 = vld [vmem:[%s2192 + $0x50] sm:$0xf]
  %v2214 = vld [vmem:[%s2192 + $0x54] sm:$0xf]
  %v2215 = vld [vmem:[%s2192 + $0x58] sm:$0xf]
  %v2216 = vld [vmem:[%s2192 + $0x5c] sm:$0xf]
  %v2217 = vld [vmem:[%s2192 + $0x60] sm:$0xf]
  %v2218 = vld [vmem:[%s2192 + $0x64] sm:$0xf]
  %v2219 = vld [vmem:[%s2192 + $0x68] sm:$0xf]
  %v2220 = vld [vmem:[%s2192 + $0x6c] sm:$0xf]
  %v2221 = vld [vmem:[%s2192 + $0x70] sm:$0xf]
  %v2222 = vld [vmem:[%s2192 + $0x74] sm:$0xf]
  %v2223 = vld [vmem:[%s2192 + $0x78] sm:$0xf]
  %v2224 = vld [vmem:[%s2192 + $0x7c] sm:$0xf]
  %v2225 = vpack.c.bf16 %v2190, %v2188
  %v2226 = vpack.c.bf16 %v2191, %v2189
  %v2259 = vunpack.c.l.b16 %v2193
  %v2260 = vunpack.c.l.b16 %v2194
  %v2261 = vunpack.c.l.b16 %v2195
  %v2262 = vunpack.c.l.b16 %v2196
  %v2263 = vunpack.c.l.b16 %v2197
  %v2264 = vunpack.c.l.b16 %v2198
  %v2265 = vunpack.c.l.b16 %v2199
  %v2266 = vunpack.c.l.b16 %v2200
  %v2267 = vunpack.c.l.b16 %v2201
  %v2268 = vunpack.c.l.b16 %v2202
  %v2269 = vunpack.c.l.b16 %v2203
  %v2270 = vunpack.c.l.b16 %v2204
  %v2271 = vunpack.c.l.b16 %v2205
  %v2272 = vunpack.c.l.b16 %v2206
  %v2273 = vunpack.c.l.b16 %v2207
  %v2274 = vunpack.c.l.b16 %v2208
  %v2275 = vunpack.c.l.b16 %v2209
  %v2276 = vunpack.c.l.b16 %v2210
  %v2277 = vunpack.c.l.b16 %v2211
  %v2278 = vunpack.c.l.b16 %v2212
  %v2279 = vunpack.c.l.b16 %v2213
  %v2280 = vunpack.c.l.b16 %v2214
  %v2281 = vunpack.c.l.b16 %v2215
  %v2282 = vunpack.c.l.b16 %v2216
  %v2283 = vunpack.c.l.b16 %v2217
  %v2284 = vunpack.c.l.b16 %v2218
  %v2285 = vunpack.c.l.b16 %v2219
  %v2286 = vunpack.c.l.b16 %v2220
  %v2287 = vunpack.c.l.b16 %v2221
  %v2288 = vunpack.c.l.b16 %v2222
  %v2289 = vunpack.c.l.b16 %v2223
  %v2290 = vunpack.c.l.b16 %v2224
  %v2291 = vpack.c.b16 %v2260, %v2259
  %v2292 = vpack.c.b16 %v2262, %v2261
  %v2293 = vpack.c.b16 %v2264, %v2263
  %v2294 = vpack.c.b16 %v2266, %v2265
  %v2295 = vpack.c.b16 %v2268, %v2267
  %v2296 = vpack.c.b16 %v2270, %v2269
  %v2297 = vpack.c.b16 %v2272, %v2271
  %v2298 = vpack.c.b16 %v2274, %v2273
  %v2299 = vpack.c.b16 %v2276, %v2275
  %v2300 = vpack.c.b16 %v2278, %v2277
  %v2301 = vpack.c.b16 %v2280, %v2279
  %v2302 = vpack.c.b16 %v2282, %v2281
  %v2303 = vpack.c.b16 %v2284, %v2283
  %v2304 = vpack.c.b16 %v2286, %v2285
  %v2305 = vpack.c.b16 %v2288, %v2287
  %v2306 = vpack.c.b16 %v2290, %v2289
  %2323 = vmatprep.subr.bf16.mxu0 0
  %2324 = vmatpush1.bf16.msra.mxu0 %v2298
  %2325 = vmatprep.subr.bf16.mxu0 0
  %2326 = vmatpush1.bf16.msra.mxu0 %v2297
  %2327 = vmatprep.subr.bf16.mxu0 0
  %2328 = vmatpush1.bf16.msra.mxu0 %v2296
  %2329 = vmatprep.subr.bf16.mxu0 0
  %2330 = vmatpush1.bf16.msra.mxu0 %v2295
  %2331 = vmatprep.subr.bf16.mxu0 0
  %2332 = vmatpush1.bf16.msra.mxu0 %v2294
  %2333 = vmatprep.subr.bf16.mxu0 0
  %2334 = vmatpush1.bf16.msra.mxu0 %v2293
  %2335 = vmatprep.subr.bf16.mxu0 0
  %2336 = vmatpush1.bf16.msra.mxu0 %v2292
  %2337 = vmatprep.subr.bf16.mxu0 0
  %2338 = vmatpush1.bf16.msra.mxu0 %v2291
  %2339 = vmatprep.subr.bf16.mxu0 0
  %2340 = vmatpush2.bf16.msra.mxu0 %v2306
  %2341 = vmatprep.subr.bf16.mxu0 0
  %2342 = vmatpush2.bf16.msra.mxu0 %v2305
  %2343 = vmatprep.subr.bf16.mxu0 0
  %2344 = vmatpush2.bf16.msra.mxu0 %v2304
  %2345 = vmatprep.subr.bf16.mxu0 0
  %2346 = vmatpush2.bf16.msra.mxu0 %v2303
  %2347 = vmatprep.subr.bf16.mxu0 0
  %2348 = vmatpush2.bf16.msra.mxu0 %v2302
  %2349 = vmatprep.subr.bf16.mxu0 0
  %2350 = vmatpush2.bf16.msra.mxu0 %v2301
  %2351 = vmatprep.subr.bf16.mxu0 0
  %2352 = vmatpush2.bf16.msra.mxu0 %v2300
  %2353 = vmatprep.subr.bf16.mxu0 0
  %2354 = vmatpush2.bf16.msra.mxu0 %v2299
  %2355 = vmatprep.mubr.bf16.mxu0 %v2226
  %2356 = vmatmul.mubr.bf16.gmra.mxu0 %v2225
  %v2357 = vpop.f32.mrf.mxu0
  %v2358 = vadd.f32 0.0, %v2357
  %v2359 = vpop.f32.mrf.mxu0
  %v2360 = vpop.f32.mrf.mxu0
  %v2361 = vpop.f32.mrf.mxu0
  %2362 = vdwg.mxu0
  %v2363 = vadd.f32 %v2003, %v2358
  %s2364 = scalar_lea.vmem %s17, 1
  %v2365 = vld [vmem:[%s2364] sm:$0x1]
  %v2367 = vlaneseq
  %v2368 = vshrl.u32 %v2367, 7
  %v2369 = vsub.s32 0, %v2368
  %v2370 = vrot.slane %v2365, %v2369
  %v2372 = vadd.f32 %v2363, %v2370
  %2373 = vst.msk [vmem:[#allocation2] sm:$0x1] %vm588, %v2372
  %vm2374 = vcmask 521221
  %2375 = vst.msk [vmem:[#allocation2 - $0x4] sm:$0x20] %vm2374, %v2372
  %v2376 = vld [vmem:[#allocation2] sm:$0x3]
  %v2377 = vld [vmem:[%s18] sm:$0x1]
  %v2378 = vld [vmem:[%s19] sm:$0x1]
  %v2379 = vsel %vm610, %v2376, 0.0
  %2380 = vadd.xlane.f32.xlu0 %v2379
  %v2381 = vpop.xlane.xlu0 %2380
  %v2382 = vmul.f32 %v2381, %v614
  %v2383 = vsub.f32 %v2376, %v2382
  %v2384 = vmul.f32 %v2383, %v2383
  %v2385 = vsel %vm610, %v2384, 0.0
  %2386 = vadd.xlane.f32.xlu0 %v2385
  %v2387 = vpop.xlane.xlu0 %2386
  %v2388 = vmul.f32 %v2387, %v614
  %v2389 = vadd.f32 %v2388, 1e-05
  %v2390 = vrsqrt.pop %v2389
  %v2391 = vmul.f32 %v2383, %v2390
  %v2393 = vlaneseq
  %v2394 = vshrl.u32 %v2393, 7
  %v2395 = vsub.s32 0, %v2394
  %v2396 = vrot.slane %v2377, %v2395
  %v2398 = vmul.f32 %v2391, %v2396
  %v2400 = vlaneseq
  %v2401 = vshrl.u32 %v2400, 7
  %v2402 = vsub.s32 0, %v2401
  %v2403 = vrot.slane %v2378, %v2402
  %v2405 = vadd.f32 %v2398, %v2403
  %v2406 = vld [vmem:[%s20] sm:$0xf]
  %v2407 = vld [vmem:[%s20 + $0x4] sm:$0xf]
  %v2408 = vld [vmem:[%s20 + $0x8] sm:$0xf]
  %v2409 = vld [vmem:[%s20 + $0xc] sm:$0xf]
  %v2410 = vld [vmem:[%s20 + $0x10] sm:$0xf]
  %v2411 = vld [vmem:[%s20 + $0x14] sm:$0xf]
  %v2412 = vld [vmem:[%s20 + $0x18] sm:$0xf]
  %v2413 = vld [vmem:[%s20 + $0x1c] sm:$0xf]
  %v2414 = vpack.c.bf16 %v2405, %v2405
  %v2423 = vunpack.c.l.b16 %v2406
  %v2424 = vunpack.c.l.b16 %v2407
  %v2425 = vunpack.c.l.b16 %v2408
  %v2426 = vunpack.c.l.b16 %v2409
  %v2427 = vunpack.c.l.b16 %v2410
  %v2428 = vunpack.c.l.b16 %v2411
  %v2429 = vunpack.c.l.b16 %v2412
  %v2430 = vunpack.c.l.b16 %v2413
  %v2431 = vpack.c.b16 %v2424, %v2423
  %v2432 = vpack.c.b16 %v2426, %v2425
  %v2433 = vpack.c.b16 %v2428, %v2427
  %v2434 = vpack.c.b16 %v2430, %v2429
  %v2440 = vsel %vm606, %v2414, 0
  %2442 = vmatprep.subr.bf16.mxu0 0
  %2443 = vmatpush1.bf16.msra.mxu0 0
  %2444 = vmatprep.subr.bf16.mxu0 0
  %2445 = vmatpush1.bf16.msra.mxu0 0
  %2446 = vmatprep.subr.bf16.mxu0 0
  %2447 = vmatpush1.bf16.msra.mxu0 0
  %2448 = vmatprep.subr.bf16.mxu0 0
  %2449 = vmatpush1.bf16.msra.mxu0 0
  %2450 = vmatprep.subr.bf16.mxu0 0
  %2451 = vmatpush1.bf16.msra.mxu0 %v2434
  %2452 = vmatprep.subr.bf16.mxu0 0
  %2453 = vmatpush1.bf16.msra.mxu0 %v2433
  %2454 = vmatprep.subr.bf16.mxu0 0
  %2455 = vmatpush1.bf16.msra.mxu0 %v2432
  %2456 = vmatprep.subr.bf16.mxu0 0
  %2457 = vmatpush1.bf16.msra.mxu0 %v2431
  %2458 = vmatprep.subr.bf16.mxu0 0
  %2459 = vmatpush2.bf16.msra.mxu0 0
  %2460 = vmatprep.subr.bf16.mxu0 0
  %2461 = vmatpush2.bf16.msra.mxu0 0
  %2462 = vmatprep.subr.bf16.mxu0 0
  %2463 = vmatpush2.bf16.msra.mxu0 0
  %2464 = vmatprep.subr.bf16.mxu0 0
  %2465 = vmatpush2.bf16.msra.mxu0 0
  %2466 = vmatprep.subr.bf16.mxu0 0
  %2467 = vmatpush2.bf16.msra.mxu0 0
  %2468 = vmatprep.subr.bf16.mxu0 0
  %2469 = vmatpush2.bf16.msra.mxu0 0
  %2470 = vmatprep.subr.bf16.mxu0 0
  %2471 = vmatpush2.bf16.msra.mxu0 0
  %2472 = vmatprep.subr.bf16.mxu0 0
  %2473 = vmatpush2.bf16.msra.mxu0 0
  %2474 = vmatprep.mubr.bf16.mxu0 0
  %2475 = vmatmul.mubr.bf16.gmra.mxu0 %v2440
  %v2476 = vpop.f32.mrf.mxu0
  %v2477 = vadd.f32 0.0, %v2476
  %v2478 = vpop.f32.mrf.mxu0
  %v2479 = vpop.f32.mrf.mxu0
  %v2480 = vpop.f32.mrf.mxu0
  %2481 = vdwg.mxu0
  %v2482 = vmul.f32 %v2477, %v2477
  %v2483 = vsel %vm610, %v2482, 0.0
  %2484 = vadd.xlane.f32.xlu0 %v2483
  %v2485 = vpop.xlane.xlu0 %2484
  %v2486 = vadd.f32 %v2485, 1e-12
  %v2487 = vrsqrt.pop %v2486
  %v2488 = vmul.f32 %v2477, %v2487
  %2489 = vst.msk [vmem:[%s21] sm:$0x3] %vm610, %v2488
  // Predicated region
  $region86: #{clip_forward.2} parent=0 // pred_check
    _
  $region87: #{clip_forward.2} parent=0 // pred_check_branch
    %2491 = sbr.rel (0) target = $region89
  $region88: #{clip_forward.2} parent=0 // pred_region
    _
  $region89: #{clip_forward.2} parent=0 // pred_fallthru
    _
  // Predicated region
  $region90: #{clip_forward.2} parent=0 // pred_check
    _
  $region91: #{clip_forward.2} parent=0 // pred_check_branch
    %2493 = sbr.rel (0) target = $region93
  $region92: #{clip_forward.2} parent=0 // pred_region
    _
  $region93: #{clip_forward.2} parent=0 // pred_fallthru
    _

</llo_original>
